<compile_context>
chip_gen: v6e
topology: v6e:2x2x1
jax: 0.10.0
libtpu: 0.0.40
codegen_flags: <defaults>
</compile_context>

<pallas_src>
import functools

import jax
import jax.numpy as jnp
from jax.experimental import pallas as pl
from jax.experimental.pallas import tpu as pltpu


def text_lstm_kernel(*refs, num_layers, T, H, num_classes):
    """One batch tile (feature-major) per grid step.

    refs layout:
      [0]                      gx0_ref  (T, 4H, B_tile)  layer-0 input proj (+bias)
      [1]                      w_hh0    (4H, H)           layer-0 recurrent weight
      for l in 1..L-1:         w_ih_l (4H, H), w_hh_l (4H, H), bias_l (4H, 1)
      then                     wf (C, H), bf (C, 1), out_ref (C, B_tile)
      scratch (only if L>1):   seq_ref (T, H, B_tile)     inter-layer sequence
    """
    gx0_ref = refs[0]
    w_hh0_ref = refs[1]
    upper = [(refs[2 + 3 * i], refs[3 + 3 * i], refs[4 + 3 * i])
             for i in range(num_layers - 1)]
    base = 2 + 3 * (num_layers - 1)
    wf_ref, bf_ref = refs[base], refs[base + 1]
    out_ref = refs[base + 2]
    seq_ref = refs[base + 3] if num_layers > 1 else None

    B = out_ref.shape[1]          # lane axis (128)
    G = 4 * H
    unroll = True if T <= 32 else 8

    def sig(z):                   # sigmoid via tanh: no divide, one EUP op
        return 0.5 * (jnp.tanh(0.5 * z) + 1.0)

    def cell(gates, c):           # gates: (4H, B) feature-major; splits = sublane slices
        i_g = sig(gates[0:H, :])
        f_g = sig(gates[H:2 * H, :])
        g_g = jnp.tanh(gates[2 * H:3 * H, :])
        o_g = sig(gates[3 * H:4 * H, :])
        c_new = f_g * c + i_g * g_g
        h_new = o_g * jnp.tanh(c_new)
        return h_new, c_new

    # ---------------- layer 0 (input projection precomputed in wrapper) --------
    w_hh0 = w_hh0_ref[...]
    mm_dtype = w_hh0.dtype

    def body0(t, carry):
        h, c = carry
        gates = gx0_ref[t] + jnp.dot(w_hh0, h.astype(mm_dtype),
                                     preferred_element_type=jnp.float32)
        h_new, c_new = cell(gates, c)
        if num_layers > 1:        # last layer's sequence is never read
            seq_ref[t] = h_new
        return h_new, c_new

    h, c = jax.lax.fori_loop(
        0, T, body0,
        (jnp.zeros((H, B), jnp.float32), jnp.zeros((H, B), jnp.float32)),
        unroll=unroll)

    # ---------------- layers 1 .. L-1 ------------------------------------------
    # TODO(synk): PyTorch applies inter-layer dropout in training mode; identity in eval.
    for l in range(1, num_layers):
        w_ih_ref, w_hh_ref, b_ref = upper[l - 1]
        w_ih = w_ih_ref[...]
        w_hh = w_hh_ref[...]
        bias = jnp.broadcast_to(b_ref[...], (G, B))   # hoisted out of the loop
        is_last = (l == num_layers - 1)

        def body(t, carry, w_ih=w_ih, w_hh=w_hh, bias=bias, is_last=is_last):
            h, c = carry
            x_t = seq_ref[t]                                   # (H, B) prev layer
            gates = (jnp.dot(w_ih, x_t.astype(mm_dtype),
                             preferred_element_type=jnp.float32)
                     + jnp.dot(w_hh, h.astype(mm_dtype),
                               preferred_element_type=jnp.float32)
                     + bias)
            h_new, c_new = cell(gates, c)
            if not is_last:
                seq_ref[t] = h_new                             # reuse the same slab
            return h_new, c_new

        h, c = jax.lax.fori_loop(
            0, T, body,
            (jnp.zeros((H, B), jnp.float32), jnp.zeros((H, B), jnp.float32)),
            unroll=unroll)

    # ---------------- classifier head on the last hidden state -----------------
    # TODO(synk): nn.Dropout before fc is identity in eval mode.
    wf = wf_ref[...]                                           # (C, H)
    logits = jnp.dot(wf, h.astype(wf.dtype),
                     preferred_element_type=jnp.float32) + bf_ref[...]   # (C, B)
    if num_classes == 1:
        out = sig(logits)
    else:
        m = jnp.max(logits, axis=0, keepdims=True)
        s = logits - m
        out = s - jnp.log(jnp.sum(jnp.exp(s), axis=0, keepdims=True))    # log_softmax
    # C < 128 -> masked store, but this runs once per tile (negligible).
    out_ref[...] = out.astype(out_ref.dtype)


def text_lstm_forward(token_ids, emb_table, layer_params, fc_w, fc_b, *,
                      num_classes, matmul_dtype=jnp.float32):
    """token_ids: (T, B) int32 (seq-first, like the PyTorch module).
    layer_params: list of (w_ih (4H, Ein), w_hh (4H, H), b_ih (4H,), b_hh (4H,)).
    matmul_dtype: set jnp.bfloat16 on v6e/v7x for MXU throughput (f32 accumulate)."""
    T, B = token_ids.shape
    H = layer_params[0][1].shape[1]
    num_layers = len(layer_params)
    C = fc_w.shape[0]

    # Embedding lookup (plain XLA gather; padding_idx row of the table is zero).
    xe = jnp.take(emb_table, token_ids, axis=0).astype(jnp.float32)      # (T, B, E)

    # Batch on the LANE axis: pad to a multiple of 128.
    B_TILE = 128
    B_pad = ((B + B_TILE - 1) // B_TILE) * B_TILE
    if B_pad != B:
        xe = jnp.pad(xe, ((0, 0), (0, B_pad - B), (0, 0)))

    # Layer-0 input projection as one full-batch XLA GEMM, feature-major output.
    w_ih0, w_hh0, b_ih0, b_hh0 = layer_params[0]
    gx0 = jnp.einsum('tbe,ge->tgb',
                     xe.astype(matmul_dtype), w_ih0.astype(matmul_dtype),
                     preferred_element_type=jnp.float32)
    gx0 = (gx0 + (b_ih0 + b_hh0)[None, :, None]).astype(jnp.float32)     # (T, 4H, B_pad)

    flat_inputs = [gx0, w_hh0.astype(matmul_dtype)]
    in_specs = [pl.BlockSpec((T, 4 * H, B_TILE), lambda b: (0, 0, b)),
                pl.BlockSpec((4 * H, H), lambda b: (0, 0))]
    for (w_ih, w_hh, b_ih, b_hh) in layer_params[1:]:
        flat_inputs += [w_ih.astype(matmul_dtype), w_hh.astype(matmul_dtype),
                        (b_ih + b_hh).reshape(4 * H, 1).astype(jnp.float32)]
        in_specs += [pl.BlockSpec((4 * H, H), lambda b: (0, 0)),
                     pl.BlockSpec((4 * H, H), lambda b: (0, 0)),
                     pl.BlockSpec((4 * H, 1), lambda b: (0, 0))]
    flat_inputs += [fc_w.astype(matmul_dtype), fc_b.reshape(C, 1).astype(jnp.float32)]
    in_specs += [pl.BlockSpec((C, H), lambda b: (0, 0)),
                 pl.BlockSpec((C, 1), lambda b: (0, 0))]

    scratch_shapes = []
    if num_layers > 1:
        scratch_shapes.append(pltpu.VMEM((T, H, B_TILE), jnp.float32))   # inter-layer seq

    kern = functools.partial(text_lstm_kernel, num_layers=num_layers, T=T, H=H,
                             num_classes=num_classes)

    out_fm = pl.pallas_call(
        kern,
        out_shape=jax.ShapeDtypeStruct((C, B_pad), jnp.float32),
        grid_spec=pltpu.PrefetchScalarGridSpec(
            num_scalar_prefetch=0,
            grid=(B_pad // B_TILE,),
            in_specs=in_specs,
            out_specs=pl.BlockSpec((C, B_TILE), lambda b: (0, b)),
            scratch_shapes=scratch_shapes,
        ),
        compiler_params=pltpu.CompilerParams(dimension_semantics=("parallel",)),
    )(*flat_inputs)

    # back to batch-major, drop padding, mirror the PyTorch `.squeeze()`
    return jnp.squeeze(out_fm.T[:B])


def ref_text_lstm(token_ids, emb_table, layer_params, fc_w, fc_b, *, num_classes):
    """Pure-JAX reference reproducing PyTorch Embedding -> LSTM -> Linear -> activation."""
    T, B = token_ids.shape
    inp = jnp.take(emb_table, token_ids, axis=0)                          # (T, B, E)
    h_last = None
    for (w_ih, w_hh, b_ih, b_hh) in layer_params:
        H = w_hh.shape[1]
        h = jnp.zeros((B, H), jnp.float32)
        c = jnp.zeros((B, H), jnp.float32)
        outs = []
        for t in range(T):
            gates = inp[t] @ w_ih.T + b_ih + h @ w_hh.T + b_hh
            i, f, g, o = jnp.split(gates, 4, axis=-1)
            i = jax.nn.sigmoid(i)
            f = jax.nn.sigmoid(f)
            g = jnp.tanh(g)
            o = jax.nn.sigmoid(o)
            c = f * c + i * g
            h = o * jnp.tanh(c)
            outs.append(h)
        inp = jnp.stack(outs, axis=0)
        h_last = h
    logits = h_last @ fc_w.T + fc_b
    if num_classes == 1:
        return jnp.squeeze(jax.nn.sigmoid(logits))
    return jnp.squeeze(jax.nn.log_softmax(logits, axis=1))


if __name__ == "__main__":
    # Small shapes consistent with the module: 4H = 128 keeps gates lane/sublane aligned.
    vocab_size, embedding_dim, hidden_dim = 50, 32, 32
    num_layers, num_classes = 2, 4
    T, B = 12, 2

    key = jax.random.PRNGKey(0)
    keys = jax.random.split(key, 12)

    emb = 0.1 * jax.random.normal(keys[0], (vocab_size, embedding_dim), jnp.float32)
    emb = emb.at[1].set(0.0)     # nn.Embedding(padding_idx=1): padding row is zero

    layer_params = []
    kidx = 1
    for l in range(num_layers):
        ein = embedding_dim if l == 0 else hidden_dim
        w_ih = 0.1 * jax.random.normal(keys[kidx + 0], (4 * hidden_dim, ein), jnp.float32)
        w_hh = 0.1 * jax.random.normal(keys[kidx + 1], (4 * hidden_dim, hidden_dim), jnp.float32)
        b_ih = 0.1 * jax.random.normal(keys[kidx + 2], (4 * hidden_dim,), jnp.float32)
        b_hh = 0.1 * jax.random.normal(keys[kidx + 3], (4 * hidden_dim,), jnp.float32)
        layer_params.append((w_ih, w_hh, b_ih, b_hh))
        kidx += 4

    fc_w = 0.1 * jax.random.normal(keys[kidx], (num_classes, hidden_dim), jnp.float32)
    fc_b = 0.1 * jax.random.normal(keys[kidx + 1], (num_classes,), jnp.float32)
    token_ids = jax.random.randint(keys[kidx + 2], (T, B), 0, vocab_size, dtype=jnp.int32)

    y = text_lstm_forward(token_ids, emb, layer_params, fc_w, fc_b,
                          num_classes=num_classes)
    y = jax.block_until_ready(y)

    y_ref = ref_text_lstm(token_ids, emb, layer_params, fc_w, fc_b,
                          num_classes=num_classes)
    assert y.shape == y_ref.shape, (y.shape, y_ref.shape)
    assert jnp.allclose(y, y_ref, atol=1e-4, rtol=1e-4), "mismatch vs reference"
    print("KERNEL_OK")
</pallas_src>

<mosaic_0001>
module attributes {stable_mosaic.version = 11 : i64} {
  func.func @text_lstm_kernel(%arg0: i32, %arg1: memref<12x128x128xf32, #tpu.memory_space<vmem>>, %arg2: memref<128x32xf32, #tpu.memory_space<vmem>>, %arg3: memref<128x32xf32, #tpu.memory_space<vmem>>, %arg4: memref<128x32xf32, #tpu.memory_space<vmem>>, %arg5: memref<128x1xf32, #tpu.memory_space<vmem>>, %arg6: memref<4x32xf32, #tpu.memory_space<vmem>>, %arg7: memref<4x1xf32, #tpu.memory_space<vmem>>, %arg8: memref<4x128xf32, #tpu.memory_space<vmem>>, %arg9: memref<12x32x128xf32, #tpu.memory_space<vmem>>) attributes {dimension_semantics = [#tpu.dimension_semantics<parallel>], iteration_bounds = array<i64: 1>, scalar_prefetch = 0 : i64, scratch_operands = 1 : i64, tpu.core_type = #tpu.core_type<tc>, window_params = [{transform_indices = @transform_0, window_bounds = array<i64: 12, 128, 128>}, {pipeline_mode = #tpu.pipeline_mode<synchronous>, transform_indices = @transform_1, window_bounds = array<i64: 128, 32>}, {pipeline_mode = #tpu.pipeline_mode<synchronous>, transform_indices = @transform_2, window_bounds = array<i64: 128, 32>}, {pipeline_mode = #tpu.pipeline_mode<synchronous>, transform_indices = @transform_3, window_bounds = array<i64: 128, 32>}, {pipeline_mode = #tpu.pipeline_mode<synchronous>, transform_indices = @transform_4, window_bounds = array<i64: 128, 1>}, {pipeline_mode = #tpu.pipeline_mode<synchronous>, transform_indices = @transform_5, window_bounds = array<i64: 4, 32>}, {pipeline_mode = #tpu.pipeline_mode<synchronous>, transform_indices = @transform_6, window_bounds = array<i64: 4, 1>}, {transform_indices = @transform_7, window_bounds = array<i64: 4, 128>}]} {
    %c0 = arith.constant 0 : index
    %c0_0 = arith.constant 0 : index
    %0 = vector.load %arg2[%c0, %c0_0] : memref<128x32xf32, #tpu.memory_space<vmem>>, vector<128x32xf32>
    %cst = arith.constant 0.000000e+00 : f32
    %1 = vector.broadcast %cst : f32 to vector<32x128xf32>
    %cst_1 = arith.constant 0.000000e+00 : f32
    %2 = vector.broadcast %cst_1 : f32 to vector<32x128xf32>
    %c0_i32 = arith.constant 0 : i32
    %3 = arith.index_cast %c0_i32 : i32 to index
    %c0_2 = arith.constant 0 : index
    %c0_3 = arith.constant 0 : index
    %4 = vector.load %arg1[%3, %c0_2, %c0_3] : memref<12x128x128xf32, #tpu.memory_space<vmem>>, vector<1x128x128xf32>
    %5 = vector.shape_cast %4 : vector<1x128x128xf32> to vector<128x128xf32>
    %cst_4 = arith.constant dense<0.000000e+00> : vector<128x128xf32>
    %6 = tpu.matmul %0, %1, %cst_4 {dimension_numbers = #tpu.dot_dimension_numbers<[1], [0], [0], [1], [0, 0, 1, 1], [], []>} : vector<128x32xf32>, vector<32x128xf32>, vector<128x128xf32> -> vector<128x128xf32>
    %7 = arith.addf %5, %6 : vector<128x128xf32>
    %8 = vector.extract_strided_slice %7 {offsets = [0, 0], sizes = [32, 128], strides = [1, 1]} : vector<128x128xf32> to vector<32x128xf32>
    %cst_5 = arith.constant 5.000000e-01 : f32
    %9 = vector.broadcast %cst_5 : f32 to vector<32x128xf32>
    %10 = arith.mulf %9, %8 : vector<32x128xf32>
    %11 = math.tanh %10 : vector<32x128xf32>
    %cst_6 = arith.constant 1.000000e+00 : f32
    %12 = vector.broadcast %cst_6 : f32 to vector<32x128xf32>
    %13 = arith.addf %11, %12 : vector<32x128xf32>
    %cst_7 = arith.constant 5.000000e-01 : f32
    %14 = vector.broadcast %cst_7 : f32 to vector<32x128xf32>
    %15 = arith.mulf %14, %13 : vector<32x128xf32>
    %16 = vector.extract_strided_slice %7 {offsets = [32, 0], sizes = [32, 128], strides = [1, 1]} : vector<128x128xf32> to vector<32x128xf32>
    %cst_8 = arith.constant 5.000000e-01 : f32
    %17 = vector.broadcast %cst_8 : f32 to vector<32x128xf32>
    %18 = arith.mulf %17, %16 : vector<32x128xf32>
    %19 = math.tanh %18 : vector<32x128xf32>
    %cst_9 = arith.constant 1.000000e+00 : f32
    %20 = vector.broadcast %cst_9 : f32 to vector<32x128xf32>
    %21 = arith.addf %19, %20 : vector<32x128xf32>
    %cst_10 = arith.constant 5.000000e-01 : f32
    %22 = vector.broadcast %cst_10 : f32 to vector<32x128xf32>
    %23 = arith.mulf %22, %21 : vector<32x128xf32>
    %24 = vector.extract_strided_slice %7 {offsets = [64, 0], sizes = [32, 128], strides = [1, 1]} : vector<128x128xf32> to vector<32x128xf32>
    %25 = math.tanh %24 : vector<32x128xf32>
    %26 = vector.extract_strided_slice %7 {offsets = [96, 0], sizes = [32, 128], strides = [1, 1]} : vector<128x128xf32> to vector<32x128xf32>
    %cst_11 = arith.constant 5.000000e-01 : f32
    %27 = vector.broadcast %cst_11 : f32 to vector<32x128xf32>
    %28 = arith.mulf %27, %26 : vector<32x128xf32>
    %29 = math.tanh %28 : vector<32x128xf32>
    %cst_12 = arith.constant 1.000000e+00 : f32
    %30 = vector.broadcast %cst_12 : f32 to vector<32x128xf32>
    %31 = arith.addf %29, %30 : vector<32x128xf32>
    %cst_13 = arith.constant 5.000000e-01 : f32
    %32 = vector.broadcast %cst_13 : f32 to vector<32x128xf32>
    %33 = arith.mulf %32, %31 : vector<32x128xf32>
    %34 = arith.mulf %23, %2 : vector<32x128xf32>
    %35 = arith.mulf %15, %25 : vector<32x128xf32>
    %36 = arith.addf %34, %35 : vector<32x128xf32>
    %37 = math.tanh %36 : vector<32x128xf32>
    %38 = arith.mulf %33, %37 : vector<32x128xf32>
    %39 = arith.index_cast %c0_i32 : i32 to index
    %c0_14 = arith.constant 0 : index
    %c0_15 = arith.constant 0 : index
    %40 = vector.load %arg9[%39, %c0_14, %c0_15] : memref<12x32x128xf32, #tpu.memory_space<vmem>>, vector<1x32x128xf32>
    %41 = vector.shape_cast %40 : vector<1x32x128xf32> to vector<32x128xf32>
    %42 = vector.shape_cast %38 : vector<32x128xf32> to vector<1x32x128xf32>
    tpu.vector_store %arg9[%39, %c0_14, %c0_15], %42 {strides = array<i32>} : memref<12x32x128xf32, #tpu.memory_space<vmem>>, vector<1x32x128xf32>,
    %c1_i32 = arith.constant 1 : i32
    %43 = arith.index_cast %c1_i32 : i32 to index
    %c0_16 = arith.constant 0 : index
    %c0_17 = arith.constant 0 : index
    %44 = vector.load %arg1[%43, %c0_16, %c0_17] : memref<12x128x128xf32, #tpu.memory_space<vmem>>, vector<1x128x128xf32>
    %45 = vector.shape_cast %44 : vector<1x128x128xf32> to vector<128x128xf32>
    %cst_18 = arith.constant dense<0.000000e+00> : vector<128x128xf32>
    %46 = tpu.matmul %0, %38, %cst_18 {dimension_numbers = #tpu.dot_dimension_numbers<[1], [0], [0], [1], [0, 0, 1, 1], [], []>} : vector<128x32xf32>, vector<32x128xf32>, vector<128x128xf32> -> vector<128x128xf32>
    %47 = arith.addf %45, %46 : vector<128x128xf32>
    %48 = vector.extract_strided_slice %47 {offsets = [0, 0], sizes = [32, 128], strides = [1, 1]} : vector<128x128xf32> to vector<32x128xf32>
    %cst_19 = arith.constant 5.000000e-01 : f32
    %49 = vector.broadcast %cst_19 : f32 to vector<32x128xf32>
    %50 = arith.mulf %49, %48 : vector<32x128xf32>
    %51 = math.tanh %50 : vector<32x128xf32>
    %cst_20 = arith.constant 1.000000e+00 : f32
    %52 = vector.broadcast %cst_20 : f32 to vector<32x128xf32>
    %53 = arith.addf %51, %52 : vector<32x128xf32>
    %cst_21 = arith.constant 5.000000e-01 : f32
    %54 = vector.broadcast %cst_21 : f32 to vector<32x128xf32>
    %55 = arith.mulf %54, %53 : vector<32x128xf32>
    %56 = vector.extract_strided_slice %47 {offsets = [32, 0], sizes = [32, 128], strides = [1, 1]} : vector<128x128xf32> to vector<32x128xf32>
    %cst_22 = arith.constant 5.000000e-01 : f32
    %57 = vector.broadcast %cst_22 : f32 to vector<32x128xf32>
    %58 = arith.mulf %57, %56 : vector<32x128xf32>
    %59 = math.tanh %58 : vector<32x128xf32>
    %cst_23 = arith.constant 1.000000e+00 : f32
    %60 = vector.broadcast %cst_23 : f32 to vector<32x128xf32>
    %61 = arith.addf %59, %60 : vector<32x128xf32>
    %cst_24 = arith.constant 5.000000e-01 : f32
    %62 = vector.broadcast %cst_24 : f32 to vector<32x128xf32>
    %63 = arith.mulf %62, %61 : vector<32x128xf32>
    %64 = vector.extract_strided_slice %47 {offsets = [64, 0], sizes = [32, 128], strides = [1, 1]} : vector<128x128xf32> to vector<32x128xf32>
    %65 = math.tanh %64 : vector<32x128xf32>
    %66 = vector.extract_strided_slice %47 {offsets = [96, 0], sizes = [32, 128], strides = [1, 1]} : vector<128x128xf32> to vector<32x128xf32>
    %cst_25 = arith.constant 5.000000e-01 : f32
    %67 = vector.broadcast %cst_25 : f32 to vector<32x128xf32>
    %68 = arith.mulf %67, %66 : vector<32x128xf32>
    %69 = math.tanh %68 : vector<32x128xf32>
    %cst_26 = arith.constant 1.000000e+00 : f32
    %70 = vector.broadcast %cst_26 : f32 to vector<32x128xf32>
    %71 = arith.addf %69, %70 : vector<32x128xf32>
    %cst_27 = arith.constant 5.000000e-01 : f32
    %72 = vector.broadcast %cst_27 : f32 to vector<32x128xf32>
    %73 = arith.mulf %72, %71 : vector<32x128xf32>
    %74 = arith.mulf %63, %36 : vector<32x128xf32>
    %75 = arith.mulf %55, %65 : vector<32x128xf32>
    %76 = arith.addf %74, %75 : vector<32x128xf32>
    %77 = math.tanh %76 : vector<32x128xf32>
    %78 = arith.mulf %73, %77 : vector<32x128xf32>
    %79 = arith.index_cast %c1_i32 : i32 to index
    %c0_28 = arith.constant 0 : index
    %c0_29 = arith.constant 0 : index
    %80 = vector.load %arg9[%79, %c0_28, %c0_29] : memref<12x32x128xf32, #tpu.memory_space<vmem>>, vector<1x32x128xf32>
    %81 = vector.shape_cast %80 : vector<1x32x128xf32> to vector<32x128xf32>
    %82 = vector.shape_cast %78 : vector<32x128xf32> to vector<1x32x128xf32>
    tpu.vector_store %arg9[%79, %c0_28, %c0_29], %82 {strides = array<i32>} : memref<12x32x128xf32, #tpu.memory_space<vmem>>, vector<1x32x128xf32>,
    %c2_i32 = arith.constant 2 : i32
    %83 = arith.index_cast %c2_i32 : i32 to index
    %c0_30 = arith.constant 0 : index
    %c0_31 = arith.constant 0 : index
    %84 = vector.load %arg1[%83, %c0_30, %c0_31] : memref<12x128x128xf32, #tpu.memory_space<vmem>>, vector<1x128x128xf32>
    %85 = vector.shape_cast %84 : vector<1x128x128xf32> to vector<128x128xf32>
    %cst_32 = arith.constant dense<0.000000e+00> : vector<128x128xf32>
    %86 = tpu.matmul %0, %78, %cst_32 {dimension_numbers = #tpu.dot_dimension_numbers<[1], [0], [0], [1], [0, 0, 1, 1], [], []>} : vector<128x32xf32>, vector<32x128xf32>, vector<128x128xf32> -> vector<128x128xf32>
    %87 = arith.addf %85, %86 : vector<128x128xf32>
    %88 = vector.extract_strided_slice %87 {offsets = [0, 0], sizes = [32, 128], strides = [1, 1]} : vector<128x128xf32> to vector<32x128xf32>
    %cst_33 = arith.constant 5.000000e-01 : f32
    %89 = vector.broadcast %cst_33 : f32 to vector<32x128xf32>
    %90 = arith.mulf %89, %88 : vector<32x128xf32>
    %91 = math.tanh %90 : vector<32x128xf32>
    %cst_34 = arith.constant 1.000000e+00 : f32
    %92 = vector.broadcast %cst_34 : f32 to vector<32x128xf32>
    %93 = arith.addf %91, %92 : vector<32x128xf32>
    %cst_35 = arith.constant 5.000000e-01 : f32
    %94 = vector.broadcast %cst_35 : f32 to vector<32x128xf32>
    %95 = arith.mulf %94, %93 : vector<32x128xf32>
    %96 = vector.extract_strided_slice %87 {offsets = [32, 0], sizes = [32, 128], strides = [1, 1]} : vector<128x128xf32> to vector<32x128xf32>
    %cst_36 = arith.constant 5.000000e-01 : f32
    %97 = vector.broadcast %cst_36 : f32 to vector<32x128xf32>
    %98 = arith.mulf %97, %96 : vector<32x128xf32>
    %99 = math.tanh %98 : vector<32x128xf32>
    %cst_37 = arith.constant 1.000000e+00 : f32
    %100 = vector.broadcast %cst_37 : f32 to vector<32x128xf32>
    %101 = arith.addf %99, %100 : vector<32x128xf32>
    %cst_38 = arith.constant 5.000000e-01 : f32
    %102 = vector.broadcast %cst_38 : f32 to vector<32x128xf32>
    %103 = arith.mulf %102, %101 : vector<32x128xf32>
    %104 = vector.extract_strided_slice %87 {offsets = [64, 0], sizes = [32, 128], strides = [1, 1]} : vector<128x128xf32> to vector<32x128xf32>
    %105 = math.tanh %104 : vector<32x128xf32>
    %106 = vector.extract_strided_slice %87 {offsets = [96, 0], sizes = [32, 128], strides = [1, 1]} : vector<128x128xf32> to vector<32x128xf32>
    %cst_39 = arith.constant 5.000000e-01 : f32
    %107 = vector.broadcast %cst_39 : f32 to vector<32x128xf32>
    %108 = arith.mulf %107, %106 : vector<32x128xf32>
    %109 = math.tanh %108 : vector<32x128xf32>
    %cst_40 = arith.constant 1.000000e+00 : f32
    %110 = vector.broadcast %cst_40 : f32 to vector<32x128xf32>
    %111 = arith.addf %109, %110 : vector<32x128xf32>
    %cst_41 = arith.constant 5.000000e-01 : f32
    %112 = vector.broadcast %cst_41 : f32 to vector<32x128xf32>
    %113 = arith.mulf %112, %111 : vector<32x128xf32>
    %114 = arith.mulf %103, %76 : vector<32x128xf32>
    %115 = arith.mulf %95, %105 : vector<32x128xf32>
    %116 = arith.addf %114, %115 : vector<32x128xf32>
    %117 = math.tanh %116 : vector<32x128xf32>
    %118 = arith.mulf %113, %117 : vector<32x128xf32>
    %119 = arith.index_cast %c2_i32 : i32 to index
    %c0_42 = arith.constant 0 : index
    %c0_43 = arith.constant 0 : index
    %120 = vector.load %arg9[%119, %c0_42, %c0_43] : memref<12x32x128xf32, #tpu.memory_space<vmem>>, vector<1x32x128xf32>
    %121 = vector.shape_cast %120 : vector<1x32x128xf32> to vector<32x128xf32>
    %122 = vector.shape_cast %118 : vector<32x128xf32> to vector<1x32x128xf32>
    tpu.vector_store %arg9[%119, %c0_42, %c0_43], %122 {strides = array<i32>} : memref<12x32x128xf32, #tpu.memory_space<vmem>>, vector<1x32x128xf32>,
    %c3_i32 = arith.constant 3 : i32
    %123 = arith.index_cast %c3_i32 : i32 to index
    %c0_44 = arith.constant 0 : index
    %c0_45 = arith.constant 0 : index
    %124 = vector.load %arg1[%123, %c0_44, %c0_45] : memref<12x128x128xf32, #tpu.memory_space<vmem>>, vector<1x128x128xf32>
    %125 = vector.shape_cast %124 : vector<1x128x128xf32> to vector<128x128xf32>
    %cst_46 = arith.constant dense<0.000000e+00> : vector<128x128xf32>
    %126 = tpu.matmul %0, %118, %cst_46 {dimension_numbers = #tpu.dot_dimension_numbers<[1], [0], [0], [1], [0, 0, 1, 1], [], []>} : vector<128x32xf32>, vector<32x128xf32>, vector<128x128xf32> -> vector<128x128xf32>
    %127 = arith.addf %125, %126 : vector<128x128xf32>
    %128 = vector.extract_strided_slice %127 {offsets = [0, 0], sizes = [32, 128], strides = [1, 1]} : vector<128x128xf32> to vector<32x128xf32>
    %cst_47 = arith.constant 5.000000e-01 : f32
    %129 = vector.broadcast %cst_47 : f32 to vector<32x128xf32>
    %130 = arith.mulf %129, %128 : vector<32x128xf32>
    %131 = math.tanh %130 : vector<32x128xf32>
    %cst_48 = arith.constant 1.000000e+00 : f32
    %132 = vector.broadcast %cst_48 : f32 to vector<32x128xf32>
    %133 = arith.addf %131, %132 : vector<32x128xf32>
    %cst_49 = arith.constant 5.000000e-01 : f32
    %134 = vector.broadcast %cst_49 : f32 to vector<32x128xf32>
    %135 = arith.mulf %134, %133 : vector<32x128xf32>
    %136 = vector.extract_strided_slice %127 {offsets = [32, 0], sizes = [32, 128], strides = [1, 1]} : vector<128x128xf32> to vector<32x128xf32>
    %cst_50 = arith.constant 5.000000e-01 : f32
    %137 = vector.broadcast %cst_50 : f32 to vector<32x128xf32>
    %138 = arith.mulf %137, %136 : vector<32x128xf32>
    %139 = math.tanh %138 : vector<32x128xf32>
    %cst_51 = arith.constant 1.000000e+00 : f32
    %140 = vector.broadcast %cst_51 : f32 to vector<32x128xf32>
    %141 = arith.addf %139, %140 : vector<32x128xf32>
    %cst_52 = arith.constant 5.000000e-01 : f32
    %142 = vector.broadcast %cst_52 : f32 to vector<32x128xf32>
    %143 = arith.mulf %142, %141 : vector<32x128xf32>
    %144 = vector.extract_strided_slice %127 {offsets = [64, 0], sizes = [32, 128], strides = [1, 1]} : vector<128x128xf32> to vector<32x128xf32>
    %145 = math.tanh %144 : vector<32x128xf32>
    %146 = vector.extract_strided_slice %127 {offsets = [96, 0], sizes = [32, 128], strides = [1, 1]} : vector<128x128xf32> to vector<32x128xf32>
    %cst_53 = arith.constant 5.000000e-01 : f32
    %147 = vector.broadcast %cst_53 : f32 to vector<32x128xf32>
    %148 = arith.mulf %147, %146 : vector<32x128xf32>
    %149 = math.tanh %148 : vector<32x128xf32>
    %cst_54 = arith.constant 1.000000e+00 : f32
    %150 = vector.broadcast %cst_54 : f32 to vector<32x128xf32>
    %151 = arith.addf %149, %150 : vector<32x128xf32>
    %cst_55 = arith.constant 5.000000e-01 : f32
    %152 = vector.broadcast %cst_55 : f32 to vector<32x128xf32>
    %153 = arith.mulf %152, %151 : vector<32x128xf32>
    %154 = arith.mulf %143, %116 : vector<32x128xf32>
    %155 = arith.mulf %135, %145 : vector<32x128xf32>
    %156 = arith.addf %154, %155 : vector<32x128xf32>
    %157 = math.tanh %156 : vector<32x128xf32>
    %158 = arith.mulf %153, %157 : vector<32x128xf32>
    %159 = arith.index_cast %c3_i32 : i32 to index
    %c0_56 = arith.constant 0 : index
    %c0_57 = arith.constant 0 : index
    %160 = vector.load %arg9[%159, %c0_56, %c0_57] : memref<12x32x128xf32, #tpu.memory_space<vmem>>, vector<1x32x128xf32>
    %161 = vector.shape_cast %160 : vector<1x32x128xf32> to vector<32x128xf32>
    %162 = vector.shape_cast %158 : vector<32x128xf32> to vector<1x32x128xf32>
    tpu.vector_store %arg9[%159, %c0_56, %c0_57], %162 {strides = array<i32>} : memref<12x32x128xf32, #tpu.memory_space<vmem>>, vector<1x32x128xf32>,
    %c4_i32 = arith.constant 4 : i32
    %163 = arith.index_cast %c4_i32 : i32 to index
    %c0_58 = arith.constant 0 : index
    %c0_59 = arith.constant 0 : index
    %164 = vector.load %arg1[%163, %c0_58, %c0_59] : memref<12x128x128xf32, #tpu.memory_space<vmem>>, vector<1x128x128xf32>
    %165 = vector.shape_cast %164 : vector<1x128x128xf32> to vector<128x128xf32>
    %cst_60 = arith.constant dense<0.000000e+00> : vector<128x128xf32>
    %166 = tpu.matmul %0, %158, %cst_60 {dimension_numbers = #tpu.dot_dimension_numbers<[1], [0], [0], [1], [0, 0, 1, 1], [], []>} : vector<128x32xf32>, vector<32x128xf32>, vector<128x128xf32> -> vector<128x128xf32>
    %167 = arith.addf %165, %166 : vector<128x128xf32>
    %168 = vector.extract_strided_slice %167 {offsets = [0, 0], sizes = [32, 128], strides = [1, 1]} : vector<128x128xf32> to vector<32x128xf32>
    %cst_61 = arith.constant 5.000000e-01 : f32
    %169 = vector.broadcast %cst_61 : f32 to vector<32x128xf32>
    %170 = arith.mulf %169, %168 : vector<32x128xf32>
    %171 = math.tanh %170 : vector<32x128xf32>
    %cst_62 = arith.constant 1.000000e+00 : f32
    %172 = vector.broadcast %cst_62 : f32 to vector<32x128xf32>
    %173 = arith.addf %171, %172 : vector<32x128xf32>
    %cst_63 = arith.constant 5.000000e-01 : f32
    %174 = vector.broadcast %cst_63 : f32 to vector<32x128xf32>
    %175 = arith.mulf %174, %173 : vector<32x128xf32>
    %176 = vector.extract_strided_slice %167 {offsets = [32, 0], sizes = [32, 128], strides = [1, 1]} : vector<128x128xf32> to vector<32x128xf32>
    %cst_64 = arith.constant 5.000000e-01 : f32
    %177 = vector.broadcast %cst_64 : f32 to vector<32x128xf32>
    %178 = arith.mulf %177, %176 : vector<32x128xf32>
    %179 = math.tanh %178 : vector<32x128xf32>
    %cst_65 = arith.constant 1.000000e+00 : f32
    %180 = vector.broadcast %cst_65 : f32 to vector<32x128xf32>
    %181 = arith.addf %179, %180 : vector<32x128xf32>
    %cst_66 = arith.constant 5.000000e-01 : f32
    %182 = vector.broadcast %cst_66 : f32 to vector<32x128xf32>
    %183 = arith.mulf %182, %181 : vector<32x128xf32>
    %184 = vector.extract_strided_slice %167 {offsets = [64, 0], sizes = [32, 128], strides = [1, 1]} : vector<128x128xf32> to vector<32x128xf32>
    %185 = math.tanh %184 : vector<32x128xf32>
    %186 = vector.extract_strided_slice %167 {offsets = [96, 0], sizes = [32, 128], strides = [1, 1]} : vector<128x128xf32> to vector<32x128xf32>
    %cst_67 = arith.constant 5.000000e-01 : f32
    %187 = vector.broadcast %cst_67 : f32 to vector<32x128xf32>
    %188 = arith.mulf %187, %186 : vector<32x128xf32>
    %189 = math.tanh %188 : vector<32x128xf32>
    %cst_68 = arith.constant 1.000000e+00 : f32
    %190 = vector.broadcast %cst_68 : f32 to vector<32x128xf32>
    %191 = arith.addf %189, %190 : vector<32x128xf32>
    %cst_69 = arith.constant 5.000000e-01 : f32
    %192 = vector.broadcast %cst_69 : f32 to vector<32x128xf32>
    %193 = arith.mulf %192, %191 : vector<32x128xf32>
    %194 = arith.mulf %183, %156 : vector<32x128xf32>
    %195 = arith.mulf %175, %185 : vector<32x128xf32>
    %196 = arith.addf %194, %195 : vector<32x128xf32>
    %197 = math.tanh %196 : vector<32x128xf32>
    %198 = arith.mulf %193, %197 : vector<32x128xf32>
    %199 = arith.index_cast %c4_i32 : i32 to index
    %c0_70 = arith.constant 0 : index
    %c0_71 = arith.constant 0 : index
    %200 = vector.load %arg9[%199, %c0_70, %c0_71] : memref<12x32x128xf32, #tpu.memory_space<vmem>>, vector<1x32x128xf32>
    %201 = vector.shape_cast %200 : vector<1x32x128xf32> to vector<32x128xf32>
    %202 = vector.shape_cast %198 : vector<32x128xf32> to vector<1x32x128xf32>
    tpu.vector_store %arg9[%199, %c0_70, %c0_71], %202 {strides = array<i32>} : memref<12x32x128xf32, #tpu.memory_space<vmem>>, vector<1x32x128xf32>,
    %c5_i32 = arith.constant 5 : i32
    %203 = arith.index_cast %c5_i32 : i32 to index
    %c0_72 = arith.constant 0 : index
    %c0_73 = arith.constant 0 : index
    %204 = vector.load %arg1[%203, %c0_72, %c0_73] : memref<12x128x128xf32, #tpu.memory_space<vmem>>, vector<1x128x128xf32>
    %205 = vector.shape_cast %204 : vector<1x128x128xf32> to vector<128x128xf32>
    %cst_74 = arith.constant dense<0.000000e+00> : vector<128x128xf32>
    %206 = tpu.matmul %0, %198, %cst_74 {dimension_numbers = #tpu.dot_dimension_numbers<[1], [0], [0], [1], [0, 0, 1, 1], [], []>} : vector<128x32xf32>, vector<32x128xf32>, vector<128x128xf32> -> vector<128x128xf32>
    %207 = arith.addf %205, %206 : vector<128x128xf32>
    %208 = vector.extract_strided_slice %207 {offsets = [0, 0], sizes = [32, 128], strides = [1, 1]} : vector<128x128xf32> to vector<32x128xf32>
    %cst_75 = arith.constant 5.000000e-01 : f32
    %209 = vector.broadcast %cst_75 : f32 to vector<32x128xf32>
    %210 = arith.mulf %209, %208 : vector<32x128xf32>
    %211 = math.tanh %210 : vector<32x128xf32>
    %cst_76 = arith.constant 1.000000e+00 : f32
    %212 = vector.broadcast %cst_76 : f32 to vector<32x128xf32>
    %213 = arith.addf %211, %212 : vector<32x128xf32>
    %cst_77 = arith.constant 5.000000e-01 : f32
    %214 = vector.broadcast %cst_77 : f32 to vector<32x128xf32>
    %215 = arith.mulf %214, %213 : vector<32x128xf32>
    %216 = vector.extract_strided_slice %207 {offsets = [32, 0], sizes = [32, 128], strides = [1, 1]} : vector<128x128xf32> to vector<32x128xf32>
    %cst_78 = arith.constant 5.000000e-01 : f32
    %217 = vector.broadcast %cst_78 : f32 to vector<32x128xf32>
    %218 = arith.mulf %217, %216 : vector<32x128xf32>
    %219 = math.tanh %218 : vector<32x128xf32>
    %cst_79 = arith.constant 1.000000e+00 : f32
    %220 = vector.broadcast %cst_79 : f32 to vector<32x128xf32>
    %221 = arith.addf %219, %220 : vector<32x128xf32>
    %cst_80 = arith.constant 5.000000e-01 : f32
    %222 = vector.broadcast %cst_80 : f32 to vector<32x128xf32>
    %223 = arith.mulf %222, %221 : vector<32x128xf32>
    %224 = vector.extract_strided_slice %207 {offsets = [64, 0], sizes = [32, 128], strides = [1, 1]} : vector<128x128xf32> to vector<32x128xf32>
    %225 = math.tanh %224 : vector<32x128xf32>
    %226 = vector.extract_strided_slice %207 {offsets = [96, 0], sizes = [32, 128], strides = [1, 1]} : vector<128x128xf32> to vector<32x128xf32>
    %cst_81 = arith.constant 5.000000e-01 : f32
    %227 = vector.broadcast %cst_81 : f32 to vector<32x128xf32>
    %228 = arith.mulf %227, %226 : vector<32x128xf32>
    %229 = math.tanh %228 : vector<32x128xf32>
    %cst_82 = arith.constant 1.000000e+00 : f32
    %230 = vector.broadcast %cst_82 : f32 to vector<32x128xf32>
    %231 = arith.addf %229, %230 : vector<32x128xf32>
    %cst_83 = arith.constant 5.000000e-01 : f32
    %232 = vector.broadcast %cst_83 : f32 to vector<32x128xf32>
    %233 = arith.mulf %232, %231 : vector<32x128xf32>
    %234 = arith.mulf %223, %196 : vector<32x128xf32>
    %235 = arith.mulf %215, %225 : vector<32x128xf32>
    %236 = arith.addf %234, %235 : vector<32x128xf32>
    %237 = math.tanh %236 : vector<32x128xf32>
    %238 = arith.mulf %233, %237 : vector<32x128xf32>
    %239 = arith.index_cast %c5_i32 : i32 to index
    %c0_84 = arith.constant 0 : index
    %c0_85 = arith.constant 0 : index
    %240 = vector.load %arg9[%239, %c0_84, %c0_85] : memref<12x32x128xf32, #tpu.memory_space<vmem>>, vector<1x32x128xf32>
    %241 = vector.shape_cast %240 : vector<1x32x128xf32> to vector<32x128xf32>
    %242 = vector.shape_cast %238 : vector<32x128xf32> to vector<1x32x128xf32>
    tpu.vector_store %arg9[%239, %c0_84, %c0_85], %242 {strides = array<i32>} : memref<12x32x128xf32, #tpu.memory_space<vmem>>, vector<1x32x128xf32>,
    %c6_i32 = arith.constant 6 : i32
    %243 = arith.index_cast %c6_i32 : i32 to index
    %c0_86 = arith.constant 0 : index
    %c0_87 = arith.constant 0 : index
    %244 = vector.load %arg1[%243, %c0_86, %c0_87] : memref<12x128x128xf32, #tpu.memory_space<vmem>>, vector<1x128x128xf32>
    %245 = vector.shape_cast %244 : vector<1x128x128xf32> to vector<128x128xf32>
    %cst_88 = arith.constant dense<0.000000e+00> : vector<128x128xf32>
    %246 = tpu.matmul %0, %238, %cst_88 {dimension_numbers = #tpu.dot_dimension_numbers<[1], [0], [0], [1], [0, 0, 1, 1], [], []>} : vector<128x32xf32>, vector<32x128xf32>, vector<128x128xf32> -> vector<128x128xf32>
    %247 = arith.addf %245, %246 : vector<128x128xf32>
    %248 = vector.extract_strided_slice %247 {offsets = [0, 0], sizes = [32, 128], strides = [1, 1]} : vector<128x128xf32> to vector<32x128xf32>
    %cst_89 = arith.constant 5.000000e-01 : f32
    %249 = vector.broadcast %cst_89 : f32 to vector<32x128xf32>
    %250 = arith.mulf %249, %248 : vector<32x128xf32>
    %251 = math.tanh %250 : vector<32x128xf32>
    %cst_90 = arith.constant 1.000000e+00 : f32
    %252 = vector.broadcast %cst_90 : f32 to vector<32x128xf32>
    %253 = arith.addf %251, %252 : vector<32x128xf32>
    %cst_91 = arith.constant 5.000000e-01 : f32
    %254 = vector.broadcast %cst_91 : f32 to vector<32x128xf32>
    %255 = arith.mulf %254, %253 : vector<32x128xf32>
    %256 = vector.extract_strided_slice %247 {offsets = [32, 0], sizes = [32, 128], strides = [1, 1]} : vector<128x128xf32> to vector<32x128xf32>
    %cst_92 = arith.constant 5.000000e-01 : f32
    %257 = vector.broadcast %cst_92 : f32 to vector<32x128xf32>
    %258 = arith.mulf %257, %256 : vector<32x128xf32>
    %259 = math.tanh %258 : vector<32x128xf32>
    %cst_93 = arith.constant 1.000000e+00 : f32
    %260 = vector.broadcast %cst_93 : f32 to vector<32x128xf32>
    %261 = arith.addf %259, %260 : vector<32x128xf32>
    %cst_94 = arith.constant 5.000000e-01 : f32
    %262 = vector.broadcast %cst_94 : f32 to vector<32x128xf32>
    %263 = arith.mulf %262, %261 : vector<32x128xf32>
    %264 = vector.extract_strided_slice %247 {offsets = [64, 0], sizes = [32, 128], strides = [1, 1]} : vector<128x128xf32> to vector<32x128xf32>
    %265 = math.tanh %264 : vector<32x128xf32>
    %266 = vector.extract_strided_slice %247 {offsets = [96, 0], sizes = [32, 128], strides = [1, 1]} : vector<128x128xf32> to vector<32x128xf32>
    %cst_95 = arith.constant 5.000000e-01 : f32
    %267 = vector.broadcast %cst_95 : f32 to vector<32x128xf32>
    %268 = arith.mulf %267, %266 : vector<32x128xf32>
    %269 = math.tanh %268 : vector<32x128xf32>
    %cst_96 = arith.constant 1.000000e+00 : f32
    %270 = vector.broadcast %cst_96 : f32 to vector<32x128xf32>
    %271 = arith.addf %269, %270 : vector<32x128xf32>
    %cst_97 = arith.constant 5.000000e-01 : f32
    %272 = vector.broadcast %cst_97 : f32 to vector<32x128xf32>
    %273 = arith.mulf %272, %271 : vector<32x128xf32>
    %274 = arith.mulf %263, %236 : vector<32x128xf32>
    %275 = arith.mulf %255, %265 : vector<32x128xf32>
    %276 = arith.addf %274, %275 : vector<32x128xf32>
    %277 = math.tanh %276 : vector<32x128xf32>
    %278 = arith.mulf %273, %277 : vector<32x128xf32>
    %279 = arith.index_cast %c6_i32 : i32 to index
    %c0_98 = arith.constant 0 : index
    %c0_99 = arith.constant 0 : index
    %280 = vector.load %arg9[%279, %c0_98, %c0_99] : memref<12x32x128xf32, #tpu.memory_space<vmem>>, vector<1x32x128xf32>
    %281 = vector.shape_cast %280 : vector<1x32x128xf32> to vector<32x128xf32>
    %282 = vector.shape_cast %278 : vector<32x128xf32> to vector<1x32x128xf32>
    tpu.vector_store %arg9[%279, %c0_98, %c0_99], %282 {strides = array<i32>} : memref<12x32x128xf32, #tpu.memory_space<vmem>>, vector<1x32x128xf32>,
    %c7_i32 = arith.constant 7 : i32
    %283 = arith.index_cast %c7_i32 : i32 to index
    %c0_100 = arith.constant 0 : index
    %c0_101 = arith.constant 0 : index
    %284 = vector.load %arg1[%283, %c0_100, %c0_101] : memref<12x128x128xf32, #tpu.memory_space<vmem>>, vector<1x128x128xf32>
    %285 = vector.shape_cast %284 : vector<1x128x128xf32> to vector<128x128xf32>
    %cst_102 = arith.constant dense<0.000000e+00> : vector<128x128xf32>
    %286 = tpu.matmul %0, %278, %cst_102 {dimension_numbers = #tpu.dot_dimension_numbers<[1], [0], [0], [1], [0, 0, 1, 1], [], []>} : vector<128x32xf32>, vector<32x128xf32>, vector<128x128xf32> -> vector<128x128xf32>
    %287 = arith.addf %285, %286 : vector<128x128xf32>
    %288 = vector.extract_strided_slice %287 {offsets = [0, 0], sizes = [32, 128], strides = [1, 1]} : vector<128x128xf32> to vector<32x128xf32>
    %cst_103 = arith.constant 5.000000e-01 : f32
    %289 = vector.broadcast %cst_103 : f32 to vector<32x128xf32>
    %290 = arith.mulf %289, %288 : vector<32x128xf32>
    %291 = math.tanh %290 : vector<32x128xf32>
    %cst_104 = arith.constant 1.000000e+00 : f32
    %292 = vector.broadcast %cst_104 : f32 to vector<32x128xf32>
    %293 = arith.addf %291, %292 : vector<32x128xf32>
    %cst_105 = arith.constant 5.000000e-01 : f32
    %294 = vector.broadcast %cst_105 : f32 to vector<32x128xf32>
    %295 = arith.mulf %294, %293 : vector<32x128xf32>
    %296 = vector.extract_strided_slice %287 {offsets = [32, 0], sizes = [32, 128], strides = [1, 1]} : vector<128x128xf32> to vector<32x128xf32>
    %cst_106 = arith.constant 5.000000e-01 : f32
    %297 = vector.broadcast %cst_106 : f32 to vector<32x128xf32>
    %298 = arith.mulf %297, %296 : vector<32x128xf32>
    %299 = math.tanh %298 : vector<32x128xf32>
    %cst_107 = arith.constant 1.000000e+00 : f32
    %300 = vector.broadcast %cst_107 : f32 to vector<32x128xf32>
    %301 = arith.addf %299, %300 : vector<32x128xf32>
    %cst_108 = arith.constant 5.000000e-01 : f32
    %302 = vector.broadcast %cst_108 : f32 to vector<32x128xf32>
    %303 = arith.mulf %302, %301 : vector<32x128xf32>
    %304 = vector.extract_strided_slice %287 {offsets = [64, 0], sizes = [32, 128], strides = [1, 1]} : vector<128x128xf32> to vector<32x128xf32>
    %305 = math.tanh %304 : vector<32x128xf32>
    %306 = vector.extract_strided_slice %287 {offsets = [96, 0], sizes = [32, 128], strides = [1, 1]} : vector<128x128xf32> to vector<32x128xf32>
    %cst_109 = arith.constant 5.000000e-01 : f32
    %307 = vector.broadcast %cst_109 : f32 to vector<32x128xf32>
    %308 = arith.mulf %307, %306 : vector<32x128xf32>
    %309 = math.tanh %308 : vector<32x128xf32>
    %cst_110 = arith.constant 1.000000e+00 : f32
    %310 = vector.broadcast %cst_110 : f32 to vector<32x128xf32>
    %311 = arith.addf %309, %310 : vector<32x128xf32>
    %cst_111 = arith.constant 5.000000e-01 : f32
    %312 = vector.broadcast %cst_111 : f32 to vector<32x128xf32>
    %313 = arith.mulf %312, %311 : vector<32x128xf32>
    %314 = arith.mulf %303, %276 : vector<32x128xf32>
    %315 = arith.mulf %295, %305 : vector<32x128xf32>
    %316 = arith.addf %314, %315 : vector<32x128xf32>
    %317 = math.tanh %316 : vector<32x128xf32>
    %318 = arith.mulf %313, %317 : vector<32x128xf32>
    %319 = arith.index_cast %c7_i32 : i32 to index
    %c0_112 = arith.constant 0 : index
    %c0_113 = arith.constant 0 : index
    %320 = vector.load %arg9[%319, %c0_112, %c0_113] : memref<12x32x128xf32, #tpu.memory_space<vmem>>, vector<1x32x128xf32>
    %321 = vector.shape_cast %320 : vector<1x32x128xf32> to vector<32x128xf32>
    %322 = vector.shape_cast %318 : vector<32x128xf32> to vector<1x32x128xf32>
    tpu.vector_store %arg9[%319, %c0_112, %c0_113], %322 {strides = array<i32>} : memref<12x32x128xf32, #tpu.memory_space<vmem>>, vector<1x32x128xf32>,
    %c8_i32 = arith.constant 8 : i32
    %323 = arith.index_cast %c8_i32 : i32 to index
    %c0_114 = arith.constant 0 : index
    %c0_115 = arith.constant 0 : index
    %324 = vector.load %arg1[%323, %c0_114, %c0_115] : memref<12x128x128xf32, #tpu.memory_space<vmem>>, vector<1x128x128xf32>
    %325 = vector.shape_cast %324 : vector<1x128x128xf32> to vector<128x128xf32>
    %cst_116 = arith.constant dense<0.000000e+00> : vector<128x128xf32>
    %326 = tpu.matmul %0, %318, %cst_116 {dimension_numbers = #tpu.dot_dimension_numbers<[1], [0], [0], [1], [0, 0, 1, 1], [], []>} : vector<128x32xf32>, vector<32x128xf32>, vector<128x128xf32> -> vector<128x128xf32>
    %327 = arith.addf %325, %326 : vector<128x128xf32>
    %328 = vector.extract_strided_slice %327 {offsets = [0, 0], sizes = [32, 128], strides = [1, 1]} : vector<128x128xf32> to vector<32x128xf32>
    %cst_117 = arith.constant 5.000000e-01 : f32
    %329 = vector.broadcast %cst_117 : f32 to vector<32x128xf32>
    %330 = arith.mulf %329, %328 : vector<32x128xf32>
    %331 = math.tanh %330 : vector<32x128xf32>
    %cst_118 = arith.constant 1.000000e+00 : f32
    %332 = vector.broadcast %cst_118 : f32 to vector<32x128xf32>
    %333 = arith.addf %331, %332 : vector<32x128xf32>
    %cst_119 = arith.constant 5.000000e-01 : f32
    %334 = vector.broadcast %cst_119 : f32 to vector<32x128xf32>
    %335 = arith.mulf %334, %333 : vector<32x128xf32>
    %336 = vector.extract_strided_slice %327 {offsets = [32, 0], sizes = [32, 128], strides = [1, 1]} : vector<128x128xf32> to vector<32x128xf32>
    %cst_120 = arith.constant 5.000000e-01 : f32
    %337 = vector.broadcast %cst_120 : f32 to vector<32x128xf32>
    %338 = arith.mulf %337, %336 : vector<32x128xf32>
    %339 = math.tanh %338 : vector<32x128xf32>
    %cst_121 = arith.constant 1.000000e+00 : f32
    %340 = vector.broadcast %cst_121 : f32 to vector<32x128xf32>
    %341 = arith.addf %339, %340 : vector<32x128xf32>
    %cst_122 = arith.constant 5.000000e-01 : f32
    %342 = vector.broadcast %cst_122 : f32 to vector<32x128xf32>
    %343 = arith.mulf %342, %341 : vector<32x128xf32>
    %344 = vector.extract_strided_slice %327 {offsets = [64, 0], sizes = [32, 128], strides = [1, 1]} : vector<128x128xf32> to vector<32x128xf32>
    %345 = math.tanh %344 : vector<32x128xf32>
    %346 = vector.extract_strided_slice %327 {offsets = [96, 0], sizes = [32, 128], strides = [1, 1]} : vector<128x128xf32> to vector<32x128xf32>
    %cst_123 = arith.constant 5.000000e-01 : f32
    %347 = vector.broadcast %cst_123 : f32 to vector<32x128xf32>
    %348 = arith.mulf %347, %346 : vector<32x128xf32>
    %349 = math.tanh %348 : vector<32x128xf32>
    %cst_124 = arith.constant 1.000000e+00 : f32
    %350 = vector.broadcast %cst_124 : f32 to vector<32x128xf32>
    %351 = arith.addf %349, %350 : vector<32x128xf32>
    %cst_125 = arith.constant 5.000000e-01 : f32
    %352 = vector.broadcast %cst_125 : f32 to vector<32x128xf32>
    %353 = arith.mulf %352, %351 : vector<32x128xf32>
    %354 = arith.mulf %343, %316 : vector<32x128xf32>
    %355 = arith.mulf %335, %345 : vector<32x128xf32>
    %356 = arith.addf %354, %355 : vector<32x128xf32>
    %357 = math.tanh %356 : vector<32x128xf32>
    %358 = arith.mulf %353, %357 : vector<32x128xf32>
    %359 = arith.index_cast %c8_i32 : i32 to index
    %c0_126 = arith.constant 0 : index
    %c0_127 = arith.constant 0 : index
    %360 = vector.load %arg9[%359, %c0_126, %c0_127] : memref<12x32x128xf32, #tpu.memory_space<vmem>>, vector<1x32x128xf32>
    %361 = vector.shape_cast %360 : vector<1x32x128xf32> to vector<32x128xf32>
    %362 = vector.shape_cast %358 : vector<32x128xf32> to vector<1x32x128xf32>
    tpu.vector_store %arg9[%359, %c0_126, %c0_127], %362 {strides = array<i32>} : memref<12x32x128xf32, #tpu.memory_space<vmem>>, vector<1x32x128xf32>,
    %c9_i32 = arith.constant 9 : i32
    %363 = arith.index_cast %c9_i32 : i32 to index
    %c0_128 = arith.constant 0 : index
    %c0_129 = arith.constant 0 : index
    %364 = vector.load %arg1[%363, %c0_128, %c0_129] : memref<12x128x128xf32, #tpu.memory_space<vmem>>, vector<1x128x128xf32>
    %365 = vector.shape_cast %364 : vector<1x128x128xf32> to vector<128x128xf32>
    %cst_130 = arith.constant dense<0.000000e+00> : vector<128x128xf32>
    %366 = tpu.matmul %0, %358, %cst_130 {dimension_numbers = #tpu.dot_dimension_numbers<[1], [0], [0], [1], [0, 0, 1, 1], [], []>} : vector<128x32xf32>, vector<32x128xf32>, vector<128x128xf32> -> vector<128x128xf32>
    %367 = arith.addf %365, %366 : vector<128x128xf32>
    %368 = vector.extract_strided_slice %367 {offsets = [0, 0], sizes = [32, 128], strides = [1, 1]} : vector<128x128xf32> to vector<32x128xf32>
    %cst_131 = arith.constant 5.000000e-01 : f32
    %369 = vector.broadcast %cst_131 : f32 to vector<32x128xf32>
    %370 = arith.mulf %369, %368 : vector<32x128xf32>
    %371 = math.tanh %370 : vector<32x128xf32>
    %cst_132 = arith.constant 1.000000e+00 : f32
    %372 = vector.broadcast %cst_132 : f32 to vector<32x128xf32>
    %373 = arith.addf %371, %372 : vector<32x128xf32>
    %cst_133 = arith.constant 5.000000e-01 : f32
    %374 = vector.broadcast %cst_133 : f32 to vector<32x128xf32>
    %375 = arith.mulf %374, %373 : vector<32x128xf32>
    %376 = vector.extract_strided_slice %367 {offsets = [32, 0], sizes = [32, 128], strides = [1, 1]} : vector<128x128xf32> to vector<32x128xf32>
    %cst_134 = arith.constant 5.000000e-01 : f32
    %377 = vector.broadcast %cst_134 : f32 to vector<32x128xf32>
    %378 = arith.mulf %377, %376 : vector<32x128xf32>
    %379 = math.tanh %378 : vector<32x128xf32>
    %cst_135 = arith.constant 1.000000e+00 : f32
    %380 = vector.broadcast %cst_135 : f32 to vector<32x128xf32>
    %381 = arith.addf %379, %380 : vector<32x128xf32>
    %cst_136 = arith.constant 5.000000e-01 : f32
    %382 = vector.broadcast %cst_136 : f32 to vector<32x128xf32>
    %383 = arith.mulf %382, %381 : vector<32x128xf32>
    %384 = vector.extract_strided_slice %367 {offsets = [64, 0], sizes = [32, 128], strides = [1, 1]} : vector<128x128xf32> to vector<32x128xf32>
    %385 = math.tanh %384 : vector<32x128xf32>
    %386 = vector.extract_strided_slice %367 {offsets = [96, 0], sizes = [32, 128], strides = [1, 1]} : vector<128x128xf32> to vector<32x128xf32>
    %cst_137 = arith.constant 5.000000e-01 : f32
    %387 = vector.broadcast %cst_137 : f32 to vector<32x128xf32>
    %388 = arith.mulf %387, %386 : vector<32x128xf32>
    %389 = math.tanh %388 : vector<32x128xf32>
    %cst_138 = arith.constant 1.000000e+00 : f32
    %390 = vector.broadcast %cst_138 : f32 to vector<32x128xf32>
    %391 = arith.addf %389, %390 : vector<32x128xf32>
    %cst_139 = arith.constant 5.000000e-01 : f32
    %392 = vector.broadcast %cst_139 : f32 to vector<32x128xf32>
    %393 = arith.mulf %392, %391 : vector<32x128xf32>
    %394 = arith.mulf %383, %356 : vector<32x128xf32>
    %395 = arith.mulf %375, %385 : vector<32x128xf32>
    %396 = arith.addf %394, %395 : vector<32x128xf32>
    %397 = math.tanh %396 : vector<32x128xf32>
    %398 = arith.mulf %393, %397 : vector<32x128xf32>
    %399 = arith.index_cast %c9_i32 : i32 to index
    %c0_140 = arith.constant 0 : index
    %c0_141 = arith.constant 0 : index
    %400 = vector.load %arg9[%399, %c0_140, %c0_141] : memref<12x32x128xf32, #tpu.memory_space<vmem>>, vector<1x32x128xf32>
    %401 = vector.shape_cast %400 : vector<1x32x128xf32> to vector<32x128xf32>
    %402 = vector.shape_cast %398 : vector<32x128xf32> to vector<1x32x128xf32>
    tpu.vector_store %arg9[%399, %c0_140, %c0_141], %402 {strides = array<i32>} : memref<12x32x128xf32, #tpu.memory_space<vmem>>, vector<1x32x128xf32>,
    %c10_i32 = arith.constant 10 : i32
    %403 = arith.index_cast %c10_i32 : i32 to index
    %c0_142 = arith.constant 0 : index
    %c0_143 = arith.constant 0 : index
    %404 = vector.load %arg1[%403, %c0_142, %c0_143] : memref<12x128x128xf32, #tpu.memory_space<vmem>>, vector<1x128x128xf32>
    %405 = vector.shape_cast %404 : vector<1x128x128xf32> to vector<128x128xf32>
    %cst_144 = arith.constant dense<0.000000e+00> : vector<128x128xf32>
    %406 = tpu.matmul %0, %398, %cst_144 {dimension_numbers = #tpu.dot_dimension_numbers<[1], [0], [0], [1], [0, 0, 1, 1], [], []>} : vector<128x32xf32>, vector<32x128xf32>, vector<128x128xf32> -> vector<128x128xf32>
    %407 = arith.addf %405, %406 : vector<128x128xf32>
    %408 = vector.extract_strided_slice %407 {offsets = [0, 0], sizes = [32, 128], strides = [1, 1]} : vector<128x128xf32> to vector<32x128xf32>
    %cst_145 = arith.constant 5.000000e-01 : f32
    %409 = vector.broadcast %cst_145 : f32 to vector<32x128xf32>
    %410 = arith.mulf %409, %408 : vector<32x128xf32>
    %411 = math.tanh %410 : vector<32x128xf32>
    %cst_146 = arith.constant 1.000000e+00 : f32
    %412 = vector.broadcast %cst_146 : f32 to vector<32x128xf32>
    %413 = arith.addf %411, %412 : vector<32x128xf32>
    %cst_147 = arith.constant 5.000000e-01 : f32
    %414 = vector.broadcast %cst_147 : f32 to vector<32x128xf32>
    %415 = arith.mulf %414, %413 : vector<32x128xf32>
    %416 = vector.extract_strided_slice %407 {offsets = [32, 0], sizes = [32, 128], strides = [1, 1]} : vector<128x128xf32> to vector<32x128xf32>
    %cst_148 = arith.constant 5.000000e-01 : f32
    %417 = vector.broadcast %cst_148 : f32 to vector<32x128xf32>
    %418 = arith.mulf %417, %416 : vector<32x128xf32>
    %419 = math.tanh %418 : vector<32x128xf32>
    %cst_149 = arith.constant 1.000000e+00 : f32
    %420 = vector.broadcast %cst_149 : f32 to vector<32x128xf32>
    %421 = arith.addf %419, %420 : vector<32x128xf32>
    %cst_150 = arith.constant 5.000000e-01 : f32
    %422 = vector.broadcast %cst_150 : f32 to vector<32x128xf32>
    %423 = arith.mulf %422, %421 : vector<32x128xf32>
    %424 = vector.extract_strided_slice %407 {offsets = [64, 0], sizes = [32, 128], strides = [1, 1]} : vector<128x128xf32> to vector<32x128xf32>
    %425 = math.tanh %424 : vector<32x128xf32>
    %426 = vector.extract_strided_slice %407 {offsets = [96, 0], sizes = [32, 128], strides = [1, 1]} : vector<128x128xf32> to vector<32x128xf32>
    %cst_151 = arith.constant 5.000000e-01 : f32
    %427 = vector.broadcast %cst_151 : f32 to vector<32x128xf32>
    %428 = arith.mulf %427, %426 : vector<32x128xf32>
    %429 = math.tanh %428 : vector<32x128xf32>
    %cst_152 = arith.constant 1.000000e+00 : f32
    %430 = vector.broadcast %cst_152 : f32 to vector<32x128xf32>
    %431 = arith.addf %429, %430 : vector<32x128xf32>
    %cst_153 = arith.constant 5.000000e-01 : f32
    %432 = vector.broadcast %cst_153 : f32 to vector<32x128xf32>
    %433 = arith.mulf %432, %431 : vector<32x128xf32>
    %434 = arith.mulf %423, %396 : vector<32x128xf32>
    %435 = arith.mulf %415, %425 : vector<32x128xf32>
    %436 = arith.addf %434, %435 : vector<32x128xf32>
    %437 = math.tanh %436 : vector<32x128xf32>
    %438 = arith.mulf %433, %437 : vector<32x128xf32>
    %439 = arith.index_cast %c10_i32 : i32 to index
    %c0_154 = arith.constant 0 : index
    %c0_155 = arith.constant 0 : index
    %440 = vector.load %arg9[%439, %c0_154, %c0_155] : memref<12x32x128xf32, #tpu.memory_space<vmem>>, vector<1x32x128xf32>
    %441 = vector.shape_cast %440 : vector<1x32x128xf32> to vector<32x128xf32>
    %442 = vector.shape_cast %438 : vector<32x128xf32> to vector<1x32x128xf32>
    tpu.vector_store %arg9[%439, %c0_154, %c0_155], %442 {strides = array<i32>} : memref<12x32x128xf32, #tpu.memory_space<vmem>>, vector<1x32x128xf32>,
    %c11_i32 = arith.constant 11 : i32
    %443 = arith.index_cast %c11_i32 : i32 to index
    %c0_156 = arith.constant 0 : index
    %c0_157 = arith.constant 0 : index
    %444 = vector.load %arg1[%443, %c0_156, %c0_157] : memref<12x128x128xf32, #tpu.memory_space<vmem>>, vector<1x128x128xf32>
    %445 = vector.shape_cast %444 : vector<1x128x128xf32> to vector<128x128xf32>
    %cst_158 = arith.constant dense<0.000000e+00> : vector<128x128xf32>
    %446 = tpu.matmul %0, %438, %cst_158 {dimension_numbers = #tpu.dot_dimension_numbers<[1], [0], [0], [1], [0, 0, 1, 1], [], []>} : vector<128x32xf32>, vector<32x128xf32>, vector<128x128xf32> -> vector<128x128xf32>
    %447 = arith.addf %445, %446 : vector<128x128xf32>
    %448 = vector.extract_strided_slice %447 {offsets = [0, 0], sizes = [32, 128], strides = [1, 1]} : vector<128x128xf32> to vector<32x128xf32>
    %cst_159 = arith.constant 5.000000e-01 : f32
    %449 = vector.broadcast %cst_159 : f32 to vector<32x128xf32>
    %450 = arith.mulf %449, %448 : vector<32x128xf32>
    %451 = math.tanh %450 : vector<32x128xf32>
    %cst_160 = arith.constant 1.000000e+00 : f32
    %452 = vector.broadcast %cst_160 : f32 to vector<32x128xf32>
    %453 = arith.addf %451, %452 : vector<32x128xf32>
    %cst_161 = arith.constant 5.000000e-01 : f32
    %454 = vector.broadcast %cst_161 : f32 to vector<32x128xf32>
    %455 = arith.mulf %454, %453 : vector<32x128xf32>
    %456 = vector.extract_strided_slice %447 {offsets = [32, 0], sizes = [32, 128], strides = [1, 1]} : vector<128x128xf32> to vector<32x128xf32>
    %cst_162 = arith.constant 5.000000e-01 : f32
    %457 = vector.broadcast %cst_162 : f32 to vector<32x128xf32>
    %458 = arith.mulf %457, %456 : vector<32x128xf32>
    %459 = math.tanh %458 : vector<32x128xf32>
    %cst_163 = arith.constant 1.000000e+00 : f32
    %460 = vector.broadcast %cst_163 : f32 to vector<32x128xf32>
    %461 = arith.addf %459, %460 : vector<32x128xf32>
    %cst_164 = arith.constant 5.000000e-01 : f32
    %462 = vector.broadcast %cst_164 : f32 to vector<32x128xf32>
    %463 = arith.mulf %462, %461 : vector<32x128xf32>
    %464 = vector.extract_strided_slice %447 {offsets = [64, 0], sizes = [32, 128], strides = [1, 1]} : vector<128x128xf32> to vector<32x128xf32>
    %465 = math.tanh %464 : vector<32x128xf32>
    %466 = vector.extract_strided_slice %447 {offsets = [96, 0], sizes = [32, 128], strides = [1, 1]} : vector<128x128xf32> to vector<32x128xf32>
    %cst_165 = arith.constant 5.000000e-01 : f32
    %467 = vector.broadcast %cst_165 : f32 to vector<32x128xf32>
    %468 = arith.mulf %467, %466 : vector<32x128xf32>
    %469 = math.tanh %468 : vector<32x128xf32>
    %cst_166 = arith.constant 1.000000e+00 : f32
    %470 = vector.broadcast %cst_166 : f32 to vector<32x128xf32>
    %471 = arith.addf %469, %470 : vector<32x128xf32>
    %cst_167 = arith.constant 5.000000e-01 : f32
    %472 = vector.broadcast %cst_167 : f32 to vector<32x128xf32>
    %473 = arith.mulf %472, %471 : vector<32x128xf32>
    %474 = arith.mulf %463, %436 : vector<32x128xf32>
    %475 = arith.mulf %455, %465 : vector<32x128xf32>
    %476 = arith.addf %474, %475 : vector<32x128xf32>
    %477 = math.tanh %476 : vector<32x128xf32>
    %478 = arith.mulf %473, %477 : vector<32x128xf32>
    %479 = arith.index_cast %c11_i32 : i32 to index
    %c0_168 = arith.constant 0 : index
    %c0_169 = arith.constant 0 : index
    %480 = vector.load %arg9[%479, %c0_168, %c0_169] : memref<12x32x128xf32, #tpu.memory_space<vmem>>, vector<1x32x128xf32>
    %481 = vector.shape_cast %480 : vector<1x32x128xf32> to vector<32x128xf32>
    %482 = vector.shape_cast %478 : vector<32x128xf32> to vector<1x32x128xf32>
    tpu.vector_store %arg9[%479, %c0_168, %c0_169], %482 {strides = array<i32>} : memref<12x32x128xf32, #tpu.memory_space<vmem>>, vector<1x32x128xf32>,
    %c12_i32 = arith.constant 12 : i32
    %c0_170 = arith.constant 0 : index
    %c0_171 = arith.constant 0 : index
    %483 = vector.load %arg3[%c0_170, %c0_171] : memref<128x32xf32, #tpu.memory_space<vmem>>, vector<128x32xf32>
    %c0_172 = arith.constant 0 : index
    %c0_173 = arith.constant 0 : index
    %484 = vector.load %arg4[%c0_172, %c0_173] : memref<128x32xf32, #tpu.memory_space<vmem>>, vector<128x32xf32>
    %c0_174 = arith.constant 0 : index
    %c0_175 = arith.constant 0 : index
    %485 = vector.load %arg5[%c0_174, %c0_175] : memref<128x1xf32, #tpu.memory_space<vmem>>, vector<128x1xf32>
    %486 = vector.shape_cast %485 : vector<128x1xf32> to vector<128x1xf32>
    %487 = vector.broadcast %486 : vector<128x1xf32> to vector<128x128xf32>
    %cst_176 = arith.constant 0.000000e+00 : f32
    %488 = vector.broadcast %cst_176 : f32 to vector<32x128xf32>
    %cst_177 = arith.constant 0.000000e+00 : f32
    %489 = vector.broadcast %cst_177 : f32 to vector<32x128xf32>
    %c0_i32_178 = arith.constant 0 : i32
    %490 = arith.index_cast %c0_i32_178 : i32 to index
    %c0_179 = arith.constant 0 : index
    %c0_180 = arith.constant 0 : index
    %491 = vector.load %arg9[%490, %c0_179, %c0_180] : memref<12x32x128xf32, #tpu.memory_space<vmem>>, vector<1x32x128xf32>
    %492 = vector.shape_cast %491 : vector<1x32x128xf32> to vector<32x128xf32>
    %cst_181 = arith.constant dense<0.000000e+00> : vector<128x128xf32>
    %493 = tpu.matmul %483, %492, %cst_181 {dimension_numbers = #tpu.dot_dimension_numbers<[1], [0], [0], [1], [0, 0, 1, 1], [], []>} : vector<128x32xf32>, vector<32x128xf32>, vector<128x128xf32> -> vector<128x128xf32>
    %cst_182 = arith.constant dense<0.000000e+00> : vector<128x128xf32>
    %494 = tpu.matmul %484, %488, %cst_182 {dimension_numbers = #tpu.dot_dimension_numbers<[1], [0], [0], [1], [0, 0, 1, 1], [], []>} : vector<128x32xf32>, vector<32x128xf32>, vector<128x128xf32> -> vector<128x128xf32>
    %495 = arith.addf %493, %494 : vector<128x128xf32>
    %496 = arith.addf %495, %487 : vector<128x128xf32>
    %497 = vector.extract_strided_slice %496 {offsets = [0, 0], sizes = [32, 128], strides = [1, 1]} : vector<128x128xf32> to vector<32x128xf32>
    %cst_183 = arith.constant 5.000000e-01 : f32
    %498 = vector.broadcast %cst_183 : f32 to vector<32x128xf32>
    %499 = arith.mulf %498, %497 : vector<32x128xf32>
    %500 = math.tanh %499 : vector<32x128xf32>
    %cst_184 = arith.constant 1.000000e+00 : f32
    %501 = vector.broadcast %cst_184 : f32 to vector<32x128xf32>
    %502 = arith.addf %500, %501 : vector<32x128xf32>
    %cst_185 = arith.constant 5.000000e-01 : f32
    %503 = vector.broadcast %cst_185 : f32 to vector<32x128xf32>
    %504 = arith.mulf %503, %502 : vector<32x128xf32>
    %505 = vector.extract_strided_slice %496 {offsets = [32, 0], sizes = [32, 128], strides = [1, 1]} : vector<128x128xf32> to vector<32x128xf32>
    %cst_186 = arith.constant 5.000000e-01 : f32
    %506 = vector.broadcast %cst_186 : f32 to vector<32x128xf32>
    %507 = arith.mulf %506, %505 : vector<32x128xf32>
    %508 = math.tanh %507 : vector<32x128xf32>
    %cst_187 = arith.constant 1.000000e+00 : f32
    %509 = vector.broadcast %cst_187 : f32 to vector<32x128xf32>
    %510 = arith.addf %508, %509 : vector<32x128xf32>
    %cst_188 = arith.constant 5.000000e-01 : f32
    %511 = vector.broadcast %cst_188 : f32 to vector<32x128xf32>
    %512 = arith.mulf %511, %510 : vector<32x128xf32>
    %513 = vector.extract_strided_slice %496 {offsets = [64, 0], sizes = [32, 128], strides = [1, 1]} : vector<128x128xf32> to vector<32x128xf32>
    %514 = math.tanh %513 : vector<32x128xf32>
    %515 = vector.extract_strided_slice %496 {offsets = [96, 0], sizes = [32, 128], strides = [1, 1]} : vector<128x128xf32> to vector<32x128xf32>
    %cst_189 = arith.constant 5.000000e-01 : f32
    %516 = vector.broadcast %cst_189 : f32 to vector<32x128xf32>
    %517 = arith.mulf %516, %515 : vector<32x128xf32>
    %518 = math.tanh %517 : vector<32x128xf32>
    %cst_190 = arith.constant 1.000000e+00 : f32
    %519 = vector.broadcast %cst_190 : f32 to vector<32x128xf32>
    %520 = arith.addf %518, %519 : vector<32x128xf32>
    %cst_191 = arith.constant 5.000000e-01 : f32
    %521 = vector.broadcast %cst_191 : f32 to vector<32x128xf32>
    %522 = arith.mulf %521, %520 : vector<32x128xf32>
    %523 = arith.mulf %512, %489 : vector<32x128xf32>
    %524 = arith.mulf %504, %514 : vector<32x128xf32>
    %525 = arith.addf %523, %524 : vector<32x128xf32>
    %526 = math.tanh %525 : vector<32x128xf32>
    %527 = arith.mulf %522, %526 : vector<32x128xf32>
    %c1_i32_192 = arith.constant 1 : i32
    %528 = arith.index_cast %c1_i32_192 : i32 to index
    %c0_193 = arith.constant 0 : index
    %c0_194 = arith.constant 0 : index
    %529 = vector.load %arg9[%528, %c0_193, %c0_194] : memref<12x32x128xf32, #tpu.memory_space<vmem>>, vector<1x32x128xf32>
    %530 = vector.shape_cast %529 : vector<1x32x128xf32> to vector<32x128xf32>
    %cst_195 = arith.constant dense<0.000000e+00> : vector<128x128xf32>
    %531 = tpu.matmul %483, %530, %cst_195 {dimension_numbers = #tpu.dot_dimension_numbers<[1], [0], [0], [1], [0, 0, 1, 1], [], []>} : vector<128x32xf32>, vector<32x128xf32>, vector<128x128xf32> -> vector<128x128xf32>
    %cst_196 = arith.constant dense<0.000000e+00> : vector<128x128xf32>
    %532 = tpu.matmul %484, %527, %cst_196 {dimension_numbers = #tpu.dot_dimension_numbers<[1], [0], [0], [1], [0, 0, 1, 1], [], []>} : vector<128x32xf32>, vector<32x128xf32>, vector<128x128xf32> -> vector<128x128xf32>
    %533 = arith.addf %531, %532 : vector<128x128xf32>
    %534 = arith.addf %533, %487 : vector<128x128xf32>
    %535 = vector.extract_strided_slice %534 {offsets = [0, 0], sizes = [32, 128], strides = [1, 1]} : vector<128x128xf32> to vector<32x128xf32>
    %cst_197 = arith.constant 5.000000e-01 : f32
    %536 = vector.broadcast %cst_197 : f32 to vector<32x128xf32>
    %537 = arith.mulf %536, %535 : vector<32x128xf32>
    %538 = math.tanh %537 : vector<32x128xf32>
    %cst_198 = arith.constant 1.000000e+00 : f32
    %539 = vector.broadcast %cst_198 : f32 to vector<32x128xf32>
    %540 = arith.addf %538, %539 : vector<32x128xf32>
    %cst_199 = arith.constant 5.000000e-01 : f32
    %541 = vector.broadcast %cst_199 : f32 to vector<32x128xf32>
    %542 = arith.mulf %541, %540 : vector<32x128xf32>
    %543 = vector.extract_strided_slice %534 {offsets = [32, 0], sizes = [32, 128], strides = [1, 1]} : vector<128x128xf32> to vector<32x128xf32>
    %cst_200 = arith.constant 5.000000e-01 : f32
    %544 = vector.broadcast %cst_200 : f32 to vector<32x128xf32>
    %545 = arith.mulf %544, %543 : vector<32x128xf32>
    %546 = math.tanh %545 : vector<32x128xf32>
    %cst_201 = arith.constant 1.000000e+00 : f32
    %547 = vector.broadcast %cst_201 : f32 to vector<32x128xf32>
    %548 = arith.addf %546, %547 : vector<32x128xf32>
    %cst_202 = arith.constant 5.000000e-01 : f32
    %549 = vector.broadcast %cst_202 : f32 to vector<32x128xf32>
    %550 = arith.mulf %549, %548 : vector<32x128xf32>
    %551 = vector.extract_strided_slice %534 {offsets = [64, 0], sizes = [32, 128], strides = [1, 1]} : vector<128x128xf32> to vector<32x128xf32>
    %552 = math.tanh %551 : vector<32x128xf32>
    %553 = vector.extract_strided_slice %534 {offsets = [96, 0], sizes = [32, 128], strides = [1, 1]} : vector<128x128xf32> to vector<32x128xf32>
    %cst_203 = arith.constant 5.000000e-01 : f32
    %554 = vector.broadcast %cst_203 : f32 to vector<32x128xf32>
    %555 = arith.mulf %554, %553 : vector<32x128xf32>
    %556 = math.tanh %555 : vector<32x128xf32>
    %cst_204 = arith.constant 1.000000e+00 : f32
    %557 = vector.broadcast %cst_204 : f32 to vector<32x128xf32>
    %558 = arith.addf %556, %557 : vector<32x128xf32>
    %cst_205 = arith.constant 5.000000e-01 : f32
    %559 = vector.broadcast %cst_205 : f32 to vector<32x128xf32>
    %560 = arith.mulf %559, %558 : vector<32x128xf32>
    %561 = arith.mulf %550, %525 : vector<32x128xf32>
    %562 = arith.mulf %542, %552 : vector<32x128xf32>
    %563 = arith.addf %561, %562 : vector<32x128xf32>
    %564 = math.tanh %563 : vector<32x128xf32>
    %565 = arith.mulf %560, %564 : vector<32x128xf32>
    %c2_i32_206 = arith.constant 2 : i32
    %566 = arith.index_cast %c2_i32_206 : i32 to index
    %c0_207 = arith.constant 0 : index
    %c0_208 = arith.constant 0 : index
    %567 = vector.load %arg9[%566, %c0_207, %c0_208] : memref<12x32x128xf32, #tpu.memory_space<vmem>>, vector<1x32x128xf32>
    %568 = vector.shape_cast %567 : vector<1x32x128xf32> to vector<32x128xf32>
    %cst_209 = arith.constant dense<0.000000e+00> : vector<128x128xf32>
    %569 = tpu.matmul %483, %568, %cst_209 {dimension_numbers = #tpu.dot_dimension_numbers<[1], [0], [0], [1], [0, 0, 1, 1], [], []>} : vector<128x32xf32>, vector<32x128xf32>, vector<128x128xf32> -> vector<128x128xf32>
    %cst_210 = arith.constant dense<0.000000e+00> : vector<128x128xf32>
    %570 = tpu.matmul %484, %565, %cst_210 {dimension_numbers = #tpu.dot_dimension_numbers<[1], [0], [0], [1], [0, 0, 1, 1], [], []>} : vector<128x32xf32>, vector<32x128xf32>, vector<128x128xf32> -> vector<128x128xf32>
    %571 = arith.addf %569, %570 : vector<128x128xf32>
    %572 = arith.addf %571, %487 : vector<128x128xf32>
    %573 = vector.extract_strided_slice %572 {offsets = [0, 0], sizes = [32, 128], strides = [1, 1]} : vector<128x128xf32> to vector<32x128xf32>
    %cst_211 = arith.constant 5.000000e-01 : f32
    %574 = vector.broadcast %cst_211 : f32 to vector<32x128xf32>
    %575 = arith.mulf %574, %573 : vector<32x128xf32>
    %576 = math.tanh %575 : vector<32x128xf32>
    %cst_212 = arith.constant 1.000000e+00 : f32
    %577 = vector.broadcast %cst_212 : f32 to vector<32x128xf32>
    %578 = arith.addf %576, %577 : vector<32x128xf32>
    %cst_213 = arith.constant 5.000000e-01 : f32
    %579 = vector.broadcast %cst_213 : f32 to vector<32x128xf32>
    %580 = arith.mulf %579, %578 : vector<32x128xf32>
    %581 = vector.extract_strided_slice %572 {offsets = [32, 0], sizes = [32, 128], strides = [1, 1]} : vector<128x128xf32> to vector<32x128xf32>
    %cst_214 = arith.constant 5.000000e-01 : f32
    %582 = vector.broadcast %cst_214 : f32 to vector<32x128xf32>
    %583 = arith.mulf %582, %581 : vector<32x128xf32>
    %584 = math.tanh %583 : vector<32x128xf32>
    %cst_215 = arith.constant 1.000000e+00 : f32
    %585 = vector.broadcast %cst_215 : f32 to vector<32x128xf32>
    %586 = arith.addf %584, %585 : vector<32x128xf32>
    %cst_216 = arith.constant 5.000000e-01 : f32
    %587 = vector.broadcast %cst_216 : f32 to vector<32x128xf32>
    %588 = arith.mulf %587, %586 : vector<32x128xf32>
    %589 = vector.extract_strided_slice %572 {offsets = [64, 0], sizes = [32, 128], strides = [1, 1]} : vector<128x128xf32> to vector<32x128xf32>
    %590 = math.tanh %589 : vector<32x128xf32>
    %591 = vector.extract_strided_slice %572 {offsets = [96, 0], sizes = [32, 128], strides = [1, 1]} : vector<128x128xf32> to vector<32x128xf32>
    %cst_217 = arith.constant 5.000000e-01 : f32
    %592 = vector.broadcast %cst_217 : f32 to vector<32x128xf32>
    %593 = arith.mulf %592, %591 : vector<32x128xf32>
    %594 = math.tanh %593 : vector<32x128xf32>
    %cst_218 = arith.constant 1.000000e+00 : f32
    %595 = vector.broadcast %cst_218 : f32 to vector<32x128xf32>
    %596 = arith.addf %594, %595 : vector<32x128xf32>
    %cst_219 = arith.constant 5.000000e-01 : f32
    %597 = vector.broadcast %cst_219 : f32 to vector<32x128xf32>
    %598 = arith.mulf %597, %596 : vector<32x128xf32>
    %599 = arith.mulf %588, %563 : vector<32x128xf32>
    %600 = arith.mulf %580, %590 : vector<32x128xf32>
    %601 = arith.addf %599, %600 : vector<32x128xf32>
    %602 = math.tanh %601 : vector<32x128xf32>
    %603 = arith.mulf %598, %602 : vector<32x128xf32>
    %c3_i32_220 = arith.constant 3 : i32
    %604 = arith.index_cast %c3_i32_220 : i32 to index
    %c0_221 = arith.constant 0 : index
    %c0_222 = arith.constant 0 : index
    %605 = vector.load %arg9[%604, %c0_221, %c0_222] : memref<12x32x128xf32, #tpu.memory_space<vmem>>, vector<1x32x128xf32>
    %606 = vector.shape_cast %605 : vector<1x32x128xf32> to vector<32x128xf32>
    %cst_223 = arith.constant dense<0.000000e+00> : vector<128x128xf32>
    %607 = tpu.matmul %483, %606, %cst_223 {dimension_numbers = #tpu.dot_dimension_numbers<[1], [0], [0], [1], [0, 0, 1, 1], [], []>} : vector<128x32xf32>, vector<32x128xf32>, vector<128x128xf32> -> vector<128x128xf32>
    %cst_224 = arith.constant dense<0.000000e+00> : vector<128x128xf32>
    %608 = tpu.matmul %484, %603, %cst_224 {dimension_numbers = #tpu.dot_dimension_numbers<[1], [0], [0], [1], [0, 0, 1, 1], [], []>} : vector<128x32xf32>, vector<32x128xf32>, vector<128x128xf32> -> vector<128x128xf32>
    %609 = arith.addf %607, %608 : vector<128x128xf32>
    %610 = arith.addf %609, %487 : vector<128x128xf32>
    %611 = vector.extract_strided_slice %610 {offsets = [0, 0], sizes = [32, 128], strides = [1, 1]} : vector<128x128xf32> to vector<32x128xf32>
    %cst_225 = arith.constant 5.000000e-01 : f32
    %612 = vector.broadcast %cst_225 : f32 to vector<32x128xf32>
    %613 = arith.mulf %612, %611 : vector<32x128xf32>
    %614 = math.tanh %613 : vector<32x128xf32>
    %cst_226 = arith.constant 1.000000e+00 : f32
    %615 = vector.broadcast %cst_226 : f32 to vector<32x128xf32>
    %616 = arith.addf %614, %615 : vector<32x128xf32>
    %cst_227 = arith.constant 5.000000e-01 : f32
    %617 = vector.broadcast %cst_227 : f32 to vector<32x128xf32>
    %618 = arith.mulf %617, %616 : vector<32x128xf32>
    %619 = vector.extract_strided_slice %610 {offsets = [32, 0], sizes = [32, 128], strides = [1, 1]} : vector<128x128xf32> to vector<32x128xf32>
    %cst_228 = arith.constant 5.000000e-01 : f32
    %620 = vector.broadcast %cst_228 : f32 to vector<32x128xf32>
    %621 = arith.mulf %620, %619 : vector<32x128xf32>
    %622 = math.tanh %621 : vector<32x128xf32>
    %cst_229 = arith.constant 1.000000e+00 : f32
    %623 = vector.broadcast %cst_229 : f32 to vector<32x128xf32>
    %624 = arith.addf %622, %623 : vector<32x128xf32>
    %cst_230 = arith.constant 5.000000e-01 : f32
    %625 = vector.broadcast %cst_230 : f32 to vector<32x128xf32>
    %626 = arith.mulf %625, %624 : vector<32x128xf32>
    %627 = vector.extract_strided_slice %610 {offsets = [64, 0], sizes = [32, 128], strides = [1, 1]} : vector<128x128xf32> to vector<32x128xf32>
    %628 = math.tanh %627 : vector<32x128xf32>
    %629 = vector.extract_strided_slice %610 {offsets = [96, 0], sizes = [32, 128], strides = [1, 1]} : vector<128x128xf32> to vector<32x128xf32>
    %cst_231 = arith.constant 5.000000e-01 : f32
    %630 = vector.broadcast %cst_231 : f32 to vector<32x128xf32>
    %631 = arith.mulf %630, %629 : vector<32x128xf32>
    %632 = math.tanh %631 : vector<32x128xf32>
    %cst_232 = arith.constant 1.000000e+00 : f32
    %633 = vector.broadcast %cst_232 : f32 to vector<32x128xf32>
    %634 = arith.addf %632, %633 : vector<32x128xf32>
    %cst_233 = arith.constant 5.000000e-01 : f32
    %635 = vector.broadcast %cst_233 : f32 to vector<32x128xf32>
    %636 = arith.mulf %635, %634 : vector<32x128xf32>
    %637 = arith.mulf %626, %601 : vector<32x128xf32>
    %638 = arith.mulf %618, %628 : vector<32x128xf32>
    %639 = arith.addf %637, %638 : vector<32x128xf32>
    %640 = math.tanh %639 : vector<32x128xf32>
    %641 = arith.mulf %636, %640 : vector<32x128xf32>
    %c4_i32_234 = arith.constant 4 : i32
    %642 = arith.index_cast %c4_i32_234 : i32 to index
    %c0_235 = arith.constant 0 : index
    %c0_236 = arith.constant 0 : index
    %643 = vector.load %arg9[%642, %c0_235, %c0_236] : memref<12x32x128xf32, #tpu.memory_space<vmem>>, vector<1x32x128xf32>
    %644 = vector.shape_cast %643 : vector<1x32x128xf32> to vector<32x128xf32>
    %cst_237 = arith.constant dense<0.000000e+00> : vector<128x128xf32>
    %645 = tpu.matmul %483, %644, %cst_237 {dimension_numbers = #tpu.dot_dimension_numbers<[1], [0], [0], [1], [0, 0, 1, 1], [], []>} : vector<128x32xf32>, vector<32x128xf32>, vector<128x128xf32> -> vector<128x128xf32>
    %cst_238 = arith.constant dense<0.000000e+00> : vector<128x128xf32>
    %646 = tpu.matmul %484, %641, %cst_238 {dimension_numbers = #tpu.dot_dimension_numbers<[1], [0], [0], [1], [0, 0, 1, 1], [], []>} : vector<128x32xf32>, vector<32x128xf32>, vector<128x128xf32> -> vector<128x128xf32>
    %647 = arith.addf %645, %646 : vector<128x128xf32>
    %648 = arith.addf %647, %487 : vector<128x128xf32>
    %649 = vector.extract_strided_slice %648 {offsets = [0, 0], sizes = [32, 128], strides = [1, 1]} : vector<128x128xf32> to vector<32x128xf32>
    %cst_239 = arith.constant 5.000000e-01 : f32
    %650 = vector.broadcast %cst_239 : f32 to vector<32x128xf32>
    %651 = arith.mulf %650, %649 : vector<32x128xf32>
    %652 = math.tanh %651 : vector<32x128xf32>
    %cst_240 = arith.constant 1.000000e+00 : f32
    %653 = vector.broadcast %cst_240 : f32 to vector<32x128xf32>
    %654 = arith.addf %652, %653 : vector<32x128xf32>
    %cst_241 = arith.constant 5.000000e-01 : f32
    %655 = vector.broadcast %cst_241 : f32 to vector<32x128xf32>
    %656 = arith.mulf %655, %654 : vector<32x128xf32>
    %657 = vector.extract_strided_slice %648 {offsets = [32, 0], sizes = [32, 128], strides = [1, 1]} : vector<128x128xf32> to vector<32x128xf32>
    %cst_242 = arith.constant 5.000000e-01 : f32
    %658 = vector.broadcast %cst_242 : f32 to vector<32x128xf32>
    %659 = arith.mulf %658, %657 : vector<32x128xf32>
    %660 = math.tanh %659 : vector<32x128xf32>
    %cst_243 = arith.constant 1.000000e+00 : f32
    %661 = vector.broadcast %cst_243 : f32 to vector<32x128xf32>
    %662 = arith.addf %660, %661 : vector<32x128xf32>
    %cst_244 = arith.constant 5.000000e-01 : f32
    %663 = vector.broadcast %cst_244 : f32 to vector<32x128xf32>
    %664 = arith.mulf %663, %662 : vector<32x128xf32>
    %665 = vector.extract_strided_slice %648 {offsets = [64, 0], sizes = [32, 128], strides = [1, 1]} : vector<128x128xf32> to vector<32x128xf32>
    %666 = math.tanh %665 : vector<32x128xf32>
    %667 = vector.extract_strided_slice %648 {offsets = [96, 0], sizes = [32, 128], strides = [1, 1]} : vector<128x128xf32> to vector<32x128xf32>
    %cst_245 = arith.constant 5.000000e-01 : f32
    %668 = vector.broadcast %cst_245 : f32 to vector<32x128xf32>
    %669 = arith.mulf %668, %667 : vector<32x128xf32>
    %670 = math.tanh %669 : vector<32x128xf32>
    %cst_246 = arith.constant 1.000000e+00 : f32
    %671 = vector.broadcast %cst_246 : f32 to vector<32x128xf32>
    %672 = arith.addf %670, %671 : vector<32x128xf32>
    %cst_247 = arith.constant 5.000000e-01 : f32
    %673 = vector.broadcast %cst_247 : f32 to vector<32x128xf32>
    %674 = arith.mulf %673, %672 : vector<32x128xf32>
    %675 = arith.mulf %664, %639 : vector<32x128xf32>
    %676 = arith.mulf %656, %666 : vector<32x128xf32>
    %677 = arith.addf %675, %676 : vector<32x128xf32>
    %678 = math.tanh %677 : vector<32x128xf32>
    %679 = arith.mulf %674, %678 : vector<32x128xf32>
    %c5_i32_248 = arith.constant 5 : i32
    %680 = arith.index_cast %c5_i32_248 : i32 to index
    %c0_249 = arith.constant 0 : index
    %c0_250 = arith.constant 0 : index
    %681 = vector.load %arg9[%680, %c0_249, %c0_250] : memref<12x32x128xf32, #tpu.memory_space<vmem>>, vector<1x32x128xf32>
    %682 = vector.shape_cast %681 : vector<1x32x128xf32> to vector<32x128xf32>
    %cst_251 = arith.constant dense<0.000000e+00> : vector<128x128xf32>
    %683 = tpu.matmul %483, %682, %cst_251 {dimension_numbers = #tpu.dot_dimension_numbers<[1], [0], [0], [1], [0, 0, 1, 1], [], []>} : vector<128x32xf32>, vector<32x128xf32>, vector<128x128xf32> -> vector<128x128xf32>
    %cst_252 = arith.constant dense<0.000000e+00> : vector<128x128xf32>
    %684 = tpu.matmul %484, %679, %cst_252 {dimension_numbers = #tpu.dot_dimension_numbers<[1], [0], [0], [1], [0, 0, 1, 1], [], []>} : vector<128x32xf32>, vector<32x128xf32>, vector<128x128xf32> -> vector<128x128xf32>
    %685 = arith.addf %683, %684 : vector<128x128xf32>
    %686 = arith.addf %685, %487 : vector<128x128xf32>
    %687 = vector.extract_strided_slice %686 {offsets = [0, 0], sizes = [32, 128], strides = [1, 1]} : vector<128x128xf32> to vector<32x128xf32>
    %cst_253 = arith.constant 5.000000e-01 : f32
    %688 = vector.broadcast %cst_253 : f32 to vector<32x128xf32>
    %689 = arith.mulf %688, %687 : vector<32x128xf32>
    %690 = math.tanh %689 : vector<32x128xf32>
    %cst_254 = arith.constant 1.000000e+00 : f32
    %691 = vector.broadcast %cst_254 : f32 to vector<32x128xf32>
    %692 = arith.addf %690, %691 : vector<32x128xf32>
    %cst_255 = arith.constant 5.000000e-01 : f32
    %693 = vector.broadcast %cst_255 : f32 to vector<32x128xf32>
    %694 = arith.mulf %693, %692 : vector<32x128xf32>
    %695 = vector.extract_strided_slice %686 {offsets = [32, 0], sizes = [32, 128], strides = [1, 1]} : vector<128x128xf32> to vector<32x128xf32>
    %cst_256 = arith.constant 5.000000e-01 : f32
    %696 = vector.broadcast %cst_256 : f32 to vector<32x128xf32>
    %697 = arith.mulf %696, %695 : vector<32x128xf32>
    %698 = math.tanh %697 : vector<32x128xf32>
    %cst_257 = arith.constant 1.000000e+00 : f32
    %699 = vector.broadcast %cst_257 : f32 to vector<32x128xf32>
    %700 = arith.addf %698, %699 : vector<32x128xf32>
    %cst_258 = arith.constant 5.000000e-01 : f32
    %701 = vector.broadcast %cst_258 : f32 to vector<32x128xf32>
    %702 = arith.mulf %701, %700 : vector<32x128xf32>
    %703 = vector.extract_strided_slice %686 {offsets = [64, 0], sizes = [32, 128], strides = [1, 1]} : vector<128x128xf32> to vector<32x128xf32>
    %704 = math.tanh %703 : vector<32x128xf32>
    %705 = vector.extract_strided_slice %686 {offsets = [96, 0], sizes = [32, 128], strides = [1, 1]} : vector<128x128xf32> to vector<32x128xf32>
    %cst_259 = arith.constant 5.000000e-01 : f32
    %706 = vector.broadcast %cst_259 : f32 to vector<32x128xf32>
    %707 = arith.mulf %706, %705 : vector<32x128xf32>
    %708 = math.tanh %707 : vector<32x128xf32>
    %cst_260 = arith.constant 1.000000e+00 : f32
    %709 = vector.broadcast %cst_260 : f32 to vector<32x128xf32>
    %710 = arith.addf %708, %709 : vector<32x128xf32>
    %cst_261 = arith.constant 5.000000e-01 : f32
    %711 = vector.broadcast %cst_261 : f32 to vector<32x128xf32>
    %712 = arith.mulf %711, %710 : vector<32x128xf32>
    %713 = arith.mulf %702, %677 : vector<32x128xf32>
    %714 = arith.mulf %694, %704 : vector<32x128xf32>
    %715 = arith.addf %713, %714 : vector<32x128xf32>
    %716 = math.tanh %715 : vector<32x128xf32>
    %717 = arith.mulf %712, %716 : vector<32x128xf32>
    %c6_i32_262 = arith.constant 6 : i32
    %718 = arith.index_cast %c6_i32_262 : i32 to index
    %c0_263 = arith.constant 0 : index
    %c0_264 = arith.constant 0 : index
    %719 = vector.load %arg9[%718, %c0_263, %c0_264] : memref<12x32x128xf32, #tpu.memory_space<vmem>>, vector<1x32x128xf32>
    %720 = vector.shape_cast %719 : vector<1x32x128xf32> to vector<32x128xf32>
    %cst_265 = arith.constant dense<0.000000e+00> : vector<128x128xf32>
    %721 = tpu.matmul %483, %720, %cst_265 {dimension_numbers = #tpu.dot_dimension_numbers<[1], [0], [0], [1], [0, 0, 1, 1], [], []>} : vector<128x32xf32>, vector<32x128xf32>, vector<128x128xf32> -> vector<128x128xf32>
    %cst_266 = arith.constant dense<0.000000e+00> : vector<128x128xf32>
    %722 = tpu.matmul %484, %717, %cst_266 {dimension_numbers = #tpu.dot_dimension_numbers<[1], [0], [0], [1], [0, 0, 1, 1], [], []>} : vector<128x32xf32>, vector<32x128xf32>, vector<128x128xf32> -> vector<128x128xf32>
    %723 = arith.addf %721, %722 : vector<128x128xf32>
    %724 = arith.addf %723, %487 : vector<128x128xf32>
    %725 = vector.extract_strided_slice %724 {offsets = [0, 0], sizes = [32, 128], strides = [1, 1]} : vector<128x128xf32> to vector<32x128xf32>
    %cst_267 = arith.constant 5.000000e-01 : f32
    %726 = vector.broadcast %cst_267 : f32 to vector<32x128xf32>
    %727 = arith.mulf %726, %725 : vector<32x128xf32>
    %728 = math.tanh %727 : vector<32x128xf32>
    %cst_268 = arith.constant 1.000000e+00 : f32
    %729 = vector.broadcast %cst_268 : f32 to vector<32x128xf32>
    %730 = arith.addf %728, %729 : vector<32x128xf32>
    %cst_269 = arith.constant 5.000000e-01 : f32
    %731 = vector.broadcast %cst_269 : f32 to vector<32x128xf32>
    %732 = arith.mulf %731, %730 : vector<32x128xf32>
    %733 = vector.extract_strided_slice %724 {offsets = [32, 0], sizes = [32, 128], strides = [1, 1]} : vector<128x128xf32> to vector<32x128xf32>
    %cst_270 = arith.constant 5.000000e-01 : f32
    %734 = vector.broadcast %cst_270 : f32 to vector<32x128xf32>
    %735 = arith.mulf %734, %733 : vector<32x128xf32>
    %736 = math.tanh %735 : vector<32x128xf32>
    %cst_271 = arith.constant 1.000000e+00 : f32
    %737 = vector.broadcast %cst_271 : f32 to vector<32x128xf32>
    %738 = arith.addf %736, %737 : vector<32x128xf32>
    %cst_272 = arith.constant 5.000000e-01 : f32
    %739 = vector.broadcast %cst_272 : f32 to vector<32x128xf32>
    %740 = arith.mulf %739, %738 : vector<32x128xf32>
    %741 = vector.extract_strided_slice %724 {offsets = [64, 0], sizes = [32, 128], strides = [1, 1]} : vector<128x128xf32> to vector<32x128xf32>
    %742 = math.tanh %741 : vector<32x128xf32>
    %743 = vector.extract_strided_slice %724 {offsets = [96, 0], sizes = [32, 128], strides = [1, 1]} : vector<128x128xf32> to vector<32x128xf32>
    %cst_273 = arith.constant 5.000000e-01 : f32
    %744 = vector.broadcast %cst_273 : f32 to vector<32x128xf32>
    %745 = arith.mulf %744, %743 : vector<32x128xf32>
    %746 = math.tanh %745 : vector<32x128xf32>
    %cst_274 = arith.constant 1.000000e+00 : f32
    %747 = vector.broadcast %cst_274 : f32 to vector<32x128xf32>
    %748 = arith.addf %746, %747 : vector<32x128xf32>
    %cst_275 = arith.constant 5.000000e-01 : f32
    %749 = vector.broadcast %cst_275 : f32 to vector<32x128xf32>
    %750 = arith.mulf %749, %748 : vector<32x128xf32>
    %751 = arith.mulf %740, %715 : vector<32x128xf32>
    %752 = arith.mulf %732, %742 : vector<32x128xf32>
    %753 = arith.addf %751, %752 : vector<32x128xf32>
    %754 = math.tanh %753 : vector<32x128xf32>
    %755 = arith.mulf %750, %754 : vector<32x128xf32>
    %c7_i32_276 = arith.constant 7 : i32
    %756 = arith.index_cast %c7_i32_276 : i32 to index
    %c0_277 = arith.constant 0 : index
    %c0_278 = arith.constant 0 : index
    %757 = vector.load %arg9[%756, %c0_277, %c0_278] : memref<12x32x128xf32, #tpu.memory_space<vmem>>, vector<1x32x128xf32>
    %758 = vector.shape_cast %757 : vector<1x32x128xf32> to vector<32x128xf32>
    %cst_279 = arith.constant dense<0.000000e+00> : vector<128x128xf32>
    %759 = tpu.matmul %483, %758, %cst_279 {dimension_numbers = #tpu.dot_dimension_numbers<[1], [0], [0], [1], [0, 0, 1, 1], [], []>} : vector<128x32xf32>, vector<32x128xf32>, vector<128x128xf32> -> vector<128x128xf32>
    %cst_280 = arith.constant dense<0.000000e+00> : vector<128x128xf32>
    %760 = tpu.matmul %484, %755, %cst_280 {dimension_numbers = #tpu.dot_dimension_numbers<[1], [0], [0], [1], [0, 0, 1, 1], [], []>} : vector<128x32xf32>, vector<32x128xf32>, vector<128x128xf32> -> vector<128x128xf32>
    %761 = arith.addf %759, %760 : vector<128x128xf32>
    %762 = arith.addf %761, %487 : vector<128x128xf32>
    %763 = vector.extract_strided_slice %762 {offsets = [0, 0], sizes = [32, 128], strides = [1, 1]} : vector<128x128xf32> to vector<32x128xf32>
    %cst_281 = arith.constant 5.000000e-01 : f32
    %764 = vector.broadcast %cst_281 : f32 to vector<32x128xf32>
    %765 = arith.mulf %764, %763 : vector<32x128xf32>
    %766 = math.tanh %765 : vector<32x128xf32>
    %cst_282 = arith.constant 1.000000e+00 : f32
    %767 = vector.broadcast %cst_282 : f32 to vector<32x128xf32>
    %768 = arith.addf %766, %767 : vector<32x128xf32>
    %cst_283 = arith.constant 5.000000e-01 : f32
    %769 = vector.broadcast %cst_283 : f32 to vector<32x128xf32>
    %770 = arith.mulf %769, %768 : vector<32x128xf32>
    %771 = vector.extract_strided_slice %762 {offsets = [32, 0], sizes = [32, 128], strides = [1, 1]} : vector<128x128xf32> to vector<32x128xf32>
    %cst_284 = arith.constant 5.000000e-01 : f32
    %772 = vector.broadcast %cst_284 : f32 to vector<32x128xf32>
    %773 = arith.mulf %772, %771 : vector<32x128xf32>
    %774 = math.tanh %773 : vector<32x128xf32>
    %cst_285 = arith.constant 1.000000e+00 : f32
    %775 = vector.broadcast %cst_285 : f32 to vector<32x128xf32>
    %776 = arith.addf %774, %775 : vector<32x128xf32>
    %cst_286 = arith.constant 5.000000e-01 : f32
    %777 = vector.broadcast %cst_286 : f32 to vector<32x128xf32>
    %778 = arith.mulf %777, %776 : vector<32x128xf32>
    %779 = vector.extract_strided_slice %762 {offsets = [64, 0], sizes = [32, 128], strides = [1, 1]} : vector<128x128xf32> to vector<32x128xf32>
    %780 = math.tanh %779 : vector<32x128xf32>
    %781 = vector.extract_strided_slice %762 {offsets = [96, 0], sizes = [32, 128], strides = [1, 1]} : vector<128x128xf32> to vector<32x128xf32>
    %cst_287 = arith.constant 5.000000e-01 : f32
    %782 = vector.broadcast %cst_287 : f32 to vector<32x128xf32>
    %783 = arith.mulf %782, %781 : vector<32x128xf32>
    %784 = math.tanh %783 : vector<32x128xf32>
    %cst_288 = arith.constant 1.000000e+00 : f32
    %785 = vector.broadcast %cst_288 : f32 to vector<32x128xf32>
    %786 = arith.addf %784, %785 : vector<32x128xf32>
    %cst_289 = arith.constant 5.000000e-01 : f32
    %787 = vector.broadcast %cst_289 : f32 to vector<32x128xf32>
    %788 = arith.mulf %787, %786 : vector<32x128xf32>
    %789 = arith.mulf %778, %753 : vector<32x128xf32>
    %790 = arith.mulf %770, %780 : vector<32x128xf32>
    %791 = arith.addf %789, %790 : vector<32x128xf32>
    %792 = math.tanh %791 : vector<32x128xf32>
    %793 = arith.mulf %788, %792 : vector<32x128xf32>
    %c8_i32_290 = arith.constant 8 : i32
    %794 = arith.index_cast %c8_i32_290 : i32 to index
    %c0_291 = arith.constant 0 : index
    %c0_292 = arith.constant 0 : index
    %795 = vector.load %arg9[%794, %c0_291, %c0_292] : memref<12x32x128xf32, #tpu.memory_space<vmem>>, vector<1x32x128xf32>
    %796 = vector.shape_cast %795 : vector<1x32x128xf32> to vector<32x128xf32>
    %cst_293 = arith.constant dense<0.000000e+00> : vector<128x128xf32>
    %797 = tpu.matmul %483, %796, %cst_293 {dimension_numbers = #tpu.dot_dimension_numbers<[1], [0], [0], [1], [0, 0, 1, 1], [], []>} : vector<128x32xf32>, vector<32x128xf32>, vector<128x128xf32> -> vector<128x128xf32>
    %cst_294 = arith.constant dense<0.000000e+00> : vector<128x128xf32>
    %798 = tpu.matmul %484, %793, %cst_294 {dimension_numbers = #tpu.dot_dimension_numbers<[1], [0], [0], [1], [0, 0, 1, 1], [], []>} : vector<128x32xf32>, vector<32x128xf32>, vector<128x128xf32> -> vector<128x128xf32>
    %799 = arith.addf %797, %798 : vector<128x128xf32>
    %800 = arith.addf %799, %487 : vector<128x128xf32>
    %801 = vector.extract_strided_slice %800 {offsets = [0, 0], sizes = [32, 128], strides = [1, 1]} : vector<128x128xf32> to vector<32x128xf32>
    %cst_295 = arith.constant 5.000000e-01 : f32
    %802 = vector.broadcast %cst_295 : f32 to vector<32x128xf32>
    %803 = arith.mulf %802, %801 : vector<32x128xf32>
    %804 = math.tanh %803 : vector<32x128xf32>
    %cst_296 = arith.constant 1.000000e+00 : f32
    %805 = vector.broadcast %cst_296 : f32 to vector<32x128xf32>
    %806 = arith.addf %804, %805 : vector<32x128xf32>
    %cst_297 = arith.constant 5.000000e-01 : f32
    %807 = vector.broadcast %cst_297 : f32 to vector<32x128xf32>
    %808 = arith.mulf %807, %806 : vector<32x128xf32>
    %809 = vector.extract_strided_slice %800 {offsets = [32, 0], sizes = [32, 128], strides = [1, 1]} : vector<128x128xf32> to vector<32x128xf32>
    %cst_298 = arith.constant 5.000000e-01 : f32
    %810 = vector.broadcast %cst_298 : f32 to vector<32x128xf32>
    %811 = arith.mulf %810, %809 : vector<32x128xf32>
    %812 = math.tanh %811 : vector<32x128xf32>
    %cst_299 = arith.constant 1.000000e+00 : f32
    %813 = vector.broadcast %cst_299 : f32 to vector<32x128xf32>
    %814 = arith.addf %812, %813 : vector<32x128xf32>
    %cst_300 = arith.constant 5.000000e-01 : f32
    %815 = vector.broadcast %cst_300 : f32 to vector<32x128xf32>
    %816 = arith.mulf %815, %814 : vector<32x128xf32>
    %817 = vector.extract_strided_slice %800 {offsets = [64, 0], sizes = [32, 128], strides = [1, 1]} : vector<128x128xf32> to vector<32x128xf32>
    %818 = math.tanh %817 : vector<32x128xf32>
    %819 = vector.extract_strided_slice %800 {offsets = [96, 0], sizes = [32, 128], strides = [1, 1]} : vector<128x128xf32> to vector<32x128xf32>
    %cst_301 = arith.constant 5.000000e-01 : f32
    %820 = vector.broadcast %cst_301 : f32 to vector<32x128xf32>
    %821 = arith.mulf %820, %819 : vector<32x128xf32>
    %822 = math.tanh %821 : vector<32x128xf32>
    %cst_302 = arith.constant 1.000000e+00 : f32
    %823 = vector.broadcast %cst_302 : f32 to vector<32x128xf32>
    %824 = arith.addf %822, %823 : vector<32x128xf32>
    %cst_303 = arith.constant 5.000000e-01 : f32
    %825 = vector.broadcast %cst_303 : f32 to vector<32x128xf32>
    %826 = arith.mulf %825, %824 : vector<32x128xf32>
    %827 = arith.mulf %816, %791 : vector<32x128xf32>
    %828 = arith.mulf %808, %818 : vector<32x128xf32>
    %829 = arith.addf %827, %828 : vector<32x128xf32>
    %830 = math.tanh %829 : vector<32x128xf32>
    %831 = arith.mulf %826, %830 : vector<32x128xf32>
    %c9_i32_304 = arith.constant 9 : i32
    %832 = arith.index_cast %c9_i32_304 : i32 to index
    %c0_305 = arith.constant 0 : index
    %c0_306 = arith.constant 0 : index
    %833 = vector.load %arg9[%832, %c0_305, %c0_306] : memref<12x32x128xf32, #tpu.memory_space<vmem>>, vector<1x32x128xf32>
    %834 = vector.shape_cast %833 : vector<1x32x128xf32> to vector<32x128xf32>
    %cst_307 = arith.constant dense<0.000000e+00> : vector<128x128xf32>
    %835 = tpu.matmul %483, %834, %cst_307 {dimension_numbers = #tpu.dot_dimension_numbers<[1], [0], [0], [1], [0, 0, 1, 1], [], []>} : vector<128x32xf32>, vector<32x128xf32>, vector<128x128xf32> -> vector<128x128xf32>
    %cst_308 = arith.constant dense<0.000000e+00> : vector<128x128xf32>
    %836 = tpu.matmul %484, %831, %cst_308 {dimension_numbers = #tpu.dot_dimension_numbers<[1], [0], [0], [1], [0, 0, 1, 1], [], []>} : vector<128x32xf32>, vector<32x128xf32>, vector<128x128xf32> -> vector<128x128xf32>
    %837 = arith.addf %835, %836 : vector<128x128xf32>
    %838 = arith.addf %837, %487 : vector<128x128xf32>
    %839 = vector.extract_strided_slice %838 {offsets = [0, 0], sizes = [32, 128], strides = [1, 1]} : vector<128x128xf32> to vector<32x128xf32>
    %cst_309 = arith.constant 5.000000e-01 : f32
    %840 = vector.broadcast %cst_309 : f32 to vector<32x128xf32>
    %841 = arith.mulf %840, %839 : vector<32x128xf32>
    %842 = math.tanh %841 : vector<32x128xf32>
    %cst_310 = arith.constant 1.000000e+00 : f32
    %843 = vector.broadcast %cst_310 : f32 to vector<32x128xf32>
    %844 = arith.addf %842, %843 : vector<32x128xf32>
    %cst_311 = arith.constant 5.000000e-01 : f32
    %845 = vector.broadcast %cst_311 : f32 to vector<32x128xf32>
    %846 = arith.mulf %845, %844 : vector<32x128xf32>
    %847 = vector.extract_strided_slice %838 {offsets = [32, 0], sizes = [32, 128], strides = [1, 1]} : vector<128x128xf32> to vector<32x128xf32>
    %cst_312 = arith.constant 5.000000e-01 : f32
    %848 = vector.broadcast %cst_312 : f32 to vector<32x128xf32>
    %849 = arith.mulf %848, %847 : vector<32x128xf32>
    %850 = math.tanh %849 : vector<32x128xf32>
    %cst_313 = arith.constant 1.000000e+00 : f32
    %851 = vector.broadcast %cst_313 : f32 to vector<32x128xf32>
    %852 = arith.addf %850, %851 : vector<32x128xf32>
    %cst_314 = arith.constant 5.000000e-01 : f32
    %853 = vector.broadcast %cst_314 : f32 to vector<32x128xf32>
    %854 = arith.mulf %853, %852 : vector<32x128xf32>
    %855 = vector.extract_strided_slice %838 {offsets = [64, 0], sizes = [32, 128], strides = [1, 1]} : vector<128x128xf32> to vector<32x128xf32>
    %856 = math.tanh %855 : vector<32x128xf32>
    %857 = vector.extract_strided_slice %838 {offsets = [96, 0], sizes = [32, 128], strides = [1, 1]} : vector<128x128xf32> to vector<32x128xf32>
    %cst_315 = arith.constant 5.000000e-01 : f32
    %858 = vector.broadcast %cst_315 : f32 to vector<32x128xf32>
    %859 = arith.mulf %858, %857 : vector<32x128xf32>
    %860 = math.tanh %859 : vector<32x128xf32>
    %cst_316 = arith.constant 1.000000e+00 : f32
    %861 = vector.broadcast %cst_316 : f32 to vector<32x128xf32>
    %862 = arith.addf %860, %861 : vector<32x128xf32>
    %cst_317 = arith.constant 5.000000e-01 : f32
    %863 = vector.broadcast %cst_317 : f32 to vector<32x128xf32>
    %864 = arith.mulf %863, %862 : vector<32x128xf32>
    %865 = arith.mulf %854, %829 : vector<32x128xf32>
    %866 = arith.mulf %846, %856 : vector<32x128xf32>
    %867 = arith.addf %865, %866 : vector<32x128xf32>
    %868 = math.tanh %867 : vector<32x128xf32>
    %869 = arith.mulf %864, %868 : vector<32x128xf32>
    %c10_i32_318 = arith.constant 10 : i32
    %870 = arith.index_cast %c10_i32_318 : i32 to index
    %c0_319 = arith.constant 0 : index
    %c0_320 = arith.constant 0 : index
    %871 = vector.load %arg9[%870, %c0_319, %c0_320] : memref<12x32x128xf32, #tpu.memory_space<vmem>>, vector<1x32x128xf32>
    %872 = vector.shape_cast %871 : vector<1x32x128xf32> to vector<32x128xf32>
    %cst_321 = arith.constant dense<0.000000e+00> : vector<128x128xf32>
    %873 = tpu.matmul %483, %872, %cst_321 {dimension_numbers = #tpu.dot_dimension_numbers<[1], [0], [0], [1], [0, 0, 1, 1], [], []>} : vector<128x32xf32>, vector<32x128xf32>, vector<128x128xf32> -> vector<128x128xf32>
    %cst_322 = arith.constant dense<0.000000e+00> : vector<128x128xf32>
    %874 = tpu.matmul %484, %869, %cst_322 {dimension_numbers = #tpu.dot_dimension_numbers<[1], [0], [0], [1], [0, 0, 1, 1], [], []>} : vector<128x32xf32>, vector<32x128xf32>, vector<128x128xf32> -> vector<128x128xf32>
    %875 = arith.addf %873, %874 : vector<128x128xf32>
    %876 = arith.addf %875, %487 : vector<128x128xf32>
    %877 = vector.extract_strided_slice %876 {offsets = [0, 0], sizes = [32, 128], strides = [1, 1]} : vector<128x128xf32> to vector<32x128xf32>
    %cst_323 = arith.constant 5.000000e-01 : f32
    %878 = vector.broadcast %cst_323 : f32 to vector<32x128xf32>
    %879 = arith.mulf %878, %877 : vector<32x128xf32>
    %880 = math.tanh %879 : vector<32x128xf32>
    %cst_324 = arith.constant 1.000000e+00 : f32
    %881 = vector.broadcast %cst_324 : f32 to vector<32x128xf32>
    %882 = arith.addf %880, %881 : vector<32x128xf32>
    %cst_325 = arith.constant 5.000000e-01 : f32
    %883 = vector.broadcast %cst_325 : f32 to vector<32x128xf32>
    %884 = arith.mulf %883, %882 : vector<32x128xf32>
    %885 = vector.extract_strided_slice %876 {offsets = [32, 0], sizes = [32, 128], strides = [1, 1]} : vector<128x128xf32> to vector<32x128xf32>
    %cst_326 = arith.constant 5.000000e-01 : f32
    %886 = vector.broadcast %cst_326 : f32 to vector<32x128xf32>
    %887 = arith.mulf %886, %885 : vector<32x128xf32>
    %888 = math.tanh %887 : vector<32x128xf32>
    %cst_327 = arith.constant 1.000000e+00 : f32
    %889 = vector.broadcast %cst_327 : f32 to vector<32x128xf32>
    %890 = arith.addf %888, %889 : vector<32x128xf32>
    %cst_328 = arith.constant 5.000000e-01 : f32
    %891 = vector.broadcast %cst_328 : f32 to vector<32x128xf32>
    %892 = arith.mulf %891, %890 : vector<32x128xf32>
    %893 = vector.extract_strided_slice %876 {offsets = [64, 0], sizes = [32, 128], strides = [1, 1]} : vector<128x128xf32> to vector<32x128xf32>
    %894 = math.tanh %893 : vector<32x128xf32>
    %895 = vector.extract_strided_slice %876 {offsets = [96, 0], sizes = [32, 128], strides = [1, 1]} : vector<128x128xf32> to vector<32x128xf32>
    %cst_329 = arith.constant 5.000000e-01 : f32
    %896 = vector.broadcast %cst_329 : f32 to vector<32x128xf32>
    %897 = arith.mulf %896, %895 : vector<32x128xf32>
    %898 = math.tanh %897 : vector<32x128xf32>
    %cst_330 = arith.constant 1.000000e+00 : f32
    %899 = vector.broadcast %cst_330 : f32 to vector<32x128xf32>
    %900 = arith.addf %898, %899 : vector<32x128xf32>
    %cst_331 = arith.constant 5.000000e-01 : f32
    %901 = vector.broadcast %cst_331 : f32 to vector<32x128xf32>
    %902 = arith.mulf %901, %900 : vector<32x128xf32>
    %903 = arith.mulf %892, %867 : vector<32x128xf32>
    %904 = arith.mulf %884, %894 : vector<32x128xf32>
    %905 = arith.addf %903, %904 : vector<32x128xf32>
    %906 = math.tanh %905 : vector<32x128xf32>
    %907 = arith.mulf %902, %906 : vector<32x128xf32>
    %c11_i32_332 = arith.constant 11 : i32
    %908 = arith.index_cast %c11_i32_332 : i32 to index
    %c0_333 = arith.constant 0 : index
    %c0_334 = arith.constant 0 : index
    %909 = vector.load %arg9[%908, %c0_333, %c0_334] : memref<12x32x128xf32, #tpu.memory_space<vmem>>, vector<1x32x128xf32>
    %910 = vector.shape_cast %909 : vector<1x32x128xf32> to vector<32x128xf32>
    %cst_335 = arith.constant dense<0.000000e+00> : vector<128x128xf32>
    %911 = tpu.matmul %483, %910, %cst_335 {dimension_numbers = #tpu.dot_dimension_numbers<[1], [0], [0], [1], [0, 0, 1, 1], [], []>} : vector<128x32xf32>, vector<32x128xf32>, vector<128x128xf32> -> vector<128x128xf32>
    %cst_336 = arith.constant dense<0.000000e+00> : vector<128x128xf32>
    %912 = tpu.matmul %484, %907, %cst_336 {dimension_numbers = #tpu.dot_dimension_numbers<[1], [0], [0], [1], [0, 0, 1, 1], [], []>} : vector<128x32xf32>, vector<32x128xf32>, vector<128x128xf32> -> vector<128x128xf32>
    %913 = arith.addf %911, %912 : vector<128x128xf32>
    %914 = arith.addf %913, %487 : vector<128x128xf32>
    %915 = vector.extract_strided_slice %914 {offsets = [0, 0], sizes = [32, 128], strides = [1, 1]} : vector<128x128xf32> to vector<32x128xf32>
    %cst_337 = arith.constant 5.000000e-01 : f32
    %916 = vector.broadcast %cst_337 : f32 to vector<32x128xf32>
    %917 = arith.mulf %916, %915 : vector<32x128xf32>
    %918 = math.tanh %917 : vector<32x128xf32>
    %cst_338 = arith.constant 1.000000e+00 : f32
    %919 = vector.broadcast %cst_338 : f32 to vector<32x128xf32>
    %920 = arith.addf %918, %919 : vector<32x128xf32>
    %cst_339 = arith.constant 5.000000e-01 : f32
    %921 = vector.broadcast %cst_339 : f32 to vector<32x128xf32>
    %922 = arith.mulf %921, %920 : vector<32x128xf32>
    %923 = vector.extract_strided_slice %914 {offsets = [32, 0], sizes = [32, 128], strides = [1, 1]} : vector<128x128xf32> to vector<32x128xf32>
    %cst_340 = arith.constant 5.000000e-01 : f32
    %924 = vector.broadcast %cst_340 : f32 to vector<32x128xf32>
    %925 = arith.mulf %924, %923 : vector<32x128xf32>
    %926 = math.tanh %925 : vector<32x128xf32>
    %cst_341 = arith.constant 1.000000e+00 : f32
    %927 = vector.broadcast %cst_341 : f32 to vector<32x128xf32>
    %928 = arith.addf %926, %927 : vector<32x128xf32>
    %cst_342 = arith.constant 5.000000e-01 : f32
    %929 = vector.broadcast %cst_342 : f32 to vector<32x128xf32>
    %930 = arith.mulf %929, %928 : vector<32x128xf32>
    %931 = vector.extract_strided_slice %914 {offsets = [64, 0], sizes = [32, 128], strides = [1, 1]} : vector<128x128xf32> to vector<32x128xf32>
    %932 = math.tanh %931 : vector<32x128xf32>
    %933 = vector.extract_strided_slice %914 {offsets = [96, 0], sizes = [32, 128], strides = [1, 1]} : vector<128x128xf32> to vector<32x128xf32>
    %cst_343 = arith.constant 5.000000e-01 : f32
    %934 = vector.broadcast %cst_343 : f32 to vector<32x128xf32>
    %935 = arith.mulf %934, %933 : vector<32x128xf32>
    %936 = math.tanh %935 : vector<32x128xf32>
    %cst_344 = arith.constant 1.000000e+00 : f32
    %937 = vector.broadcast %cst_344 : f32 to vector<32x128xf32>
    %938 = arith.addf %936, %937 : vector<32x128xf32>
    %cst_345 = arith.constant 5.000000e-01 : f32
    %939 = vector.broadcast %cst_345 : f32 to vector<32x128xf32>
    %940 = arith.mulf %939, %938 : vector<32x128xf32>
    %941 = arith.mulf %930, %905 : vector<32x128xf32>
    %942 = arith.mulf %922, %932 : vector<32x128xf32>
    %943 = arith.addf %941, %942 : vector<32x128xf32>
    %944 = math.tanh %943 : vector<32x128xf32>
    %945 = arith.mulf %940, %944 : vector<32x128xf32>
    %c12_i32_346 = arith.constant 12 : i32
    %c0_347 = arith.constant 0 : index
    %c0_348 = arith.constant 0 : index
    %946 = vector.load %arg6[%c0_347, %c0_348] : memref<4x32xf32, #tpu.memory_space<vmem>>, vector<4x32xf32>
    %cst_349 = arith.constant dense<0.000000e+00> : vector<4x128xf32>
    %947 = tpu.matmul %946, %945, %cst_349 {dimension_numbers = #tpu.dot_dimension_numbers<[1], [0], [0], [1], [0, 0, 1, 1], [], []>} : vector<4x32xf32>, vector<32x128xf32>, vector<4x128xf32> -> vector<4x128xf32>
    %c0_350 = arith.constant 0 : index
    %c0_351 = arith.constant 0 : index
    %948 = vector.load %arg7[%c0_350, %c0_351] : memref<4x1xf32, #tpu.memory_space<vmem>>, vector<4x1xf32>
    %949 = vector.broadcast %948 : vector<4x1xf32> to vector<4x128xf32>
    %950 = arith.addf %947, %949 : vector<4x128xf32>
    %cst_352 = arith.constant dense<0xFF800000> : vector<128xf32>
    %951 = vector.multi_reduction <maximumf>, %950, %cst_352 [0] : vector<4x128xf32> to vector<128xf32>
    %952 = vector.shape_cast %951 : vector<128xf32> to vector<1x128xf32>
    %953 = vector.broadcast %952 : vector<1x128xf32> to vector<4x128xf32>
    %954 = arith.subf %950, %953 : vector<4x128xf32>
    %955 = math.exp %954 : vector<4x128xf32>
    %cst_353 = arith.constant dense<0.000000e+00> : vector<128xf32>
    %956 = vector.multi_reduction <add>, %955, %cst_353 [0] : vector<4x128xf32> to vector<128xf32>
    %957 = vector.shape_cast %956 : vector<128xf32> to vector<1x128xf32>
    %958 = math.log %957 : vector<1x128xf32>
    %959 = vector.broadcast %958 : vector<1x128xf32> to vector<4x128xf32>
    %960 = arith.subf %954, %959 : vector<4x128xf32>
    %c0_354 = arith.constant 0 : index
    %c0_355 = arith.constant 0 : index
    %961 = vector.load %arg8[%c0_354, %c0_355] : memref<4x128xf32, #tpu.memory_space<vmem>>, vector<4x128xf32>
    tpu.vector_store %arg8[%c0_354, %c0_355], %960 {strides = array<i32>} : memref<4x128xf32, #tpu.memory_space<vmem>>, vector<4x128xf32>,
    return
  }
  func.func @transform_0(%arg0: i32) -> (i32, i32, i32) {
    %c0_i32 = arith.constant 0 : i32
    %c0_i32_0 = arith.constant 0 : i32
    %c0_i32_1 = arith.constant 0 : i32
    return %c0_i32, %c0_i32_0, %arg0 : i32, i32, i32
  }
  func.func @transform_1(%arg0: i32) -> (i32, i32) {
    %c0_i32 = arith.constant 0 : i32
    %c0_i32_0 = arith.constant 0 : i32
    %c0_i32_1 = arith.constant 0 : i32
    return %c0_i32, %c0_i32_0 : i32, i32
  }
  func.func @transform_2(%arg0: i32) -> (i32, i32) {
    %c0_i32 = arith.constant 0 : i32
    %c0_i32_0 = arith.constant 0 : i32
    %c0_i32_1 = arith.constant 0 : i32
    return %c0_i32, %c0_i32_0 : i32, i32
  }
  func.func @transform_3(%arg0: i32) -> (i32, i32) {
    %c0_i32 = arith.constant 0 : i32
    %c0_i32_0 = arith.constant 0 : i32
    %c0_i32_1 = arith.constant 0 : i32
    return %c0_i32, %c0_i32_0 : i32, i32
  }
  func.func @transform_4(%arg0: i32) -> (i32, i32) {
    %c0_i32 = arith.constant 0 : i32
    %c0_i32_0 = arith.constant 0 : i32
    %c0_i32_1 = arith.constant 0 : i32
    return %c0_i32, %c0_i32_0 : i32, i32
  }
  func.func @transform_5(%arg0: i32) -> (i32, i32) {
    %c0_i32 = arith.constant 0 : i32
    %c0_i32_0 = arith.constant 0 : i32
    %c0_i32_1 = arith.constant 0 : i32
    return %c0_i32, %c0_i32_0 : i32, i32
  }
  func.func @transform_6(%arg0: i32) -> (i32, i32) {
    %c0_i32 = arith.constant 0 : i32
    %c0_i32_0 = arith.constant 0 : i32
    %c0_i32_1 = arith.constant 0 : i32
    return %c0_i32, %c0_i32_0 : i32, i32
  }
  func.func @transform_7(%arg0: i32) -> (i32, i32) {
    %c0_i32 = arith.constant 0 : i32
    %c0_i32_0 = arith.constant 0 : i32
    return %c0_i32, %arg0 : i32, i32
  }
}

</mosaic_0001>

<llo_original>
// kernel: tpu_custom_call.1
$region0: #{tpu_custom_call.1}
  #allocation0 [shape = 'u32[]', space=smem, size = 0x4, offset = 0x4, fixed_abs, tag = 'smem constant byte address 0x4 - core index']
  #allocation1 [shape = 'u32[144,128]{1,0:T(1,128)}', space=vmem, size = 0x12000, scoped, tag = 'internal scratch']
  #allocation2 [shape = 'f32[12,32,128]{2,1,0:T(8,128)}', space=vmem, size = 0x30000, scoped, tag = 'scratch operand']
  %s0 = inlined_call_operand.hbm [shape: f32[12,128,128], index: 0, kind: input, shape index: {}]
  %s1 = inlined_call_operand.vmem [shape: f32[128,32], index: 1, kind: input, shape index: {}]
  %s2 = inlined_call_operand.vmem [shape: f32[128,32], index: 2, kind: input, shape index: {}]
  %s3 = inlined_call_operand.vmem [shape: f32[128,32], index: 3, kind: input, shape index: {}]
  %s4 = inlined_call_operand.vmem [shape: f32[128,1], index: 4, kind: input, shape index: {}]
  %s5 = inlined_call_operand.vmem [shape: f32[4,32], index: 5, kind: input, shape index: {}]
  %s6 = inlined_call_operand.vmem [shape: f32[4,1], index: 6, kind: input, shape index: {}]
  %s7 = inlined_call_operand.hbm [shape: f32[4,128], index: 7, kind: output, shape index: {}]
  %s8 = sld [smem:[#allocation0]]
  $region42: #{tpu_custom_call.1} parent=0
    _
  %s10 = ssub.s32 1, %s8
  %s11 = scalar_select 0, %s10, %s8
  $region1: #{tpu_custom_call.1} parent=0
    #allocation3 [shape = 'u8[786432]{0}', space=vmem, size = 0xc0000, scoped, tag = 'input window, operand 0, single buffered']
    #allocation4 [shape = 's32[1]{0}', space=sflag, size = 0x4, scoped, tag = 'scoped memory for tpu_custom_call.1']
    #allocation5 [shape = 's32[1]{0}', space=sflag, size = 0x4, scoped, tag = 'scoped memory for tpu_custom_call.1']
    #allocation6 [shape = 'u8[2048]{0}', space=vmem, size = 0x800, scoped, tag = 'output window, operand 0, single buffered']
    %12 = vsyncpa [#allocation4], 0
    %13 = vsyncpa [#allocation5], 0
    // Predicated region
    $region2: #{tpu_custom_call.1} parent=1 // pred_check
      _
    $region3: #{tpu_custom_call.1} parent=1 // pred_check_branch
      %15 = sbr.rel (0) target = $region5
    $region4: #{tpu_custom_call.1} parent=1 // pred_region
      %s17 = ssub.s32 24576, 24576
      %18 = vsyncadd [#allocation4], %s17
      %s19 = sshll.u32 [#allocation3], 4
      %s20 = int_to_ptr.vmem [resolvable:$true] %s19
      %25 = dma.hbm_to_vmem [thread:$0]  %s0, 24576, %s20, [#allocation4], 128, 128, 8
    $region5: #{tpu_custom_call.1} parent=1 // pred_fallthru
      _
    // Predicated region
    $region6: #{tpu_custom_call.1} parent=1 // pred_check
      _
    $region7: #{tpu_custom_call.1} parent=1 // pred_check_branch
      %27 = sbr.rel (0) target = $region9
    $region8: #{tpu_custom_call.1} parent=1 // pred_region
      _
    $region9: #{tpu_custom_call.1} parent=1 // pred_fallthru
      _
    // Predicated region
    $region10: #{tpu_custom_call.1} parent=1 // pred_check
      _
    $region11: #{tpu_custom_call.1} parent=1 // pred_check_branch
      %29 = sbr.rel (0) target = $region13
    $region12: #{tpu_custom_call.1} parent=1 // pred_region
      _
    $region13: #{tpu_custom_call.1} parent=1 // pred_fallthru
      _
    // Predicated region
    $region14: #{tpu_custom_call.1} parent=1 // pred_check
      _
    $region15: #{tpu_custom_call.1} parent=1 // pred_check_branch
      %31 = sbr.rel (0) target = $region17
    $region16: #{tpu_custom_call.1} parent=1 // pred_region
      _
    $region17: #{tpu_custom_call.1} parent=1 // pred_fallthru
      _
    // Predicated region
    $region18: #{tpu_custom_call.1} parent=1 // pred_check
      _
    $region19: #{tpu_custom_call.1} parent=1 // pred_check_branch
      %33 = sbr.rel (0) target = $region21
    $region20: #{tpu_custom_call.1} parent=1 // pred_region
      _
    $region21: #{tpu_custom_call.1} parent=1 // pred_fallthru
      _
    // Predicated region
    $region22: #{tpu_custom_call.1} parent=1 // pred_check
      _
    $region23: #{tpu_custom_call.1} parent=1 // pred_check_branch
      %35 = sbr.rel (0) target = $region25
    $region24: #{tpu_custom_call.1} parent=1 // pred_region
      _
    $region25: #{tpu_custom_call.1} parent=1 // pred_fallthru
      _
    // Predicated region
    $region26: #{tpu_custom_call.1} parent=1 // pred_check
      _
    $region27: #{tpu_custom_call.1} parent=1 // pred_check_branch
      %37 = sbr.rel (0) target = $region29
    $region28: #{tpu_custom_call.1} parent=1 // pred_region
      _
    $region29: #{tpu_custom_call.1} parent=1 // pred_fallthru
      _
    // Predicated region
    $region30: #{tpu_custom_call.1} parent=1 // pred_check
      _
    $region31: #{tpu_custom_call.1} parent=1 // pred_check_branch
      %39 = sbr.rel (0) target = $region33
    $region32: #{tpu_custom_call.1} parent=1 // pred_region
      %40 = dma.done [#allocation4], 24576
    $region33: #{tpu_custom_call.1} parent=1 // pred_fallthru
      _
    %v41 = vld [vmem:[%s1] sm:$0xff]
    %v42 = vld [vmem:[%s1 + $0x8] sm:$0xff]
    %v43 = vld [vmem:[%s1 + $0x10] sm:$0xff]
    %v44 = vld [vmem:[%s1 + $0x18] sm:$0xff]
    %v45 = vld [vmem:[%s1 + $0x20] sm:$0xff]
    %v46 = vld [vmem:[%s1 + $0x28] sm:$0xff]
    %v47 = vld [vmem:[%s1 + $0x30] sm:$0xff]
    %v48 = vld [vmem:[%s1 + $0x38] sm:$0xff]
    %v49 = vld [vmem:[%s1 + $0x40] sm:$0xff]
    %v50 = vld [vmem:[%s1 + $0x48] sm:$0xff]
    %v51 = vld [vmem:[%s1 + $0x50] sm:$0xff]
    %v52 = vld [vmem:[%s1 + $0x58] sm:$0xff]
    %v53 = vld [vmem:[%s1 + $0x60] sm:$0xff]
    %v54 = vld [vmem:[%s1 + $0x68] sm:$0xff]
    %v55 = vld [vmem:[%s1 + $0x70] sm:$0xff]
    %v56 = vld [vmem:[%s1 + $0x78] sm:$0xff]
    %v57 = vld [vmem:[#allocation3] sm:$0xff]
    %v58 = vld [vmem:[#allocation3 + $0x8] sm:$0xff]
    %v59 = vld [vmem:[#allocation3 + $0x10] sm:$0xff]
    %v60 = vld [vmem:[#allocation3 + $0x18] sm:$0xff]
    %v61 = vld [vmem:[#allocation3 + $0x20] sm:$0xff]
    %v62 = vld [vmem:[#allocation3 + $0x28] sm:$0xff]
    %v63 = vld [vmem:[#allocation3 + $0x30] sm:$0xff]
    %v64 = vld [vmem:[#allocation3 + $0x38] sm:$0xff]
    %v65 = vld [vmem:[#allocation3 + $0x40] sm:$0xff]
    %v66 = vld [vmem:[#allocation3 + $0x48] sm:$0xff]
    %v67 = vld [vmem:[#allocation3 + $0x50] sm:$0xff]
    %v68 = vld [vmem:[#allocation3 + $0x58] sm:$0xff]
    %v69 = vld [vmem:[#allocation3 + $0x60] sm:$0xff]
    %v70 = vld [vmem:[#allocation3 + $0x68] sm:$0xff]
    %v71 = vld [vmem:[#allocation3 + $0x70] sm:$0xff]
    %v72 = vld [vmem:[#allocation3 + $0x78] sm:$0xff]
    %vm73 = vcmask 261120
    %v75 = vsel %vm73, %v41, 0
    %v78 = vsel %vm73, %v42, 0
    %v81 = vsel %vm73, %v43, 0
    %v84 = vsel %vm73, %v44, 0
    %v87 = vsel %vm73, %v45, 0
    %v90 = vsel %vm73, %v46, 0
    %v93 = vsel %vm73, %v47, 0
    %v96 = vsel %vm73, %v48, 0
    %v99 = vsel %vm73, %v49, 0
    %v102 = vsel %vm73, %v50, 0
    %v105 = vsel %vm73, %v51, 0
    %v108 = vsel %vm73, %v52, 0
    %v111 = vsel %vm73, %v53, 0
    %v114 = vsel %vm73, %v54, 0
    %v117 = vsel %vm73, %v55, 0
    %v120 = vsel %vm73, %v56, 0
    %122 = vmatprep.subr.mxu0 0.0
    %123 = vmatpush1.msra.mxu0 0.0
    %124 = vmatprep.subr.mxu0 0.0
    %125 = vmatpush1.msra.mxu0 0.0
    %126 = vmatprep.subr.mxu0 0.0
    %127 = vmatpush1.msra.mxu0 0.0
    %128 = vmatprep.subr.mxu0 0.0
    %129 = vmatpush1.msra.mxu0 0.0
    %130 = vmatprep.subr.mxu0 0.0
    %131 = vmatpush1.msra.mxu0 0.0
    %132 = vmatprep.subr.mxu0 0.0
    %133 = vmatpush1.msra.mxu0 0.0
    %134 = vmatprep.subr.mxu0 0.0
    %135 = vmatpush1.msra.mxu0 0.0
    %136 = vmatprep.subr.mxu0 0.0
    %137 = vmatpush1.msra.mxu0 0.0
    %138 = vmatprep.subr.mxu0 0.0
    %139 = vmatpush1.msra.mxu0 0.0
    %140 = vmatprep.subr.mxu0 0.0
    %141 = vmatpush1.msra.mxu0 0.0
    %142 = vmatprep.subr.mxu0 0.0
    %143 = vmatpush1.msra.mxu0 0.0
    %144 = vmatprep.subr.mxu0 0.0
    %145 = vmatpush1.msra.mxu0 0.0
    %146 = vmatprep.subr.mxu0 0.0
    %147 = vmatpush1.msra.mxu0 0.0
    %148 = vmatprep.subr.mxu0 0.0
    %149 = vmatpush1.msra.mxu0 0.0
    %150 = vmatprep.subr.mxu0 0.0
    %151 = vmatpush1.msra.mxu0 0.0
    %152 = vmatprep.subr.mxu0 0.0
    %153 = vmatpush1.msra.mxu0 0.0
    %154 = vmatprep.subr.mxu0 0.0
    %155 = vmatpush2.msra.mxu0 0.0
    %156 = vmatprep.subr.mxu0 0.0
    %157 = vmatpush2.msra.mxu0 0.0
    %158 = vmatprep.subr.mxu0 0.0
    %159 = vmatpush2.msra.mxu0 0.0
    %160 = vmatprep.subr.mxu0 0.0
    %161 = vmatpush2.msra.mxu0 0.0
    %162 = vmatprep.subr.mxu0 0.0
    %163 = vmatpush2.msra.mxu0 0.0
    %164 = vmatprep.subr.mxu0 0.0
    %165 = vmatpush2.msra.mxu0 0.0
    %166 = vmatprep.subr.mxu0 0.0
    %167 = vmatpush2.msra.mxu0 0.0
    %168 = vmatprep.subr.mxu0 0.0
    %169 = vmatpush2.msra.mxu0 0.0
    %170 = vmatprep.subr.mxu0 0.0
    %171 = vmatpush2.msra.mxu0 0.0
    %172 = vmatprep.subr.mxu0 0.0
    %173 = vmatpush2.msra.mxu0 0.0
    %174 = vmatprep.subr.mxu0 0.0
    %175 = vmatpush2.msra.mxu0 0.0
    %176 = vmatprep.subr.mxu0 0.0
    %177 = vmatpush2.msra.mxu0 0.0
    %178 = vmatprep.subr.mxu0 0.0
    %179 = vmatpush2.msra.mxu0 0.0
    %180 = vmatprep.subr.mxu0 0.0
    %181 = vmatpush2.msra.mxu0 0.0
    %182 = vmatprep.subr.mxu0 0.0
    %183 = vmatpush2.msra.mxu0 0.0
    %184 = vmatprep.subr.mxu0 0.0
    %185 = vmatpush2.msra.mxu0 0.0
    %186 = vmatprep.mubr.f32.mxu0 0.0
    %187 = vmatmul.mubr.f32.gmra.mxu0 %v75
    %v188 = vpop.f32.mrf.mxu0
    %v189 = vadd.f32 0.0, %v188
    %v190 = vpop.f32.mrf.mxu0
    %191 = vmatprep.mubr.f32.mxu0 0.0
    %192 = vmatmul.mubr.f32.gmra.mxu0 %v78
    %v193 = vpop.f32.mrf.mxu0
    %v194 = vadd.f32 0.0, %v193
    %v195 = vpop.f32.mrf.mxu0
    %196 = vmatprep.mubr.f32.mxu0 0.0
    %197 = vmatmul.mubr.f32.gmra.mxu0 %v81
    %v198 = vpop.f32.mrf.mxu0
    %v199 = vadd.f32 0.0, %v198
    %v200 = vpop.f32.mrf.mxu0
    %201 = vmatprep.mubr.f32.mxu0 0.0
    %202 = vmatmul.mubr.f32.gmra.mxu0 %v84
    %v203 = vpop.f32.mrf.mxu0
    %v204 = vadd.f32 0.0, %v203
    %v205 = vpop.f32.mrf.mxu0
    %206 = vmatprep.mubr.f32.mxu0 0.0
    %207 = vmatmul.mubr.f32.gmra.mxu0 %v87
    %v208 = vpop.f32.mrf.mxu0
    %v209 = vadd.f32 0.0, %v208
    %v210 = vpop.f32.mrf.mxu0
    %211 = vmatprep.mubr.f32.mxu0 0.0
    %212 = vmatmul.mubr.f32.gmra.mxu0 %v90
    %v213 = vpop.f32.mrf.mxu0
    %v214 = vadd.f32 0.0, %v213
    %v215 = vpop.f32.mrf.mxu0
    %216 = vmatprep.mubr.f32.mxu0 0.0
    %217 = vmatmul.mubr.f32.gmra.mxu0 %v93
    %v218 = vpop.f32.mrf.mxu0
    %v219 = vadd.f32 0.0, %v218
    %v220 = vpop.f32.mrf.mxu0
    %221 = vmatprep.mubr.f32.mxu0 0.0
    %222 = vmatmul.mubr.f32.gmra.mxu0 %v96
    %v223 = vpop.f32.mrf.mxu0
    %v224 = vadd.f32 0.0, %v223
    %v225 = vpop.f32.mrf.mxu0
    %226 = vmatprep.mubr.f32.mxu0 0.0
    %227 = vmatmul.mubr.f32.gmra.mxu0 %v99
    %v228 = vpop.f32.mrf.mxu0
    %v229 = vadd.f32 0.0, %v228
    %v230 = vpop.f32.mrf.mxu0
    %231 = vmatprep.mubr.f32.mxu0 0.0
    %232 = vmatmul.mubr.f32.gmra.mxu0 %v102
    %v233 = vpop.f32.mrf.mxu0
    %v234 = vadd.f32 0.0, %v233
    %v235 = vpop.f32.mrf.mxu0
    %236 = vmatprep.mubr.f32.mxu0 0.0
    %237 = vmatmul.mubr.f32.gmra.mxu0 %v105
    %v238 = vpop.f32.mrf.mxu0
    %v239 = vadd.f32 0.0, %v238
    %v240 = vpop.f32.mrf.mxu0
    %241 = vmatprep.mubr.f32.mxu0 0.0
    %242 = vmatmul.mubr.f32.gmra.mxu0 %v108
    %v243 = vpop.f32.mrf.mxu0
    %v244 = vadd.f32 0.0, %v243
    %v245 = vpop.f32.mrf.mxu0
    %246 = vmatprep.mubr.f32.mxu0 0.0
    %247 = vmatmul.mubr.f32.gmra.mxu0 %v111
    %v248 = vpop.f32.mrf.mxu0
    %v249 = vadd.f32 0.0, %v248
    %v250 = vpop.f32.mrf.mxu0
    %251 = vmatprep.mubr.f32.mxu0 0.0
    %252 = vmatmul.mubr.f32.gmra.mxu0 %v114
    %v253 = vpop.f32.mrf.mxu0
    %v254 = vadd.f32 0.0, %v253
    %v255 = vpop.f32.mrf.mxu0
    %256 = vmatprep.mubr.f32.mxu0 0.0
    %257 = vmatmul.mubr.f32.gmra.mxu0 %v117
    %v258 = vpop.f32.mrf.mxu0
    %v259 = vadd.f32 0.0, %v258
    %v260 = vpop.f32.mrf.mxu0
    %261 = vmatprep.mubr.f32.mxu0 0.0
    %262 = vmatmul.mubr.f32.gmra.mxu0 %v120
    %v263 = vpop.f32.mrf.mxu0
    %v264 = vadd.f32 0.0, %v263
    %v265 = vpop.f32.mrf.mxu0
    %266 = vdwg.mxu0
    %v267 = vadd.f32 %v57, %v189
    %v268 = vadd.f32 %v58, %v194
    %v269 = vadd.f32 %v59, %v199
    %v270 = vadd.f32 %v60, %v204
    %v271 = vadd.f32 %v61, %v209
    %v272 = vadd.f32 %v62, %v214
    %v273 = vadd.f32 %v63, %v219
    %v274 = vadd.f32 %v64, %v224
    %v275 = vadd.f32 %v65, %v229
    %v276 = vadd.f32 %v66, %v234
    %v277 = vadd.f32 %v67, %v239
    %v278 = vadd.f32 %v68, %v244
    %v279 = vadd.f32 %v69, %v249
    %v280 = vadd.f32 %v70, %v254
    %v281 = vadd.f32 %v71, %v259
    %v282 = vadd.f32 %v72, %v264
    %v283 = vmul.f32 %v267, 0.5
    %v284 = vmul.f32 %v268, 0.5
    %v285 = vmul.f32 %v269, 0.5
    %v286 = vmul.f32 %v270, 0.5
    %v287 = vtanh.pop %v283
    %v288 = vtanh.pop %v284
    %v289 = vtanh.pop %v285
    %v290 = vtanh.pop %v286
    %v291 = vadd.f32 %v287, 1.0
    %v292 = vadd.f32 %v288, 1.0
    %v293 = vadd.f32 %v289, 1.0
    %v294 = vadd.f32 %v290, 1.0
    %v295 = vmul.f32 %v291, 0.5
    %v296 = vmul.f32 %v292, 0.5
    %v297 = vmul.f32 %v293, 0.5
    %v298 = vmul.f32 %v294, 0.5
    %v299 = vmul.f32 %v271, 0.5
    %v300 = vmul.f32 %v272, 0.5
    %v301 = vmul.f32 %v273, 0.5
    %v302 = vmul.f32 %v274, 0.5
    %v303 = vtanh.pop %v299
    %v304 = vtanh.pop %v300
    %v305 = vtanh.pop %v301
    %v306 = vtanh.pop %v302
    %v307 = vadd.f32 %v303, 1.0
    %v308 = vadd.f32 %v304, 1.0
    %v309 = vadd.f32 %v305, 1.0
    %v310 = vadd.f32 %v306, 1.0
    %v311 = vmul.f32 %v307, 0.5
    %v312 = vmul.f32 %v308, 0.5
    %v313 = vmul.f32 %v309, 0.5
    %v314 = vmul.f32 %v310, 0.5
    %v315 = vtanh.pop %v275
    %v316 = vtanh.pop %v276
    %v317 = vtanh.pop %v277
    %v318 = vtanh.pop %v278
    %v319 = vmul.f32 %v279, 0.5
    %v320 = vmul.f32 %v280, 0.5
    %v321 = vmul.f32 %v281, 0.5
    %v322 = vmul.f32 %v282, 0.5
    %v323 = vtanh.pop %v319
    %v324 = vtanh.pop %v320
    %v325 = vtanh.pop %v321
    %v326 = vtanh.pop %v322
    %v327 = vadd.f32 %v323, 1.0
    %v328 = vadd.f32 %v324, 1.0
    %v329 = vadd.f32 %v325, 1.0
    %v330 = vadd.f32 %v326, 1.0
    %v331 = vmul.f32 %v327, 0.5
    %v332 = vmul.f32 %v328, 0.5
    %v333 = vmul.f32 %v329, 0.5
    %v334 = vmul.f32 %v330, 0.5
    %v335 = vmul.f32 %v311, 0.0
    %v336 = vmul.f32 %v312, 0.0
    %v337 = vmul.f32 %v313, 0.0
    %v338 = vmul.f32 %v314, 0.0
    %v339 = vmul.f32 %v295, %v315
    %v340 = vmul.f32 %v296, %v316
    %v341 = vmul.f32 %v297, %v317
    %v342 = vmul.f32 %v298, %v318
    %v343 = vadd.f32 %v335, %v339
    %v344 = vadd.f32 %v336, %v340
    %v345 = vadd.f32 %v337, %v341
    %v346 = vadd.f32 %v338, %v342
    %v347 = vtanh.pop %v343
    %v348 = vtanh.pop %v344
    %v349 = vtanh.pop %v345
    %v350 = vtanh.pop %v346
    %v351 = vmul.f32 %v331, %v347
    %v352 = vmul.f32 %v332, %v348
    %v353 = vmul.f32 %v333, %v349
    %v354 = vmul.f32 %v334, %v350
    %355 = vst [vmem:[#allocation2] sm:$0xff] %v351
    %356 = vst [vmem:[#allocation2 + $0x8] sm:$0xff] %v352
    %357 = vst [vmem:[#allocation2 + $0x10] sm:$0xff] %v353
    %358 = vst [vmem:[#allocation2 + $0x18] sm:$0xff] %v354
    %s359 = scalar_lea.vmem [#allocation3], 128
    %v360 = vld [vmem:[%s359] sm:$0xff]
    %v361 = vld [vmem:[%s359 + $0x8] sm:$0xff]
    %v362 = vld [vmem:[%s359 + $0x10] sm:$0xff]
    %v363 = vld [vmem:[%s359 + $0x18] sm:$0xff]
    %v364 = vld [vmem:[%s359 + $0x20] sm:$0xff]
    %v365 = vld [vmem:[%s359 + $0x28] sm:$0xff]
    %v366 = vld [vmem:[%s359 + $0x30] sm:$0xff]
    %v367 = vld [vmem:[%s359 + $0x38] sm:$0xff]
    %v368 = vld [vmem:[%s359 + $0x40] sm:$0xff]
    %v369 = vld [vmem:[%s359 + $0x48] sm:$0xff]
    %v370 = vld [vmem:[%s359 + $0x50] sm:$0xff]
    %v371 = vld [vmem:[%s359 + $0x58] sm:$0xff]
    %v372 = vld [vmem:[%s359 + $0x60] sm:$0xff]
    %v373 = vld [vmem:[%s359 + $0x68] sm:$0xff]
    %v374 = vld [vmem:[%s359 + $0x70] sm:$0xff]
    %v375 = vld [vmem:[%s359 + $0x78] sm:$0xff]
    %376 = vmatprep.subr.mxu0 0.0
    %377 = vmatpush1.msra.mxu0 0.0
    %378 = vmatprep.subr.mxu0 0.0
    %379 = vmatpush1.msra.mxu0 0.0
    %380 = vmatprep.subr.mxu0 0.0
    %381 = vmatpush1.msra.mxu0 0.0
    %382 = vmatprep.subr.mxu0 0.0
    %383 = vmatpush1.msra.mxu0 0.0
    %384 = vmatprep.subr.mxu0 0.0
    %385 = vmatpush1.msra.mxu0 0.0
    %386 = vmatprep.subr.mxu0 0.0
    %387 = vmatpush1.msra.mxu0 0.0
    %388 = vmatprep.subr.mxu0 0.0
    %389 = vmatpush1.msra.mxu0 0.0
    %390 = vmatprep.subr.mxu0 0.0
    %391 = vmatpush1.msra.mxu0 0.0
    %392 = vmatprep.subr.mxu0 0.0
    %393 = vmatpush1.msra.mxu0 0.0
    %394 = vmatprep.subr.mxu0 0.0
    %395 = vmatpush1.msra.mxu0 0.0
    %396 = vmatprep.subr.mxu0 0.0
    %397 = vmatpush1.msra.mxu0 0.0
    %398 = vmatprep.subr.mxu0 0.0
    %399 = vmatpush1.msra.mxu0 0.0
    %400 = vmatprep.subr.mxu0 0.0
    %401 = vmatpush1.msra.mxu0 %v354
    %402 = vmatprep.subr.mxu0 0.0
    %403 = vmatpush1.msra.mxu0 %v353
    %404 = vmatprep.subr.mxu0 0.0
    %405 = vmatpush1.msra.mxu0 %v352
    %406 = vmatprep.subr.mxu0 0.0
    %407 = vmatpush1.msra.mxu0 %v351
    %408 = vmatprep.subr.mxu0 0.0
    %409 = vmatpush2.msra.mxu0 0.0
    %410 = vmatprep.subr.mxu0 0.0
    %411 = vmatpush2.msra.mxu0 0.0
    %412 = vmatprep.subr.mxu0 0.0
    %413 = vmatpush2.msra.mxu0 0.0
    %414 = vmatprep.subr.mxu0 0.0
    %415 = vmatpush2.msra.mxu0 0.0
    %416 = vmatprep.subr.mxu0 0.0
    %417 = vmatpush2.msra.mxu0 0.0
    %418 = vmatprep.subr.mxu0 0.0
    %419 = vmatpush2.msra.mxu0 0.0
    %420 = vmatprep.subr.mxu0 0.0
    %421 = vmatpush2.msra.mxu0 0.0
    %422 = vmatprep.subr.mxu0 0.0
    %423 = vmatpush2.msra.mxu0 0.0
    %424 = vmatprep.subr.mxu0 0.0
    %425 = vmatpush2.msra.mxu0 0.0
    %426 = vmatprep.subr.mxu0 0.0
    %427 = vmatpush2.msra.mxu0 0.0
    %428 = vmatprep.subr.mxu0 0.0
    %429 = vmatpush2.msra.mxu0 0.0
    %430 = vmatprep.subr.mxu0 0.0
    %431 = vmatpush2.msra.mxu0 0.0
    %432 = vmatprep.subr.mxu0 0.0
    %433 = vmatpush2.msra.mxu0 0.0
    %434 = vmatprep.subr.mxu0 0.0
    %435 = vmatpush2.msra.mxu0 0.0
    %436 = vmatprep.subr.mxu0 0.0
    %437 = vmatpush2.msra.mxu0 0.0
    %438 = vmatprep.subr.mxu0 0.0
    %439 = vmatpush2.msra.mxu0 0.0
    %440 = vmatprep.mubr.f32.mxu0 0.0
    %441 = vmatmul.mubr.f32.gmra.mxu0 %v75
    %v442 = vpop.f32.mrf.mxu0
    %v443 = vadd.f32 0.0, %v442
    %v444 = vpop.f32.mrf.mxu0
    %445 = vmatprep.mubr.f32.mxu0 0.0
    %446 = vmatmul.mubr.f32.gmra.mxu0 %v78
    %v447 = vpop.f32.mrf.mxu0
    %v448 = vadd.f32 0.0, %v447
    %v449 = vpop.f32.mrf.mxu0
    %450 = vmatprep.mubr.f32.mxu0 0.0
    %451 = vmatmul.mubr.f32.gmra.mxu0 %v81
    %v452 = vpop.f32.mrf.mxu0
    %v453 = vadd.f32 0.0, %v452
    %v454 = vpop.f32.mrf.mxu0
    %455 = vmatprep.mubr.f32.mxu0 0.0
    %456 = vmatmul.mubr.f32.gmra.mxu0 %v84
    %v457 = vpop.f32.mrf.mxu0
    %v458 = vadd.f32 0.0, %v457
    %v459 = vpop.f32.mrf.mxu0
    %460 = vmatprep.mubr.f32.mxu0 0.0
    %461 = vmatmul.mubr.f32.gmra.mxu0 %v87
    %v462 = vpop.f32.mrf.mxu0
    %v463 = vadd.f32 0.0, %v462
    %v464 = vpop.f32.mrf.mxu0
    %465 = vmatprep.mubr.f32.mxu0 0.0
    %466 = vmatmul.mubr.f32.gmra.mxu0 %v90
    %v467 = vpop.f32.mrf.mxu0
    %v468 = vadd.f32 0.0, %v467
    %v469 = vpop.f32.mrf.mxu0
    %470 = vmatprep.mubr.f32.mxu0 0.0
    %471 = vmatmul.mubr.f32.gmra.mxu0 %v93
    %v472 = vpop.f32.mrf.mxu0
    %v473 = vadd.f32 0.0, %v472
    %v474 = vpop.f32.mrf.mxu0
    %475 = vmatprep.mubr.f32.mxu0 0.0
    %476 = vmatmul.mubr.f32.gmra.mxu0 %v96
    %v477 = vpop.f32.mrf.mxu0
    %v478 = vadd.f32 0.0, %v477
    %v479 = vpop.f32.mrf.mxu0
    %480 = vmatprep.mubr.f32.mxu0 0.0
    %481 = vmatmul.mubr.f32.gmra.mxu0 %v99
    %v482 = vpop.f32.mrf.mxu0
    %v483 = vadd.f32 0.0, %v482
    %v484 = vpop.f32.mrf.mxu0
    %485 = vmatprep.mubr.f32.mxu0 0.0
    %486 = vmatmul.mubr.f32.gmra.mxu0 %v102
    %v487 = vpop.f32.mrf.mxu0
    %v488 = vadd.f32 0.0, %v487
    %v489 = vpop.f32.mrf.mxu0
    %490 = vmatprep.mubr.f32.mxu0 0.0
    %491 = vmatmul.mubr.f32.gmra.mxu0 %v105
    %v492 = vpop.f32.mrf.mxu0
    %v493 = vadd.f32 0.0, %v492
    %v494 = vpop.f32.mrf.mxu0
    %495 = vmatprep.mubr.f32.mxu0 0.0
    %496 = vmatmul.mubr.f32.gmra.mxu0 %v108
    %v497 = vpop.f32.mrf.mxu0
    %v498 = vadd.f32 0.0, %v497
    %v499 = vpop.f32.mrf.mxu0
    %500 = vmatprep.mubr.f32.mxu0 0.0
    %501 = vmatmul.mubr.f32.gmra.mxu0 %v111
    %v502 = vpop.f32.mrf.mxu0
    %v503 = vadd.f32 0.0, %v502
    %v504 = vpop.f32.mrf.mxu0
    %505 = vmatprep.mubr.f32.mxu0 0.0
    %506 = vmatmul.mubr.f32.gmra.mxu0 %v114
    %v507 = vpop.f32.mrf.mxu0
    %v508 = vadd.f32 0.0, %v507
    %v509 = vpop.f32.mrf.mxu0
    %510 = vmatprep.mubr.f32.mxu0 0.0
    %511 = vmatmul.mubr.f32.gmra.mxu0 %v117
    %v512 = vpop.f32.mrf.mxu0
    %v513 = vadd.f32 0.0, %v512
    %v514 = vpop.f32.mrf.mxu0
    %515 = vmatprep.mubr.f32.mxu0 0.0
    %516 = vmatmul.mubr.f32.gmra.mxu0 %v120
    %v517 = vpop.f32.mrf.mxu0
    %v518 = vadd.f32 0.0, %v517
    %v519 = vpop.f32.mrf.mxu0
    %520 = vdwg.mxu0
    %v521 = vadd.f32 %v360, %v443
    %v522 = vadd.f32 %v361, %v448
    %v523 = vadd.f32 %v362, %v453
    %v524 = vadd.f32 %v363, %v458
    %v525 = vadd.f32 %v364, %v463
    %v526 = vadd.f32 %v365, %v468
    %v527 = vadd.f32 %v366, %v473
    %v528 = vadd.f32 %v367, %v478
    %v529 = vadd.f32 %v368, %v483
    %v530 = vadd.f32 %v369, %v488
    %v531 = vadd.f32 %v370, %v493
    %v532 = vadd.f32 %v371, %v498
    %v533 = vadd.f32 %v372, %v503
    %v534 = vadd.f32 %v373, %v508
    %v535 = vadd.f32 %v374, %v513
    %v536 = vadd.f32 %v375, %v518
    %v537 = vmul.f32 %v521, 0.5
    %v538 = vmul.f32 %v522, 0.5
    %v539 = vmul.f32 %v523, 0.5
    %v540 = vmul.f32 %v524, 0.5
    %v541 = vtanh.pop %v537
    %v542 = vtanh.pop %v538
    %v543 = vtanh.pop %v539
    %v544 = vtanh.pop %v540
    %v545 = vadd.f32 %v541, 1.0
    %v546 = vadd.f32 %v542, 1.0
    %v547 = vadd.f32 %v543, 1.0
    %v548 = vadd.f32 %v544, 1.0
    %v549 = vmul.f32 %v545, 0.5
    %v550 = vmul.f32 %v546, 0.5
    %v551 = vmul.f32 %v547, 0.5
    %v552 = vmul.f32 %v548, 0.5
    %v553 = vmul.f32 %v525, 0.5
    %v554 = vmul.f32 %v526, 0.5
    %v555 = vmul.f32 %v527, 0.5
    %v556 = vmul.f32 %v528, 0.5
    %v557 = vtanh.pop %v553
    %v558 = vtanh.pop %v554
    %v559 = vtanh.pop %v555
    %v560 = vtanh.pop %v556
    %v561 = vadd.f32 %v557, 1.0
    %v562 = vadd.f32 %v558, 1.0
    %v563 = vadd.f32 %v559, 1.0
    %v564 = vadd.f32 %v560, 1.0
    %v565 = vmul.f32 %v561, 0.5
    %v566 = vmul.f32 %v562, 0.5
    %v567 = vmul.f32 %v563, 0.5
    %v568 = vmul.f32 %v564, 0.5
    %v569 = vtanh.pop %v529
    %v570 = vtanh.pop %v530
    %v571 = vtanh.pop %v531
    %v572 = vtanh.pop %v532
    %v573 = vmul.f32 %v533, 0.5
    %v574 = vmul.f32 %v534, 0.5
    %v575 = vmul.f32 %v535, 0.5
    %v576 = vmul.f32 %v536, 0.5
    %v577 = vtanh.pop %v573
    %v578 = vtanh.pop %v574
    %v579 = vtanh.pop %v575
    %v580 = vtanh.pop %v576
    %v581 = vadd.f32 %v577, 1.0
    %v582 = vadd.f32 %v578, 1.0
    %v583 = vadd.f32 %v579, 1.0
    %v584 = vadd.f32 %v580, 1.0
    %v585 = vmul.f32 %v581, 0.5
    %v586 = vmul.f32 %v582, 0.5
    %v587 = vmul.f32 %v583, 0.5
    %v588 = vmul.f32 %v584, 0.5
    %v589 = vmul.f32 %v565, %v343
    %v590 = vmul.f32 %v566, %v344
    %v591 = vmul.f32 %v567, %v345
    %v592 = vmul.f32 %v568, %v346
    %v593 = vmul.f32 %v549, %v569
    %v594 = vmul.f32 %v550, %v570
    %v595 = vmul.f32 %v551, %v571
    %v596 = vmul.f32 %v552, %v572
    %v597 = vadd.f32 %v589, %v593
    %v598 = vadd.f32 %v590, %v594
    %v599 = vadd.f32 %v591, %v595
    %v600 = vadd.f32 %v592, %v596
    %v601 = vtanh.pop %v597
    %v602 = vtanh.pop %v598
    %v603 = vtanh.pop %v599
    %v604 = vtanh.pop %v600
    %v605 = vmul.f32 %v585, %v601
    %v606 = vmul.f32 %v586, %v602
    %v607 = vmul.f32 %v587, %v603
    %v608 = vmul.f32 %v588, %v604
    %s609 = scalar_lea.vmem [#allocation2], 32
    %610 = vst [vmem:[%s609] sm:$0xff] %v605
    %611 = vst [vmem:[%s609 + $0x8] sm:$0xff] %v606
    %612 = vst [vmem:[%s609 + $0x10] sm:$0xff] %v607
    %613 = vst [vmem:[%s609 + $0x18] sm:$0xff] %v608
    %s614 = scalar_lea.vmem [#allocation3], 256
    %v615 = vld [vmem:[%s614] sm:$0xff]
    %v616 = vld [vmem:[%s614 + $0x8] sm:$0xff]
    %v617 = vld [vmem:[%s614 + $0x10] sm:$0xff]
    %v618 = vld [vmem:[%s614 + $0x18] sm:$0xff]
    %v619 = vld [vmem:[%s614 + $0x20] sm:$0xff]
    %v620 = vld [vmem:[%s614 + $0x28] sm:$0xff]
    %v621 = vld [vmem:[%s614 + $0x30] sm:$0xff]
    %v622 = vld [vmem:[%s614 + $0x38] sm:$0xff]
    %v623 = vld [vmem:[%s614 + $0x40] sm:$0xff]
    %v624 = vld [vmem:[%s614 + $0x48] sm:$0xff]
    %v625 = vld [vmem:[%s614 + $0x50] sm:$0xff]
    %v626 = vld [vmem:[%s614 + $0x58] sm:$0xff]
    %v627 = vld [vmem:[%s614 + $0x60] sm:$0xff]
    %v628 = vld [vmem:[%s614 + $0x68] sm:$0xff]
    %v629 = vld [vmem:[%s614 + $0x70] sm:$0xff]
    %v630 = vld [vmem:[%s614 + $0x78] sm:$0xff]
    %631 = vmatprep.subr.mxu0 0.0
    %632 = vmatpush1.msra.mxu0 0.0
    %633 = vmatprep.subr.mxu0 0.0
    %634 = vmatpush1.msra.mxu0 0.0
    %635 = vmatprep.subr.mxu0 0.0
    %636 = vmatpush1.msra.mxu0 0.0
    %637 = vmatprep.subr.mxu0 0.0
    %638 = vmatpush1.msra.mxu0 0.0
    %639 = vmatprep.subr.mxu0 0.0
    %640 = vmatpush1.msra.mxu0 0.0
    %641 = vmatprep.subr.mxu0 0.0
    %642 = vmatpush1.msra.mxu0 0.0
    %643 = vmatprep.subr.mxu0 0.0
    %644 = vmatpush1.msra.mxu0 0.0
    %645 = vmatprep.subr.mxu0 0.0
    %646 = vmatpush1.msra.mxu0 0.0
    %647 = vmatprep.subr.mxu0 0.0
    %648 = vmatpush1.msra.mxu0 0.0
    %649 = vmatprep.subr.mxu0 0.0
    %650 = vmatpush1.msra.mxu0 0.0
    %651 = vmatprep.subr.mxu0 0.0
    %652 = vmatpush1.msra.mxu0 0.0
    %653 = vmatprep.subr.mxu0 0.0
    %654 = vmatpush1.msra.mxu0 0.0
    %655 = vmatprep.subr.mxu0 0.0
    %656 = vmatpush1.msra.mxu0 %v608
    %657 = vmatprep.subr.mxu0 0.0
    %658 = vmatpush1.msra.mxu0 %v607
    %659 = vmatprep.subr.mxu0 0.0
    %660 = vmatpush1.msra.mxu0 %v606
    %661 = vmatprep.subr.mxu0 0.0
    %662 = vmatpush1.msra.mxu0 %v605
    %663 = vmatprep.subr.mxu0 0.0
    %664 = vmatpush2.msra.mxu0 0.0
    %665 = vmatprep.subr.mxu0 0.0
    %666 = vmatpush2.msra.mxu0 0.0
    %667 = vmatprep.subr.mxu0 0.0
    %668 = vmatpush2.msra.mxu0 0.0
    %669 = vmatprep.subr.mxu0 0.0
    %670 = vmatpush2.msra.mxu0 0.0
    %671 = vmatprep.subr.mxu0 0.0
    %672 = vmatpush2.msra.mxu0 0.0
    %673 = vmatprep.subr.mxu0 0.0
    %674 = vmatpush2.msra.mxu0 0.0
    %675 = vmatprep.subr.mxu0 0.0
    %676 = vmatpush2.msra.mxu0 0.0
    %677 = vmatprep.subr.mxu0 0.0
    %678 = vmatpush2.msra.mxu0 0.0
    %679 = vmatprep.subr.mxu0 0.0
    %680 = vmatpush2.msra.mxu0 0.0
    %681 = vmatprep.subr.mxu0 0.0
    %682 = vmatpush2.msra.mxu0 0.0
    %683 = vmatprep.subr.mxu0 0.0
    %684 = vmatpush2.msra.mxu0 0.0
    %685 = vmatprep.subr.mxu0 0.0
    %686 = vmatpush2.msra.mxu0 0.0
    %687 = vmatprep.subr.mxu0 0.0
    %688 = vmatpush2.msra.mxu0 0.0
    %689 = vmatprep.subr.mxu0 0.0
    %690 = vmatpush2.msra.mxu0 0.0
    %691 = vmatprep.subr.mxu0 0.0
    %692 = vmatpush2.msra.mxu0 0.0
    %693 = vmatprep.subr.mxu0 0.0
    %694 = vmatpush2.msra.mxu0 0.0
    %695 = vmatprep.mubr.f32.mxu0 0.0
    %696 = vmatmul.mubr.f32.gmra.mxu0 %v75
    %v697 = vpop.f32.mrf.mxu0
    %v698 = vadd.f32 0.0, %v697
    %v699 = vpop.f32.mrf.mxu0
    %700 = vmatprep.mubr.f32.mxu0 0.0
    %701 = vmatmul.mubr.f32.gmra.mxu0 %v78
    %v702 = vpop.f32.mrf.mxu0
    %v703 = vadd.f32 0.0, %v702
    %v704 = vpop.f32.mrf.mxu0
    %705 = vmatprep.mubr.f32.mxu0 0.0
    %706 = vmatmul.mubr.f32.gmra.mxu0 %v81
    %v707 = vpop.f32.mrf.mxu0
    %v708 = vadd.f32 0.0, %v707
    %v709 = vpop.f32.mrf.mxu0
    %710 = vmatprep.mubr.f32.mxu0 0.0
    %711 = vmatmul.mubr.f32.gmra.mxu0 %v84
    %v712 = vpop.f32.mrf.mxu0
    %v713 = vadd.f32 0.0, %v712
    %v714 = vpop.f32.mrf.mxu0
    %715 = vmatprep.mubr.f32.mxu0 0.0
    %716 = vmatmul.mubr.f32.gmra.mxu0 %v87
    %v717 = vpop.f32.mrf.mxu0
    %v718 = vadd.f32 0.0, %v717
    %v719 = vpop.f32.mrf.mxu0
    %720 = vmatprep.mubr.f32.mxu0 0.0
    %721 = vmatmul.mubr.f32.gmra.mxu0 %v90
    %v722 = vpop.f32.mrf.mxu0
    %v723 = vadd.f32 0.0, %v722
    %v724 = vpop.f32.mrf.mxu0
    %725 = vmatprep.mubr.f32.mxu0 0.0
    %726 = vmatmul.mubr.f32.gmra.mxu0 %v93
    %v727 = vpop.f32.mrf.mxu0
    %v728 = vadd.f32 0.0, %v727
    %v729 = vpop.f32.mrf.mxu0
    %730 = vmatprep.mubr.f32.mxu0 0.0
    %731 = vmatmul.mubr.f32.gmra.mxu0 %v96
    %v732 = vpop.f32.mrf.mxu0
    %v733 = vadd.f32 0.0, %v732
    %v734 = vpop.f32.mrf.mxu0
    %735 = vmatprep.mubr.f32.mxu0 0.0
    %736 = vmatmul.mubr.f32.gmra.mxu0 %v99
    %v737 = vpop.f32.mrf.mxu0
    %v738 = vadd.f32 0.0, %v737
    %v739 = vpop.f32.mrf.mxu0
    %740 = vmatprep.mubr.f32.mxu0 0.0
    %741 = vmatmul.mubr.f32.gmra.mxu0 %v102
    %v742 = vpop.f32.mrf.mxu0
    %v743 = vadd.f32 0.0, %v742
    %v744 = vpop.f32.mrf.mxu0
    %745 = vmatprep.mubr.f32.mxu0 0.0
    %746 = vmatmul.mubr.f32.gmra.mxu0 %v105
    %v747 = vpop.f32.mrf.mxu0
    %v748 = vadd.f32 0.0, %v747
    %v749 = vpop.f32.mrf.mxu0
    %750 = vmatprep.mubr.f32.mxu0 0.0
    %751 = vmatmul.mubr.f32.gmra.mxu0 %v108
    %v752 = vpop.f32.mrf.mxu0
    %v753 = vadd.f32 0.0, %v752
    %v754 = vpop.f32.mrf.mxu0
    %755 = vmatprep.mubr.f32.mxu0 0.0
    %756 = vmatmul.mubr.f32.gmra.mxu0 %v111
    %v757 = vpop.f32.mrf.mxu0
    %v758 = vadd.f32 0.0, %v757
    %v759 = vpop.f32.mrf.mxu0
    %760 = vmatprep.mubr.f32.mxu0 0.0
    %761 = vmatmul.mubr.f32.gmra.mxu0 %v114
    %v762 = vpop.f32.mrf.mxu0
    %v763 = vadd.f32 0.0, %v762
    %v764 = vpop.f32.mrf.mxu0
    %765 = vmatprep.mubr.f32.mxu0 0.0
    %766 = vmatmul.mubr.f32.gmra.mxu0 %v117
    %v767 = vpop.f32.mrf.mxu0
    %v768 = vadd.f32 0.0, %v767
    %v769 = vpop.f32.mrf.mxu0
    %770 = vmatprep.mubr.f32.mxu0 0.0
    %771 = vmatmul.mubr.f32.gmra.mxu0 %v120
    %v772 = vpop.f32.mrf.mxu0
    %v773 = vadd.f32 0.0, %v772
    %v774 = vpop.f32.mrf.mxu0
    %775 = vdwg.mxu0
    %v776 = vadd.f32 %v615, %v698
    %v777 = vadd.f32 %v616, %v703
    %v778 = vadd.f32 %v617, %v708
    %v779 = vadd.f32 %v618, %v713
    %v780 = vadd.f32 %v619, %v718
    %v781 = vadd.f32 %v620, %v723
    %v782 = vadd.f32 %v621, %v728
    %v783 = vadd.f32 %v622, %v733
    %v784 = vadd.f32 %v623, %v738
    %v785 = vadd.f32 %v624, %v743
    %v786 = vadd.f32 %v625, %v748
    %v787 = vadd.f32 %v626, %v753
    %v788 = vadd.f32 %v627, %v758
    %v789 = vadd.f32 %v628, %v763
    %v790 = vadd.f32 %v629, %v768
    %v791 = vadd.f32 %v630, %v773
    %v792 = vmul.f32 %v776, 0.5
    %v793 = vmul.f32 %v777, 0.5
    %v794 = vmul.f32 %v778, 0.5
    %v795 = vmul.f32 %v779, 0.5
    %v796 = vtanh.pop %v792
    %v797 = vtanh.pop %v793
    %v798 = vtanh.pop %v794
    %v799 = vtanh.pop %v795
    %v800 = vadd.f32 %v796, 1.0
    %v801 = vadd.f32 %v797, 1.0
    %v802 = vadd.f32 %v798, 1.0
    %v803 = vadd.f32 %v799, 1.0
    %v804 = vmul.f32 %v800, 0.5
    %v805 = vmul.f32 %v801, 0.5
    %v806 = vmul.f32 %v802, 0.5
    %v807 = vmul.f32 %v803, 0.5
    %v808 = vmul.f32 %v780, 0.5
    %v809 = vmul.f32 %v781, 0.5
    %v810 = vmul.f32 %v782, 0.5
    %v811 = vmul.f32 %v783, 0.5
    %v812 = vtanh.pop %v808
    %v813 = vtanh.pop %v809
    %v814 = vtanh.pop %v810
    %v815 = vtanh.pop %v811
    %v816 = vadd.f32 %v812, 1.0
    %v817 = vadd.f32 %v813, 1.0
    %v818 = vadd.f32 %v814, 1.0
    %v819 = vadd.f32 %v815, 1.0
    %v820 = vmul.f32 %v816, 0.5
    %v821 = vmul.f32 %v817, 0.5
    %v822 = vmul.f32 %v818, 0.5
    %v823 = vmul.f32 %v819, 0.5
    %v824 = vtanh.pop %v784
    %v825 = vtanh.pop %v785
    %v826 = vtanh.pop %v786
    %v827 = vtanh.pop %v787
    %v828 = vmul.f32 %v788, 0.5
    %v829 = vmul.f32 %v789, 0.5
    %v830 = vmul.f32 %v790, 0.5
    %v831 = vmul.f32 %v791, 0.5
    %v832 = vtanh.pop %v828
    %v833 = vtanh.pop %v829
    %v834 = vtanh.pop %v830
    %v835 = vtanh.pop %v831
    %v836 = vadd.f32 %v832, 1.0
    %v837 = vadd.f32 %v833, 1.0
    %v838 = vadd.f32 %v834, 1.0
    %v839 = vadd.f32 %v835, 1.0
    %v840 = vmul.f32 %v836, 0.5
    %v841 = vmul.f32 %v837, 0.5
    %v842 = vmul.f32 %v838, 0.5
    %v843 = vmul.f32 %v839, 0.5
    %v844 = vmul.f32 %v820, %v597
    %v845 = vmul.f32 %v821, %v598
    %v846 = vmul.f32 %v822, %v599
    %v847 = vmul.f32 %v823, %v600
    %v848 = vmul.f32 %v804, %v824
    %v849 = vmul.f32 %v805, %v825
    %v850 = vmul.f32 %v806, %v826
    %v851 = vmul.f32 %v807, %v827
    %v852 = vadd.f32 %v844, %v848
    %v853 = vadd.f32 %v845, %v849
    %v854 = vadd.f32 %v846, %v850
    %v855 = vadd.f32 %v847, %v851
    %v856 = vtanh.pop %v852
    %v857 = vtanh.pop %v853
    %v858 = vtanh.pop %v854
    %v859 = vtanh.pop %v855
    %v860 = vmul.f32 %v840, %v856
    %v861 = vmul.f32 %v841, %v857
    %v862 = vmul.f32 %v842, %v858
    %v863 = vmul.f32 %v843, %v859
    %s864 = scalar_lea.vmem [#allocation2], 64
    %865 = vst [vmem:[%s864] sm:$0xff] %v860
    %866 = vst [vmem:[%s864 + $0x8] sm:$0xff] %v861
    %867 = vst [vmem:[%s864 + $0x10] sm:$0xff] %v862
    %868 = vst [vmem:[%s864 + $0x18] sm:$0xff] %v863
    %s869 = scalar_lea.vmem [#allocation3], 384
    %v870 = vld [vmem:[%s869] sm:$0xff]
    %v871 = vld [vmem:[%s869 + $0x8] sm:$0xff]
    %v872 = vld [vmem:[%s869 + $0x10] sm:$0xff]
    %v873 = vld [vmem:[%s869 + $0x18] sm:$0xff]
    %v874 = vld [vmem:[%s869 + $0x20] sm:$0xff]
    %v875 = vld [vmem:[%s869 + $0x28] sm:$0xff]
    %v876 = vld [vmem:[%s869 + $0x30] sm:$0xff]
    %v877 = vld [vmem:[%s869 + $0x38] sm:$0xff]
    %v878 = vld [vmem:[%s869 + $0x40] sm:$0xff]
    %v879 = vld [vmem:[%s869 + $0x48] sm:$0xff]
    %v880 = vld [vmem:[%s869 + $0x50] sm:$0xff]
    %v881 = vld [vmem:[%s869 + $0x58] sm:$0xff]
    %v882 = vld [vmem:[%s869 + $0x60] sm:$0xff]
    %v883 = vld [vmem:[%s869 + $0x68] sm:$0xff]
    %v884 = vld [vmem:[%s869 + $0x70] sm:$0xff]
    %v885 = vld [vmem:[%s869 + $0x78] sm:$0xff]
    %886 = vmatprep.subr.mxu0 0.0
    %887 = vmatpush1.msra.mxu0 0.0
    %888 = vmatprep.subr.mxu0 0.0
    %889 = vmatpush1.msra.mxu0 0.0
    %890 = vmatprep.subr.mxu0 0.0
    %891 = vmatpush1.msra.mxu0 0.0
    %892 = vmatprep.subr.mxu0 0.0
    %893 = vmatpush1.msra.mxu0 0.0
    %894 = vmatprep.subr.mxu0 0.0
    %895 = vmatpush1.msra.mxu0 0.0
    %896 = vmatprep.subr.mxu0 0.0
    %897 = vmatpush1.msra.mxu0 0.0
    %898 = vmatprep.subr.mxu0 0.0
    %899 = vmatpush1.msra.mxu0 0.0
    %900 = vmatprep.subr.mxu0 0.0
    %901 = vmatpush1.msra.mxu0 0.0
    %902 = vmatprep.subr.mxu0 0.0
    %903 = vmatpush1.msra.mxu0 0.0
    %904 = vmatprep.subr.mxu0 0.0
    %905 = vmatpush1.msra.mxu0 0.0
    %906 = vmatprep.subr.mxu0 0.0
    %907 = vmatpush1.msra.mxu0 0.0
    %908 = vmatprep.subr.mxu0 0.0
    %909 = vmatpush1.msra.mxu0 0.0
    %910 = vmatprep.subr.mxu0 0.0
    %911 = vmatpush1.msra.mxu0 %v863
    %912 = vmatprep.subr.mxu0 0.0
    %913 = vmatpush1.msra.mxu0 %v862
    %914 = vmatprep.subr.mxu0 0.0
    %915 = vmatpush1.msra.mxu0 %v861
    %916 = vmatprep.subr.mxu0 0.0
    %917 = vmatpush1.msra.mxu0 %v860
    %918 = vmatprep.subr.mxu0 0.0
    %919 = vmatpush2.msra.mxu0 0.0
    %920 = vmatprep.subr.mxu0 0.0
    %921 = vmatpush2.msra.mxu0 0.0
    %922 = vmatprep.subr.mxu0 0.0
    %923 = vmatpush2.msra.mxu0 0.0
    %924 = vmatprep.subr.mxu0 0.0
    %925 = vmatpush2.msra.mxu0 0.0
    %926 = vmatprep.subr.mxu0 0.0
    %927 = vmatpush2.msra.mxu0 0.0
    %928 = vmatprep.subr.mxu0 0.0
    %929 = vmatpush2.msra.mxu0 0.0
    %930 = vmatprep.subr.mxu0 0.0
    %931 = vmatpush2.msra.mxu0 0.0
    %932 = vmatprep.subr.mxu0 0.0
    %933 = vmatpush2.msra.mxu0 0.0
    %934 = vmatprep.subr.mxu0 0.0
    %935 = vmatpush2.msra.mxu0 0.0
    %936 = vmatprep.subr.mxu0 0.0
    %937 = vmatpush2.msra.mxu0 0.0
    %938 = vmatprep.subr.mxu0 0.0
    %939 = vmatpush2.msra.mxu0 0.0
    %940 = vmatprep.subr.mxu0 0.0
    %941 = vmatpush2.msra.mxu0 0.0
    %942 = vmatprep.subr.mxu0 0.0
    %943 = vmatpush2.msra.mxu0 0.0
    %944 = vmatprep.subr.mxu0 0.0
    %945 = vmatpush2.msra.mxu0 0.0
    %946 = vmatprep.subr.mxu0 0.0
    %947 = vmatpush2.msra.mxu0 0.0
    %948 = vmatprep.subr.mxu0 0.0
    %949 = vmatpush2.msra.mxu0 0.0
    %950 = vmatprep.mubr.f32.mxu0 0.0
    %951 = vmatmul.mubr.f32.gmra.mxu0 %v75
    %v952 = vpop.f32.mrf.mxu0
    %v953 = vadd.f32 0.0, %v952
    %v954 = vpop.f32.mrf.mxu0
    %955 = vmatprep.mubr.f32.mxu0 0.0
    %956 = vmatmul.mubr.f32.gmra.mxu0 %v78
    %v957 = vpop.f32.mrf.mxu0
    %v958 = vadd.f32 0.0, %v957
    %v959 = vpop.f32.mrf.mxu0
    %960 = vmatprep.mubr.f32.mxu0 0.0
    %961 = vmatmul.mubr.f32.gmra.mxu0 %v81
    %v962 = vpop.f32.mrf.mxu0
    %v963 = vadd.f32 0.0, %v962
    %v964 = vpop.f32.mrf.mxu0
    %965 = vmatprep.mubr.f32.mxu0 0.0
    %966 = vmatmul.mubr.f32.gmra.mxu0 %v84
    %v967 = vpop.f32.mrf.mxu0
    %v968 = vadd.f32 0.0, %v967
    %v969 = vpop.f32.mrf.mxu0
    %970 = vmatprep.mubr.f32.mxu0 0.0
    %971 = vmatmul.mubr.f32.gmra.mxu0 %v87
    %v972 = vpop.f32.mrf.mxu0
    %v973 = vadd.f32 0.0, %v972
    %v974 = vpop.f32.mrf.mxu0
    %975 = vmatprep.mubr.f32.mxu0 0.0
    %976 = vmatmul.mubr.f32.gmra.mxu0 %v90
    %v977 = vpop.f32.mrf.mxu0
    %v978 = vadd.f32 0.0, %v977
    %v979 = vpop.f32.mrf.mxu0
    %980 = vmatprep.mubr.f32.mxu0 0.0
    %981 = vmatmul.mubr.f32.gmra.mxu0 %v93
    %v982 = vpop.f32.mrf.mxu0
    %v983 = vadd.f32 0.0, %v982
    %v984 = vpop.f32.mrf.mxu0
    %985 = vmatprep.mubr.f32.mxu0 0.0
    %986 = vmatmul.mubr.f32.gmra.mxu0 %v96
    %v987 = vpop.f32.mrf.mxu0
    %v988 = vadd.f32 0.0, %v987
    %v989 = vpop.f32.mrf.mxu0
    %990 = vmatprep.mubr.f32.mxu0 0.0
    %991 = vmatmul.mubr.f32.gmra.mxu0 %v99
    %v992 = vpop.f32.mrf.mxu0
    %v993 = vadd.f32 0.0, %v992
    %v994 = vpop.f32.mrf.mxu0
    %995 = vmatprep.mubr.f32.mxu0 0.0
    %996 = vmatmul.mubr.f32.gmra.mxu0 %v102
    %v997 = vpop.f32.mrf.mxu0
    %v998 = vadd.f32 0.0, %v997
    %v999 = vpop.f32.mrf.mxu0
    %1000 = vmatprep.mubr.f32.mxu0 0.0
    %1001 = vmatmul.mubr.f32.gmra.mxu0 %v105
    %v1002 = vpop.f32.mrf.mxu0
    %v1003 = vadd.f32 0.0, %v1002
    %v1004 = vpop.f32.mrf.mxu0
    %1005 = vmatprep.mubr.f32.mxu0 0.0
    %1006 = vmatmul.mubr.f32.gmra.mxu0 %v108
    %v1007 = vpop.f32.mrf.mxu0
    %v1008 = vadd.f32 0.0, %v1007
    %v1009 = vpop.f32.mrf.mxu0
    %1010 = vmatprep.mubr.f32.mxu0 0.0
    %1011 = vmatmul.mubr.f32.gmra.mxu0 %v111
    %v1012 = vpop.f32.mrf.mxu0
    %v1013 = vadd.f32 0.0, %v1012
    %v1014 = vpop.f32.mrf.mxu0
    %1015 = vmatprep.mubr.f32.mxu0 0.0
    %1016 = vmatmul.mubr.f32.gmra.mxu0 %v114
    %v1017 = vpop.f32.mrf.mxu0
    %v1018 = vadd.f32 0.0, %v1017
    %v1019 = vpop.f32.mrf.mxu0
    %1020 = vmatprep.mubr.f32.mxu0 0.0
    %1021 = vmatmul.mubr.f32.gmra.mxu0 %v117
    %v1022 = vpop.f32.mrf.mxu0
    %v1023 = vadd.f32 0.0, %v1022
    %v1024 = vpop.f32.mrf.mxu0
    %1025 = vmatprep.mubr.f32.mxu0 0.0
    %1026 = vmatmul.mubr.f32.gmra.mxu0 %v120
    %v1027 = vpop.f32.mrf.mxu0
    %v1028 = vadd.f32 0.0, %v1027
    %v1029 = vpop.f32.mrf.mxu0
    %1030 = vdwg.mxu0
    %v1031 = vadd.f32 %v870, %v953
    %v1032 = vadd.f32 %v871, %v958
    %v1033 = vadd.f32 %v872, %v963
    %v1034 = vadd.f32 %v873, %v968
    %v1035 = vadd.f32 %v874, %v973
    %v1036 = vadd.f32 %v875, %v978
    %v1037 = vadd.f32 %v876, %v983
    %v1038 = vadd.f32 %v877, %v988
    %v1039 = vadd.f32 %v878, %v993
    %v1040 = vadd.f32 %v879, %v998
    %v1041 = vadd.f32 %v880, %v1003
    %v1042 = vadd.f32 %v881, %v1008
    %v1043 = vadd.f32 %v882, %v1013
    %v1044 = vadd.f32 %v883, %v1018
    %v1045 = vadd.f32 %v884, %v1023
    %v1046 = vadd.f32 %v885, %v1028
    %v1047 = vmul.f32 %v1031, 0.5
    %v1048 = vmul.f32 %v1032, 0.5
    %v1049 = vmul.f32 %v1033, 0.5
    %v1050 = vmul.f32 %v1034, 0.5
    %v1051 = vtanh.pop %v1047
    %v1052 = vtanh.pop %v1048
    %v1053 = vtanh.pop %v1049
    %v1054 = vtanh.pop %v1050
    %v1055 = vadd.f32 %v1051, 1.0
    %v1056 = vadd.f32 %v1052, 1.0
    %v1057 = vadd.f32 %v1053, 1.0
    %v1058 = vadd.f32 %v1054, 1.0
    %v1059 = vmul.f32 %v1055, 0.5
    %v1060 = vmul.f32 %v1056, 0.5
    %v1061 = vmul.f32 %v1057, 0.5
    %v1062 = vmul.f32 %v1058, 0.5
    %v1063 = vmul.f32 %v1035, 0.5
    %v1064 = vmul.f32 %v1036, 0.5
    %v1065 = vmul.f32 %v1037, 0.5
    %v1066 = vmul.f32 %v1038, 0.5
    %v1067 = vtanh.pop %v1063
    %v1068 = vtanh.pop %v1064
    %v1069 = vtanh.pop %v1065
    %v1070 = vtanh.pop %v1066
    %v1071 = vadd.f32 %v1067, 1.0
    %v1072 = vadd.f32 %v1068, 1.0
    %v1073 = vadd.f32 %v1069, 1.0
    %v1074 = vadd.f32 %v1070, 1.0
    %v1075 = vmul.f32 %v1071, 0.5
    %v1076 = vmul.f32 %v1072, 0.5
    %v1077 = vmul.f32 %v1073, 0.5
    %v1078 = vmul.f32 %v1074, 0.5
    %v1079 = vtanh.pop %v1039
    %v1080 = vtanh.pop %v1040
    %v1081 = vtanh.pop %v1041
    %v1082 = vtanh.pop %v1042
    %v1083 = vmul.f32 %v1043, 0.5
    %v1084 = vmul.f32 %v1044, 0.5
    %v1085 = vmul.f32 %v1045, 0.5
    %v1086 = vmul.f32 %v1046, 0.5
    %v1087 = vtanh.pop %v1083
    %v1088 = vtanh.pop %v1084
    %v1089 = vtanh.pop %v1085
    %v1090 = vtanh.pop %v1086
    %v1091 = vadd.f32 %v1087, 1.0
    %v1092 = vadd.f32 %v1088, 1.0
    %v1093 = vadd.f32 %v1089, 1.0
    %v1094 = vadd.f32 %v1090, 1.0
    %v1095 = vmul.f32 %v1091, 0.5
    %v1096 = vmul.f32 %v1092, 0.5
    %v1097 = vmul.f32 %v1093, 0.5
    %v1098 = vmul.f32 %v1094, 0.5
    %v1099 = vmul.f32 %v1075, %v852
    %v1100 = vmul.f32 %v1076, %v853
    %v1101 = vmul.f32 %v1077, %v854
    %v1102 = vmul.f32 %v1078, %v855
    %v1103 = vmul.f32 %v1059, %v1079
    %v1104 = vmul.f32 %v1060, %v1080
    %v1105 = vmul.f32 %v1061, %v1081
    %v1106 = vmul.f32 %v1062, %v1082
    %v1107 = vadd.f32 %v1099, %v1103
    %v1108 = vadd.f32 %v1100, %v1104
    %v1109 = vadd.f32 %v1101, %v1105
    %v1110 = vadd.f32 %v1102, %v1106
    %v1111 = vtanh.pop %v1107
    %v1112 = vtanh.pop %v1108
    %v1113 = vtanh.pop %v1109
    %v1114 = vtanh.pop %v1110
    %v1115 = vmul.f32 %v1095, %v1111
    %v1116 = vmul.f32 %v1096, %v1112
    %v1117 = vmul.f32 %v1097, %v1113
    %v1118 = vmul.f32 %v1098, %v1114
    %s1119 = scalar_lea.vmem [#allocation2], 96
    %1120 = vst [vmem:[%s1119] sm:$0xff] %v1115
    %1121 = vst [vmem:[%s1119 + $0x8] sm:$0xff] %v1116
    %1122 = vst [vmem:[%s1119 + $0x10] sm:$0xff] %v1117
    %1123 = vst [vmem:[%s1119 + $0x18] sm:$0xff] %v1118
    %s1124 = scalar_lea.vmem [#allocation3], 512
    %v1125 = vld [vmem:[%s1124] sm:$0xff]
    %v1126 = vld [vmem:[%s1124 + $0x8] sm:$0xff]
    %v1127 = vld [vmem:[%s1124 + $0x10] sm:$0xff]
    %v1128 = vld [vmem:[%s1124 + $0x18] sm:$0xff]
    %v1129 = vld [vmem:[%s1124 + $0x20] sm:$0xff]
    %v1130 = vld [vmem:[%s1124 + $0x28] sm:$0xff]
    %v1131 = vld [vmem:[%s1124 + $0x30] sm:$0xff]
    %v1132 = vld [vmem:[%s1124 + $0x38] sm:$0xff]
    %v1133 = vld [vmem:[%s1124 + $0x40] sm:$0xff]
    %v1134 = vld [vmem:[%s1124 + $0x48] sm:$0xff]
    %v1135 = vld [vmem:[%s1124 + $0x50] sm:$0xff]
    %v1136 = vld [vmem:[%s1124 + $0x58] sm:$0xff]
    %v1137 = vld [vmem:[%s1124 + $0x60] sm:$0xff]
    %v1138 = vld [vmem:[%s1124 + $0x68] sm:$0xff]
    %v1139 = vld [vmem:[%s1124 + $0x70] sm:$0xff]
    %v1140 = vld [vmem:[%s1124 + $0x78] sm:$0xff]
    %1141 = vmatprep.subr.mxu0 0.0
    %1142 = vmatpush1.msra.mxu0 0.0
    %1143 = vmatprep.subr.mxu0 0.0
    %1144 = vmatpush1.msra.mxu0 0.0
    %1145 = vmatprep.subr.mxu0 0.0
    %1146 = vmatpush1.msra.mxu0 0.0
    %1147 = vmatprep.subr.mxu0 0.0
    %1148 = vmatpush1.msra.mxu0 0.0
    %1149 = vmatprep.subr.mxu0 0.0
    %1150 = vmatpush1.msra.mxu0 0.0
    %1151 = vmatprep.subr.mxu0 0.0
    %1152 = vmatpush1.msra.mxu0 0.0
    %1153 = vmatprep.subr.mxu0 0.0
    %1154 = vmatpush1.msra.mxu0 0.0
    %1155 = vmatprep.subr.mxu0 0.0
    %1156 = vmatpush1.msra.mxu0 0.0
    %1157 = vmatprep.subr.mxu0 0.0
    %1158 = vmatpush1.msra.mxu0 0.0
    %1159 = vmatprep.subr.mxu0 0.0
    %1160 = vmatpush1.msra.mxu0 0.0
    %1161 = vmatprep.subr.mxu0 0.0
    %1162 = vmatpush1.msra.mxu0 0.0
    %1163 = vmatprep.subr.mxu0 0.0
    %1164 = vmatpush1.msra.mxu0 0.0
    %1165 = vmatprep.subr.mxu0 0.0
    %1166 = vmatpush1.msra.mxu0 %v1118
    %1167 = vmatprep.subr.mxu0 0.0
    %1168 = vmatpush1.msra.mxu0 %v1117
    %1169 = vmatprep.subr.mxu0 0.0
    %1170 = vmatpush1.msra.mxu0 %v1116
    %1171 = vmatprep.subr.mxu0 0.0
    %1172 = vmatpush1.msra.mxu0 %v1115
    %1173 = vmatprep.subr.mxu0 0.0
    %1174 = vmatpush2.msra.mxu0 0.0
    %1175 = vmatprep.subr.mxu0 0.0
    %1176 = vmatpush2.msra.mxu0 0.0
    %1177 = vmatprep.subr.mxu0 0.0
    %1178 = vmatpush2.msra.mxu0 0.0
    %1179 = vmatprep.subr.mxu0 0.0
    %1180 = vmatpush2.msra.mxu0 0.0
    %1181 = vmatprep.subr.mxu0 0.0
    %1182 = vmatpush2.msra.mxu0 0.0
    %1183 = vmatprep.subr.mxu0 0.0
    %1184 = vmatpush2.msra.mxu0 0.0
    %1185 = vmatprep.subr.mxu0 0.0
    %1186 = vmatpush2.msra.mxu0 0.0
    %1187 = vmatprep.subr.mxu0 0.0
    %1188 = vmatpush2.msra.mxu0 0.0
    %1189 = vmatprep.subr.mxu0 0.0
    %1190 = vmatpush2.msra.mxu0 0.0
    %1191 = vmatprep.subr.mxu0 0.0
    %1192 = vmatpush2.msra.mxu0 0.0
    %1193 = vmatprep.subr.mxu0 0.0
    %1194 = vmatpush2.msra.mxu0 0.0
    %1195 = vmatprep.subr.mxu0 0.0
    %1196 = vmatpush2.msra.mxu0 0.0
    %1197 = vmatprep.subr.mxu0 0.0
    %1198 = vmatpush2.msra.mxu0 0.0
    %1199 = vmatprep.subr.mxu0 0.0
    %1200 = vmatpush2.msra.mxu0 0.0
    %1201 = vmatprep.subr.mxu0 0.0
    %1202 = vmatpush2.msra.mxu0 0.0
    %1203 = vmatprep.subr.mxu0 0.0
    %1204 = vmatpush2.msra.mxu0 0.0
    %1205 = vmatprep.mubr.f32.mxu0 0.0
    %1206 = vmatmul.mubr.f32.gmra.mxu0 %v75
    %v1207 = vpop.f32.mrf.mxu0
    %v1208 = vadd.f32 0.0, %v1207
    %v1209 = vpop.f32.mrf.mxu0
    %1210 = vmatprep.mubr.f32.mxu0 0.0
    %1211 = vmatmul.mubr.f32.gmra.mxu0 %v78
    %v1212 = vpop.f32.mrf.mxu0
    %v1213 = vadd.f32 0.0, %v1212
    %v1214 = vpop.f32.mrf.mxu0
    %1215 = vmatprep.mubr.f32.mxu0 0.0
    %1216 = vmatmul.mubr.f32.gmra.mxu0 %v81
    %v1217 = vpop.f32.mrf.mxu0
    %v1218 = vadd.f32 0.0, %v1217
    %v1219 = vpop.f32.mrf.mxu0
    %1220 = vmatprep.mubr.f32.mxu0 0.0
    %1221 = vmatmul.mubr.f32.gmra.mxu0 %v84
    %v1222 = vpop.f32.mrf.mxu0
    %v1223 = vadd.f32 0.0, %v1222
    %v1224 = vpop.f32.mrf.mxu0
    %1225 = vmatprep.mubr.f32.mxu0 0.0
    %1226 = vmatmul.mubr.f32.gmra.mxu0 %v87
    %v1227 = vpop.f32.mrf.mxu0
    %v1228 = vadd.f32 0.0, %v1227
    %v1229 = vpop.f32.mrf.mxu0
    %1230 = vmatprep.mubr.f32.mxu0 0.0
    %1231 = vmatmul.mubr.f32.gmra.mxu0 %v90
    %v1232 = vpop.f32.mrf.mxu0
    %v1233 = vadd.f32 0.0, %v1232
    %v1234 = vpop.f32.mrf.mxu0
    %1235 = vmatprep.mubr.f32.mxu0 0.0
    %1236 = vmatmul.mubr.f32.gmra.mxu0 %v93
    %v1237 = vpop.f32.mrf.mxu0
    %v1238 = vadd.f32 0.0, %v1237
    %v1239 = vpop.f32.mrf.mxu0
    %1240 = vmatprep.mubr.f32.mxu0 0.0
    %1241 = vmatmul.mubr.f32.gmra.mxu0 %v96
    %v1242 = vpop.f32.mrf.mxu0
    %v1243 = vadd.f32 0.0, %v1242
    %v1244 = vpop.f32.mrf.mxu0
    %1245 = vmatprep.mubr.f32.mxu0 0.0
    %1246 = vmatmul.mubr.f32.gmra.mxu0 %v99
    %v1247 = vpop.f32.mrf.mxu0
    %v1248 = vadd.f32 0.0, %v1247
    %v1249 = vpop.f32.mrf.mxu0
    %1250 = vmatprep.mubr.f32.mxu0 0.0
    %1251 = vmatmul.mubr.f32.gmra.mxu0 %v102
    %v1252 = vpop.f32.mrf.mxu0
    %v1253 = vadd.f32 0.0, %v1252
    %v1254 = vpop.f32.mrf.mxu0
    %1255 = vmatprep.mubr.f32.mxu0 0.0
    %1256 = vmatmul.mubr.f32.gmra.mxu0 %v105
    %v1257 = vpop.f32.mrf.mxu0
    %v1258 = vadd.f32 0.0, %v1257
    %v1259 = vpop.f32.mrf.mxu0
    %1260 = vmatprep.mubr.f32.mxu0 0.0
    %1261 = vmatmul.mubr.f32.gmra.mxu0 %v108
    %v1262 = vpop.f32.mrf.mxu0
    %v1263 = vadd.f32 0.0, %v1262
    %v1264 = vpop.f32.mrf.mxu0
    %1265 = vmatprep.mubr.f32.mxu0 0.0
    %1266 = vmatmul.mubr.f32.gmra.mxu0 %v111
    %v1267 = vpop.f32.mrf.mxu0
    %v1268 = vadd.f32 0.0, %v1267
    %v1269 = vpop.f32.mrf.mxu0
    %1270 = vmatprep.mubr.f32.mxu0 0.0
    %1271 = vmatmul.mubr.f32.gmra.mxu0 %v114
    %v1272 = vpop.f32.mrf.mxu0
    %v1273 = vadd.f32 0.0, %v1272
    %v1274 = vpop.f32.mrf.mxu0
    %1275 = vmatprep.mubr.f32.mxu0 0.0
    %1276 = vmatmul.mubr.f32.gmra.mxu0 %v117
    %v1277 = vpop.f32.mrf.mxu0
    %v1278 = vadd.f32 0.0, %v1277
    %v1279 = vpop.f32.mrf.mxu0
    %1280 = vmatprep.mubr.f32.mxu0 0.0
    %1281 = vmatmul.mubr.f32.gmra.mxu0 %v120
    %v1282 = vpop.f32.mrf.mxu0
    %v1283 = vadd.f32 0.0, %v1282
    %v1284 = vpop.f32.mrf.mxu0
    %1285 = vdwg.mxu0
    %v1286 = vadd.f32 %v1125, %v1208
    %v1287 = vadd.f32 %v1126, %v1213
    %v1288 = vadd.f32 %v1127, %v1218
    %v1289 = vadd.f32 %v1128, %v1223
    %v1290 = vadd.f32 %v1129, %v1228
    %v1291 = vadd.f32 %v1130, %v1233
    %v1292 = vadd.f32 %v1131, %v1238
    %v1293 = vadd.f32 %v1132, %v1243
    %v1294 = vadd.f32 %v1133, %v1248
    %v1295 = vadd.f32 %v1134, %v1253
    %v1296 = vadd.f32 %v1135, %v1258
    %v1297 = vadd.f32 %v1136, %v1263
    %v1298 = vadd.f32 %v1137, %v1268
    %v1299 = vadd.f32 %v1138, %v1273
    %v1300 = vadd.f32 %v1139, %v1278
    %v1301 = vadd.f32 %v1140, %v1283
    %v1302 = vmul.f32 %v1286, 0.5
    %v1303 = vmul.f32 %v1287, 0.5
    %v1304 = vmul.f32 %v1288, 0.5
    %v1305 = vmul.f32 %v1289, 0.5
    %v1306 = vtanh.pop %v1302
    %v1307 = vtanh.pop %v1303
    %v1308 = vtanh.pop %v1304
    %v1309 = vtanh.pop %v1305
    %v1310 = vadd.f32 %v1306, 1.0
    %v1311 = vadd.f32 %v1307, 1.0
    %v1312 = vadd.f32 %v1308, 1.0
    %v1313 = vadd.f32 %v1309, 1.0
    %v1314 = vmul.f32 %v1310, 0.5
    %v1315 = vmul.f32 %v1311, 0.5
    %v1316 = vmul.f32 %v1312, 0.5
    %v1317 = vmul.f32 %v1313, 0.5
    %v1318 = vmul.f32 %v1290, 0.5
    %v1319 = vmul.f32 %v1291, 0.5
    %v1320 = vmul.f32 %v1292, 0.5
    %v1321 = vmul.f32 %v1293, 0.5
    %v1322 = vtanh.pop %v1318
    %v1323 = vtanh.pop %v1319
    %v1324 = vtanh.pop %v1320
    %v1325 = vtanh.pop %v1321
    %v1326 = vadd.f32 %v1322, 1.0
    %v1327 = vadd.f32 %v1323, 1.0
    %v1328 = vadd.f32 %v1324, 1.0
    %v1329 = vadd.f32 %v1325, 1.0
    %v1330 = vmul.f32 %v1326, 0.5
    %v1331 = vmul.f32 %v1327, 0.5
    %v1332 = vmul.f32 %v1328, 0.5
    %v1333 = vmul.f32 %v1329, 0.5
    %v1334 = vtanh.pop %v1294
    %v1335 = vtanh.pop %v1295
    %v1336 = vtanh.pop %v1296
    %v1337 = vtanh.pop %v1297
    %v1338 = vmul.f32 %v1298, 0.5
    %v1339 = vmul.f32 %v1299, 0.5
    %v1340 = vmul.f32 %v1300, 0.5
    %v1341 = vmul.f32 %v1301, 0.5
    %v1342 = vtanh.pop %v1338
    %v1343 = vtanh.pop %v1339
    %v1344 = vtanh.pop %v1340
    %v1345 = vtanh.pop %v1341
    %v1346 = vadd.f32 %v1342, 1.0
    %v1347 = vadd.f32 %v1343, 1.0
    %v1348 = vadd.f32 %v1344, 1.0
    %v1349 = vadd.f32 %v1345, 1.0
    %v1350 = vmul.f32 %v1346, 0.5
    %v1351 = vmul.f32 %v1347, 0.5
    %v1352 = vmul.f32 %v1348, 0.5
    %v1353 = vmul.f32 %v1349, 0.5
    %v1354 = vmul.f32 %v1330, %v1107
    %v1355 = vmul.f32 %v1331, %v1108
    %v1356 = vmul.f32 %v1332, %v1109
    %v1357 = vmul.f32 %v1333, %v1110
    %v1358 = vmul.f32 %v1314, %v1334
    %v1359 = vmul.f32 %v1315, %v1335
    %v1360 = vmul.f32 %v1316, %v1336
    %v1361 = vmul.f32 %v1317, %v1337
    %v1362 = vadd.f32 %v1354, %v1358
    %v1363 = vadd.f32 %v1355, %v1359
    %v1364 = vadd.f32 %v1356, %v1360
    %v1365 = vadd.f32 %v1357, %v1361
    %v1366 = vtanh.pop %v1362
    %v1367 = vtanh.pop %v1363
    %v1368 = vtanh.pop %v1364
    %v1369 = vtanh.pop %v1365
    %v1370 = vmul.f32 %v1350, %v1366
    %v1371 = vmul.f32 %v1351, %v1367
    %v1372 = vmul.f32 %v1352, %v1368
    %v1373 = vmul.f32 %v1353, %v1369
    %s1374 = scalar_lea.vmem [#allocation2], 128
    %1375 = vst [vmem:[%s1374] sm:$0xff] %v1370
    %1376 = vst [vmem:[%s1374 + $0x8] sm:$0xff] %v1371
    %1377 = vst [vmem:[%s1374 + $0x10] sm:$0xff] %v1372
    %1378 = vst [vmem:[%s1374 + $0x18] sm:$0xff] %v1373
    %s1379 = scalar_lea.vmem [#allocation3], 640
    %v1380 = vld [vmem:[%s1379] sm:$0xff]
    %v1381 = vld [vmem:[%s1379 + $0x8] sm:$0xff]
    %v1382 = vld [vmem:[%s1379 + $0x10] sm:$0xff]
    %v1383 = vld [vmem:[%s1379 + $0x18] sm:$0xff]
    %v1384 = vld [vmem:[%s1379 + $0x20] sm:$0xff]
    %v1385 = vld [vmem:[%s1379 + $0x28] sm:$0xff]
    %v1386 = vld [vmem:[%s1379 + $0x30] sm:$0xff]
    %v1387 = vld [vmem:[%s1379 + $0x38] sm:$0xff]
    %v1388 = vld [vmem:[%s1379 + $0x40] sm:$0xff]
    %v1389 = vld [vmem:[%s1379 + $0x48] sm:$0xff]
    %v1390 = vld [vmem:[%s1379 + $0x50] sm:$0xff]
    %v1391 = vld [vmem:[%s1379 + $0x58] sm:$0xff]
    %v1392 = vld [vmem:[%s1379 + $0x60] sm:$0xff]
    %v1393 = vld [vmem:[%s1379 + $0x68] sm:$0xff]
    %v1394 = vld [vmem:[%s1379 + $0x70] sm:$0xff]
    %v1395 = vld [vmem:[%s1379 + $0x78] sm:$0xff]
    %1396 = vmatprep.subr.mxu0 0.0
    %1397 = vmatpush1.msra.mxu0 0.0
    %1398 = vmatprep.subr.mxu0 0.0
    %1399 = vmatpush1.msra.mxu0 0.0
    %1400 = vmatprep.subr.mxu0 0.0
    %1401 = vmatpush1.msra.mxu0 0.0
    %1402 = vmatprep.subr.mxu0 0.0
    %1403 = vmatpush1.msra.mxu0 0.0
    %1404 = vmatprep.subr.mxu0 0.0
    %1405 = vmatpush1.msra.mxu0 0.0
    %1406 = vmatprep.subr.mxu0 0.0
    %1407 = vmatpush1.msra.mxu0 0.0
    %1408 = vmatprep.subr.mxu0 0.0
    %1409 = vmatpush1.msra.mxu0 0.0
    %1410 = vmatprep.subr.mxu0 0.0
    %1411 = vmatpush1.msra.mxu0 0.0
    %1412 = vmatprep.subr.mxu0 0.0
    %1413 = vmatpush1.msra.mxu0 0.0
    %1414 = vmatprep.subr.mxu0 0.0
    %1415 = vmatpush1.msra.mxu0 0.0
    %1416 = vmatprep.subr.mxu0 0.0
    %1417 = vmatpush1.msra.mxu0 0.0
    %1418 = vmatprep.subr.mxu0 0.0
    %1419 = vmatpush1.msra.mxu0 0.0
    %1420 = vmatprep.subr.mxu0 0.0
    %1421 = vmatpush1.msra.mxu0 %v1373
    %1422 = vmatprep.subr.mxu0 0.0
    %1423 = vmatpush1.msra.mxu0 %v1372
    %1424 = vmatprep.subr.mxu0 0.0
    %1425 = vmatpush1.msra.mxu0 %v1371
    %1426 = vmatprep.subr.mxu0 0.0
    %1427 = vmatpush1.msra.mxu0 %v1370
    %1428 = vmatprep.subr.mxu0 0.0
    %1429 = vmatpush2.msra.mxu0 0.0
    %1430 = vmatprep.subr.mxu0 0.0
    %1431 = vmatpush2.msra.mxu0 0.0
    %1432 = vmatprep.subr.mxu0 0.0
    %1433 = vmatpush2.msra.mxu0 0.0
    %1434 = vmatprep.subr.mxu0 0.0
    %1435 = vmatpush2.msra.mxu0 0.0
    %1436 = vmatprep.subr.mxu0 0.0
    %1437 = vmatpush2.msra.mxu0 0.0
    %1438 = vmatprep.subr.mxu0 0.0
    %1439 = vmatpush2.msra.mxu0 0.0
    %1440 = vmatprep.subr.mxu0 0.0
    %1441 = vmatpush2.msra.mxu0 0.0
    %1442 = vmatprep.subr.mxu0 0.0
    %1443 = vmatpush2.msra.mxu0 0.0
    %1444 = vmatprep.subr.mxu0 0.0
    %1445 = vmatpush2.msra.mxu0 0.0
    %1446 = vmatprep.subr.mxu0 0.0
    %1447 = vmatpush2.msra.mxu0 0.0
    %1448 = vmatprep.subr.mxu0 0.0
    %1449 = vmatpush2.msra.mxu0 0.0
    %1450 = vmatprep.subr.mxu0 0.0
    %1451 = vmatpush2.msra.mxu0 0.0
    %1452 = vmatprep.subr.mxu0 0.0
    %1453 = vmatpush2.msra.mxu0 0.0
    %1454 = vmatprep.subr.mxu0 0.0
    %1455 = vmatpush2.msra.mxu0 0.0
    %1456 = vmatprep.subr.mxu0 0.0
    %1457 = vmatpush2.msra.mxu0 0.0
    %1458 = vmatprep.subr.mxu0 0.0
    %1459 = vmatpush2.msra.mxu0 0.0
    %1460 = vmatprep.mubr.f32.mxu0 0.0
    %1461 = vmatmul.mubr.f32.gmra.mxu0 %v75
    %v1462 = vpop.f32.mrf.mxu0
    %v1463 = vadd.f32 0.0, %v1462
    %v1464 = vpop.f32.mrf.mxu0
    %1465 = vmatprep.mubr.f32.mxu0 0.0
    %1466 = vmatmul.mubr.f32.gmra.mxu0 %v78
    %v1467 = vpop.f32.mrf.mxu0
    %v1468 = vadd.f32 0.0, %v1467
    %v1469 = vpop.f32.mrf.mxu0
    %1470 = vmatprep.mubr.f32.mxu0 0.0
    %1471 = vmatmul.mubr.f32.gmra.mxu0 %v81
    %v1472 = vpop.f32.mrf.mxu0
    %v1473 = vadd.f32 0.0, %v1472
    %v1474 = vpop.f32.mrf.mxu0
    %1475 = vmatprep.mubr.f32.mxu0 0.0
    %1476 = vmatmul.mubr.f32.gmra.mxu0 %v84
    %v1477 = vpop.f32.mrf.mxu0
    %v1478 = vadd.f32 0.0, %v1477
    %v1479 = vpop.f32.mrf.mxu0
    %1480 = vmatprep.mubr.f32.mxu0 0.0
    %1481 = vmatmul.mubr.f32.gmra.mxu0 %v87
    %v1482 = vpop.f32.mrf.mxu0
    %v1483 = vadd.f32 0.0, %v1482
    %v1484 = vpop.f32.mrf.mxu0
    %1485 = vmatprep.mubr.f32.mxu0 0.0
    %1486 = vmatmul.mubr.f32.gmra.mxu0 %v90
    %v1487 = vpop.f32.mrf.mxu0
    %v1488 = vadd.f32 0.0, %v1487
    %v1489 = vpop.f32.mrf.mxu0
    %1490 = vmatprep.mubr.f32.mxu0 0.0
    %1491 = vmatmul.mubr.f32.gmra.mxu0 %v93
    %v1492 = vpop.f32.mrf.mxu0
    %v1493 = vadd.f32 0.0, %v1492
    %v1494 = vpop.f32.mrf.mxu0
    %1495 = vmatprep.mubr.f32.mxu0 0.0
    %1496 = vmatmul.mubr.f32.gmra.mxu0 %v96
    %v1497 = vpop.f32.mrf.mxu0
    %v1498 = vadd.f32 0.0, %v1497
    %v1499 = vpop.f32.mrf.mxu0
    %1500 = vmatprep.mubr.f32.mxu0 0.0
    %1501 = vmatmul.mubr.f32.gmra.mxu0 %v99
    %v1502 = vpop.f32.mrf.mxu0
    %v1503 = vadd.f32 0.0, %v1502
    %v1504 = vpop.f32.mrf.mxu0
    %1505 = vmatprep.mubr.f32.mxu0 0.0
    %1506 = vmatmul.mubr.f32.gmra.mxu0 %v102
    %v1507 = vpop.f32.mrf.mxu0
    %v1508 = vadd.f32 0.0, %v1507
    %v1509 = vpop.f32.mrf.mxu0
    %1510 = vmatprep.mubr.f32.mxu0 0.0
    %1511 = vmatmul.mubr.f32.gmra.mxu0 %v105
    %v1512 = vpop.f32.mrf.mxu0
    %v1513 = vadd.f32 0.0, %v1512
    %v1514 = vpop.f32.mrf.mxu0
    %1515 = vmatprep.mubr.f32.mxu0 0.0
    %1516 = vmatmul.mubr.f32.gmra.mxu0 %v108
    %v1517 = vpop.f32.mrf.mxu0
    %v1518 = vadd.f32 0.0, %v1517
    %v1519 = vpop.f32.mrf.mxu0
    %1520 = vmatprep.mubr.f32.mxu0 0.0
    %1521 = vmatmul.mubr.f32.gmra.mxu0 %v111
    %v1522 = vpop.f32.mrf.mxu0
    %v1523 = vadd.f32 0.0, %v1522
    %v1524 = vpop.f32.mrf.mxu0
    %1525 = vmatprep.mubr.f32.mxu0 0.0
    %1526 = vmatmul.mubr.f32.gmra.mxu0 %v114
    %v1527 = vpop.f32.mrf.mxu0
    %v1528 = vadd.f32 0.0, %v1527
    %v1529 = vpop.f32.mrf.mxu0
    %1530 = vmatprep.mubr.f32.mxu0 0.0
    %1531 = vmatmul.mubr.f32.gmra.mxu0 %v117
    %v1532 = vpop.f32.mrf.mxu0
    %v1533 = vadd.f32 0.0, %v1532
    %v1534 = vpop.f32.mrf.mxu0
    %1535 = vmatprep.mubr.f32.mxu0 0.0
    %1536 = vmatmul.mubr.f32.gmra.mxu0 %v120
    %v1537 = vpop.f32.mrf.mxu0
    %v1538 = vadd.f32 0.0, %v1537
    %v1539 = vpop.f32.mrf.mxu0
    %1540 = vdwg.mxu0
    %v1541 = vadd.f32 %v1380, %v1463
    %v1542 = vadd.f32 %v1381, %v1468
    %v1543 = vadd.f32 %v1382, %v1473
    %v1544 = vadd.f32 %v1383, %v1478
    %v1545 = vadd.f32 %v1384, %v1483
    %v1546 = vadd.f32 %v1385, %v1488
    %v1547 = vadd.f32 %v1386, %v1493
    %v1548 = vadd.f32 %v1387, %v1498
    %v1549 = vadd.f32 %v1388, %v1503
    %v1550 = vadd.f32 %v1389, %v1508
    %v1551 = vadd.f32 %v1390, %v1513
    %v1552 = vadd.f32 %v1391, %v1518
    %v1553 = vadd.f32 %v1392, %v1523
    %v1554 = vadd.f32 %v1393, %v1528
    %v1555 = vadd.f32 %v1394, %v1533
    %v1556 = vadd.f32 %v1395, %v1538
    %v1557 = vmul.f32 %v1541, 0.5
    %v1558 = vmul.f32 %v1542, 0.5
    %v1559 = vmul.f32 %v1543, 0.5
    %v1560 = vmul.f32 %v1544, 0.5
    %v1561 = vtanh.pop %v1557
    %v1562 = vtanh.pop %v1558
    %v1563 = vtanh.pop %v1559
    %v1564 = vtanh.pop %v1560
    %v1565 = vadd.f32 %v1561, 1.0
    %v1566 = vadd.f32 %v1562, 1.0
    %v1567 = vadd.f32 %v1563, 1.0
    %v1568 = vadd.f32 %v1564, 1.0
    %v1569 = vmul.f32 %v1565, 0.5
    %v1570 = vmul.f32 %v1566, 0.5
    %v1571 = vmul.f32 %v1567, 0.5
    %v1572 = vmul.f32 %v1568, 0.5
    %v1573 = vmul.f32 %v1545, 0.5
    %v1574 = vmul.f32 %v1546, 0.5
    %v1575 = vmul.f32 %v1547, 0.5
    %v1576 = vmul.f32 %v1548, 0.5
    %v1577 = vtanh.pop %v1573
    %v1578 = vtanh.pop %v1574
    %v1579 = vtanh.pop %v1575
    %v1580 = vtanh.pop %v1576
    %v1581 = vadd.f32 %v1577, 1.0
    %v1582 = vadd.f32 %v1578, 1.0
    %v1583 = vadd.f32 %v1579, 1.0
    %v1584 = vadd.f32 %v1580, 1.0
    %v1585 = vmul.f32 %v1581, 0.5
    %v1586 = vmul.f32 %v1582, 0.5
    %v1587 = vmul.f32 %v1583, 0.5
    %v1588 = vmul.f32 %v1584, 0.5
    %v1589 = vtanh.pop %v1549
    %v1590 = vtanh.pop %v1550
    %v1591 = vtanh.pop %v1551
    %v1592 = vtanh.pop %v1552
    %v1593 = vmul.f32 %v1553, 0.5
    %v1594 = vmul.f32 %v1554, 0.5
    %v1595 = vmul.f32 %v1555, 0.5
    %v1596 = vmul.f32 %v1556, 0.5
    %v1597 = vtanh.pop %v1593
    %v1598 = vtanh.pop %v1594
    %v1599 = vtanh.pop %v1595
    %v1600 = vtanh.pop %v1596
    %v1601 = vadd.f32 %v1597, 1.0
    %v1602 = vadd.f32 %v1598, 1.0
    %v1603 = vadd.f32 %v1599, 1.0
    %v1604 = vadd.f32 %v1600, 1.0
    %v1605 = vmul.f32 %v1601, 0.5
    %v1606 = vmul.f32 %v1602, 0.5
    %v1607 = vmul.f32 %v1603, 0.5
    %v1608 = vmul.f32 %v1604, 0.5
    %v1609 = vmul.f32 %v1585, %v1362
    %v1610 = vmul.f32 %v1586, %v1363
    %v1611 = vmul.f32 %v1587, %v1364
    %v1612 = vmul.f32 %v1588, %v1365
    %v1613 = vmul.f32 %v1569, %v1589
    %v1614 = vmul.f32 %v1570, %v1590
    %v1615 = vmul.f32 %v1571, %v1591
    %v1616 = vmul.f32 %v1572, %v1592
    %v1617 = vadd.f32 %v1609, %v1613
    %v1618 = vadd.f32 %v1610, %v1614
    %v1619 = vadd.f32 %v1611, %v1615
    %v1620 = vadd.f32 %v1612, %v1616
    %v1621 = vtanh.pop %v1617
    %v1622 = vtanh.pop %v1618
    %v1623 = vtanh.pop %v1619
    %v1624 = vtanh.pop %v1620
    %v1625 = vmul.f32 %v1605, %v1621
    %v1626 = vmul.f32 %v1606, %v1622
    %v1627 = vmul.f32 %v1607, %v1623
    %v1628 = vmul.f32 %v1608, %v1624
    %s1629 = scalar_lea.vmem [#allocation2], 160
    %1630 = vst [vmem:[%s1629] sm:$0xff] %v1625
    %1631 = vst [vmem:[%s1629 + $0x8] sm:$0xff] %v1626
    %1632 = vst [vmem:[%s1629 + $0x10] sm:$0xff] %v1627
    %1633 = vst [vmem:[%s1629 + $0x18] sm:$0xff] %v1628
    %s1634 = scalar_lea.vmem [#allocation3], 768
    %v1635 = vld [vmem:[%s1634] sm:$0xff]
    %v1636 = vld [vmem:[%s1634 + $0x8] sm:$0xff]
    %v1637 = vld [vmem:[%s1634 + $0x10] sm:$0xff]
    %v1638 = vld [vmem:[%s1634 + $0x18] sm:$0xff]
    %v1639 = vld [vmem:[%s1634 + $0x20] sm:$0xff]
    %v1640 = vld [vmem:[%s1634 + $0x28] sm:$0xff]
    %v1641 = vld [vmem:[%s1634 + $0x30] sm:$0xff]
    %v1642 = vld [vmem:[%s1634 + $0x38] sm:$0xff]
    %v1643 = vld [vmem:[%s1634 + $0x40] sm:$0xff]
    %v1644 = vld [vmem:[%s1634 + $0x48] sm:$0xff]
    %v1645 = vld [vmem:[%s1634 + $0x50] sm:$0xff]
    %v1646 = vld [vmem:[%s1634 + $0x58] sm:$0xff]
    %v1647 = vld [vmem:[%s1634 + $0x60] sm:$0xff]
    %v1648 = vld [vmem:[%s1634 + $0x68] sm:$0xff]
    %v1649 = vld [vmem:[%s1634 + $0x70] sm:$0xff]
    %v1650 = vld [vmem:[%s1634 + $0x78] sm:$0xff]
    %1651 = vmatprep.subr.mxu0 0.0
    %1652 = vmatpush1.msra.mxu0 0.0
    %1653 = vmatprep.subr.mxu0 0.0
    %1654 = vmatpush1.msra.mxu0 0.0
    %1655 = vmatprep.subr.mxu0 0.0
    %1656 = vmatpush1.msra.mxu0 0.0
    %1657 = vmatprep.subr.mxu0 0.0
    %1658 = vmatpush1.msra.mxu0 0.0
    %1659 = vmatprep.subr.mxu0 0.0
    %1660 = vmatpush1.msra.mxu0 0.0
    %1661 = vmatprep.subr.mxu0 0.0
    %1662 = vmatpush1.msra.mxu0 0.0
    %1663 = vmatprep.subr.mxu0 0.0
    %1664 = vmatpush1.msra.mxu0 0.0
    %1665 = vmatprep.subr.mxu0 0.0
    %1666 = vmatpush1.msra.mxu0 0.0
    %1667 = vmatprep.subr.mxu0 0.0
    %1668 = vmatpush1.msra.mxu0 0.0
    %1669 = vmatprep.subr.mxu0 0.0
    %1670 = vmatpush1.msra.mxu0 0.0
    %1671 = vmatprep.subr.mxu0 0.0
    %1672 = vmatpush1.msra.mxu0 0.0
    %1673 = vmatprep.subr.mxu0 0.0
    %1674 = vmatpush1.msra.mxu0 0.0
    %1675 = vmatprep.subr.mxu0 0.0
    %1676 = vmatpush1.msra.mxu0 %v1628
    %1677 = vmatprep.subr.mxu0 0.0
    %1678 = vmatpush1.msra.mxu0 %v1627
    %1679 = vmatprep.subr.mxu0 0.0
    %1680 = vmatpush1.msra.mxu0 %v1626
    %1681 = vmatprep.subr.mxu0 0.0
    %1682 = vmatpush1.msra.mxu0 %v1625
    %1683 = vmatprep.subr.mxu0 0.0
    %1684 = vmatpush2.msra.mxu0 0.0
    %1685 = vmatprep.subr.mxu0 0.0
    %1686 = vmatpush2.msra.mxu0 0.0
    %1687 = vmatprep.subr.mxu0 0.0
    %1688 = vmatpush2.msra.mxu0 0.0
    %1689 = vmatprep.subr.mxu0 0.0
    %1690 = vmatpush2.msra.mxu0 0.0
    %1691 = vmatprep.subr.mxu0 0.0
    %1692 = vmatpush2.msra.mxu0 0.0
    %1693 = vmatprep.subr.mxu0 0.0
    %1694 = vmatpush2.msra.mxu0 0.0
    %1695 = vmatprep.subr.mxu0 0.0
    %1696 = vmatpush2.msra.mxu0 0.0
    %1697 = vmatprep.subr.mxu0 0.0
    %1698 = vmatpush2.msra.mxu0 0.0
    %1699 = vmatprep.subr.mxu0 0.0
    %1700 = vmatpush2.msra.mxu0 0.0
    %1701 = vmatprep.subr.mxu0 0.0
    %1702 = vmatpush2.msra.mxu0 0.0
    %1703 = vmatprep.subr.mxu0 0.0
    %1704 = vmatpush2.msra.mxu0 0.0
    %1705 = vmatprep.subr.mxu0 0.0
    %1706 = vmatpush2.msra.mxu0 0.0
    %1707 = vmatprep.subr.mxu0 0.0
    %1708 = vmatpush2.msra.mxu0 0.0
    %1709 = vmatprep.subr.mxu0 0.0
    %1710 = vmatpush2.msra.mxu0 0.0
    %1711 = vmatprep.subr.mxu0 0.0
    %1712 = vmatpush2.msra.mxu0 0.0
    %1713 = vmatprep.subr.mxu0 0.0
    %1714 = vmatpush2.msra.mxu0 0.0
    %1715 = vmatprep.mubr.f32.mxu0 0.0
    %1716 = vmatmul.mubr.f32.gmra.mxu0 %v75
    %v1717 = vpop.f32.mrf.mxu0
    %v1718 = vadd.f32 0.0, %v1717
    %v1719 = vpop.f32.mrf.mxu0
    %1720 = vmatprep.mubr.f32.mxu0 0.0
    %1721 = vmatmul.mubr.f32.gmra.mxu0 %v78
    %v1722 = vpop.f32.mrf.mxu0
    %v1723 = vadd.f32 0.0, %v1722
    %v1724 = vpop.f32.mrf.mxu0
    %1725 = vmatprep.mubr.f32.mxu0 0.0
    %1726 = vmatmul.mubr.f32.gmra.mxu0 %v81
    %v1727 = vpop.f32.mrf.mxu0
    %v1728 = vadd.f32 0.0, %v1727
    %v1729 = vpop.f32.mrf.mxu0
    %1730 = vmatprep.mubr.f32.mxu0 0.0
    %1731 = vmatmul.mubr.f32.gmra.mxu0 %v84
    %v1732 = vpop.f32.mrf.mxu0
    %v1733 = vadd.f32 0.0, %v1732
    %v1734 = vpop.f32.mrf.mxu0
    %1735 = vmatprep.mubr.f32.mxu0 0.0
    %1736 = vmatmul.mubr.f32.gmra.mxu0 %v87
    %v1737 = vpop.f32.mrf.mxu0
    %v1738 = vadd.f32 0.0, %v1737
    %v1739 = vpop.f32.mrf.mxu0
    %1740 = vmatprep.mubr.f32.mxu0 0.0
    %1741 = vmatmul.mubr.f32.gmra.mxu0 %v90
    %v1742 = vpop.f32.mrf.mxu0
    %v1743 = vadd.f32 0.0, %v1742
    %v1744 = vpop.f32.mrf.mxu0
    %1745 = vmatprep.mubr.f32.mxu0 0.0
    %1746 = vmatmul.mubr.f32.gmra.mxu0 %v93
    %v1747 = vpop.f32.mrf.mxu0
    %v1748 = vadd.f32 0.0, %v1747
    %v1749 = vpop.f32.mrf.mxu0
    %1750 = vmatprep.mubr.f32.mxu0 0.0
    %1751 = vmatmul.mubr.f32.gmra.mxu0 %v96
    %v1752 = vpop.f32.mrf.mxu0
    %v1753 = vadd.f32 0.0, %v1752
    %v1754 = vpop.f32.mrf.mxu0
    %1755 = vmatprep.mubr.f32.mxu0 0.0
    %1756 = vmatmul.mubr.f32.gmra.mxu0 %v99
    %v1757 = vpop.f32.mrf.mxu0
    %v1758 = vadd.f32 0.0, %v1757
    %v1759 = vpop.f32.mrf.mxu0
    %1760 = vmatprep.mubr.f32.mxu0 0.0
    %1761 = vmatmul.mubr.f32.gmra.mxu0 %v102
    %v1762 = vpop.f32.mrf.mxu0
    %v1763 = vadd.f32 0.0, %v1762
    %v1764 = vpop.f32.mrf.mxu0
    %1765 = vmatprep.mubr.f32.mxu0 0.0
    %1766 = vmatmul.mubr.f32.gmra.mxu0 %v105
    %v1767 = vpop.f32.mrf.mxu0
    %v1768 = vadd.f32 0.0, %v1767
    %v1769 = vpop.f32.mrf.mxu0
    %1770 = vmatprep.mubr.f32.mxu0 0.0
    %1771 = vmatmul.mubr.f32.gmra.mxu0 %v108
    %v1772 = vpop.f32.mrf.mxu0
    %v1773 = vadd.f32 0.0, %v1772
    %v1774 = vpop.f32.mrf.mxu0
    %1775 = vmatprep.mubr.f32.mxu0 0.0
    %1776 = vmatmul.mubr.f32.gmra.mxu0 %v111
    %v1777 = vpop.f32.mrf.mxu0
    %v1778 = vadd.f32 0.0, %v1777
    %v1779 = vpop.f32.mrf.mxu0
    %1780 = vmatprep.mubr.f32.mxu0 0.0
    %1781 = vmatmul.mubr.f32.gmra.mxu0 %v114
    %v1782 = vpop.f32.mrf.mxu0
    %v1783 = vadd.f32 0.0, %v1782
    %v1784 = vpop.f32.mrf.mxu0
    %1785 = vmatprep.mubr.f32.mxu0 0.0
    %1786 = vmatmul.mubr.f32.gmra.mxu0 %v117
    %v1787 = vpop.f32.mrf.mxu0
    %v1788 = vadd.f32 0.0, %v1787
    %v1789 = vpop.f32.mrf.mxu0
    %1790 = vmatprep.mubr.f32.mxu0 0.0
    %1791 = vmatmul.mubr.f32.gmra.mxu0 %v120
    %v1792 = vpop.f32.mrf.mxu0
    %v1793 = vadd.f32 0.0, %v1792
    %v1794 = vpop.f32.mrf.mxu0
    %1795 = vdwg.mxu0
    %v1796 = vadd.f32 %v1635, %v1718
    %v1797 = vadd.f32 %v1636, %v1723
    %v1798 = vadd.f32 %v1637, %v1728
    %v1799 = vadd.f32 %v1638, %v1733
    %v1800 = vadd.f32 %v1639, %v1738
    %v1801 = vadd.f32 %v1640, %v1743
    %v1802 = vadd.f32 %v1641, %v1748
    %v1803 = vadd.f32 %v1642, %v1753
    %v1804 = vadd.f32 %v1643, %v1758
    %v1805 = vadd.f32 %v1644, %v1763
    %v1806 = vadd.f32 %v1645, %v1768
    %v1807 = vadd.f32 %v1646, %v1773
    %v1808 = vadd.f32 %v1647, %v1778
    %v1809 = vadd.f32 %v1648, %v1783
    %v1810 = vadd.f32 %v1649, %v1788
    %v1811 = vadd.f32 %v1650, %v1793
    %v1812 = vmul.f32 %v1796, 0.5
    %v1813 = vmul.f32 %v1797, 0.5
    %v1814 = vmul.f32 %v1798, 0.5
    %v1815 = vmul.f32 %v1799, 0.5
    %v1816 = vtanh.pop %v1812
    %v1817 = vtanh.pop %v1813
    %v1818 = vtanh.pop %v1814
    %v1819 = vtanh.pop %v1815
    %v1820 = vadd.f32 %v1816, 1.0
    %v1821 = vadd.f32 %v1817, 1.0
    %v1822 = vadd.f32 %v1818, 1.0
    %v1823 = vadd.f32 %v1819, 1.0
    %v1824 = vmul.f32 %v1820, 0.5
    %v1825 = vmul.f32 %v1821, 0.5
    %v1826 = vmul.f32 %v1822, 0.5
    %v1827 = vmul.f32 %v1823, 0.5
    %v1828 = vmul.f32 %v1800, 0.5
    %v1829 = vmul.f32 %v1801, 0.5
    %v1830 = vmul.f32 %v1802, 0.5
    %v1831 = vmul.f32 %v1803, 0.5
    %v1832 = vtanh.pop %v1828
    %v1833 = vtanh.pop %v1829
    %v1834 = vtanh.pop %v1830
    %v1835 = vtanh.pop %v1831
    %v1836 = vadd.f32 %v1832, 1.0
    %v1837 = vadd.f32 %v1833, 1.0
    %v1838 = vadd.f32 %v1834, 1.0
    %v1839 = vadd.f32 %v1835, 1.0
    %v1840 = vmul.f32 %v1836, 0.5
    %v1841 = vmul.f32 %v1837, 0.5
    %v1842 = vmul.f32 %v1838, 0.5
    %v1843 = vmul.f32 %v1839, 0.5
    %v1844 = vtanh.pop %v1804
    %v1845 = vtanh.pop %v1805
    %v1846 = vtanh.pop %v1806
    %v1847 = vtanh.pop %v1807
    %v1848 = vmul.f32 %v1808, 0.5
    %v1849 = vmul.f32 %v1809, 0.5
    %v1850 = vmul.f32 %v1810, 0.5
    %v1851 = vmul.f32 %v1811, 0.5
    %v1852 = vtanh.pop %v1848
    %v1853 = vtanh.pop %v1849
    %v1854 = vtanh.pop %v1850
    %v1855 = vtanh.pop %v1851
    %v1856 = vadd.f32 %v1852, 1.0
    %v1857 = vadd.f32 %v1853, 1.0
    %v1858 = vadd.f32 %v1854, 1.0
    %v1859 = vadd.f32 %v1855, 1.0
    %v1860 = vmul.f32 %v1856, 0.5
    %v1861 = vmul.f32 %v1857, 0.5
    %v1862 = vmul.f32 %v1858, 0.5
    %v1863 = vmul.f32 %v1859, 0.5
    %v1864 = vmul.f32 %v1840, %v1617
    %v1865 = vmul.f32 %v1841, %v1618
    %v1866 = vmul.f32 %v1842, %v1619
    %v1867 = vmul.f32 %v1843, %v1620
    %v1868 = vmul.f32 %v1824, %v1844
    %v1869 = vmul.f32 %v1825, %v1845
    %v1870 = vmul.f32 %v1826, %v1846
    %v1871 = vmul.f32 %v1827, %v1847
    %v1872 = vadd.f32 %v1864, %v1868
    %v1873 = vadd.f32 %v1865, %v1869
    %v1874 = vadd.f32 %v1866, %v1870
    %v1875 = vadd.f32 %v1867, %v1871
    %v1876 = vtanh.pop %v1872
    %v1877 = vtanh.pop %v1873
    %v1878 = vtanh.pop %v1874
    %v1879 = vtanh.pop %v1875
    %v1880 = vmul.f32 %v1860, %v1876
    %v1881 = vmul.f32 %v1861, %v1877
    %v1882 = vmul.f32 %v1862, %v1878
    %v1883 = vmul.f32 %v1863, %v1879
    %s1884 = scalar_lea.vmem [#allocation2], 192
    %1885 = vst [vmem:[%s1884] sm:$0xff] %v1880
    %1886 = vst [vmem:[%s1884 + $0x8] sm:$0xff] %v1881
    %1887 = vst [vmem:[%s1884 + $0x10] sm:$0xff] %v1882
    %1888 = vst [vmem:[%s1884 + $0x18] sm:$0xff] %v1883
    %s1889 = scalar_lea.vmem [#allocation3], 896
    %v1890 = vld [vmem:[%s1889] sm:$0xff]
    %v1891 = vld [vmem:[%s1889 + $0x8] sm:$0xff]
    %v1892 = vld [vmem:[%s1889 + $0x10] sm:$0xff]
    %v1893 = vld [vmem:[%s1889 + $0x18] sm:$0xff]
    %v1894 = vld [vmem:[%s1889 + $0x20] sm:$0xff]
    %v1895 = vld [vmem:[%s1889 + $0x28] sm:$0xff]
    %v1896 = vld [vmem:[%s1889 + $0x30] sm:$0xff]
    %v1897 = vld [vmem:[%s1889 + $0x38] sm:$0xff]
    %v1898 = vld [vmem:[%s1889 + $0x40] sm:$0xff]
    %v1899 = vld [vmem:[%s1889 + $0x48] sm:$0xff]
    %v1900 = vld [vmem:[%s1889 + $0x50] sm:$0xff]
    %v1901 = vld [vmem:[%s1889 + $0x58] sm:$0xff]
    %v1902 = vld [vmem:[%s1889 + $0x60] sm:$0xff]
    %v1903 = vld [vmem:[%s1889 + $0x68] sm:$0xff]
    %v1904 = vld [vmem:[%s1889 + $0x70] sm:$0xff]
    %v1905 = vld [vmem:[%s1889 + $0x78] sm:$0xff]
    %1906 = vmatprep.subr.mxu0 0.0
    %1907 = vmatpush1.msra.mxu0 0.0
    %1908 = vmatprep.subr.mxu0 0.0
    %1909 = vmatpush1.msra.mxu0 0.0
    %1910 = vmatprep.subr.mxu0 0.0
    %1911 = vmatpush1.msra.mxu0 0.0
    %1912 = vmatprep.subr.mxu0 0.0
    %1913 = vmatpush1.msra.mxu0 0.0
    %1914 = vmatprep.subr.mxu0 0.0
    %1915 = vmatpush1.msra.mxu0 0.0
    %1916 = vmatprep.subr.mxu0 0.0
    %1917 = vmatpush1.msra.mxu0 0.0
    %1918 = vmatprep.subr.mxu0 0.0
    %1919 = vmatpush1.msra.mxu0 0.0
    %1920 = vmatprep.subr.mxu0 0.0
    %1921 = vmatpush1.msra.mxu0 0.0
    %1922 = vmatprep.subr.mxu0 0.0
    %1923 = vmatpush1.msra.mxu0 0.0
    %1924 = vmatprep.subr.mxu0 0.0
    %1925 = vmatpush1.msra.mxu0 0.0
    %1926 = vmatprep.subr.mxu0 0.0
    %1927 = vmatpush1.msra.mxu0 0.0
    %1928 = vmatprep.subr.mxu0 0.0
    %1929 = vmatpush1.msra.mxu0 0.0
    %1930 = vmatprep.subr.mxu0 0.0
    %1931 = vmatpush1.msra.mxu0 %v1883
    %1932 = vmatprep.subr.mxu0 0.0
    %1933 = vmatpush1.msra.mxu0 %v1882
    %1934 = vmatprep.subr.mxu0 0.0
    %1935 = vmatpush1.msra.mxu0 %v1881
    %1936 = vmatprep.subr.mxu0 0.0
    %1937 = vmatpush1.msra.mxu0 %v1880
    %1938 = vmatprep.subr.mxu0 0.0
    %1939 = vmatpush2.msra.mxu0 0.0
    %1940 = vmatprep.subr.mxu0 0.0
    %1941 = vmatpush2.msra.mxu0 0.0
    %1942 = vmatprep.subr.mxu0 0.0
    %1943 = vmatpush2.msra.mxu0 0.0
    %1944 = vmatprep.subr.mxu0 0.0
    %1945 = vmatpush2.msra.mxu0 0.0
    %1946 = vmatprep.subr.mxu0 0.0
    %1947 = vmatpush2.msra.mxu0 0.0
    %1948 = vmatprep.subr.mxu0 0.0
    %1949 = vmatpush2.msra.mxu0 0.0
    %1950 = vmatprep.subr.mxu0 0.0
    %1951 = vmatpush2.msra.mxu0 0.0
    %1952 = vmatprep.subr.mxu0 0.0
    %1953 = vmatpush2.msra.mxu0 0.0
    %1954 = vmatprep.subr.mxu0 0.0
    %1955 = vmatpush2.msra.mxu0 0.0
    %1956 = vmatprep.subr.mxu0 0.0
    %1957 = vmatpush2.msra.mxu0 0.0
    %1958 = vmatprep.subr.mxu0 0.0
    %1959 = vmatpush2.msra.mxu0 0.0
    %1960 = vmatprep.subr.mxu0 0.0
    %1961 = vmatpush2.msra.mxu0 0.0
    %1962 = vmatprep.subr.mxu0 0.0
    %1963 = vmatpush2.msra.mxu0 0.0
    %1964 = vmatprep.subr.mxu0 0.0
    %1965 = vmatpush2.msra.mxu0 0.0
    %1966 = vmatprep.subr.mxu0 0.0
    %1967 = vmatpush2.msra.mxu0 0.0
    %1968 = vmatprep.subr.mxu0 0.0
    %1969 = vmatpush2.msra.mxu0 0.0
    %1970 = vmatprep.mubr.f32.mxu0 0.0
    %1971 = vmatmul.mubr.f32.gmra.mxu0 %v75
    %v1972 = vpop.f32.mrf.mxu0
    %v1973 = vadd.f32 0.0, %v1972
    %v1974 = vpop.f32.mrf.mxu0
    %1975 = vmatprep.mubr.f32.mxu0 0.0
    %1976 = vmatmul.mubr.f32.gmra.mxu0 %v78
    %v1977 = vpop.f32.mrf.mxu0
    %v1978 = vadd.f32 0.0, %v1977
    %v1979 = vpop.f32.mrf.mxu0
    %1980 = vmatprep.mubr.f32.mxu0 0.0
    %1981 = vmatmul.mubr.f32.gmra.mxu0 %v81
    %v1982 = vpop.f32.mrf.mxu0
    %v1983 = vadd.f32 0.0, %v1982
    %v1984 = vpop.f32.mrf.mxu0
    %1985 = vmatprep.mubr.f32.mxu0 0.0
    %1986 = vmatmul.mubr.f32.gmra.mxu0 %v84
    %v1987 = vpop.f32.mrf.mxu0
    %v1988 = vadd.f32 0.0, %v1987
    %v1989 = vpop.f32.mrf.mxu0
    %1990 = vmatprep.mubr.f32.mxu0 0.0
    %1991 = vmatmul.mubr.f32.gmra.mxu0 %v87
    %v1992 = vpop.f32.mrf.mxu0
    %v1993 = vadd.f32 0.0, %v1992
    %v1994 = vpop.f32.mrf.mxu0
    %1995 = vmatprep.mubr.f32.mxu0 0.0
    %1996 = vmatmul.mubr.f32.gmra.mxu0 %v90
    %v1997 = vpop.f32.mrf.mxu0
    %v1998 = vadd.f32 0.0, %v1997
    %v1999 = vpop.f32.mrf.mxu0
    %2000 = vmatprep.mubr.f32.mxu0 0.0
    %2001 = vmatmul.mubr.f32.gmra.mxu0 %v93
    %v2002 = vpop.f32.mrf.mxu0
    %v2003 = vadd.f32 0.0, %v2002
    %v2004 = vpop.f32.mrf.mxu0
    %2005 = vmatprep.mubr.f32.mxu0 0.0
    %2006 = vmatmul.mubr.f32.gmra.mxu0 %v96
    %v2007 = vpop.f32.mrf.mxu0
    %v2008 = vadd.f32 0.0, %v2007
    %v2009 = vpop.f32.mrf.mxu0
    %2010 = vmatprep.mubr.f32.mxu0 0.0
    %2011 = vmatmul.mubr.f32.gmra.mxu0 %v99
    %v2012 = vpop.f32.mrf.mxu0
    %v2013 = vadd.f32 0.0, %v2012
    %v2014 = vpop.f32.mrf.mxu0
    %2015 = vmatprep.mubr.f32.mxu0 0.0
    %2016 = vmatmul.mubr.f32.gmra.mxu0 %v102
    %v2017 = vpop.f32.mrf.mxu0
    %v2018 = vadd.f32 0.0, %v2017
    %v2019 = vpop.f32.mrf.mxu0
    %2020 = vmatprep.mubr.f32.mxu0 0.0
    %2021 = vmatmul.mubr.f32.gmra.mxu0 %v105
    %v2022 = vpop.f32.mrf.mxu0
    %v2023 = vadd.f32 0.0, %v2022
    %v2024 = vpop.f32.mrf.mxu0
    %2025 = vmatprep.mubr.f32.mxu0 0.0
    %2026 = vmatmul.mubr.f32.gmra.mxu0 %v108
    %v2027 = vpop.f32.mrf.mxu0
    %v2028 = vadd.f32 0.0, %v2027
    %v2029 = vpop.f32.mrf.mxu0
    %2030 = vmatprep.mubr.f32.mxu0 0.0
    %2031 = vmatmul.mubr.f32.gmra.mxu0 %v111
    %v2032 = vpop.f32.mrf.mxu0
    %v2033 = vadd.f32 0.0, %v2032
    %v2034 = vpop.f32.mrf.mxu0
    %2035 = vmatprep.mubr.f32.mxu0 0.0
    %2036 = vmatmul.mubr.f32.gmra.mxu0 %v114
    %v2037 = vpop.f32.mrf.mxu0
    %v2038 = vadd.f32 0.0, %v2037
    %v2039 = vpop.f32.mrf.mxu0
    %2040 = vmatprep.mubr.f32.mxu0 0.0
    %2041 = vmatmul.mubr.f32.gmra.mxu0 %v117
    %v2042 = vpop.f32.mrf.mxu0
    %v2043 = vadd.f32 0.0, %v2042
    %v2044 = vpop.f32.mrf.mxu0
    %2045 = vmatprep.mubr.f32.mxu0 0.0
    %2046 = vmatmul.mubr.f32.gmra.mxu0 %v120
    %v2047 = vpop.f32.mrf.mxu0
    %v2048 = vadd.f32 0.0, %v2047
    %v2049 = vpop.f32.mrf.mxu0
    %2050 = vdwg.mxu0
    %v2051 = vadd.f32 %v1890, %v1973
    %v2052 = vadd.f32 %v1891, %v1978
    %v2053 = vadd.f32 %v1892, %v1983
    %v2054 = vadd.f32 %v1893, %v1988
    %v2055 = vadd.f32 %v1894, %v1993
    %v2056 = vadd.f32 %v1895, %v1998
    %v2057 = vadd.f32 %v1896, %v2003
    %v2058 = vadd.f32 %v1897, %v2008
    %v2059 = vadd.f32 %v1898, %v2013
    %v2060 = vadd.f32 %v1899, %v2018
    %v2061 = vadd.f32 %v1900, %v2023
    %v2062 = vadd.f32 %v1901, %v2028
    %v2063 = vadd.f32 %v1902, %v2033
    %v2064 = vadd.f32 %v1903, %v2038
    %v2065 = vadd.f32 %v1904, %v2043
    %v2066 = vadd.f32 %v1905, %v2048
    %v2067 = vmul.f32 %v2051, 0.5
    %v2068 = vmul.f32 %v2052, 0.5
    %v2069 = vmul.f32 %v2053, 0.5
    %v2070 = vmul.f32 %v2054, 0.5
    %v2071 = vtanh.pop %v2067
    %v2072 = vtanh.pop %v2068
    %v2073 = vtanh.pop %v2069
    %v2074 = vtanh.pop %v2070
    %v2075 = vadd.f32 %v2071, 1.0
    %v2076 = vadd.f32 %v2072, 1.0
    %v2077 = vadd.f32 %v2073, 1.0
    %v2078 = vadd.f32 %v2074, 1.0
    %v2079 = vmul.f32 %v2075, 0.5
    %v2080 = vmul.f32 %v2076, 0.5
    %v2081 = vmul.f32 %v2077, 0.5
    %v2082 = vmul.f32 %v2078, 0.5
    %v2083 = vmul.f32 %v2055, 0.5
    %v2084 = vmul.f32 %v2056, 0.5
    %v2085 = vmul.f32 %v2057, 0.5
    %v2086 = vmul.f32 %v2058, 0.5
    %v2087 = vtanh.pop %v2083
    %v2088 = vtanh.pop %v2084
    %v2089 = vtanh.pop %v2085
    %v2090 = vtanh.pop %v2086
    %v2091 = vadd.f32 %v2087, 1.0
    %v2092 = vadd.f32 %v2088, 1.0
    %v2093 = vadd.f32 %v2089, 1.0
    %v2094 = vadd.f32 %v2090, 1.0
    %v2095 = vmul.f32 %v2091, 0.5
    %v2096 = vmul.f32 %v2092, 0.5
    %v2097 = vmul.f32 %v2093, 0.5
    %v2098 = vmul.f32 %v2094, 0.5
    %v2099 = vtanh.pop %v2059
    %v2100 = vtanh.pop %v2060
    %v2101 = vtanh.pop %v2061
    %v2102 = vtanh.pop %v2062
    %v2103 = vmul.f32 %v2063, 0.5
    %v2104 = vmul.f32 %v2064, 0.5
    %v2105 = vmul.f32 %v2065, 0.5
    %v2106 = vmul.f32 %v2066, 0.5
    %v2107 = vtanh.pop %v2103
    %v2108 = vtanh.pop %v2104
    %v2109 = vtanh.pop %v2105
    %v2110 = vtanh.pop %v2106
    %v2111 = vadd.f32 %v2107, 1.0
    %v2112 = vadd.f32 %v2108, 1.0
    %v2113 = vadd.f32 %v2109, 1.0
    %v2114 = vadd.f32 %v2110, 1.0
    %v2115 = vmul.f32 %v2111, 0.5
    %v2116 = vmul.f32 %v2112, 0.5
    %v2117 = vmul.f32 %v2113, 0.5
    %v2118 = vmul.f32 %v2114, 0.5
    %v2119 = vmul.f32 %v2095, %v1872
    %v2120 = vmul.f32 %v2096, %v1873
    %v2121 = vmul.f32 %v2097, %v1874
    %v2122 = vmul.f32 %v2098, %v1875
    %v2123 = vmul.f32 %v2079, %v2099
    %v2124 = vmul.f32 %v2080, %v2100
    %v2125 = vmul.f32 %v2081, %v2101
    %v2126 = vmul.f32 %v2082, %v2102
    %v2127 = vadd.f32 %v2119, %v2123
    %v2128 = vadd.f32 %v2120, %v2124
    %v2129 = vadd.f32 %v2121, %v2125
    %v2130 = vadd.f32 %v2122, %v2126
    %v2131 = vtanh.pop %v2127
    %v2132 = vtanh.pop %v2128
    %v2133 = vtanh.pop %v2129
    %v2134 = vtanh.pop %v2130
    %v2135 = vmul.f32 %v2115, %v2131
    %v2136 = vmul.f32 %v2116, %v2132
    %v2137 = vmul.f32 %v2117, %v2133
    %v2138 = vmul.f32 %v2118, %v2134
    %s2139 = scalar_lea.vmem [#allocation2], 224
    %2140 = vst [vmem:[%s2139] sm:$0xff] %v2135
    %2141 = vst [vmem:[%s2139 + $0x8] sm:$0xff] %v2136
    %2142 = vst [vmem:[%s2139 + $0x10] sm:$0xff] %v2137
    %2143 = vst [vmem:[%s2139 + $0x18] sm:$0xff] %v2138
    %s2144 = scalar_lea.vmem [#allocation3], 1024
    %v2145 = vld [vmem:[%s2144] sm:$0xff]
    %v2146 = vld [vmem:[%s2144 + $0x8] sm:$0xff]
    %v2147 = vld [vmem:[%s2144 + $0x10] sm:$0xff]
    %v2148 = vld [vmem:[%s2144 + $0x18] sm:$0xff]
    %v2149 = vld [vmem:[%s2144 + $0x20] sm:$0xff]
    %v2150 = vld [vmem:[%s2144 + $0x28] sm:$0xff]
    %v2151 = vld [vmem:[%s2144 + $0x30] sm:$0xff]
    %v2152 = vld [vmem:[%s2144 + $0x38] sm:$0xff]
    %v2153 = vld [vmem:[%s2144 + $0x40] sm:$0xff]
    %v2154 = vld [vmem:[%s2144 + $0x48] sm:$0xff]
    %v2155 = vld [vmem:[%s2144 + $0x50] sm:$0xff]
    %v2156 = vld [vmem:[%s2144 + $0x58] sm:$0xff]
    %v2157 = vld [vmem:[%s2144 + $0x60] sm:$0xff]
    %v2158 = vld [vmem:[%s2144 + $0x68] sm:$0xff]
    %v2159 = vld [vmem:[%s2144 + $0x70] sm:$0xff]
    %v2160 = vld [vmem:[%s2144 + $0x78] sm:$0xff]
    %2161 = vmatprep.subr.mxu0 0.0
    %2162 = vmatpush1.msra.mxu0 0.0
    %2163 = vmatprep.subr.mxu0 0.0
    %2164 = vmatpush1.msra.mxu0 0.0
    %2165 = vmatprep.subr.mxu0 0.0
    %2166 = vmatpush1.msra.mxu0 0.0
    %2167 = vmatprep.subr.mxu0 0.0
    %2168 = vmatpush1.msra.mxu0 0.0
    %2169 = vmatprep.subr.mxu0 0.0
    %2170 = vmatpush1.msra.mxu0 0.0
    %2171 = vmatprep.subr.mxu0 0.0
    %2172 = vmatpush1.msra.mxu0 0.0
    %2173 = vmatprep.subr.mxu0 0.0
    %2174 = vmatpush1.msra.mxu0 0.0
    %2175 = vmatprep.subr.mxu0 0.0
    %2176 = vmatpush1.msra.mxu0 0.0
    %2177 = vmatprep.subr.mxu0 0.0
    %2178 = vmatpush1.msra.mxu0 0.0
    %2179 = vmatprep.subr.mxu0 0.0
    %2180 = vmatpush1.msra.mxu0 0.0
    %2181 = vmatprep.subr.mxu0 0.0
    %2182 = vmatpush1.msra.mxu0 0.0
    %2183 = vmatprep.subr.mxu0 0.0
    %2184 = vmatpush1.msra.mxu0 0.0
    %2185 = vmatprep.subr.mxu0 0.0
    %2186 = vmatpush1.msra.mxu0 %v2138
    %2187 = vmatprep.subr.mxu0 0.0
    %2188 = vmatpush1.msra.mxu0 %v2137
    %2189 = vmatprep.subr.mxu0 0.0
    %2190 = vmatpush1.msra.mxu0 %v2136
    %2191 = vmatprep.subr.mxu0 0.0
    %2192 = vmatpush1.msra.mxu0 %v2135
    %2193 = vmatprep.subr.mxu0 0.0
    %2194 = vmatpush2.msra.mxu0 0.0
    %2195 = vmatprep.subr.mxu0 0.0
    %2196 = vmatpush2.msra.mxu0 0.0
    %2197 = vmatprep.subr.mxu0 0.0
    %2198 = vmatpush2.msra.mxu0 0.0
    %2199 = vmatprep.subr.mxu0 0.0
    %2200 = vmatpush2.msra.mxu0 0.0
    %2201 = vmatprep.subr.mxu0 0.0
    %2202 = vmatpush2.msra.mxu0 0.0
    %2203 = vmatprep.subr.mxu0 0.0
    %2204 = vmatpush2.msra.mxu0 0.0
    %2205 = vmatprep.subr.mxu0 0.0
    %2206 = vmatpush2.msra.mxu0 0.0
    %2207 = vmatprep.subr.mxu0 0.0
    %2208 = vmatpush2.msra.mxu0 0.0
    %2209 = vmatprep.subr.mxu0 0.0
    %2210 = vmatpush2.msra.mxu0 0.0
    %2211 = vmatprep.subr.mxu0 0.0
    %2212 = vmatpush2.msra.mxu0 0.0
    %2213 = vmatprep.subr.mxu0 0.0
    %2214 = vmatpush2.msra.mxu0 0.0
    %2215 = vmatprep.subr.mxu0 0.0
    %2216 = vmatpush2.msra.mxu0 0.0
    %2217 = vmatprep.subr.mxu0 0.0
    %2218 = vmatpush2.msra.mxu0 0.0
    %2219 = vmatprep.subr.mxu0 0.0
    %2220 = vmatpush2.msra.mxu0 0.0
    %2221 = vmatprep.subr.mxu0 0.0
    %2222 = vmatpush2.msra.mxu0 0.0
    %2223 = vmatprep.subr.mxu0 0.0
    %2224 = vmatpush2.msra.mxu0 0.0
    %2225 = vmatprep.mubr.f32.mxu0 0.0
    %2226 = vmatmul.mubr.f32.gmra.mxu0 %v75
    %v2227 = vpop.f32.mrf.mxu0
    %v2228 = vadd.f32 0.0, %v2227
    %v2229 = vpop.f32.mrf.mxu0
    %2230 = vmatprep.mubr.f32.mxu0 0.0
    %2231 = vmatmul.mubr.f32.gmra.mxu0 %v78
    %v2232 = vpop.f32.mrf.mxu0
    %v2233 = vadd.f32 0.0, %v2232
    %v2234 = vpop.f32.mrf.mxu0
    %2235 = vmatprep.mubr.f32.mxu0 0.0
    %2236 = vmatmul.mubr.f32.gmra.mxu0 %v81
    %v2237 = vpop.f32.mrf.mxu0
    %v2238 = vadd.f32 0.0, %v2237
    %v2239 = vpop.f32.mrf.mxu0
    %2240 = vmatprep.mubr.f32.mxu0 0.0
    %2241 = vmatmul.mubr.f32.gmra.mxu0 %v84
    %v2242 = vpop.f32.mrf.mxu0
    %v2243 = vadd.f32 0.0, %v2242
    %v2244 = vpop.f32.mrf.mxu0
    %2245 = vmatprep.mubr.f32.mxu0 0.0
    %2246 = vmatmul.mubr.f32.gmra.mxu0 %v87
    %v2247 = vpop.f32.mrf.mxu0
    %v2248 = vadd.f32 0.0, %v2247
    %v2249 = vpop.f32.mrf.mxu0
    %2250 = vmatprep.mubr.f32.mxu0 0.0
    %2251 = vmatmul.mubr.f32.gmra.mxu0 %v90
    %v2252 = vpop.f32.mrf.mxu0
    %v2253 = vadd.f32 0.0, %v2252
    %v2254 = vpop.f32.mrf.mxu0
    %2255 = vmatprep.mubr.f32.mxu0 0.0
    %2256 = vmatmul.mubr.f32.gmra.mxu0 %v93
    %v2257 = vpop.f32.mrf.mxu0
    %v2258 = vadd.f32 0.0, %v2257
    %v2259 = vpop.f32.mrf.mxu0
    %2260 = vmatprep.mubr.f32.mxu0 0.0
    %2261 = vmatmul.mubr.f32.gmra.mxu0 %v96
    %v2262 = vpop.f32.mrf.mxu0
    %v2263 = vadd.f32 0.0, %v2262
    %v2264 = vpop.f32.mrf.mxu0
    %2265 = vmatprep.mubr.f32.mxu0 0.0
    %2266 = vmatmul.mubr.f32.gmra.mxu0 %v99
    %v2267 = vpop.f32.mrf.mxu0
    %v2268 = vadd.f32 0.0, %v2267
    %v2269 = vpop.f32.mrf.mxu0
    %2270 = vmatprep.mubr.f32.mxu0 0.0
    %2271 = vmatmul.mubr.f32.gmra.mxu0 %v102
    %v2272 = vpop.f32.mrf.mxu0
    %v2273 = vadd.f32 0.0, %v2272
    %v2274 = vpop.f32.mrf.mxu0
    %2275 = vmatprep.mubr.f32.mxu0 0.0
    %2276 = vmatmul.mubr.f32.gmra.mxu0 %v105
    %v2277 = vpop.f32.mrf.mxu0
    %v2278 = vadd.f32 0.0, %v2277
    %v2279 = vpop.f32.mrf.mxu0
    %2280 = vmatprep.mubr.f32.mxu0 0.0
    %2281 = vmatmul.mubr.f32.gmra.mxu0 %v108
    %v2282 = vpop.f32.mrf.mxu0
    %v2283 = vadd.f32 0.0, %v2282
    %v2284 = vpop.f32.mrf.mxu0
    %2285 = vmatprep.mubr.f32.mxu0 0.0
    %2286 = vmatmul.mubr.f32.gmra.mxu0 %v111
    %v2287 = vpop.f32.mrf.mxu0
    %v2288 = vadd.f32 0.0, %v2287
    %v2289 = vpop.f32.mrf.mxu0
    %2290 = vmatprep.mubr.f32.mxu0 0.0
    %2291 = vmatmul.mubr.f32.gmra.mxu0 %v114
    %v2292 = vpop.f32.mrf.mxu0
    %v2293 = vadd.f32 0.0, %v2292
    %v2294 = vpop.f32.mrf.mxu0
    %2295 = vmatprep.mubr.f32.mxu0 0.0
    %2296 = vmatmul.mubr.f32.gmra.mxu0 %v117
    %v2297 = vpop.f32.mrf.mxu0
    %v2298 = vadd.f32 0.0, %v2297
    %v2299 = vpop.f32.mrf.mxu0
    %2300 = vmatprep.mubr.f32.mxu0 0.0
    %2301 = vmatmul.mubr.f32.gmra.mxu0 %v120
    %v2302 = vpop.f32.mrf.mxu0
    %v2303 = vadd.f32 0.0, %v2302
    %v2304 = vpop.f32.mrf.mxu0
    %2305 = vdwg.mxu0
    %v2306 = vadd.f32 %v2145, %v2228
    %v2307 = vadd.f32 %v2146, %v2233
    %v2308 = vadd.f32 %v2147, %v2238
    %v2309 = vadd.f32 %v2148, %v2243
    %v2310 = vadd.f32 %v2149, %v2248
    %v2311 = vadd.f32 %v2150, %v2253
    %v2312 = vadd.f32 %v2151, %v2258
    %v2313 = vadd.f32 %v2152, %v2263
    %v2314 = vadd.f32 %v2153, %v2268
    %v2315 = vadd.f32 %v2154, %v2273
    %v2316 = vadd.f32 %v2155, %v2278
    %v2317 = vadd.f32 %v2156, %v2283
    %v2318 = vadd.f32 %v2157, %v2288
    %v2319 = vadd.f32 %v2158, %v2293
    %v2320 = vadd.f32 %v2159, %v2298
    %v2321 = vadd.f32 %v2160, %v2303
    %v2322 = vmul.f32 %v2306, 0.5
    %v2323 = vmul.f32 %v2307, 0.5
    %v2324 = vmul.f32 %v2308, 0.5
    %v2325 = vmul.f32 %v2309, 0.5
    %v2326 = vtanh.pop %v2322
    %v2327 = vtanh.pop %v2323
    %v2328 = vtanh.pop %v2324
    %v2329 = vtanh.pop %v2325
    %v2330 = vadd.f32 %v2326, 1.0
    %v2331 = vadd.f32 %v2327, 1.0
    %v2332 = vadd.f32 %v2328, 1.0
    %v2333 = vadd.f32 %v2329, 1.0
    %v2334 = vmul.f32 %v2330, 0.5
    %v2335 = vmul.f32 %v2331, 0.5
    %v2336 = vmul.f32 %v2332, 0.5
    %v2337 = vmul.f32 %v2333, 0.5
    %v2338 = vmul.f32 %v2310, 0.5
    %v2339 = vmul.f32 %v2311, 0.5
    %v2340 = vmul.f32 %v2312, 0.5
    %v2341 = vmul.f32 %v2313, 0.5
    %v2342 = vtanh.pop %v2338
    %v2343 = vtanh.pop %v2339
    %v2344 = vtanh.pop %v2340
    %v2345 = vtanh.pop %v2341
    %v2346 = vadd.f32 %v2342, 1.0
    %v2347 = vadd.f32 %v2343, 1.0
    %v2348 = vadd.f32 %v2344, 1.0
    %v2349 = vadd.f32 %v2345, 1.0
    %v2350 = vmul.f32 %v2346, 0.5
    %v2351 = vmul.f32 %v2347, 0.5
    %v2352 = vmul.f32 %v2348, 0.5
    %v2353 = vmul.f32 %v2349, 0.5
    %v2354 = vtanh.pop %v2314
    %v2355 = vtanh.pop %v2315
    %v2356 = vtanh.pop %v2316
    %v2357 = vtanh.pop %v2317
    %v2358 = vmul.f32 %v2318, 0.5
    %v2359 = vmul.f32 %v2319, 0.5
    %v2360 = vmul.f32 %v2320, 0.5
    %v2361 = vmul.f32 %v2321, 0.5
    %v2362 = vtanh.pop %v2358
    %v2363 = vtanh.pop %v2359
    %v2364 = vtanh.pop %v2360
    %v2365 = vtanh.pop %v2361
    %v2366 = vadd.f32 %v2362, 1.0
    %v2367 = vadd.f32 %v2363, 1.0
    %v2368 = vadd.f32 %v2364, 1.0
    %v2369 = vadd.f32 %v2365, 1.0
    %v2370 = vmul.f32 %v2366, 0.5
    %v2371 = vmul.f32 %v2367, 0.5
    %v2372 = vmul.f32 %v2368, 0.5
    %v2373 = vmul.f32 %v2369, 0.5
    %v2374 = vmul.f32 %v2350, %v2127
    %v2375 = vmul.f32 %v2351, %v2128
    %v2376 = vmul.f32 %v2352, %v2129
    %v2377 = vmul.f32 %v2353, %v2130
    %v2378 = vmul.f32 %v2334, %v2354
    %v2379 = vmul.f32 %v2335, %v2355
    %v2380 = vmul.f32 %v2336, %v2356
    %v2381 = vmul.f32 %v2337, %v2357
    %v2382 = vadd.f32 %v2374, %v2378
    %v2383 = vadd.f32 %v2375, %v2379
    %v2384 = vadd.f32 %v2376, %v2380
    %v2385 = vadd.f32 %v2377, %v2381
    %v2386 = vtanh.pop %v2382
    %v2387 = vtanh.pop %v2383
    %v2388 = vtanh.pop %v2384
    %v2389 = vtanh.pop %v2385
    %v2390 = vmul.f32 %v2370, %v2386
    %v2391 = vmul.f32 %v2371, %v2387
    %v2392 = vmul.f32 %v2372, %v2388
    %v2393 = vmul.f32 %v2373, %v2389
    %s2394 = scalar_lea.vmem [#allocation2], 256
    %2395 = vst [vmem:[%s2394] sm:$0xff] %v2390
    %2396 = vst [vmem:[%s2394 + $0x8] sm:$0xff] %v2391
    %2397 = vst [vmem:[%s2394 + $0x10] sm:$0xff] %v2392
    %2398 = vst [vmem:[%s2394 + $0x18] sm:$0xff] %v2393
    %s2399 = scalar_lea.vmem [#allocation3], 1152
    %v2400 = vld [vmem:[%s2399] sm:$0xff]
    %v2401 = vld [vmem:[%s2399 + $0x8] sm:$0xff]
    %v2402 = vld [vmem:[%s2399 + $0x10] sm:$0xff]
    %v2403 = vld [vmem:[%s2399 + $0x18] sm:$0xff]
    %v2404 = vld [vmem:[%s2399 + $0x20] sm:$0xff]
    %v2405 = vld [vmem:[%s2399 + $0x28] sm:$0xff]
    %v2406 = vld [vmem:[%s2399 + $0x30] sm:$0xff]
    %v2407 = vld [vmem:[%s2399 + $0x38] sm:$0xff]
    %v2408 = vld [vmem:[%s2399 + $0x40] sm:$0xff]
    %v2409 = vld [vmem:[%s2399 + $0x48] sm:$0xff]
    %v2410 = vld [vmem:[%s2399 + $0x50] sm:$0xff]
    %v2411 = vld [vmem:[%s2399 + $0x58] sm:$0xff]
    %v2412 = vld [vmem:[%s2399 + $0x60] sm:$0xff]
    %v2413 = vld [vmem:[%s2399 + $0x68] sm:$0xff]
    %v2414 = vld [vmem:[%s2399 + $0x70] sm:$0xff]
    %v2415 = vld [vmem:[%s2399 + $0x78] sm:$0xff]
    %2416 = vmatprep.subr.mxu0 0.0
    %2417 = vmatpush1.msra.mxu0 0.0
    %2418 = vmatprep.subr.mxu0 0.0
    %2419 = vmatpush1.msra.mxu0 0.0
    %2420 = vmatprep.subr.mxu0 0.0
    %2421 = vmatpush1.msra.mxu0 0.0
    %2422 = vmatprep.subr.mxu0 0.0
    %2423 = vmatpush1.msra.mxu0 0.0
    %2424 = vmatprep.subr.mxu0 0.0
    %2425 = vmatpush1.msra.mxu0 0.0
    %2426 = vmatprep.subr.mxu0 0.0
    %2427 = vmatpush1.msra.mxu0 0.0
    %2428 = vmatprep.subr.mxu0 0.0
    %2429 = vmatpush1.msra.mxu0 0.0
    %2430 = vmatprep.subr.mxu0 0.0
    %2431 = vmatpush1.msra.mxu0 0.0
    %2432 = vmatprep.subr.mxu0 0.0
    %2433 = vmatpush1.msra.mxu0 0.0
    %2434 = vmatprep.subr.mxu0 0.0
    %2435 = vmatpush1.msra.mxu0 0.0
    %2436 = vmatprep.subr.mxu0 0.0
    %2437 = vmatpush1.msra.mxu0 0.0
    %2438 = vmatprep.subr.mxu0 0.0
    %2439 = vmatpush1.msra.mxu0 0.0
    %2440 = vmatprep.subr.mxu0 0.0
    %2441 = vmatpush1.msra.mxu0 %v2393
    %2442 = vmatprep.subr.mxu0 0.0
    %2443 = vmatpush1.msra.mxu0 %v2392
    %2444 = vmatprep.subr.mxu0 0.0
    %2445 = vmatpush1.msra.mxu0 %v2391
    %2446 = vmatprep.subr.mxu0 0.0
    %2447 = vmatpush1.msra.mxu0 %v2390
    %2448 = vmatprep.subr.mxu0 0.0
    %2449 = vmatpush2.msra.mxu0 0.0
    %2450 = vmatprep.subr.mxu0 0.0
    %2451 = vmatpush2.msra.mxu0 0.0
    %2452 = vmatprep.subr.mxu0 0.0
    %2453 = vmatpush2.msra.mxu0 0.0
    %2454 = vmatprep.subr.mxu0 0.0
    %2455 = vmatpush2.msra.mxu0 0.0
    %2456 = vmatprep.subr.mxu0 0.0
    %2457 = vmatpush2.msra.mxu0 0.0
    %2458 = vmatprep.subr.mxu0 0.0
    %2459 = vmatpush2.msra.mxu0 0.0
    %2460 = vmatprep.subr.mxu0 0.0
    %2461 = vmatpush2.msra.mxu0 0.0
    %2462 = vmatprep.subr.mxu0 0.0
    %2463 = vmatpush2.msra.mxu0 0.0
    %2464 = vmatprep.subr.mxu0 0.0
    %2465 = vmatpush2.msra.mxu0 0.0
    %2466 = vmatprep.subr.mxu0 0.0
    %2467 = vmatpush2.msra.mxu0 0.0
    %2468 = vmatprep.subr.mxu0 0.0
    %2469 = vmatpush2.msra.mxu0 0.0
    %2470 = vmatprep.subr.mxu0 0.0
    %2471 = vmatpush2.msra.mxu0 0.0
    %2472 = vmatprep.subr.mxu0 0.0
    %2473 = vmatpush2.msra.mxu0 0.0
    %2474 = vmatprep.subr.mxu0 0.0
    %2475 = vmatpush2.msra.mxu0 0.0
    %2476 = vmatprep.subr.mxu0 0.0
    %2477 = vmatpush2.msra.mxu0 0.0
    %2478 = vmatprep.subr.mxu0 0.0
    %2479 = vmatpush2.msra.mxu0 0.0
    %2480 = vmatprep.mubr.f32.mxu0 0.0
    %2481 = vmatmul.mubr.f32.gmra.mxu0 %v75
    %v2482 = vpop.f32.mrf.mxu0
    %v2483 = vadd.f32 0.0, %v2482
    %v2484 = vpop.f32.mrf.mxu0
    %2485 = vmatprep.mubr.f32.mxu0 0.0
    %2486 = vmatmul.mubr.f32.gmra.mxu0 %v78
    %v2487 = vpop.f32.mrf.mxu0
    %v2488 = vadd.f32 0.0, %v2487
    %v2489 = vpop.f32.mrf.mxu0
    %2490 = vmatprep.mubr.f32.mxu0 0.0
    %2491 = vmatmul.mubr.f32.gmra.mxu0 %v81
    %v2492 = vpop.f32.mrf.mxu0
    %v2493 = vadd.f32 0.0, %v2492
    %v2494 = vpop.f32.mrf.mxu0
    %2495 = vmatprep.mubr.f32.mxu0 0.0
    %2496 = vmatmul.mubr.f32.gmra.mxu0 %v84
    %v2497 = vpop.f32.mrf.mxu0
    %v2498 = vadd.f32 0.0, %v2497
    %v2499 = vpop.f32.mrf.mxu0
    %2500 = vmatprep.mubr.f32.mxu0 0.0
    %2501 = vmatmul.mubr.f32.gmra.mxu0 %v87
    %v2502 = vpop.f32.mrf.mxu0
    %v2503 = vadd.f32 0.0, %v2502
    %v2504 = vpop.f32.mrf.mxu0
    %2505 = vmatprep.mubr.f32.mxu0 0.0
    %2506 = vmatmul.mubr.f32.gmra.mxu0 %v90
    %v2507 = vpop.f32.mrf.mxu0
    %v2508 = vadd.f32 0.0, %v2507
    %v2509 = vpop.f32.mrf.mxu0
    %2510 = vmatprep.mubr.f32.mxu0 0.0
    %2511 = vmatmul.mubr.f32.gmra.mxu0 %v93
    %v2512 = vpop.f32.mrf.mxu0
    %v2513 = vadd.f32 0.0, %v2512
    %v2514 = vpop.f32.mrf.mxu0
    %2515 = vmatprep.mubr.f32.mxu0 0.0
    %2516 = vmatmul.mubr.f32.gmra.mxu0 %v96
    %v2517 = vpop.f32.mrf.mxu0
    %v2518 = vadd.f32 0.0, %v2517
    %v2519 = vpop.f32.mrf.mxu0
    %2520 = vmatprep.mubr.f32.mxu0 0.0
    %2521 = vmatmul.mubr.f32.gmra.mxu0 %v99
    %v2522 = vpop.f32.mrf.mxu0
    %v2523 = vadd.f32 0.0, %v2522
    %v2524 = vpop.f32.mrf.mxu0
    %2525 = vmatprep.mubr.f32.mxu0 0.0
    %2526 = vmatmul.mubr.f32.gmra.mxu0 %v102
    %v2527 = vpop.f32.mrf.mxu0
    %v2528 = vadd.f32 0.0, %v2527
    %v2529 = vpop.f32.mrf.mxu0
    %2530 = vmatprep.mubr.f32.mxu0 0.0
    %2531 = vmatmul.mubr.f32.gmra.mxu0 %v105
    %v2532 = vpop.f32.mrf.mxu0
    %v2533 = vadd.f32 0.0, %v2532
    %v2534 = vpop.f32.mrf.mxu0
    %2535 = vmatprep.mubr.f32.mxu0 0.0
    %2536 = vmatmul.mubr.f32.gmra.mxu0 %v108
    %v2537 = vpop.f32.mrf.mxu0
    %v2538 = vadd.f32 0.0, %v2537
    %v2539 = vpop.f32.mrf.mxu0
    %2540 = vmatprep.mubr.f32.mxu0 0.0
    %2541 = vmatmul.mubr.f32.gmra.mxu0 %v111
    %v2542 = vpop.f32.mrf.mxu0
    %v2543 = vadd.f32 0.0, %v2542
    %v2544 = vpop.f32.mrf.mxu0
    %2545 = vmatprep.mubr.f32.mxu0 0.0
    %2546 = vmatmul.mubr.f32.gmra.mxu0 %v114
    %v2547 = vpop.f32.mrf.mxu0
    %v2548 = vadd.f32 0.0, %v2547
    %v2549 = vpop.f32.mrf.mxu0
    %2550 = vmatprep.mubr.f32.mxu0 0.0
    %2551 = vmatmul.mubr.f32.gmra.mxu0 %v117
    %v2552 = vpop.f32.mrf.mxu0
    %v2553 = vadd.f32 0.0, %v2552
    %v2554 = vpop.f32.mrf.mxu0
    %2555 = vmatprep.mubr.f32.mxu0 0.0
    %2556 = vmatmul.mubr.f32.gmra.mxu0 %v120
    %v2557 = vpop.f32.mrf.mxu0
    %v2558 = vadd.f32 0.0, %v2557
    %v2559 = vpop.f32.mrf.mxu0
    %2560 = vdwg.mxu0
    %v2561 = vadd.f32 %v2400, %v2483
    %v2562 = vadd.f32 %v2401, %v2488
    %v2563 = vadd.f32 %v2402, %v2493
    %v2564 = vadd.f32 %v2403, %v2498
    %v2565 = vadd.f32 %v2404, %v2503
    %v2566 = vadd.f32 %v2405, %v2508
    %v2567 = vadd.f32 %v2406, %v2513
    %v2568 = vadd.f32 %v2407, %v2518
    %v2569 = vadd.f32 %v2408, %v2523
    %v2570 = vadd.f32 %v2409, %v2528
    %v2571 = vadd.f32 %v2410, %v2533
    %v2572 = vadd.f32 %v2411, %v2538
    %v2573 = vadd.f32 %v2412, %v2543
    %v2574 = vadd.f32 %v2413, %v2548
    %v2575 = vadd.f32 %v2414, %v2553
    %v2576 = vadd.f32 %v2415, %v2558
    %v2577 = vmul.f32 %v2561, 0.5
    %v2578 = vmul.f32 %v2562, 0.5
    %v2579 = vmul.f32 %v2563, 0.5
    %v2580 = vmul.f32 %v2564, 0.5
    %v2581 = vtanh.pop %v2577
    %v2582 = vtanh.pop %v2578
    %v2583 = vtanh.pop %v2579
    %v2584 = vtanh.pop %v2580
    %v2585 = vadd.f32 %v2581, 1.0
    %v2586 = vadd.f32 %v2582, 1.0
    %v2587 = vadd.f32 %v2583, 1.0
    %v2588 = vadd.f32 %v2584, 1.0
    %v2589 = vmul.f32 %v2585, 0.5
    %v2590 = vmul.f32 %v2586, 0.5
    %v2591 = vmul.f32 %v2587, 0.5
    %v2592 = vmul.f32 %v2588, 0.5
    %v2593 = vmul.f32 %v2565, 0.5
    %v2594 = vmul.f32 %v2566, 0.5
    %v2595 = vmul.f32 %v2567, 0.5
    %v2596 = vmul.f32 %v2568, 0.5
    %v2597 = vtanh.pop %v2593
    %v2598 = vtanh.pop %v2594
    %v2599 = vtanh.pop %v2595
    %v2600 = vtanh.pop %v2596
    %v2601 = vadd.f32 %v2597, 1.0
    %v2602 = vadd.f32 %v2598, 1.0
    %v2603 = vadd.f32 %v2599, 1.0
    %v2604 = vadd.f32 %v2600, 1.0
    %v2605 = vmul.f32 %v2601, 0.5
    %v2606 = vmul.f32 %v2602, 0.5
    %v2607 = vmul.f32 %v2603, 0.5
    %v2608 = vmul.f32 %v2604, 0.5
    %v2609 = vtanh.pop %v2569
    %v2610 = vtanh.pop %v2570
    %v2611 = vtanh.pop %v2571
    %v2612 = vtanh.pop %v2572
    %v2613 = vmul.f32 %v2573, 0.5
    %v2614 = vmul.f32 %v2574, 0.5
    %v2615 = vmul.f32 %v2575, 0.5
    %v2616 = vmul.f32 %v2576, 0.5
    %v2617 = vtanh.pop %v2613
    %v2618 = vtanh.pop %v2614
    %v2619 = vtanh.pop %v2615
    %v2620 = vtanh.pop %v2616
    %v2621 = vadd.f32 %v2617, 1.0
    %v2622 = vadd.f32 %v2618, 1.0
    %v2623 = vadd.f32 %v2619, 1.0
    %v2624 = vadd.f32 %v2620, 1.0
    %v2625 = vmul.f32 %v2621, 0.5
    %v2626 = vmul.f32 %v2622, 0.5
    %v2627 = vmul.f32 %v2623, 0.5
    %v2628 = vmul.f32 %v2624, 0.5
    %v2629 = vmul.f32 %v2605, %v2382
    %v2630 = vmul.f32 %v2606, %v2383
    %v2631 = vmul.f32 %v2607, %v2384
    %v2632 = vmul.f32 %v2608, %v2385
    %v2633 = vmul.f32 %v2589, %v2609
    %v2634 = vmul.f32 %v2590, %v2610
    %v2635 = vmul.f32 %v2591, %v2611
    %v2636 = vmul.f32 %v2592, %v2612
    %v2637 = vadd.f32 %v2629, %v2633
    %v2638 = vadd.f32 %v2630, %v2634
    %v2639 = vadd.f32 %v2631, %v2635
    %v2640 = vadd.f32 %v2632, %v2636
    %v2641 = vtanh.pop %v2637
    %v2642 = vtanh.pop %v2638
    %v2643 = vtanh.pop %v2639
    %v2644 = vtanh.pop %v2640
    %v2645 = vmul.f32 %v2625, %v2641
    %v2646 = vmul.f32 %v2626, %v2642
    %v2647 = vmul.f32 %v2627, %v2643
    %v2648 = vmul.f32 %v2628, %v2644
    %s2649 = scalar_lea.vmem [#allocation2], 288
    %2650 = vst [vmem:[%s2649] sm:$0xff] %v2645
    %2651 = vst [vmem:[%s2649 + $0x8] sm:$0xff] %v2646
    %2652 = vst [vmem:[%s2649 + $0x10] sm:$0xff] %v2647
    %2653 = vst [vmem:[%s2649 + $0x18] sm:$0xff] %v2648
    %s2654 = scalar_lea.vmem [#allocation3], 1280
    %v2655 = vld [vmem:[%s2654] sm:$0xff]
    %v2656 = vld [vmem:[%s2654 + $0x8] sm:$0xff]
    %v2657 = vld [vmem:[%s2654 + $0x10] sm:$0xff]
    %v2658 = vld [vmem:[%s2654 + $0x18] sm:$0xff]
    %v2659 = vld [vmem:[%s2654 + $0x20] sm:$0xff]
    %v2660 = vld [vmem:[%s2654 + $0x28] sm:$0xff]
    %v2661 = vld [vmem:[%s2654 + $0x30] sm:$0xff]
    %v2662 = vld [vmem:[%s2654 + $0x38] sm:$0xff]
    %v2663 = vld [vmem:[%s2654 + $0x40] sm:$0xff]
    %v2664 = vld [vmem:[%s2654 + $0x48] sm:$0xff]
    %v2665 = vld [vmem:[%s2654 + $0x50] sm:$0xff]
    %v2666 = vld [vmem:[%s2654 + $0x58] sm:$0xff]
    %v2667 = vld [vmem:[%s2654 + $0x60] sm:$0xff]
    %v2668 = vld [vmem:[%s2654 + $0x68] sm:$0xff]
    %v2669 = vld [vmem:[%s2654 + $0x70] sm:$0xff]
    %v2670 = vld [vmem:[%s2654 + $0x78] sm:$0xff]
    %2671 = vmatprep.subr.mxu0 0.0
    %2672 = vmatpush1.msra.mxu0 0.0
    %2673 = vmatprep.subr.mxu0 0.0
    %2674 = vmatpush1.msra.mxu0 0.0
    %2675 = vmatprep.subr.mxu0 0.0
    %2676 = vmatpush1.msra.mxu0 0.0
    %2677 = vmatprep.subr.mxu0 0.0
    %2678 = vmatpush1.msra.mxu0 0.0
    %2679 = vmatprep.subr.mxu0 0.0
    %2680 = vmatpush1.msra.mxu0 0.0
    %2681 = vmatprep.subr.mxu0 0.0
    %2682 = vmatpush1.msra.mxu0 0.0
    %2683 = vmatprep.subr.mxu0 0.0
    %2684 = vmatpush1.msra.mxu0 0.0
    %2685 = vmatprep.subr.mxu0 0.0
    %2686 = vmatpush1.msra.mxu0 0.0
    %2687 = vmatprep.subr.mxu0 0.0
    %2688 = vmatpush1.msra.mxu0 0.0
    %2689 = vmatprep.subr.mxu0 0.0
    %2690 = vmatpush1.msra.mxu0 0.0
    %2691 = vmatprep.subr.mxu0 0.0
    %2692 = vmatpush1.msra.mxu0 0.0
    %2693 = vmatprep.subr.mxu0 0.0
    %2694 = vmatpush1.msra.mxu0 0.0
    %2695 = vmatprep.subr.mxu0 0.0
    %2696 = vmatpush1.msra.mxu0 %v2648
    %2697 = vmatprep.subr.mxu0 0.0
    %2698 = vmatpush1.msra.mxu0 %v2647
    %2699 = vmatprep.subr.mxu0 0.0
    %2700 = vmatpush1.msra.mxu0 %v2646
    %2701 = vmatprep.subr.mxu0 0.0
    %2702 = vmatpush1.msra.mxu0 %v2645
    %2703 = vmatprep.subr.mxu0 0.0
    %2704 = vmatpush2.msra.mxu0 0.0
    %2705 = vmatprep.subr.mxu0 0.0
    %2706 = vmatpush2.msra.mxu0 0.0
    %2707 = vmatprep.subr.mxu0 0.0
    %2708 = vmatpush2.msra.mxu0 0.0
    %2709 = vmatprep.subr.mxu0 0.0
    %2710 = vmatpush2.msra.mxu0 0.0
    %2711 = vmatprep.subr.mxu0 0.0
    %2712 = vmatpush2.msra.mxu0 0.0
    %2713 = vmatprep.subr.mxu0 0.0
    %2714 = vmatpush2.msra.mxu0 0.0
    %2715 = vmatprep.subr.mxu0 0.0
    %2716 = vmatpush2.msra.mxu0 0.0
    %2717 = vmatprep.subr.mxu0 0.0
    %2718 = vmatpush2.msra.mxu0 0.0
    %2719 = vmatprep.subr.mxu0 0.0
    %2720 = vmatpush2.msra.mxu0 0.0
    %2721 = vmatprep.subr.mxu0 0.0
    %2722 = vmatpush2.msra.mxu0 0.0
    %2723 = vmatprep.subr.mxu0 0.0
    %2724 = vmatpush2.msra.mxu0 0.0
    %2725 = vmatprep.subr.mxu0 0.0
    %2726 = vmatpush2.msra.mxu0 0.0
    %2727 = vmatprep.subr.mxu0 0.0
    %2728 = vmatpush2.msra.mxu0 0.0
    %2729 = vmatprep.subr.mxu0 0.0
    %2730 = vmatpush2.msra.mxu0 0.0
    %2731 = vmatprep.subr.mxu0 0.0
    %2732 = vmatpush2.msra.mxu0 0.0
    %2733 = vmatprep.subr.mxu0 0.0
    %2734 = vmatpush2.msra.mxu0 0.0
    %2735 = vmatprep.mubr.f32.mxu0 0.0
    %2736 = vmatmul.mubr.f32.gmra.mxu0 %v75
    %v2737 = vpop.f32.mrf.mxu0
    %v2738 = vadd.f32 0.0, %v2737
    %v2739 = vpop.f32.mrf.mxu0
    %2740 = vmatprep.mubr.f32.mxu0 0.0
    %2741 = vmatmul.mubr.f32.gmra.mxu0 %v78
    %v2742 = vpop.f32.mrf.mxu0
    %v2743 = vadd.f32 0.0, %v2742
    %v2744 = vpop.f32.mrf.mxu0
    %2745 = vmatprep.mubr.f32.mxu0 0.0
    %2746 = vmatmul.mubr.f32.gmra.mxu0 %v81
    %v2747 = vpop.f32.mrf.mxu0
    %v2748 = vadd.f32 0.0, %v2747
    %v2749 = vpop.f32.mrf.mxu0
    %2750 = vmatprep.mubr.f32.mxu0 0.0
    %2751 = vmatmul.mubr.f32.gmra.mxu0 %v84
    %v2752 = vpop.f32.mrf.mxu0
    %v2753 = vadd.f32 0.0, %v2752
    %v2754 = vpop.f32.mrf.mxu0
    %2755 = vmatprep.mubr.f32.mxu0 0.0
    %2756 = vmatmul.mubr.f32.gmra.mxu0 %v87
    %v2757 = vpop.f32.mrf.mxu0
    %v2758 = vadd.f32 0.0, %v2757
    %v2759 = vpop.f32.mrf.mxu0
    %2760 = vmatprep.mubr.f32.mxu0 0.0
    %2761 = vmatmul.mubr.f32.gmra.mxu0 %v90
    %v2762 = vpop.f32.mrf.mxu0
    %v2763 = vadd.f32 0.0, %v2762
    %v2764 = vpop.f32.mrf.mxu0
    %2765 = vmatprep.mubr.f32.mxu0 0.0
    %2766 = vmatmul.mubr.f32.gmra.mxu0 %v93
    %v2767 = vpop.f32.mrf.mxu0
    %v2768 = vadd.f32 0.0, %v2767
    %v2769 = vpop.f32.mrf.mxu0
    %2770 = vmatprep.mubr.f32.mxu0 0.0
    %2771 = vmatmul.mubr.f32.gmra.mxu0 %v96
    %v2772 = vpop.f32.mrf.mxu0
    %v2773 = vadd.f32 0.0, %v2772
    %v2774 = vpop.f32.mrf.mxu0
    %2775 = vmatprep.mubr.f32.mxu0 0.0
    %2776 = vmatmul.mubr.f32.gmra.mxu0 %v99
    %v2777 = vpop.f32.mrf.mxu0
    %v2778 = vadd.f32 0.0, %v2777
    %v2779 = vpop.f32.mrf.mxu0
    %2780 = vmatprep.mubr.f32.mxu0 0.0
    %2781 = vmatmul.mubr.f32.gmra.mxu0 %v102
    %v2782 = vpop.f32.mrf.mxu0
    %v2783 = vadd.f32 0.0, %v2782
    %v2784 = vpop.f32.mrf.mxu0
    %2785 = vmatprep.mubr.f32.mxu0 0.0
    %2786 = vmatmul.mubr.f32.gmra.mxu0 %v105
    %v2787 = vpop.f32.mrf.mxu0
    %v2788 = vadd.f32 0.0, %v2787
    %v2789 = vpop.f32.mrf.mxu0
    %2790 = vmatprep.mubr.f32.mxu0 0.0
    %2791 = vmatmul.mubr.f32.gmra.mxu0 %v108
    %v2792 = vpop.f32.mrf.mxu0
    %v2793 = vadd.f32 0.0, %v2792
    %v2794 = vpop.f32.mrf.mxu0
    %2795 = vmatprep.mubr.f32.mxu0 0.0
    %2796 = vmatmul.mubr.f32.gmra.mxu0 %v111
    %v2797 = vpop.f32.mrf.mxu0
    %v2798 = vadd.f32 0.0, %v2797
    %v2799 = vpop.f32.mrf.mxu0
    %2800 = vmatprep.mubr.f32.mxu0 0.0
    %2801 = vmatmul.mubr.f32.gmra.mxu0 %v114
    %v2802 = vpop.f32.mrf.mxu0
    %v2803 = vadd.f32 0.0, %v2802
    %v2804 = vpop.f32.mrf.mxu0
    %2805 = vmatprep.mubr.f32.mxu0 0.0
    %2806 = vmatmul.mubr.f32.gmra.mxu0 %v117
    %v2807 = vpop.f32.mrf.mxu0
    %v2808 = vadd.f32 0.0, %v2807
    %v2809 = vpop.f32.mrf.mxu0
    %2810 = vmatprep.mubr.f32.mxu0 0.0
    %2811 = vmatmul.mubr.f32.gmra.mxu0 %v120
    %v2812 = vpop.f32.mrf.mxu0
    %v2813 = vadd.f32 0.0, %v2812
    %v2814 = vpop.f32.mrf.mxu0
    %2815 = vdwg.mxu0
    %v2816 = vadd.f32 %v2655, %v2738
    %v2817 = vadd.f32 %v2656, %v2743
    %v2818 = vadd.f32 %v2657, %v2748
    %v2819 = vadd.f32 %v2658, %v2753
    %v2820 = vadd.f32 %v2659, %v2758
    %v2821 = vadd.f32 %v2660, %v2763
    %v2822 = vadd.f32 %v2661, %v2768
    %v2823 = vadd.f32 %v2662, %v2773
    %v2824 = vadd.f32 %v2663, %v2778
    %v2825 = vadd.f32 %v2664, %v2783
    %v2826 = vadd.f32 %v2665, %v2788
    %v2827 = vadd.f32 %v2666, %v2793
    %v2828 = vadd.f32 %v2667, %v2798
    %v2829 = vadd.f32 %v2668, %v2803
    %v2830 = vadd.f32 %v2669, %v2808
    %v2831 = vadd.f32 %v2670, %v2813
    %v2832 = vmul.f32 %v2816, 0.5
    %v2833 = vmul.f32 %v2817, 0.5
    %v2834 = vmul.f32 %v2818, 0.5
    %v2835 = vmul.f32 %v2819, 0.5
    %v2836 = vtanh.pop %v2832
    %v2837 = vtanh.pop %v2833
    %v2838 = vtanh.pop %v2834
    %v2839 = vtanh.pop %v2835
    %v2840 = vadd.f32 %v2836, 1.0
    %v2841 = vadd.f32 %v2837, 1.0
    %v2842 = vadd.f32 %v2838, 1.0
    %v2843 = vadd.f32 %v2839, 1.0
    %v2844 = vmul.f32 %v2840, 0.5
    %v2845 = vmul.f32 %v2841, 0.5
    %v2846 = vmul.f32 %v2842, 0.5
    %v2847 = vmul.f32 %v2843, 0.5
    %v2848 = vmul.f32 %v2820, 0.5
    %v2849 = vmul.f32 %v2821, 0.5
    %v2850 = vmul.f32 %v2822, 0.5
    %v2851 = vmul.f32 %v2823, 0.5
    %v2852 = vtanh.pop %v2848
    %v2853 = vtanh.pop %v2849
    %v2854 = vtanh.pop %v2850
    %v2855 = vtanh.pop %v2851
    %v2856 = vadd.f32 %v2852, 1.0
    %v2857 = vadd.f32 %v2853, 1.0
    %v2858 = vadd.f32 %v2854, 1.0
    %v2859 = vadd.f32 %v2855, 1.0
    %v2860 = vmul.f32 %v2856, 0.5
    %v2861 = vmul.f32 %v2857, 0.5
    %v2862 = vmul.f32 %v2858, 0.5
    %v2863 = vmul.f32 %v2859, 0.5
    %v2864 = vtanh.pop %v2824
    %v2865 = vtanh.pop %v2825
    %v2866 = vtanh.pop %v2826
    %v2867 = vtanh.pop %v2827
    %v2868 = vmul.f32 %v2828, 0.5
    %v2869 = vmul.f32 %v2829, 0.5
    %v2870 = vmul.f32 %v2830, 0.5
    %v2871 = vmul.f32 %v2831, 0.5
    %v2872 = vtanh.pop %v2868
    %v2873 = vtanh.pop %v2869
    %v2874 = vtanh.pop %v2870
    %v2875 = vtanh.pop %v2871
    %v2876 = vadd.f32 %v2872, 1.0
    %v2877 = vadd.f32 %v2873, 1.0
    %v2878 = vadd.f32 %v2874, 1.0
    %v2879 = vadd.f32 %v2875, 1.0
    %v2880 = vmul.f32 %v2876, 0.5
    %v2881 = vmul.f32 %v2877, 0.5
    %v2882 = vmul.f32 %v2878, 0.5
    %v2883 = vmul.f32 %v2879, 0.5
    %v2884 = vmul.f32 %v2860, %v2637
    %v2885 = vmul.f32 %v2861, %v2638
    %v2886 = vmul.f32 %v2862, %v2639
    %v2887 = vmul.f32 %v2863, %v2640
    %v2888 = vmul.f32 %v2844, %v2864
    %v2889 = vmul.f32 %v2845, %v2865
    %v2890 = vmul.f32 %v2846, %v2866
    %v2891 = vmul.f32 %v2847, %v2867
    %v2892 = vadd.f32 %v2884, %v2888
    %v2893 = vadd.f32 %v2885, %v2889
    %v2894 = vadd.f32 %v2886, %v2890
    %v2895 = vadd.f32 %v2887, %v2891
    %v2896 = vtanh.pop %v2892
    %v2897 = vtanh.pop %v2893
    %v2898 = vtanh.pop %v2894
    %v2899 = vtanh.pop %v2895
    %v2900 = vmul.f32 %v2880, %v2896
    %v2901 = vmul.f32 %v2881, %v2897
    %v2902 = vmul.f32 %v2882, %v2898
    %v2903 = vmul.f32 %v2883, %v2899
    %s2904 = scalar_lea.vmem [#allocation2], 320
    %2905 = vst [vmem:[%s2904] sm:$0xff] %v2900
    %2906 = vst [vmem:[%s2904 + $0x8] sm:$0xff] %v2901
    %2907 = vst [vmem:[%s2904 + $0x10] sm:$0xff] %v2902
    %2908 = vst [vmem:[%s2904 + $0x18] sm:$0xff] %v2903
    %s2909 = scalar_lea.vmem [#allocation3], 1408
    %v2910 = vld [vmem:[%s2909] sm:$0xff]
    %v2911 = vld [vmem:[%s2909 + $0x8] sm:$0xff]
    %v2912 = vld [vmem:[%s2909 + $0x10] sm:$0xff]
    %v2913 = vld [vmem:[%s2909 + $0x18] sm:$0xff]
    %v2914 = vld [vmem:[%s2909 + $0x20] sm:$0xff]
    %v2915 = vld [vmem:[%s2909 + $0x28] sm:$0xff]
    %v2916 = vld [vmem:[%s2909 + $0x30] sm:$0xff]
    %v2917 = vld [vmem:[%s2909 + $0x38] sm:$0xff]
    %v2918 = vld [vmem:[%s2909 + $0x40] sm:$0xff]
    %v2919 = vld [vmem:[%s2909 + $0x48] sm:$0xff]
    %v2920 = vld [vmem:[%s2909 + $0x50] sm:$0xff]
    %v2921 = vld [vmem:[%s2909 + $0x58] sm:$0xff]
    %v2922 = vld [vmem:[%s2909 + $0x60] sm:$0xff]
    %v2923 = vld [vmem:[%s2909 + $0x68] sm:$0xff]
    %v2924 = vld [vmem:[%s2909 + $0x70] sm:$0xff]
    %v2925 = vld [vmem:[%s2909 + $0x78] sm:$0xff]
    %2926 = vmatprep.subr.mxu0 0.0
    %2927 = vmatpush1.msra.mxu0 0.0
    %2928 = vmatprep.subr.mxu0 0.0
    %2929 = vmatpush1.msra.mxu0 0.0
    %2930 = vmatprep.subr.mxu0 0.0
    %2931 = vmatpush1.msra.mxu0 0.0
    %2932 = vmatprep.subr.mxu0 0.0
    %2933 = vmatpush1.msra.mxu0 0.0
    %2934 = vmatprep.subr.mxu0 0.0
    %2935 = vmatpush1.msra.mxu0 0.0
    %2936 = vmatprep.subr.mxu0 0.0
    %2937 = vmatpush1.msra.mxu0 0.0
    %2938 = vmatprep.subr.mxu0 0.0
    %2939 = vmatpush1.msra.mxu0 0.0
    %2940 = vmatprep.subr.mxu0 0.0
    %2941 = vmatpush1.msra.mxu0 0.0
    %2942 = vmatprep.subr.mxu0 0.0
    %2943 = vmatpush1.msra.mxu0 0.0
    %2944 = vmatprep.subr.mxu0 0.0
    %2945 = vmatpush1.msra.mxu0 0.0
    %2946 = vmatprep.subr.mxu0 0.0
    %2947 = vmatpush1.msra.mxu0 0.0
    %2948 = vmatprep.subr.mxu0 0.0
    %2949 = vmatpush1.msra.mxu0 0.0
    %2950 = vmatprep.subr.mxu0 0.0
    %2951 = vmatpush1.msra.mxu0 %v2903
    %2952 = vmatprep.subr.mxu0 0.0
    %2953 = vmatpush1.msra.mxu0 %v2902
    %2954 = vmatprep.subr.mxu0 0.0
    %2955 = vmatpush1.msra.mxu0 %v2901
    %2956 = vmatprep.subr.mxu0 0.0
    %2957 = vmatpush1.msra.mxu0 %v2900
    %2958 = vmatprep.subr.mxu0 0.0
    %2959 = vmatpush2.msra.mxu0 0.0
    %2960 = vmatprep.subr.mxu0 0.0
    %2961 = vmatpush2.msra.mxu0 0.0
    %2962 = vmatprep.subr.mxu0 0.0
    %2963 = vmatpush2.msra.mxu0 0.0
    %2964 = vmatprep.subr.mxu0 0.0
    %2965 = vmatpush2.msra.mxu0 0.0
    %2966 = vmatprep.subr.mxu0 0.0
    %2967 = vmatpush2.msra.mxu0 0.0
    %2968 = vmatprep.subr.mxu0 0.0
    %2969 = vmatpush2.msra.mxu0 0.0
    %2970 = vmatprep.subr.mxu0 0.0
    %2971 = vmatpush2.msra.mxu0 0.0
    %2972 = vmatprep.subr.mxu0 0.0
    %2973 = vmatpush2.msra.mxu0 0.0
    %2974 = vmatprep.subr.mxu0 0.0
    %2975 = vmatpush2.msra.mxu0 0.0
    %2976 = vmatprep.subr.mxu0 0.0
    %2977 = vmatpush2.msra.mxu0 0.0
    %2978 = vmatprep.subr.mxu0 0.0
    %2979 = vmatpush2.msra.mxu0 0.0
    %2980 = vmatprep.subr.mxu0 0.0
    %2981 = vmatpush2.msra.mxu0 0.0
    %2982 = vmatprep.subr.mxu0 0.0
    %2983 = vmatpush2.msra.mxu0 0.0
    %2984 = vmatprep.subr.mxu0 0.0
    %2985 = vmatpush2.msra.mxu0 0.0
    %2986 = vmatprep.subr.mxu0 0.0
    %2987 = vmatpush2.msra.mxu0 0.0
    %2988 = vmatprep.subr.mxu0 0.0
    %2989 = vmatpush2.msra.mxu0 0.0
    %2990 = vmatprep.mubr.f32.mxu0 0.0
    %2991 = vmatmul.mubr.f32.gmra.mxu0 %v75
    %v2992 = vpop.f32.mrf.mxu0
    %v2993 = vadd.f32 0.0, %v2992
    %v2994 = vpop.f32.mrf.mxu0
    %2995 = vmatprep.mubr.f32.mxu0 0.0
    %2996 = vmatmul.mubr.f32.gmra.mxu0 %v78
    %v2997 = vpop.f32.mrf.mxu0
    %v2998 = vadd.f32 0.0, %v2997
    %v2999 = vpop.f32.mrf.mxu0
    %3000 = vmatprep.mubr.f32.mxu0 0.0
    %3001 = vmatmul.mubr.f32.gmra.mxu0 %v81
    %v3002 = vpop.f32.mrf.mxu0
    %v3003 = vadd.f32 0.0, %v3002
    %v3004 = vpop.f32.mrf.mxu0
    %3005 = vmatprep.mubr.f32.mxu0 0.0
    %3006 = vmatmul.mubr.f32.gmra.mxu0 %v84
    %v3007 = vpop.f32.mrf.mxu0
    %v3008 = vadd.f32 0.0, %v3007
    %v3009 = vpop.f32.mrf.mxu0
    %3010 = vmatprep.mubr.f32.mxu0 0.0
    %3011 = vmatmul.mubr.f32.gmra.mxu0 %v87
    %v3012 = vpop.f32.mrf.mxu0
    %v3013 = vadd.f32 0.0, %v3012
    %v3014 = vpop.f32.mrf.mxu0
    %3015 = vmatprep.mubr.f32.mxu0 0.0
    %3016 = vmatmul.mubr.f32.gmra.mxu0 %v90
    %v3017 = vpop.f32.mrf.mxu0
    %v3018 = vadd.f32 0.0, %v3017
    %v3019 = vpop.f32.mrf.mxu0
    %3020 = vmatprep.mubr.f32.mxu0 0.0
    %3021 = vmatmul.mubr.f32.gmra.mxu0 %v93
    %v3022 = vpop.f32.mrf.mxu0
    %v3023 = vadd.f32 0.0, %v3022
    %v3024 = vpop.f32.mrf.mxu0
    %3025 = vmatprep.mubr.f32.mxu0 0.0
    %3026 = vmatmul.mubr.f32.gmra.mxu0 %v96
    %v3027 = vpop.f32.mrf.mxu0
    %v3028 = vadd.f32 0.0, %v3027
    %v3029 = vpop.f32.mrf.mxu0
    %3030 = vmatprep.mubr.f32.mxu0 0.0
    %3031 = vmatmul.mubr.f32.gmra.mxu0 %v99
    %v3032 = vpop.f32.mrf.mxu0
    %v3033 = vadd.f32 0.0, %v3032
    %v3034 = vpop.f32.mrf.mxu0
    %3035 = vmatprep.mubr.f32.mxu0 0.0
    %3036 = vmatmul.mubr.f32.gmra.mxu0 %v102
    %v3037 = vpop.f32.mrf.mxu0
    %v3038 = vadd.f32 0.0, %v3037
    %v3039 = vpop.f32.mrf.mxu0
    %3040 = vmatprep.mubr.f32.mxu0 0.0
    %3041 = vmatmul.mubr.f32.gmra.mxu0 %v105
    %v3042 = vpop.f32.mrf.mxu0
    %v3043 = vadd.f32 0.0, %v3042
    %v3044 = vpop.f32.mrf.mxu0
    %3045 = vmatprep.mubr.f32.mxu0 0.0
    %3046 = vmatmul.mubr.f32.gmra.mxu0 %v108
    %v3047 = vpop.f32.mrf.mxu0
    %v3048 = vadd.f32 0.0, %v3047
    %v3049 = vpop.f32.mrf.mxu0
    %3050 = vmatprep.mubr.f32.mxu0 0.0
    %3051 = vmatmul.mubr.f32.gmra.mxu0 %v111
    %v3052 = vpop.f32.mrf.mxu0
    %v3053 = vadd.f32 0.0, %v3052
    %v3054 = vpop.f32.mrf.mxu0
    %3055 = vmatprep.mubr.f32.mxu0 0.0
    %3056 = vmatmul.mubr.f32.gmra.mxu0 %v114
    %v3057 = vpop.f32.mrf.mxu0
    %v3058 = vadd.f32 0.0, %v3057
    %v3059 = vpop.f32.mrf.mxu0
    %3060 = vmatprep.mubr.f32.mxu0 0.0
    %3061 = vmatmul.mubr.f32.gmra.mxu0 %v117
    %v3062 = vpop.f32.mrf.mxu0
    %v3063 = vadd.f32 0.0, %v3062
    %v3064 = vpop.f32.mrf.mxu0
    %3065 = vmatprep.mubr.f32.mxu0 0.0
    %3066 = vmatmul.mubr.f32.gmra.mxu0 %v120
    %v3067 = vpop.f32.mrf.mxu0
    %v3068 = vadd.f32 0.0, %v3067
    %v3069 = vpop.f32.mrf.mxu0
    %3070 = vdwg.mxu0
    %v3071 = vadd.f32 %v2910, %v2993
    %v3072 = vadd.f32 %v2911, %v2998
    %v3073 = vadd.f32 %v2912, %v3003
    %v3074 = vadd.f32 %v2913, %v3008
    %v3075 = vadd.f32 %v2914, %v3013
    %v3076 = vadd.f32 %v2915, %v3018
    %v3077 = vadd.f32 %v2916, %v3023
    %v3078 = vadd.f32 %v2917, %v3028
    %v3079 = vadd.f32 %v2918, %v3033
    %v3080 = vadd.f32 %v2919, %v3038
    %v3081 = vadd.f32 %v2920, %v3043
    %v3082 = vadd.f32 %v2921, %v3048
    %v3083 = vadd.f32 %v2922, %v3053
    %v3084 = vadd.f32 %v2923, %v3058
    %v3085 = vadd.f32 %v2924, %v3063
    %v3086 = vadd.f32 %v2925, %v3068
    %v3087 = vmul.f32 %v3071, 0.5
    %v3088 = vmul.f32 %v3072, 0.5
    %v3089 = vmul.f32 %v3073, 0.5
    %v3090 = vmul.f32 %v3074, 0.5
    %v3091 = vtanh.pop %v3087
    %v3092 = vtanh.pop %v3088
    %v3093 = vtanh.pop %v3089
    %v3094 = vtanh.pop %v3090
    %v3095 = vadd.f32 %v3091, 1.0
    %v3096 = vadd.f32 %v3092, 1.0
    %v3097 = vadd.f32 %v3093, 1.0
    %v3098 = vadd.f32 %v3094, 1.0
    %v3099 = vmul.f32 %v3095, 0.5
    %v3100 = vmul.f32 %v3096, 0.5
    %v3101 = vmul.f32 %v3097, 0.5
    %v3102 = vmul.f32 %v3098, 0.5
    %v3103 = vmul.f32 %v3075, 0.5
    %v3104 = vmul.f32 %v3076, 0.5
    %v3105 = vmul.f32 %v3077, 0.5
    %v3106 = vmul.f32 %v3078, 0.5
    %v3107 = vtanh.pop %v3103
    %v3108 = vtanh.pop %v3104
    %v3109 = vtanh.pop %v3105
    %v3110 = vtanh.pop %v3106
    %v3111 = vadd.f32 %v3107, 1.0
    %v3112 = vadd.f32 %v3108, 1.0
    %v3113 = vadd.f32 %v3109, 1.0
    %v3114 = vadd.f32 %v3110, 1.0
    %v3115 = vmul.f32 %v3111, 0.5
    %v3116 = vmul.f32 %v3112, 0.5
    %v3117 = vmul.f32 %v3113, 0.5
    %v3118 = vmul.f32 %v3114, 0.5
    %v3119 = vtanh.pop %v3079
    %v3120 = vtanh.pop %v3080
    %v3121 = vtanh.pop %v3081
    %v3122 = vtanh.pop %v3082
    %v3123 = vmul.f32 %v3083, 0.5
    %v3124 = vmul.f32 %v3084, 0.5
    %v3125 = vmul.f32 %v3085, 0.5
    %v3126 = vmul.f32 %v3086, 0.5
    %v3127 = vtanh.pop %v3123
    %v3128 = vtanh.pop %v3124
    %v3129 = vtanh.pop %v3125
    %v3130 = vtanh.pop %v3126
    %v3131 = vadd.f32 %v3127, 1.0
    %v3132 = vadd.f32 %v3128, 1.0
    %v3133 = vadd.f32 %v3129, 1.0
    %v3134 = vadd.f32 %v3130, 1.0
    %v3135 = vmul.f32 %v3131, 0.5
    %v3136 = vmul.f32 %v3132, 0.5
    %v3137 = vmul.f32 %v3133, 0.5
    %v3138 = vmul.f32 %v3134, 0.5
    %v3139 = vmul.f32 %v3115, %v2892
    %v3140 = vmul.f32 %v3116, %v2893
    %v3141 = vmul.f32 %v3117, %v2894
    %v3142 = vmul.f32 %v3118, %v2895
    %v3143 = vmul.f32 %v3099, %v3119
    %v3144 = vmul.f32 %v3100, %v3120
    %v3145 = vmul.f32 %v3101, %v3121
    %v3146 = vmul.f32 %v3102, %v3122
    %v3147 = vadd.f32 %v3139, %v3143
    %v3148 = vadd.f32 %v3140, %v3144
    %v3149 = vadd.f32 %v3141, %v3145
    %v3150 = vadd.f32 %v3142, %v3146
    %v3151 = vtanh.pop %v3147
    %v3152 = vtanh.pop %v3148
    %v3153 = vtanh.pop %v3149
    %v3154 = vtanh.pop %v3150
    %v3155 = vmul.f32 %v3135, %v3151
    %v3156 = vmul.f32 %v3136, %v3152
    %v3157 = vmul.f32 %v3137, %v3153
    %v3158 = vmul.f32 %v3138, %v3154
    %s3159 = scalar_lea.vmem [#allocation2], 352
    %3160 = vst [vmem:[%s3159] sm:$0xff] %v3155
    %3161 = vst [vmem:[%s3159 + $0x8] sm:$0xff] %v3156
    %3162 = vst [vmem:[%s3159 + $0x10] sm:$0xff] %v3157
    %3163 = vst [vmem:[%s3159 + $0x18] sm:$0xff] %v3158
    %v3164 = vld [vmem:[%s2] sm:$0xff]
    %v3165 = vld [vmem:[%s2 + $0x8] sm:$0xff]
    %v3166 = vld [vmem:[%s2 + $0x10] sm:$0xff]
    %v3167 = vld [vmem:[%s2 + $0x18] sm:$0xff]
    %v3168 = vld [vmem:[%s2 + $0x20] sm:$0xff]
    %v3169 = vld [vmem:[%s2 + $0x28] sm:$0xff]
    %v3170 = vld [vmem:[%s2 + $0x30] sm:$0xff]
    %v3171 = vld [vmem:[%s2 + $0x38] sm:$0xff]
    %v3172 = vld [vmem:[%s2 + $0x40] sm:$0xff]
    %v3173 = vld [vmem:[%s2 + $0x48] sm:$0xff]
    %v3174 = vld [vmem:[%s2 + $0x50] sm:$0xff]
    %v3175 = vld [vmem:[%s2 + $0x58] sm:$0xff]
    %v3176 = vld [vmem:[%s2 + $0x60] sm:$0xff]
    %v3177 = vld [vmem:[%s2 + $0x68] sm:$0xff]
    %v3178 = vld [vmem:[%s2 + $0x70] sm:$0xff]
    %v3179 = vld [vmem:[%s2 + $0x78] sm:$0xff]
    %v3180 = vld [vmem:[%s3] sm:$0xff]
    %v3181 = vld [vmem:[%s3 + $0x8] sm:$0xff]
    %v3182 = vld [vmem:[%s3 + $0x10] sm:$0xff]
    %v3183 = vld [vmem:[%s3 + $0x18] sm:$0xff]
    %v3184 = vld [vmem:[%s3 + $0x20] sm:$0xff]
    %v3185 = vld [vmem:[%s3 + $0x28] sm:$0xff]
    %v3186 = vld [vmem:[%s3 + $0x30] sm:$0xff]
    %v3187 = vld [vmem:[%s3 + $0x38] sm:$0xff]
    %v3188 = vld [vmem:[%s3 + $0x40] sm:$0xff]
    %v3189 = vld [vmem:[%s3 + $0x48] sm:$0xff]
    %v3190 = vld [vmem:[%s3 + $0x50] sm:$0xff]
    %v3191 = vld [vmem:[%s3 + $0x58] sm:$0xff]
    %v3192 = vld [vmem:[%s3 + $0x60] sm:$0xff]
    %v3193 = vld [vmem:[%s3 + $0x68] sm:$0xff]
    %v3194 = vld [vmem:[%s3 + $0x70] sm:$0xff]
    %v3195 = vld [vmem:[%s3 + $0x78] sm:$0xff]
    %v3196 = vld [vmem:[%s4] sm:$0xff]
    %v3197 = vld [vmem:[%s4 + $0x8] sm:$0xff]
    %v3198 = vld [vmem:[%s4 + $0x10] sm:$0xff]
    %v3199 = vld [vmem:[%s4 + $0x18] sm:$0xff]
    %v3200 = vld [vmem:[%s4 + $0x20] sm:$0xff]
    %v3201 = vld [vmem:[%s4 + $0x28] sm:$0xff]
    %v3202 = vld [vmem:[%s4 + $0x30] sm:$0xff]
    %v3203 = vld [vmem:[%s4 + $0x38] sm:$0xff]
    %v3204 = vld [vmem:[%s4 + $0x40] sm:$0xff]
    %v3205 = vld [vmem:[%s4 + $0x48] sm:$0xff]
    %v3206 = vld [vmem:[%s4 + $0x50] sm:$0xff]
    %v3207 = vld [vmem:[%s4 + $0x58] sm:$0xff]
    %v3208 = vld [vmem:[%s4 + $0x60] sm:$0xff]
    %v3209 = vld [vmem:[%s4 + $0x68] sm:$0xff]
    %v3210 = vld [vmem:[%s4 + $0x70] sm:$0xff]
    %v3211 = vld [vmem:[%s4 + $0x78] sm:$0xff]
    %3213 = vset.pattern.permute.xlu0 0
    %3214 = vperm.xlu0 %3213, %v3196
    %v3215 = vpop.permute.xlu0 %3214
    %3218 = vset.pattern.permute.xlu0 0
    %3219 = vperm.xlu0 %3218, %v3197
    %v3220 = vpop.permute.xlu0 %3219
    %3223 = vset.pattern.permute.xlu0 0
    %3224 = vperm.xlu0 %3223, %v3198
    %v3225 = vpop.permute.xlu0 %3224
    %3228 = vset.pattern.permute.xlu0 0
    %3229 = vperm.xlu0 %3228, %v3199
    %v3230 = vpop.permute.xlu0 %3229
    %3233 = vset.pattern.permute.xlu0 0
    %3234 = vperm.xlu0 %3233, %v3200
    %v3235 = vpop.permute.xlu0 %3234
    %3238 = vset.pattern.permute.xlu0 0
    %3239 = vperm.xlu0 %3238, %v3201
    %v3240 = vpop.permute.xlu0 %3239
    %3243 = vset.pattern.permute.xlu0 0
    %3244 = vperm.xlu0 %3243, %v3202
    %v3245 = vpop.permute.xlu0 %3244
    %3248 = vset.pattern.permute.xlu0 0
    %3249 = vperm.xlu0 %3248, %v3203
    %v3250 = vpop.permute.xlu0 %3249
    %3253 = vset.pattern.permute.xlu0 0
    %3254 = vperm.xlu0 %3253, %v3204
    %v3255 = vpop.permute.xlu0 %3254
    %3258 = vset.pattern.permute.xlu0 0
    %3259 = vperm.xlu0 %3258, %v3205
    %v3260 = vpop.permute.xlu0 %3259
    %3263 = vset.pattern.permute.xlu0 0
    %3264 = vperm.xlu0 %3263, %v3206
    %v3265 = vpop.permute.xlu0 %3264
    %3268 = vset.pattern.permute.xlu0 0
    %3269 = vperm.xlu0 %3268, %v3207
    %v3270 = vpop.permute.xlu0 %3269
    %3273 = vset.pattern.permute.xlu0 0
    %3274 = vperm.xlu0 %3273, %v3208
    %v3275 = vpop.permute.xlu0 %3274
    %3278 = vset.pattern.permute.xlu0 0
    %3279 = vperm.xlu0 %3278, %v3209
    %v3280 = vpop.permute.xlu0 %3279
    %3283 = vset.pattern.permute.xlu0 0
    %3284 = vperm.xlu0 %3283, %v3210
    %v3285 = vpop.permute.xlu0 %3284
    %3288 = vset.pattern.permute.xlu0 0
    %3289 = vperm.xlu0 %3288, %v3211
    %v3290 = vpop.permute.xlu0 %3289
    %v3292 = vld [vmem:[#allocation2] sm:$0xff]
    %v3293 = vld [vmem:[#allocation2 + $0x8] sm:$0xff]
    %v3294 = vld [vmem:[#allocation2 + $0x10] sm:$0xff]
    %v3295 = vld [vmem:[#allocation2 + $0x18] sm:$0xff]
    %v3297 = vsel %vm73, %v3180, 0
    %v3300 = vsel %vm73, %v3181, 0
    %v3303 = vsel %vm73, %v3182, 0
    %v3306 = vsel %vm73, %v3183, 0
    %v3309 = vsel %vm73, %v3184, 0
    %v3312 = vsel %vm73, %v3185, 0
    %v3315 = vsel %vm73, %v3186, 0
    %v3318 = vsel %vm73, %v3187, 0
    %v3321 = vsel %vm73, %v3188, 0
    %v3324 = vsel %vm73, %v3189, 0
    %v3327 = vsel %vm73, %v3190, 0
    %v3330 = vsel %vm73, %v3191, 0
    %v3333 = vsel %vm73, %v3192, 0
    %v3336 = vsel %vm73, %v3193, 0
    %v3339 = vsel %vm73, %v3194, 0
    %v3342 = vsel %vm73, %v3195, 0
    %3344 = vmatprep.subr.mxu0 0.0
    %3345 = vmatpush1.msra.mxu0 0.0
    %3346 = vmatprep.subr.mxu0 0.0
    %3347 = vmatpush1.msra.mxu0 0.0
    %3348 = vmatprep.subr.mxu0 0.0
    %3349 = vmatpush1.msra.mxu0 0.0
    %3350 = vmatprep.subr.mxu0 0.0
    %3351 = vmatpush1.msra.mxu0 0.0
    %3352 = vmatprep.subr.mxu0 0.0
    %3353 = vmatpush1.msra.mxu0 0.0
    %3354 = vmatprep.subr.mxu0 0.0
    %3355 = vmatpush1.msra.mxu0 0.0
    %3356 = vmatprep.subr.mxu0 0.0
    %3357 = vmatpush1.msra.mxu0 0.0
    %3358 = vmatprep.subr.mxu0 0.0
    %3359 = vmatpush1.msra.mxu0 0.0
    %3360 = vmatprep.subr.mxu0 0.0
    %3361 = vmatpush1.msra.mxu0 0.0
    %3362 = vmatprep.subr.mxu0 0.0
    %3363 = vmatpush1.msra.mxu0 0.0
    %3364 = vmatprep.subr.mxu0 0.0
    %3365 = vmatpush1.msra.mxu0 0.0
    %3366 = vmatprep.subr.mxu0 0.0
    %3367 = vmatpush1.msra.mxu0 0.0
    %3368 = vmatprep.subr.mxu0 0.0
    %3369 = vmatpush1.msra.mxu0 0.0
    %3370 = vmatprep.subr.mxu0 0.0
    %3371 = vmatpush1.msra.mxu0 0.0
    %3372 = vmatprep.subr.mxu0 0.0
    %3373 = vmatpush1.msra.mxu0 0.0
    %3374 = vmatprep.subr.mxu0 0.0
    %3375 = vmatpush1.msra.mxu0 0.0
    %3376 = vmatprep.subr.mxu0 0.0
    %3377 = vmatpush2.msra.mxu0 0.0
    %3378 = vmatprep.subr.mxu0 0.0
    %3379 = vmatpush2.msra.mxu0 0.0
    %3380 = vmatprep.subr.mxu0 0.0
    %3381 = vmatpush2.msra.mxu0 0.0
    %3382 = vmatprep.subr.mxu0 0.0
    %3383 = vmatpush2.msra.mxu0 0.0
    %3384 = vmatprep.subr.mxu0 0.0
    %3385 = vmatpush2.msra.mxu0 0.0
    %3386 = vmatprep.subr.mxu0 0.0
    %3387 = vmatpush2.msra.mxu0 0.0
    %3388 = vmatprep.subr.mxu0 0.0
    %3389 = vmatpush2.msra.mxu0 0.0
    %3390 = vmatprep.subr.mxu0 0.0
    %3391 = vmatpush2.msra.mxu0 0.0
    %3392 = vmatprep.subr.mxu0 0.0
    %3393 = vmatpush2.msra.mxu0 0.0
    %3394 = vmatprep.subr.mxu0 0.0
    %3395 = vmatpush2.msra.mxu0 0.0
    %3396 = vmatprep.subr.mxu0 0.0
    %3397 = vmatpush2.msra.mxu0 0.0
    %3398 = vmatprep.subr.mxu0 0.0
    %3399 = vmatpush2.msra.mxu0 0.0
    %3400 = vmatprep.subr.mxu0 0.0
    %3401 = vmatpush2.msra.mxu0 0.0
    %3402 = vmatprep.subr.mxu0 0.0
    %3403 = vmatpush2.msra.mxu0 0.0
    %3404 = vmatprep.subr.mxu0 0.0
    %3405 = vmatpush2.msra.mxu0 0.0
    %3406 = vmatprep.subr.mxu0 0.0
    %3407 = vmatpush2.msra.mxu0 0.0
    %3408 = vmatprep.mubr.f32.mxu0 0.0
    %3409 = vmatmul.mubr.f32.gmra.mxu0 %v3297
    %v3410 = vpop.f32.mrf.mxu0
    %v3411 = vadd.f32 0.0, %v3410
    %v3412 = vpop.f32.mrf.mxu0
    %3413 = vmatprep.mubr.f32.mxu0 0.0
    %3414 = vmatmul.mubr.f32.gmra.mxu0 %v3300
    %v3415 = vpop.f32.mrf.mxu0
    %v3416 = vadd.f32 0.0, %v3415
    %v3417 = vpop.f32.mrf.mxu0
    %3418 = vmatprep.mubr.f32.mxu0 0.0
    %3419 = vmatmul.mubr.f32.gmra.mxu0 %v3303
    %v3420 = vpop.f32.mrf.mxu0
    %v3421 = vadd.f32 0.0, %v3420
    %v3422 = vpop.f32.mrf.mxu0
    %3423 = vmatprep.mubr.f32.mxu0 0.0
    %3424 = vmatmul.mubr.f32.gmra.mxu0 %v3306
    %v3425 = vpop.f32.mrf.mxu0
    %v3426 = vadd.f32 0.0, %v3425
    %v3427 = vpop.f32.mrf.mxu0
    %3428 = vmatprep.mubr.f32.mxu0 0.0
    %3429 = vmatmul.mubr.f32.gmra.mxu0 %v3309
    %v3430 = vpop.f32.mrf.mxu0
    %v3431 = vadd.f32 0.0, %v3430
    %v3432 = vpop.f32.mrf.mxu0
    %3433 = vmatprep.mubr.f32.mxu0 0.0
    %3434 = vmatmul.mubr.f32.gmra.mxu0 %v3312
    %v3435 = vpop.f32.mrf.mxu0
    %v3436 = vadd.f32 0.0, %v3435
    %v3437 = vpop.f32.mrf.mxu0
    %3438 = vmatprep.mubr.f32.mxu0 0.0
    %3439 = vmatmul.mubr.f32.gmra.mxu0 %v3315
    %v3440 = vpop.f32.mrf.mxu0
    %v3441 = vadd.f32 0.0, %v3440
    %v3442 = vpop.f32.mrf.mxu0
    %3443 = vmatprep.mubr.f32.mxu0 0.0
    %3444 = vmatmul.mubr.f32.gmra.mxu0 %v3318
    %v3445 = vpop.f32.mrf.mxu0
    %v3446 = vadd.f32 0.0, %v3445
    %v3447 = vpop.f32.mrf.mxu0
    %3448 = vmatprep.mubr.f32.mxu0 0.0
    %3449 = vmatmul.mubr.f32.gmra.mxu0 %v3321
    %v3450 = vpop.f32.mrf.mxu0
    %v3451 = vadd.f32 0.0, %v3450
    %v3452 = vpop.f32.mrf.mxu0
    %3453 = vmatprep.mubr.f32.mxu0 0.0
    %3454 = vmatmul.mubr.f32.gmra.mxu0 %v3324
    %v3455 = vpop.f32.mrf.mxu0
    %v3456 = vadd.f32 0.0, %v3455
    %v3457 = vpop.f32.mrf.mxu0
    %3458 = vmatprep.mubr.f32.mxu0 0.0
    %3459 = vmatmul.mubr.f32.gmra.mxu0 %v3327
    %v3460 = vpop.f32.mrf.mxu0
    %v3461 = vadd.f32 0.0, %v3460
    %v3462 = vpop.f32.mrf.mxu0
    %3463 = vmatprep.mubr.f32.mxu0 0.0
    %3464 = vmatmul.mubr.f32.gmra.mxu0 %v3330
    %v3465 = vpop.f32.mrf.mxu0
    %v3466 = vadd.f32 0.0, %v3465
    %v3467 = vpop.f32.mrf.mxu0
    %3468 = vmatprep.mubr.f32.mxu0 0.0
    %3469 = vmatmul.mubr.f32.gmra.mxu0 %v3333
    %v3470 = vpop.f32.mrf.mxu0
    %v3471 = vadd.f32 0.0, %v3470
    %v3472 = vpop.f32.mrf.mxu0
    %3473 = vmatprep.mubr.f32.mxu0 0.0
    %3474 = vmatmul.mubr.f32.gmra.mxu0 %v3336
    %v3475 = vpop.f32.mrf.mxu0
    %v3476 = vadd.f32 0.0, %v3475
    %v3477 = vpop.f32.mrf.mxu0
    %3478 = vmatprep.mubr.f32.mxu0 0.0
    %3479 = vmatmul.mubr.f32.gmra.mxu0 %v3339
    %v3480 = vpop.f32.mrf.mxu0
    %v3481 = vadd.f32 0.0, %v3480
    %v3482 = vpop.f32.mrf.mxu0
    %3483 = vmatprep.mubr.f32.mxu0 0.0
    %3484 = vmatmul.mubr.f32.gmra.mxu0 %v3342
    %v3485 = vpop.f32.mrf.mxu0
    %v3486 = vadd.f32 0.0, %v3485
    %v3487 = vpop.f32.mrf.mxu0
    %3488 = vdwg.mxu0
    %v3490 = vsel %vm73, %v3164, 0
    %v3493 = vsel %vm73, %v3165, 0
    %v3496 = vsel %vm73, %v3166, 0
    %v3499 = vsel %vm73, %v3167, 0
    %v3502 = vsel %vm73, %v3168, 0
    %v3505 = vsel %vm73, %v3169, 0
    %v3508 = vsel %vm73, %v3170, 0
    %v3511 = vsel %vm73, %v3171, 0
    %v3514 = vsel %vm73, %v3172, 0
    %v3517 = vsel %vm73, %v3173, 0
    %v3520 = vsel %vm73, %v3174, 0
    %v3523 = vsel %vm73, %v3175, 0
    %v3526 = vsel %vm73, %v3176, 0
    %v3529 = vsel %vm73, %v3177, 0
    %v3532 = vsel %vm73, %v3178, 0
    %v3535 = vsel %vm73, %v3179, 0
    %3537 = vmatprep.subr.mxu0 0.0
    %3538 = vmatpush1.msra.mxu0 0.0
    %3539 = vmatprep.subr.mxu0 0.0
    %3540 = vmatpush1.msra.mxu0 0.0
    %3541 = vmatprep.subr.mxu0 0.0
    %3542 = vmatpush1.msra.mxu0 0.0
    %3543 = vmatprep.subr.mxu0 0.0
    %3544 = vmatpush1.msra.mxu0 0.0
    %3545 = vmatprep.subr.mxu0 0.0
    %3546 = vmatpush1.msra.mxu0 0.0
    %3547 = vmatprep.subr.mxu0 0.0
    %3548 = vmatpush1.msra.mxu0 0.0
    %3549 = vmatprep.subr.mxu0 0.0
    %3550 = vmatpush1.msra.mxu0 0.0
    %3551 = vmatprep.subr.mxu0 0.0
    %3552 = vmatpush1.msra.mxu0 0.0
    %3553 = vmatprep.subr.mxu0 0.0
    %3554 = vmatpush1.msra.mxu0 0.0
    %3555 = vmatprep.subr.mxu0 0.0
    %3556 = vmatpush1.msra.mxu0 0.0
    %3557 = vmatprep.subr.mxu0 0.0
    %3558 = vmatpush1.msra.mxu0 0.0
    %3559 = vmatprep.subr.mxu0 0.0
    %3560 = vmatpush1.msra.mxu0 0.0
    %3561 = vmatprep.subr.mxu0 0.0
    %3562 = vmatpush1.msra.mxu0 %v3295
    %3563 = vmatprep.subr.mxu0 0.0
    %3564 = vmatpush1.msra.mxu0 %v3294
    %3565 = vmatprep.subr.mxu0 0.0
    %3566 = vmatpush1.msra.mxu0 %v3293
    %3567 = vmatprep.subr.mxu0 0.0
    %3568 = vmatpush1.msra.mxu0 %v3292
    %3569 = vmatprep.subr.mxu0 0.0
    %3570 = vmatpush2.msra.mxu0 0.0
    %3571 = vmatprep.subr.mxu0 0.0
    %3572 = vmatpush2.msra.mxu0 0.0
    %3573 = vmatprep.subr.mxu0 0.0
    %3574 = vmatpush2.msra.mxu0 0.0
    %3575 = vmatprep.subr.mxu0 0.0
    %3576 = vmatpush2.msra.mxu0 0.0
    %3577 = vmatprep.subr.mxu0 0.0
    %3578 = vmatpush2.msra.mxu0 0.0
    %3579 = vmatprep.subr.mxu0 0.0
    %3580 = vmatpush2.msra.mxu0 0.0
    %3581 = vmatprep.subr.mxu0 0.0
    %3582 = vmatpush2.msra.mxu0 0.0
    %3583 = vmatprep.subr.mxu0 0.0
    %3584 = vmatpush2.msra.mxu0 0.0
    %3585 = vmatprep.subr.mxu0 0.0
    %3586 = vmatpush2.msra.mxu0 0.0
    %3587 = vmatprep.subr.mxu0 0.0
    %3588 = vmatpush2.msra.mxu0 0.0
    %3589 = vmatprep.subr.mxu0 0.0
    %3590 = vmatpush2.msra.mxu0 0.0
    %3591 = vmatprep.subr.mxu0 0.0
    %3592 = vmatpush2.msra.mxu0 0.0
    %3593 = vmatprep.subr.mxu0 0.0
    %3594 = vmatpush2.msra.mxu0 0.0
    %3595 = vmatprep.subr.mxu0 0.0
    %3596 = vmatpush2.msra.mxu0 0.0
    %3597 = vmatprep.subr.mxu0 0.0
    %3598 = vmatpush2.msra.mxu0 0.0
    %3599 = vmatprep.subr.mxu0 0.0
    %3600 = vmatpush2.msra.mxu0 0.0
    %3601 = vmatprep.mubr.f32.mxu0 0.0
    %3602 = vmatmul.mubr.f32.gmra.mxu0 %v3490
    %v3603 = vpop.f32.mrf.mxu0
    %v3604 = vadd.f32 %v3411, %v3603
    %v3605 = vpop.f32.mrf.mxu0
    %3606 = vmatprep.mubr.f32.mxu0 0.0
    %3607 = vmatmul.mubr.f32.gmra.mxu0 %v3493
    %v3608 = vpop.f32.mrf.mxu0
    %v3609 = vadd.f32 %v3416, %v3608
    %v3610 = vpop.f32.mrf.mxu0
    %3611 = vmatprep.mubr.f32.mxu0 0.0
    %3612 = vmatmul.mubr.f32.gmra.mxu0 %v3496
    %v3613 = vpop.f32.mrf.mxu0
    %v3614 = vadd.f32 %v3421, %v3613
    %v3615 = vpop.f32.mrf.mxu0
    %3616 = vmatprep.mubr.f32.mxu0 0.0
    %3617 = vmatmul.mubr.f32.gmra.mxu0 %v3499
    %v3618 = vpop.f32.mrf.mxu0
    %v3619 = vadd.f32 %v3426, %v3618
    %v3620 = vpop.f32.mrf.mxu0
    %3621 = vmatprep.mubr.f32.mxu0 0.0
    %3622 = vmatmul.mubr.f32.gmra.mxu0 %v3502
    %v3623 = vpop.f32.mrf.mxu0
    %v3624 = vadd.f32 %v3431, %v3623
    %v3625 = vpop.f32.mrf.mxu0
    %3626 = vmatprep.mubr.f32.mxu0 0.0
    %3627 = vmatmul.mubr.f32.gmra.mxu0 %v3505
    %v3628 = vpop.f32.mrf.mxu0
    %v3629 = vadd.f32 %v3436, %v3628
    %v3630 = vpop.f32.mrf.mxu0
    %3631 = vmatprep.mubr.f32.mxu0 0.0
    %3632 = vmatmul.mubr.f32.gmra.mxu0 %v3508
    %v3633 = vpop.f32.mrf.mxu0
    %v3634 = vadd.f32 %v3441, %v3633
    %v3635 = vpop.f32.mrf.mxu0
    %3636 = vmatprep.mubr.f32.mxu0 0.0
    %3637 = vmatmul.mubr.f32.gmra.mxu0 %v3511
    %v3638 = vpop.f32.mrf.mxu0
    %v3639 = vadd.f32 %v3446, %v3638
    %v3640 = vpop.f32.mrf.mxu0
    %3641 = vmatprep.mubr.f32.mxu0 0.0
    %3642 = vmatmul.mubr.f32.gmra.mxu0 %v3514
    %v3643 = vpop.f32.mrf.mxu0
    %v3644 = vadd.f32 %v3451, %v3643
    %v3645 = vpop.f32.mrf.mxu0
    %3646 = vmatprep.mubr.f32.mxu0 0.0
    %3647 = vmatmul.mubr.f32.gmra.mxu0 %v3517
    %v3648 = vpop.f32.mrf.mxu0
    %v3649 = vadd.f32 %v3456, %v3648
    %v3650 = vpop.f32.mrf.mxu0
    %3651 = vmatprep.mubr.f32.mxu0 0.0
    %3652 = vmatmul.mubr.f32.gmra.mxu0 %v3520
    %v3653 = vpop.f32.mrf.mxu0
    %v3654 = vadd.f32 %v3461, %v3653
    %v3655 = vpop.f32.mrf.mxu0
    %3656 = vmatprep.mubr.f32.mxu0 0.0
    %3657 = vmatmul.mubr.f32.gmra.mxu0 %v3523
    %v3658 = vpop.f32.mrf.mxu0
    %v3659 = vadd.f32 %v3466, %v3658
    %v3660 = vpop.f32.mrf.mxu0
    %3661 = vmatprep.mubr.f32.mxu0 0.0
    %3662 = vmatmul.mubr.f32.gmra.mxu0 %v3526
    %v3663 = vpop.f32.mrf.mxu0
    %v3664 = vadd.f32 %v3471, %v3663
    %v3665 = vpop.f32.mrf.mxu0
    %3666 = vmatprep.mubr.f32.mxu0 0.0
    %3667 = vmatmul.mubr.f32.gmra.mxu0 %v3529
    %v3668 = vpop.f32.mrf.mxu0
    %v3669 = vadd.f32 %v3476, %v3668
    %v3670 = vpop.f32.mrf.mxu0
    %3671 = vmatprep.mubr.f32.mxu0 0.0
    %3672 = vmatmul.mubr.f32.gmra.mxu0 %v3532
    %v3673 = vpop.f32.mrf.mxu0
    %v3674 = vadd.f32 %v3481, %v3673
    %v3675 = vpop.f32.mrf.mxu0
    %3676 = vmatprep.mubr.f32.mxu0 0.0
    %3677 = vmatmul.mubr.f32.gmra.mxu0 %v3535
    %v3678 = vpop.f32.mrf.mxu0
    %v3679 = vadd.f32 %v3486, %v3678
    %v3680 = vpop.f32.mrf.mxu0
    %3681 = vdwg.mxu0
    %v3682 = vadd.f32 %v3604, %v3215
    %v3683 = vadd.f32 %v3609, %v3220
    %v3684 = vadd.f32 %v3614, %v3225
    %v3685 = vadd.f32 %v3619, %v3230
    %v3686 = vadd.f32 %v3624, %v3235
    %v3687 = vadd.f32 %v3629, %v3240
    %v3688 = vadd.f32 %v3634, %v3245
    %v3689 = vadd.f32 %v3639, %v3250
    %v3690 = vadd.f32 %v3644, %v3255
    %v3691 = vadd.f32 %v3649, %v3260
    %v3692 = vadd.f32 %v3654, %v3265
    %v3693 = vadd.f32 %v3659, %v3270
    %v3694 = vadd.f32 %v3664, %v3275
    %v3695 = vadd.f32 %v3669, %v3280
    %v3696 = vadd.f32 %v3674, %v3285
    %v3697 = vadd.f32 %v3679, %v3290
    %v3698 = vmul.f32 %v3682, 0.5
    %v3699 = vmul.f32 %v3683, 0.5
    %v3700 = vmul.f32 %v3684, 0.5
    %v3701 = vmul.f32 %v3685, 0.5
    %v3702 = vtanh.pop %v3698
    %v3703 = vtanh.pop %v3699
    %v3704 = vtanh.pop %v3700
    %v3705 = vtanh.pop %v3701
    %v3706 = vadd.f32 %v3702, 1.0
    %v3707 = vadd.f32 %v3703, 1.0
    %v3708 = vadd.f32 %v3704, 1.0
    %v3709 = vadd.f32 %v3705, 1.0
    %v3710 = vmul.f32 %v3706, 0.5
    %v3711 = vmul.f32 %v3707, 0.5
    %v3712 = vmul.f32 %v3708, 0.5
    %v3713 = vmul.f32 %v3709, 0.5
    %v3714 = vmul.f32 %v3686, 0.5
    %v3715 = vmul.f32 %v3687, 0.5
    %v3716 = vmul.f32 %v3688, 0.5
    %v3717 = vmul.f32 %v3689, 0.5
    %v3718 = vtanh.pop %v3714
    %v3719 = vtanh.pop %v3715
    %v3720 = vtanh.pop %v3716
    %v3721 = vtanh.pop %v3717
    %v3722 = vadd.f32 %v3718, 1.0
    %v3723 = vadd.f32 %v3719, 1.0
    %v3724 = vadd.f32 %v3720, 1.0
    %v3725 = vadd.f32 %v3721, 1.0
    %v3726 = vmul.f32 %v3722, 0.5
    %v3727 = vmul.f32 %v3723, 0.5
    %v3728 = vmul.f32 %v3724, 0.5
    %v3729 = vmul.f32 %v3725, 0.5
    %v3730 = vtanh.pop %v3690
    %v3731 = vtanh.pop %v3691
    %v3732 = vtanh.pop %v3692
    %v3733 = vtanh.pop %v3693
    %v3734 = vmul.f32 %v3694, 0.5
    %v3735 = vmul.f32 %v3695, 0.5
    %v3736 = vmul.f32 %v3696, 0.5
    %v3737 = vmul.f32 %v3697, 0.5
    %v3738 = vtanh.pop %v3734
    %v3739 = vtanh.pop %v3735
    %v3740 = vtanh.pop %v3736
    %v3741 = vtanh.pop %v3737
    %v3742 = vadd.f32 %v3738, 1.0
    %v3743 = vadd.f32 %v3739, 1.0
    %v3744 = vadd.f32 %v3740, 1.0
    %v3745 = vadd.f32 %v3741, 1.0
    %v3746 = vmul.f32 %v3742, 0.5
    %v3747 = vmul.f32 %v3743, 0.5
    %v3748 = vmul.f32 %v3744, 0.5
    %v3749 = vmul.f32 %v3745, 0.5
    %v3750 = vmul.f32 %v3726, 0.0
    %v3751 = vmul.f32 %v3727, 0.0
    %v3752 = vmul.f32 %v3728, 0.0
    %v3753 = vmul.f32 %v3729, 0.0
    %v3754 = vmul.f32 %v3710, %v3730
    %v3755 = vmul.f32 %v3711, %v3731
    %v3756 = vmul.f32 %v3712, %v3732
    %v3757 = vmul.f32 %v3713, %v3733
    %v3758 = vadd.f32 %v3750, %v3754
    %v3759 = vadd.f32 %v3751, %v3755
    %v3760 = vadd.f32 %v3752, %v3756
    %v3761 = vadd.f32 %v3753, %v3757
    %v3762 = vtanh.pop %v3758
    %v3763 = vtanh.pop %v3759
    %v3764 = vtanh.pop %v3760
    %v3765 = vtanh.pop %v3761
    %v3766 = vmul.f32 %v3746, %v3762
    %v3767 = vmul.f32 %v3747, %v3763
    %v3768 = vmul.f32 %v3748, %v3764
    %v3769 = vmul.f32 %v3749, %v3765
    %v3770 = vld [vmem:[%s609] sm:$0xff]
    %v3771 = vld [vmem:[%s609 + $0x8] sm:$0xff]
    %v3772 = vld [vmem:[%s609 + $0x10] sm:$0xff]
    %v3773 = vld [vmem:[%s609 + $0x18] sm:$0xff]
    %3774 = vmatprep.subr.mxu0 0.0
    %3775 = vmatpush1.msra.mxu0 0.0
    %3776 = vmatprep.subr.mxu0 0.0
    %3777 = vmatpush1.msra.mxu0 0.0
    %3778 = vmatprep.subr.mxu0 0.0
    %3779 = vmatpush1.msra.mxu0 0.0
    %3780 = vmatprep.subr.mxu0 0.0
    %3781 = vmatpush1.msra.mxu0 0.0
    %3782 = vmatprep.subr.mxu0 0.0
    %3783 = vmatpush1.msra.mxu0 0.0
    %3784 = vmatprep.subr.mxu0 0.0
    %3785 = vmatpush1.msra.mxu0 0.0
    %3786 = vmatprep.subr.mxu0 0.0
    %3787 = vmatpush1.msra.mxu0 0.0
    %3788 = vmatprep.subr.mxu0 0.0
    %3789 = vmatpush1.msra.mxu0 0.0
    %3790 = vmatprep.subr.mxu0 0.0
    %3791 = vmatpush1.msra.mxu0 0.0
    %3792 = vmatprep.subr.mxu0 0.0
    %3793 = vmatpush1.msra.mxu0 0.0
    %3794 = vmatprep.subr.mxu0 0.0
    %3795 = vmatpush1.msra.mxu0 0.0
    %3796 = vmatprep.subr.mxu0 0.0
    %3797 = vmatpush1.msra.mxu0 0.0
    %3798 = vmatprep.subr.mxu0 0.0
    %3799 = vmatpush1.msra.mxu0 %v3769
    %3800 = vmatprep.subr.mxu0 0.0
    %3801 = vmatpush1.msra.mxu0 %v3768
    %3802 = vmatprep.subr.mxu0 0.0
    %3803 = vmatpush1.msra.mxu0 %v3767
    %3804 = vmatprep.subr.mxu0 0.0
    %3805 = vmatpush1.msra.mxu0 %v3766
    %3806 = vmatprep.subr.mxu0 0.0
    %3807 = vmatpush2.msra.mxu0 0.0
    %3808 = vmatprep.subr.mxu0 0.0
    %3809 = vmatpush2.msra.mxu0 0.0
    %3810 = vmatprep.subr.mxu0 0.0
    %3811 = vmatpush2.msra.mxu0 0.0
    %3812 = vmatprep.subr.mxu0 0.0
    %3813 = vmatpush2.msra.mxu0 0.0
    %3814 = vmatprep.subr.mxu0 0.0
    %3815 = vmatpush2.msra.mxu0 0.0
    %3816 = vmatprep.subr.mxu0 0.0
    %3817 = vmatpush2.msra.mxu0 0.0
    %3818 = vmatprep.subr.mxu0 0.0
    %3819 = vmatpush2.msra.mxu0 0.0
    %3820 = vmatprep.subr.mxu0 0.0
    %3821 = vmatpush2.msra.mxu0 0.0
    %3822 = vmatprep.subr.mxu0 0.0
    %3823 = vmatpush2.msra.mxu0 0.0
    %3824 = vmatprep.subr.mxu0 0.0
    %3825 = vmatpush2.msra.mxu0 0.0
    %3826 = vmatprep.subr.mxu0 0.0
    %3827 = vmatpush2.msra.mxu0 0.0
    %3828 = vmatprep.subr.mxu0 0.0
    %3829 = vmatpush2.msra.mxu0 0.0
    %3830 = vmatprep.subr.mxu0 0.0
    %3831 = vmatpush2.msra.mxu0 0.0
    %3832 = vmatprep.subr.mxu0 0.0
    %3833 = vmatpush2.msra.mxu0 0.0
    %3834 = vmatprep.subr.mxu0 0.0
    %3835 = vmatpush2.msra.mxu0 0.0
    %3836 = vmatprep.subr.mxu0 0.0
    %3837 = vmatpush2.msra.mxu0 0.0
    %3838 = vmatprep.mubr.f32.mxu0 0.0
    %3839 = vmatmul.mubr.f32.gmra.mxu0 %v3297
    %v3840 = vpop.f32.mrf.mxu0
    %v3841 = vadd.f32 0.0, %v3840
    %v3842 = vpop.f32.mrf.mxu0
    %3843 = vmatprep.mubr.f32.mxu0 0.0
    %3844 = vmatmul.mubr.f32.gmra.mxu0 %v3300
    %v3845 = vpop.f32.mrf.mxu0
    %v3846 = vadd.f32 0.0, %v3845
    %v3847 = vpop.f32.mrf.mxu0
    %3848 = vmatprep.mubr.f32.mxu0 0.0
    %3849 = vmatmul.mubr.f32.gmra.mxu0 %v3303
    %v3850 = vpop.f32.mrf.mxu0
    %v3851 = vadd.f32 0.0, %v3850
    %v3852 = vpop.f32.mrf.mxu0
    %3853 = vmatprep.mubr.f32.mxu0 0.0
    %3854 = vmatmul.mubr.f32.gmra.mxu0 %v3306
    %v3855 = vpop.f32.mrf.mxu0
    %v3856 = vadd.f32 0.0, %v3855
    %v3857 = vpop.f32.mrf.mxu0
    %3858 = vmatprep.mubr.f32.mxu0 0.0
    %3859 = vmatmul.mubr.f32.gmra.mxu0 %v3309
    %v3860 = vpop.f32.mrf.mxu0
    %v3861 = vadd.f32 0.0, %v3860
    %v3862 = vpop.f32.mrf.mxu0
    %3863 = vmatprep.mubr.f32.mxu0 0.0
    %3864 = vmatmul.mubr.f32.gmra.mxu0 %v3312
    %v3865 = vpop.f32.mrf.mxu0
    %v3866 = vadd.f32 0.0, %v3865
    %v3867 = vpop.f32.mrf.mxu0
    %3868 = vmatprep.mubr.f32.mxu0 0.0
    %3869 = vmatmul.mubr.f32.gmra.mxu0 %v3315
    %v3870 = vpop.f32.mrf.mxu0
    %v3871 = vadd.f32 0.0, %v3870
    %v3872 = vpop.f32.mrf.mxu0
    %3873 = vmatprep.mubr.f32.mxu0 0.0
    %3874 = vmatmul.mubr.f32.gmra.mxu0 %v3318
    %v3875 = vpop.f32.mrf.mxu0
    %v3876 = vadd.f32 0.0, %v3875
    %v3877 = vpop.f32.mrf.mxu0
    %3878 = vmatprep.mubr.f32.mxu0 0.0
    %3879 = vmatmul.mubr.f32.gmra.mxu0 %v3321
    %v3880 = vpop.f32.mrf.mxu0
    %v3881 = vadd.f32 0.0, %v3880
    %v3882 = vpop.f32.mrf.mxu0
    %3883 = vmatprep.mubr.f32.mxu0 0.0
    %3884 = vmatmul.mubr.f32.gmra.mxu0 %v3324
    %v3885 = vpop.f32.mrf.mxu0
    %v3886 = vadd.f32 0.0, %v3885
    %v3887 = vpop.f32.mrf.mxu0
    %3888 = vmatprep.mubr.f32.mxu0 0.0
    %3889 = vmatmul.mubr.f32.gmra.mxu0 %v3327
    %v3890 = vpop.f32.mrf.mxu0
    %v3891 = vadd.f32 0.0, %v3890
    %v3892 = vpop.f32.mrf.mxu0
    %3893 = vmatprep.mubr.f32.mxu0 0.0
    %3894 = vmatmul.mubr.f32.gmra.mxu0 %v3330
    %v3895 = vpop.f32.mrf.mxu0
    %v3896 = vadd.f32 0.0, %v3895
    %v3897 = vpop.f32.mrf.mxu0
    %3898 = vmatprep.mubr.f32.mxu0 0.0
    %3899 = vmatmul.mubr.f32.gmra.mxu0 %v3333
    %v3900 = vpop.f32.mrf.mxu0
    %v3901 = vadd.f32 0.0, %v3900
    %v3902 = vpop.f32.mrf.mxu0
    %3903 = vmatprep.mubr.f32.mxu0 0.0
    %3904 = vmatmul.mubr.f32.gmra.mxu0 %v3336
    %v3905 = vpop.f32.mrf.mxu0
    %v3906 = vadd.f32 0.0, %v3905
    %v3907 = vpop.f32.mrf.mxu0
    %3908 = vmatprep.mubr.f32.mxu0 0.0
    %3909 = vmatmul.mubr.f32.gmra.mxu0 %v3339
    %v3910 = vpop.f32.mrf.mxu0
    %v3911 = vadd.f32 0.0, %v3910
    %v3912 = vpop.f32.mrf.mxu0
    %3913 = vmatprep.mubr.f32.mxu0 0.0
    %3914 = vmatmul.mubr.f32.gmra.mxu0 %v3342
    %v3915 = vpop.f32.mrf.mxu0
    %v3916 = vadd.f32 0.0, %v3915
    %v3917 = vpop.f32.mrf.mxu0
    %3918 = vdwg.mxu0
    %3919 = vmatprep.subr.mxu0 0.0
    %3920 = vmatpush1.msra.mxu0 0.0
    %3921 = vmatprep.subr.mxu0 0.0
    %3922 = vmatpush1.msra.mxu0 0.0
    %3923 = vmatprep.subr.mxu0 0.0
    %3924 = vmatpush1.msra.mxu0 0.0
    %3925 = vmatprep.subr.mxu0 0.0
    %3926 = vmatpush1.msra.mxu0 0.0
    %3927 = vmatprep.subr.mxu0 0.0
    %3928 = vmatpush1.msra.mxu0 0.0
    %3929 = vmatprep.subr.mxu0 0.0
    %3930 = vmatpush1.msra.mxu0 0.0
    %3931 = vmatprep.subr.mxu0 0.0
    %3932 = vmatpush1.msra.mxu0 0.0
    %3933 = vmatprep.subr.mxu0 0.0
    %3934 = vmatpush1.msra.mxu0 0.0
    %3935 = vmatprep.subr.mxu0 0.0
    %3936 = vmatpush1.msra.mxu0 0.0
    %3937 = vmatprep.subr.mxu0 0.0
    %3938 = vmatpush1.msra.mxu0 0.0
    %3939 = vmatprep.subr.mxu0 0.0
    %3940 = vmatpush1.msra.mxu0 0.0
    %3941 = vmatprep.subr.mxu0 0.0
    %3942 = vmatpush1.msra.mxu0 0.0
    %3943 = vmatprep.subr.mxu0 0.0
    %3944 = vmatpush1.msra.mxu0 %v3773
    %3945 = vmatprep.subr.mxu0 0.0
    %3946 = vmatpush1.msra.mxu0 %v3772
    %3947 = vmatprep.subr.mxu0 0.0
    %3948 = vmatpush1.msra.mxu0 %v3771
    %3949 = vmatprep.subr.mxu0 0.0
    %3950 = vmatpush1.msra.mxu0 %v3770
    %3951 = vmatprep.subr.mxu0 0.0
    %3952 = vmatpush2.msra.mxu0 0.0
    %3953 = vmatprep.subr.mxu0 0.0
    %3954 = vmatpush2.msra.mxu0 0.0
    %3955 = vmatprep.subr.mxu0 0.0
    %3956 = vmatpush2.msra.mxu0 0.0
    %3957 = vmatprep.subr.mxu0 0.0
    %3958 = vmatpush2.msra.mxu0 0.0
    %3959 = vmatprep.subr.mxu0 0.0
    %3960 = vmatpush2.msra.mxu0 0.0
    %3961 = vmatprep.subr.mxu0 0.0
    %3962 = vmatpush2.msra.mxu0 0.0
    %3963 = vmatprep.subr.mxu0 0.0
    %3964 = vmatpush2.msra.mxu0 0.0
    %3965 = vmatprep.subr.mxu0 0.0
    %3966 = vmatpush2.msra.mxu0 0.0
    %3967 = vmatprep.subr.mxu0 0.0
    %3968 = vmatpush2.msra.mxu0 0.0
    %3969 = vmatprep.subr.mxu0 0.0
    %3970 = vmatpush2.msra.mxu0 0.0
    %3971 = vmatprep.subr.mxu0 0.0
    %3972 = vmatpush2.msra.mxu0 0.0
    %3973 = vmatprep.subr.mxu0 0.0
    %3974 = vmatpush2.msra.mxu0 0.0
    %3975 = vmatprep.subr.mxu0 0.0
    %3976 = vmatpush2.msra.mxu0 0.0
    %3977 = vmatprep.subr.mxu0 0.0
    %3978 = vmatpush2.msra.mxu0 0.0
    %3979 = vmatprep.subr.mxu0 0.0
    %3980 = vmatpush2.msra.mxu0 0.0
    %3981 = vmatprep.subr.mxu0 0.0
    %3982 = vmatpush2.msra.mxu0 0.0
    %3983 = vmatprep.mubr.f32.mxu0 0.0
    %3984 = vmatmul.mubr.f32.gmra.mxu0 %v3490
    %v3985 = vpop.f32.mrf.mxu0
    %v3986 = vadd.f32 %v3841, %v3985
    %v3987 = vpop.f32.mrf.mxu0
    %3988 = vmatprep.mubr.f32.mxu0 0.0
    %3989 = vmatmul.mubr.f32.gmra.mxu0 %v3493
    %v3990 = vpop.f32.mrf.mxu0
    %v3991 = vadd.f32 %v3846, %v3990
    %v3992 = vpop.f32.mrf.mxu0
    %3993 = vmatprep.mubr.f32.mxu0 0.0
    %3994 = vmatmul.mubr.f32.gmra.mxu0 %v3496
    %v3995 = vpop.f32.mrf.mxu0
    %v3996 = vadd.f32 %v3851, %v3995
    %v3997 = vpop.f32.mrf.mxu0
    %3998 = vmatprep.mubr.f32.mxu0 0.0
    %3999 = vmatmul.mubr.f32.gmra.mxu0 %v3499
    %v4000 = vpop.f32.mrf.mxu0
    %v4001 = vadd.f32 %v3856, %v4000
    %v4002 = vpop.f32.mrf.mxu0
    %4003 = vmatprep.mubr.f32.mxu0 0.0
    %4004 = vmatmul.mubr.f32.gmra.mxu0 %v3502
    %v4005 = vpop.f32.mrf.mxu0
    %v4006 = vadd.f32 %v3861, %v4005
    %v4007 = vpop.f32.mrf.mxu0
    %4008 = vmatprep.mubr.f32.mxu0 0.0
    %4009 = vmatmul.mubr.f32.gmra.mxu0 %v3505
    %v4010 = vpop.f32.mrf.mxu0
    %v4011 = vadd.f32 %v3866, %v4010
    %v4012 = vpop.f32.mrf.mxu0
    %4013 = vmatprep.mubr.f32.mxu0 0.0
    %4014 = vmatmul.mubr.f32.gmra.mxu0 %v3508
    %v4015 = vpop.f32.mrf.mxu0
    %v4016 = vadd.f32 %v3871, %v4015
    %v4017 = vpop.f32.mrf.mxu0
    %4018 = vmatprep.mubr.f32.mxu0 0.0
    %4019 = vmatmul.mubr.f32.gmra.mxu0 %v3511
    %v4020 = vpop.f32.mrf.mxu0
    %v4021 = vadd.f32 %v3876, %v4020
    %v4022 = vpop.f32.mrf.mxu0
    %4023 = vmatprep.mubr.f32.mxu0 0.0
    %4024 = vmatmul.mubr.f32.gmra.mxu0 %v3514
    %v4025 = vpop.f32.mrf.mxu0
    %v4026 = vadd.f32 %v3881, %v4025
    %v4027 = vpop.f32.mrf.mxu0
    %4028 = vmatprep.mubr.f32.mxu0 0.0
    %4029 = vmatmul.mubr.f32.gmra.mxu0 %v3517
    %v4030 = vpop.f32.mrf.mxu0
    %v4031 = vadd.f32 %v3886, %v4030
    %v4032 = vpop.f32.mrf.mxu0
    %4033 = vmatprep.mubr.f32.mxu0 0.0
    %4034 = vmatmul.mubr.f32.gmra.mxu0 %v3520
    %v4035 = vpop.f32.mrf.mxu0
    %v4036 = vadd.f32 %v3891, %v4035
    %v4037 = vpop.f32.mrf.mxu0
    %4038 = vmatprep.mubr.f32.mxu0 0.0
    %4039 = vmatmul.mubr.f32.gmra.mxu0 %v3523
    %v4040 = vpop.f32.mrf.mxu0
    %v4041 = vadd.f32 %v3896, %v4040
    %v4042 = vpop.f32.mrf.mxu0
    %4043 = vmatprep.mubr.f32.mxu0 0.0
    %4044 = vmatmul.mubr.f32.gmra.mxu0 %v3526
    %v4045 = vpop.f32.mrf.mxu0
    %v4046 = vadd.f32 %v3901, %v4045
    %v4047 = vpop.f32.mrf.mxu0
    %4048 = vmatprep.mubr.f32.mxu0 0.0
    %4049 = vmatmul.mubr.f32.gmra.mxu0 %v3529
    %v4050 = vpop.f32.mrf.mxu0
    %v4051 = vadd.f32 %v3906, %v4050
    %v4052 = vpop.f32.mrf.mxu0
    %4053 = vmatprep.mubr.f32.mxu0 0.0
    %4054 = vmatmul.mubr.f32.gmra.mxu0 %v3532
    %v4055 = vpop.f32.mrf.mxu0
    %v4056 = vadd.f32 %v3911, %v4055
    %v4057 = vpop.f32.mrf.mxu0
    %4058 = vmatprep.mubr.f32.mxu0 0.0
    %4059 = vmatmul.mubr.f32.gmra.mxu0 %v3535
    %v4060 = vpop.f32.mrf.mxu0
    %v4061 = vadd.f32 %v3916, %v4060
    %v4062 = vpop.f32.mrf.mxu0
    %4063 = vdwg.mxu0
    %v4064 = vadd.f32 %v3986, %v3215
    %v4065 = vadd.f32 %v3991, %v3220
    %v4066 = vadd.f32 %v3996, %v3225
    %v4067 = vadd.f32 %v4001, %v3230
    %v4068 = vadd.f32 %v4006, %v3235
    %v4069 = vadd.f32 %v4011, %v3240
    %v4070 = vadd.f32 %v4016, %v3245
    %v4071 = vadd.f32 %v4021, %v3250
    %v4072 = vadd.f32 %v4026, %v3255
    %v4073 = vadd.f32 %v4031, %v3260
    %v4074 = vadd.f32 %v4036, %v3265
    %v4075 = vadd.f32 %v4041, %v3270
    %v4076 = vadd.f32 %v4046, %v3275
    %v4077 = vadd.f32 %v4051, %v3280
    %v4078 = vadd.f32 %v4056, %v3285
    %v4079 = vadd.f32 %v4061, %v3290
    %v4080 = vmul.f32 %v4064, 0.5
    %v4081 = vmul.f32 %v4065, 0.5
    %v4082 = vmul.f32 %v4066, 0.5
    %v4083 = vmul.f32 %v4067, 0.5
    %v4084 = vtanh.pop %v4080
    %v4085 = vtanh.pop %v4081
    %v4086 = vtanh.pop %v4082
    %v4087 = vtanh.pop %v4083
    %v4088 = vadd.f32 %v4084, 1.0
    %v4089 = vadd.f32 %v4085, 1.0
    %v4090 = vadd.f32 %v4086, 1.0
    %v4091 = vadd.f32 %v4087, 1.0
    %v4092 = vmul.f32 %v4088, 0.5
    %v4093 = vmul.f32 %v4089, 0.5
    %v4094 = vmul.f32 %v4090, 0.5
    %v4095 = vmul.f32 %v4091, 0.5
    %v4096 = vmul.f32 %v4068, 0.5
    %v4097 = vmul.f32 %v4069, 0.5
    %v4098 = vmul.f32 %v4070, 0.5
    %v4099 = vmul.f32 %v4071, 0.5
    %v4100 = vtanh.pop %v4096
    %v4101 = vtanh.pop %v4097
    %v4102 = vtanh.pop %v4098
    %v4103 = vtanh.pop %v4099
    %v4104 = vadd.f32 %v4100, 1.0
    %v4105 = vadd.f32 %v4101, 1.0
    %v4106 = vadd.f32 %v4102, 1.0
    %v4107 = vadd.f32 %v4103, 1.0
    %v4108 = vmul.f32 %v4104, 0.5
    %v4109 = vmul.f32 %v4105, 0.5
    %v4110 = vmul.f32 %v4106, 0.5
    %v4111 = vmul.f32 %v4107, 0.5
    %v4112 = vtanh.pop %v4072
    %v4113 = vtanh.pop %v4073
    %v4114 = vtanh.pop %v4074
    %v4115 = vtanh.pop %v4075
    %v4116 = vmul.f32 %v4076, 0.5
    %v4117 = vmul.f32 %v4077, 0.5
    %v4118 = vmul.f32 %v4078, 0.5
    %v4119 = vmul.f32 %v4079, 0.5
    %v4120 = vtanh.pop %v4116
    %v4121 = vtanh.pop %v4117
    %v4122 = vtanh.pop %v4118
    %v4123 = vtanh.pop %v4119
    %v4124 = vadd.f32 %v4120, 1.0
    %v4125 = vadd.f32 %v4121, 1.0
    %v4126 = vadd.f32 %v4122, 1.0
    %v4127 = vadd.f32 %v4123, 1.0
    %v4128 = vmul.f32 %v4124, 0.5
    %v4129 = vmul.f32 %v4125, 0.5
    %v4130 = vmul.f32 %v4126, 0.5
    %v4131 = vmul.f32 %v4127, 0.5
    %v4132 = vmul.f32 %v4108, %v3758
    %v4133 = vmul.f32 %v4109, %v3759
    %v4134 = vmul.f32 %v4110, %v3760
    %v4135 = vmul.f32 %v4111, %v3761
    %v4136 = vmul.f32 %v4092, %v4112
    %v4137 = vmul.f32 %v4093, %v4113
    %v4138 = vmul.f32 %v4094, %v4114
    %v4139 = vmul.f32 %v4095, %v4115
    %v4140 = vadd.f32 %v4132, %v4136
    %v4141 = vadd.f32 %v4133, %v4137
    %v4142 = vadd.f32 %v4134, %v4138
    %v4143 = vadd.f32 %v4135, %v4139
    %v4144 = vtanh.pop %v4140
    %v4145 = vtanh.pop %v4141
    %v4146 = vtanh.pop %v4142
    %v4147 = vtanh.pop %v4143
    %v4148 = vmul.f32 %v4128, %v4144
    %v4149 = vmul.f32 %v4129, %v4145
    %v4150 = vmul.f32 %v4130, %v4146
    %v4151 = vmul.f32 %v4131, %v4147
    %v4152 = vld [vmem:[%s864] sm:$0xff]
    %v4153 = vld [vmem:[%s864 + $0x8] sm:$0xff]
    %v4154 = vld [vmem:[%s864 + $0x10] sm:$0xff]
    %v4155 = vld [vmem:[%s864 + $0x18] sm:$0xff]
    %4156 = vmatprep.subr.mxu0 0.0
    %4157 = vmatpush1.msra.mxu0 0.0
    %4158 = vmatprep.subr.mxu0 0.0
    %4159 = vmatpush1.msra.mxu0 0.0
    %4160 = vmatprep.subr.mxu0 0.0
    %4161 = vmatpush1.msra.mxu0 0.0
    %4162 = vmatprep.subr.mxu0 0.0
    %4163 = vmatpush1.msra.mxu0 0.0
    %4164 = vmatprep.subr.mxu0 0.0
    %4165 = vmatpush1.msra.mxu0 0.0
    %4166 = vmatprep.subr.mxu0 0.0
    %4167 = vmatpush1.msra.mxu0 0.0
    %4168 = vmatprep.subr.mxu0 0.0
    %4169 = vmatpush1.msra.mxu0 0.0
    %4170 = vmatprep.subr.mxu0 0.0
    %4171 = vmatpush1.msra.mxu0 0.0
    %4172 = vmatprep.subr.mxu0 0.0
    %4173 = vmatpush1.msra.mxu0 0.0
    %4174 = vmatprep.subr.mxu0 0.0
    %4175 = vmatpush1.msra.mxu0 0.0
    %4176 = vmatprep.subr.mxu0 0.0
    %4177 = vmatpush1.msra.mxu0 0.0
    %4178 = vmatprep.subr.mxu0 0.0
    %4179 = vmatpush1.msra.mxu0 0.0
    %4180 = vmatprep.subr.mxu0 0.0
    %4181 = vmatpush1.msra.mxu0 %v4151
    %4182 = vmatprep.subr.mxu0 0.0
    %4183 = vmatpush1.msra.mxu0 %v4150
    %4184 = vmatprep.subr.mxu0 0.0
    %4185 = vmatpush1.msra.mxu0 %v4149
    %4186 = vmatprep.subr.mxu0 0.0
    %4187 = vmatpush1.msra.mxu0 %v4148
    %4188 = vmatprep.subr.mxu0 0.0
    %4189 = vmatpush2.msra.mxu0 0.0
    %4190 = vmatprep.subr.mxu0 0.0
    %4191 = vmatpush2.msra.mxu0 0.0
    %4192 = vmatprep.subr.mxu0 0.0
    %4193 = vmatpush2.msra.mxu0 0.0
    %4194 = vmatprep.subr.mxu0 0.0
    %4195 = vmatpush2.msra.mxu0 0.0
    %4196 = vmatprep.subr.mxu0 0.0
    %4197 = vmatpush2.msra.mxu0 0.0
    %4198 = vmatprep.subr.mxu0 0.0
    %4199 = vmatpush2.msra.mxu0 0.0
    %4200 = vmatprep.subr.mxu0 0.0
    %4201 = vmatpush2.msra.mxu0 0.0
    %4202 = vmatprep.subr.mxu0 0.0
    %4203 = vmatpush2.msra.mxu0 0.0
    %4204 = vmatprep.subr.mxu0 0.0
    %4205 = vmatpush2.msra.mxu0 0.0
    %4206 = vmatprep.subr.mxu0 0.0
    %4207 = vmatpush2.msra.mxu0 0.0
    %4208 = vmatprep.subr.mxu0 0.0
    %4209 = vmatpush2.msra.mxu0 0.0
    %4210 = vmatprep.subr.mxu0 0.0
    %4211 = vmatpush2.msra.mxu0 0.0
    %4212 = vmatprep.subr.mxu0 0.0
    %4213 = vmatpush2.msra.mxu0 0.0
    %4214 = vmatprep.subr.mxu0 0.0
    %4215 = vmatpush2.msra.mxu0 0.0
    %4216 = vmatprep.subr.mxu0 0.0
    %4217 = vmatpush2.msra.mxu0 0.0
    %4218 = vmatprep.subr.mxu0 0.0
    %4219 = vmatpush2.msra.mxu0 0.0
    %4220 = vmatprep.mubr.f32.mxu0 0.0
    %4221 = vmatmul.mubr.f32.gmra.mxu0 %v3297
    %v4222 = vpop.f32.mrf.mxu0
    %v4223 = vadd.f32 0.0, %v4222
    %v4224 = vpop.f32.mrf.mxu0
    %4225 = vmatprep.mubr.f32.mxu0 0.0
    %4226 = vmatmul.mubr.f32.gmra.mxu0 %v3300
    %v4227 = vpop.f32.mrf.mxu0
    %v4228 = vadd.f32 0.0, %v4227
    %v4229 = vpop.f32.mrf.mxu0
    %4230 = vmatprep.mubr.f32.mxu0 0.0
    %4231 = vmatmul.mubr.f32.gmra.mxu0 %v3303
    %v4232 = vpop.f32.mrf.mxu0
    %v4233 = vadd.f32 0.0, %v4232
    %v4234 = vpop.f32.mrf.mxu0
    %4235 = vmatprep.mubr.f32.mxu0 0.0
    %4236 = vmatmul.mubr.f32.gmra.mxu0 %v3306
    %v4237 = vpop.f32.mrf.mxu0
    %v4238 = vadd.f32 0.0, %v4237
    %v4239 = vpop.f32.mrf.mxu0
    %4240 = vmatprep.mubr.f32.mxu0 0.0
    %4241 = vmatmul.mubr.f32.gmra.mxu0 %v3309
    %v4242 = vpop.f32.mrf.mxu0
    %v4243 = vadd.f32 0.0, %v4242
    %v4244 = vpop.f32.mrf.mxu0
    %4245 = vmatprep.mubr.f32.mxu0 0.0
    %4246 = vmatmul.mubr.f32.gmra.mxu0 %v3312
    %v4247 = vpop.f32.mrf.mxu0
    %v4248 = vadd.f32 0.0, %v4247
    %v4249 = vpop.f32.mrf.mxu0
    %4250 = vmatprep.mubr.f32.mxu0 0.0
    %4251 = vmatmul.mubr.f32.gmra.mxu0 %v3315
    %v4252 = vpop.f32.mrf.mxu0
    %v4253 = vadd.f32 0.0, %v4252
    %v4254 = vpop.f32.mrf.mxu0
    %4255 = vmatprep.mubr.f32.mxu0 0.0
    %4256 = vmatmul.mubr.f32.gmra.mxu0 %v3318
    %v4257 = vpop.f32.mrf.mxu0
    %v4258 = vadd.f32 0.0, %v4257
    %v4259 = vpop.f32.mrf.mxu0
    %4260 = vmatprep.mubr.f32.mxu0 0.0
    %4261 = vmatmul.mubr.f32.gmra.mxu0 %v3321
    %v4262 = vpop.f32.mrf.mxu0
    %v4263 = vadd.f32 0.0, %v4262
    %v4264 = vpop.f32.mrf.mxu0
    %4265 = vmatprep.mubr.f32.mxu0 0.0
    %4266 = vmatmul.mubr.f32.gmra.mxu0 %v3324
    %v4267 = vpop.f32.mrf.mxu0
    %v4268 = vadd.f32 0.0, %v4267
    %v4269 = vpop.f32.mrf.mxu0
    %4270 = vmatprep.mubr.f32.mxu0 0.0
    %4271 = vmatmul.mubr.f32.gmra.mxu0 %v3327
    %v4272 = vpop.f32.mrf.mxu0
    %v4273 = vadd.f32 0.0, %v4272
    %v4274 = vpop.f32.mrf.mxu0
    %4275 = vmatprep.mubr.f32.mxu0 0.0
    %4276 = vmatmul.mubr.f32.gmra.mxu0 %v3330
    %v4277 = vpop.f32.mrf.mxu0
    %v4278 = vadd.f32 0.0, %v4277
    %v4279 = vpop.f32.mrf.mxu0
    %4280 = vmatprep.mubr.f32.mxu0 0.0
    %4281 = vmatmul.mubr.f32.gmra.mxu0 %v3333
    %v4282 = vpop.f32.mrf.mxu0
    %v4283 = vadd.f32 0.0, %v4282
    %v4284 = vpop.f32.mrf.mxu0
    %4285 = vmatprep.mubr.f32.mxu0 0.0
    %4286 = vmatmul.mubr.f32.gmra.mxu0 %v3336
    %v4287 = vpop.f32.mrf.mxu0
    %v4288 = vadd.f32 0.0, %v4287
    %v4289 = vpop.f32.mrf.mxu0
    %4290 = vmatprep.mubr.f32.mxu0 0.0
    %4291 = vmatmul.mubr.f32.gmra.mxu0 %v3339
    %v4292 = vpop.f32.mrf.mxu0
    %v4293 = vadd.f32 0.0, %v4292
    %v4294 = vpop.f32.mrf.mxu0
    %4295 = vmatprep.mubr.f32.mxu0 0.0
    %4296 = vmatmul.mubr.f32.gmra.mxu0 %v3342
    %v4297 = vpop.f32.mrf.mxu0
    %v4298 = vadd.f32 0.0, %v4297
    %v4299 = vpop.f32.mrf.mxu0
    %4300 = vdwg.mxu0
    %4301 = vmatprep.subr.mxu0 0.0
    %4302 = vmatpush1.msra.mxu0 0.0
    %4303 = vmatprep.subr.mxu0 0.0
    %4304 = vmatpush1.msra.mxu0 0.0
    %4305 = vmatprep.subr.mxu0 0.0
    %4306 = vmatpush1.msra.mxu0 0.0
    %4307 = vmatprep.subr.mxu0 0.0
    %4308 = vmatpush1.msra.mxu0 0.0
    %4309 = vmatprep.subr.mxu0 0.0
    %4310 = vmatpush1.msra.mxu0 0.0
    %4311 = vmatprep.subr.mxu0 0.0
    %4312 = vmatpush1.msra.mxu0 0.0
    %4313 = vmatprep.subr.mxu0 0.0
    %4314 = vmatpush1.msra.mxu0 0.0
    %4315 = vmatprep.subr.mxu0 0.0
    %4316 = vmatpush1.msra.mxu0 0.0
    %4317 = vmatprep.subr.mxu0 0.0
    %4318 = vmatpush1.msra.mxu0 0.0
    %4319 = vmatprep.subr.mxu0 0.0
    %4320 = vmatpush1.msra.mxu0 0.0
    %4321 = vmatprep.subr.mxu0 0.0
    %4322 = vmatpush1.msra.mxu0 0.0
    %4323 = vmatprep.subr.mxu0 0.0
    %4324 = vmatpush1.msra.mxu0 0.0
    %4325 = vmatprep.subr.mxu0 0.0
    %4326 = vmatpush1.msra.mxu0 %v4155
    %4327 = vmatprep.subr.mxu0 0.0
    %4328 = vmatpush1.msra.mxu0 %v4154
    %4329 = vmatprep.subr.mxu0 0.0
    %4330 = vmatpush1.msra.mxu0 %v4153
    %4331 = vmatprep.subr.mxu0 0.0
    %4332 = vmatpush1.msra.mxu0 %v4152
    %4333 = vmatprep.subr.mxu0 0.0
    %4334 = vmatpush2.msra.mxu0 0.0
    %4335 = vmatprep.subr.mxu0 0.0
    %4336 = vmatpush2.msra.mxu0 0.0
    %4337 = vmatprep.subr.mxu0 0.0
    %4338 = vmatpush2.msra.mxu0 0.0
    %4339 = vmatprep.subr.mxu0 0.0
    %4340 = vmatpush2.msra.mxu0 0.0
    %4341 = vmatprep.subr.mxu0 0.0
    %4342 = vmatpush2.msra.mxu0 0.0
    %4343 = vmatprep.subr.mxu0 0.0
    %4344 = vmatpush2.msra.mxu0 0.0
    %4345 = vmatprep.subr.mxu0 0.0
    %4346 = vmatpush2.msra.mxu0 0.0
    %4347 = vmatprep.subr.mxu0 0.0
    %4348 = vmatpush2.msra.mxu0 0.0
    %4349 = vmatprep.subr.mxu0 0.0
    %4350 = vmatpush2.msra.mxu0 0.0
    %4351 = vmatprep.subr.mxu0 0.0
    %4352 = vmatpush2.msra.mxu0 0.0
    %4353 = vmatprep.subr.mxu0 0.0
    %4354 = vmatpush2.msra.mxu0 0.0
    %4355 = vmatprep.subr.mxu0 0.0
    %4356 = vmatpush2.msra.mxu0 0.0
    %4357 = vmatprep.subr.mxu0 0.0
    %4358 = vmatpush2.msra.mxu0 0.0
    %4359 = vmatprep.subr.mxu0 0.0
    %4360 = vmatpush2.msra.mxu0 0.0
    %4361 = vmatprep.subr.mxu0 0.0
    %4362 = vmatpush2.msra.mxu0 0.0
    %4363 = vmatprep.subr.mxu0 0.0
    %4364 = vmatpush2.msra.mxu0 0.0
    %4365 = vmatprep.mubr.f32.mxu0 0.0
    %4366 = vmatmul.mubr.f32.gmra.mxu0 %v3490
    %v4367 = vpop.f32.mrf.mxu0
    %v4368 = vadd.f32 %v4223, %v4367
    %v4369 = vpop.f32.mrf.mxu0
    %4370 = vmatprep.mubr.f32.mxu0 0.0
    %4371 = vmatmul.mubr.f32.gmra.mxu0 %v3493
    %v4372 = vpop.f32.mrf.mxu0
    %v4373 = vadd.f32 %v4228, %v4372
    %v4374 = vpop.f32.mrf.mxu0
    %4375 = vmatprep.mubr.f32.mxu0 0.0
    %4376 = vmatmul.mubr.f32.gmra.mxu0 %v3496
    %v4377 = vpop.f32.mrf.mxu0
    %v4378 = vadd.f32 %v4233, %v4377
    %v4379 = vpop.f32.mrf.mxu0
    %4380 = vmatprep.mubr.f32.mxu0 0.0
    %4381 = vmatmul.mubr.f32.gmra.mxu0 %v3499
    %v4382 = vpop.f32.mrf.mxu0
    %v4383 = vadd.f32 %v4238, %v4382
    %v4384 = vpop.f32.mrf.mxu0
    %4385 = vmatprep.mubr.f32.mxu0 0.0
    %4386 = vmatmul.mubr.f32.gmra.mxu0 %v3502
    %v4387 = vpop.f32.mrf.mxu0
    %v4388 = vadd.f32 %v4243, %v4387
    %v4389 = vpop.f32.mrf.mxu0
    %4390 = vmatprep.mubr.f32.mxu0 0.0
    %4391 = vmatmul.mubr.f32.gmra.mxu0 %v3505
    %v4392 = vpop.f32.mrf.mxu0
    %v4393 = vadd.f32 %v4248, %v4392
    %v4394 = vpop.f32.mrf.mxu0
    %4395 = vmatprep.mubr.f32.mxu0 0.0
    %4396 = vmatmul.mubr.f32.gmra.mxu0 %v3508
    %v4397 = vpop.f32.mrf.mxu0
    %v4398 = vadd.f32 %v4253, %v4397
    %v4399 = vpop.f32.mrf.mxu0
    %4400 = vmatprep.mubr.f32.mxu0 0.0
    %4401 = vmatmul.mubr.f32.gmra.mxu0 %v3511
    %v4402 = vpop.f32.mrf.mxu0
    %v4403 = vadd.f32 %v4258, %v4402
    %v4404 = vpop.f32.mrf.mxu0
    %4405 = vmatprep.mubr.f32.mxu0 0.0
    %4406 = vmatmul.mubr.f32.gmra.mxu0 %v3514
    %v4407 = vpop.f32.mrf.mxu0
    %v4408 = vadd.f32 %v4263, %v4407
    %v4409 = vpop.f32.mrf.mxu0
    %4410 = vmatprep.mubr.f32.mxu0 0.0
    %4411 = vmatmul.mubr.f32.gmra.mxu0 %v3517
    %v4412 = vpop.f32.mrf.mxu0
    %v4413 = vadd.f32 %v4268, %v4412
    %v4414 = vpop.f32.mrf.mxu0
    %4415 = vmatprep.mubr.f32.mxu0 0.0
    %4416 = vmatmul.mubr.f32.gmra.mxu0 %v3520
    %v4417 = vpop.f32.mrf.mxu0
    %v4418 = vadd.f32 %v4273, %v4417
    %v4419 = vpop.f32.mrf.mxu0
    %4420 = vmatprep.mubr.f32.mxu0 0.0
    %4421 = vmatmul.mubr.f32.gmra.mxu0 %v3523
    %v4422 = vpop.f32.mrf.mxu0
    %v4423 = vadd.f32 %v4278, %v4422
    %v4424 = vpop.f32.mrf.mxu0
    %4425 = vmatprep.mubr.f32.mxu0 0.0
    %4426 = vmatmul.mubr.f32.gmra.mxu0 %v3526
    %v4427 = vpop.f32.mrf.mxu0
    %v4428 = vadd.f32 %v4283, %v4427
    %v4429 = vpop.f32.mrf.mxu0
    %4430 = vmatprep.mubr.f32.mxu0 0.0
    %4431 = vmatmul.mubr.f32.gmra.mxu0 %v3529
    %v4432 = vpop.f32.mrf.mxu0
    %v4433 = vadd.f32 %v4288, %v4432
    %v4434 = vpop.f32.mrf.mxu0
    %4435 = vmatprep.mubr.f32.mxu0 0.0
    %4436 = vmatmul.mubr.f32.gmra.mxu0 %v3532
    %v4437 = vpop.f32.mrf.mxu0
    %v4438 = vadd.f32 %v4293, %v4437
    %v4439 = vpop.f32.mrf.mxu0
    %4440 = vmatprep.mubr.f32.mxu0 0.0
    %4441 = vmatmul.mubr.f32.gmra.mxu0 %v3535
    %v4442 = vpop.f32.mrf.mxu0
    %v4443 = vadd.f32 %v4298, %v4442
    %v4444 = vpop.f32.mrf.mxu0
    %4445 = vdwg.mxu0
    %v4446 = vadd.f32 %v4368, %v3215
    %v4447 = vadd.f32 %v4373, %v3220
    %v4448 = vadd.f32 %v4378, %v3225
    %v4449 = vadd.f32 %v4383, %v3230
    %v4450 = vadd.f32 %v4388, %v3235
    %v4451 = vadd.f32 %v4393, %v3240
    %v4452 = vadd.f32 %v4398, %v3245
    %v4453 = vadd.f32 %v4403, %v3250
    %v4454 = vadd.f32 %v4408, %v3255
    %v4455 = vadd.f32 %v4413, %v3260
    %v4456 = vadd.f32 %v4418, %v3265
    %v4457 = vadd.f32 %v4423, %v3270
    %v4458 = vadd.f32 %v4428, %v3275
    %v4459 = vadd.f32 %v4433, %v3280
    %v4460 = vadd.f32 %v4438, %v3285
    %v4461 = vadd.f32 %v4443, %v3290
    %v4462 = vmul.f32 %v4446, 0.5
    %v4463 = vmul.f32 %v4447, 0.5
    %v4464 = vmul.f32 %v4448, 0.5
    %v4465 = vmul.f32 %v4449, 0.5
    %v4466 = vtanh.pop %v4462
    %v4467 = vtanh.pop %v4463
    %v4468 = vtanh.pop %v4464
    %v4469 = vtanh.pop %v4465
    %v4470 = vadd.f32 %v4466, 1.0
    %v4471 = vadd.f32 %v4467, 1.0
    %v4472 = vadd.f32 %v4468, 1.0
    %v4473 = vadd.f32 %v4469, 1.0
    %v4474 = vmul.f32 %v4470, 0.5
    %v4475 = vmul.f32 %v4471, 0.5
    %v4476 = vmul.f32 %v4472, 0.5
    %v4477 = vmul.f32 %v4473, 0.5
    %v4478 = vmul.f32 %v4450, 0.5
    %v4479 = vmul.f32 %v4451, 0.5
    %v4480 = vmul.f32 %v4452, 0.5
    %v4481 = vmul.f32 %v4453, 0.5
    %v4482 = vtanh.pop %v4478
    %v4483 = vtanh.pop %v4479
    %v4484 = vtanh.pop %v4480
    %v4485 = vtanh.pop %v4481
    %v4486 = vadd.f32 %v4482, 1.0
    %v4487 = vadd.f32 %v4483, 1.0
    %v4488 = vadd.f32 %v4484, 1.0
    %v4489 = vadd.f32 %v4485, 1.0
    %v4490 = vmul.f32 %v4486, 0.5
    %v4491 = vmul.f32 %v4487, 0.5
    %v4492 = vmul.f32 %v4488, 0.5
    %v4493 = vmul.f32 %v4489, 0.5
    %v4494 = vtanh.pop %v4454
    %v4495 = vtanh.pop %v4455
    %v4496 = vtanh.pop %v4456
    %v4497 = vtanh.pop %v4457
    %v4498 = vmul.f32 %v4458, 0.5
    %v4499 = vmul.f32 %v4459, 0.5
    %v4500 = vmul.f32 %v4460, 0.5
    %v4501 = vmul.f32 %v4461, 0.5
    %v4502 = vtanh.pop %v4498
    %v4503 = vtanh.pop %v4499
    %v4504 = vtanh.pop %v4500
    %v4505 = vtanh.pop %v4501
    %v4506 = vadd.f32 %v4502, 1.0
    %v4507 = vadd.f32 %v4503, 1.0
    %v4508 = vadd.f32 %v4504, 1.0
    %v4509 = vadd.f32 %v4505, 1.0
    %v4510 = vmul.f32 %v4506, 0.5
    %v4511 = vmul.f32 %v4507, 0.5
    %v4512 = vmul.f32 %v4508, 0.5
    %v4513 = vmul.f32 %v4509, 0.5
    %v4514 = vmul.f32 %v4490, %v4140
    %v4515 = vmul.f32 %v4491, %v4141
    %v4516 = vmul.f32 %v4492, %v4142
    %v4517 = vmul.f32 %v4493, %v4143
    %v4518 = vmul.f32 %v4474, %v4494
    %v4519 = vmul.f32 %v4475, %v4495
    %v4520 = vmul.f32 %v4476, %v4496
    %v4521 = vmul.f32 %v4477, %v4497
    %v4522 = vadd.f32 %v4514, %v4518
    %v4523 = vadd.f32 %v4515, %v4519
    %v4524 = vadd.f32 %v4516, %v4520
    %v4525 = vadd.f32 %v4517, %v4521
    %v4526 = vtanh.pop %v4522
    %v4527 = vtanh.pop %v4523
    %v4528 = vtanh.pop %v4524
    %v4529 = vtanh.pop %v4525
    %v4530 = vmul.f32 %v4510, %v4526
    %v4531 = vmul.f32 %v4511, %v4527
    %v4532 = vmul.f32 %v4512, %v4528
    %v4533 = vmul.f32 %v4513, %v4529
    %v4534 = vld [vmem:[%s1119] sm:$0xff]
    %v4535 = vld [vmem:[%s1119 + $0x8] sm:$0xff]
    %v4536 = vld [vmem:[%s1119 + $0x10] sm:$0xff]
    %v4537 = vld [vmem:[%s1119 + $0x18] sm:$0xff]
    %4538 = vmatprep.subr.mxu0 0.0
    %4539 = vmatpush1.msra.mxu0 0.0
    %4540 = vmatprep.subr.mxu0 0.0
    %4541 = vmatpush1.msra.mxu0 0.0
    %4542 = vmatprep.subr.mxu0 0.0
    %4543 = vmatpush1.msra.mxu0 0.0
    %4544 = vmatprep.subr.mxu0 0.0
    %4545 = vmatpush1.msra.mxu0 0.0
    %4546 = vmatprep.subr.mxu0 0.0
    %4547 = vmatpush1.msra.mxu0 0.0
    %4548 = vmatprep.subr.mxu0 0.0
    %4549 = vmatpush1.msra.mxu0 0.0
    %4550 = vmatprep.subr.mxu0 0.0
    %4551 = vmatpush1.msra.mxu0 0.0
    %4552 = vmatprep.subr.mxu0 0.0
    %4553 = vmatpush1.msra.mxu0 0.0
    %4554 = vmatprep.subr.mxu0 0.0
    %4555 = vmatpush1.msra.mxu0 0.0
    %4556 = vmatprep.subr.mxu0 0.0
    %4557 = vmatpush1.msra.mxu0 0.0
    %4558 = vmatprep.subr.mxu0 0.0
    %4559 = vmatpush1.msra.mxu0 0.0
    %4560 = vmatprep.subr.mxu0 0.0
    %4561 = vmatpush1.msra.mxu0 0.0
    %4562 = vmatprep.subr.mxu0 0.0
    %4563 = vmatpush1.msra.mxu0 %v4533
    %4564 = vmatprep.subr.mxu0 0.0
    %4565 = vmatpush1.msra.mxu0 %v4532
    %4566 = vmatprep.subr.mxu0 0.0
    %4567 = vmatpush1.msra.mxu0 %v4531
    %4568 = vmatprep.subr.mxu0 0.0
    %4569 = vmatpush1.msra.mxu0 %v4530
    %4570 = vmatprep.subr.mxu0 0.0
    %4571 = vmatpush2.msra.mxu0 0.0
    %4572 = vmatprep.subr.mxu0 0.0
    %4573 = vmatpush2.msra.mxu0 0.0
    %4574 = vmatprep.subr.mxu0 0.0
    %4575 = vmatpush2.msra.mxu0 0.0
    %4576 = vmatprep.subr.mxu0 0.0
    %4577 = vmatpush2.msra.mxu0 0.0
    %4578 = vmatprep.subr.mxu0 0.0
    %4579 = vmatpush2.msra.mxu0 0.0
    %4580 = vmatprep.subr.mxu0 0.0
    %4581 = vmatpush2.msra.mxu0 0.0
    %4582 = vmatprep.subr.mxu0 0.0
    %4583 = vmatpush2.msra.mxu0 0.0
    %4584 = vmatprep.subr.mxu0 0.0
    %4585 = vmatpush2.msra.mxu0 0.0
    %4586 = vmatprep.subr.mxu0 0.0
    %4587 = vmatpush2.msra.mxu0 0.0
    %4588 = vmatprep.subr.mxu0 0.0
    %4589 = vmatpush2.msra.mxu0 0.0
    %4590 = vmatprep.subr.mxu0 0.0
    %4591 = vmatpush2.msra.mxu0 0.0
    %4592 = vmatprep.subr.mxu0 0.0
    %4593 = vmatpush2.msra.mxu0 0.0
    %4594 = vmatprep.subr.mxu0 0.0
    %4595 = vmatpush2.msra.mxu0 0.0
    %4596 = vmatprep.subr.mxu0 0.0
    %4597 = vmatpush2.msra.mxu0 0.0
    %4598 = vmatprep.subr.mxu0 0.0
    %4599 = vmatpush2.msra.mxu0 0.0
    %4600 = vmatprep.subr.mxu0 0.0
    %4601 = vmatpush2.msra.mxu0 0.0
    %4602 = vmatprep.mubr.f32.mxu0 0.0
    %4603 = vmatmul.mubr.f32.gmra.mxu0 %v3297
    %v4604 = vpop.f32.mrf.mxu0
    %v4605 = vadd.f32 0.0, %v4604
    %v4606 = vpop.f32.mrf.mxu0
    %4607 = vmatprep.mubr.f32.mxu0 0.0
    %4608 = vmatmul.mubr.f32.gmra.mxu0 %v3300
    %v4609 = vpop.f32.mrf.mxu0
    %v4610 = vadd.f32 0.0, %v4609
    %v4611 = vpop.f32.mrf.mxu0
    %4612 = vmatprep.mubr.f32.mxu0 0.0
    %4613 = vmatmul.mubr.f32.gmra.mxu0 %v3303
    %v4614 = vpop.f32.mrf.mxu0
    %v4615 = vadd.f32 0.0, %v4614
    %v4616 = vpop.f32.mrf.mxu0
    %4617 = vmatprep.mubr.f32.mxu0 0.0
    %4618 = vmatmul.mubr.f32.gmra.mxu0 %v3306
    %v4619 = vpop.f32.mrf.mxu0
    %v4620 = vadd.f32 0.0, %v4619
    %v4621 = vpop.f32.mrf.mxu0
    %4622 = vmatprep.mubr.f32.mxu0 0.0
    %4623 = vmatmul.mubr.f32.gmra.mxu0 %v3309
    %v4624 = vpop.f32.mrf.mxu0
    %v4625 = vadd.f32 0.0, %v4624
    %v4626 = vpop.f32.mrf.mxu0
    %4627 = vmatprep.mubr.f32.mxu0 0.0
    %4628 = vmatmul.mubr.f32.gmra.mxu0 %v3312
    %v4629 = vpop.f32.mrf.mxu0
    %v4630 = vadd.f32 0.0, %v4629
    %v4631 = vpop.f32.mrf.mxu0
    %4632 = vmatprep.mubr.f32.mxu0 0.0
    %4633 = vmatmul.mubr.f32.gmra.mxu0 %v3315
    %v4634 = vpop.f32.mrf.mxu0
    %v4635 = vadd.f32 0.0, %v4634
    %v4636 = vpop.f32.mrf.mxu0
    %4637 = vmatprep.mubr.f32.mxu0 0.0
    %4638 = vmatmul.mubr.f32.gmra.mxu0 %v3318
    %v4639 = vpop.f32.mrf.mxu0
    %v4640 = vadd.f32 0.0, %v4639
    %v4641 = vpop.f32.mrf.mxu0
    %4642 = vmatprep.mubr.f32.mxu0 0.0
    %4643 = vmatmul.mubr.f32.gmra.mxu0 %v3321
    %v4644 = vpop.f32.mrf.mxu0
    %v4645 = vadd.f32 0.0, %v4644
    %v4646 = vpop.f32.mrf.mxu0
    %4647 = vmatprep.mubr.f32.mxu0 0.0
    %4648 = vmatmul.mubr.f32.gmra.mxu0 %v3324
    %v4649 = vpop.f32.mrf.mxu0
    %v4650 = vadd.f32 0.0, %v4649
    %v4651 = vpop.f32.mrf.mxu0
    %4652 = vmatprep.mubr.f32.mxu0 0.0
    %4653 = vmatmul.mubr.f32.gmra.mxu0 %v3327
    %v4654 = vpop.f32.mrf.mxu0
    %v4655 = vadd.f32 0.0, %v4654
    %v4656 = vpop.f32.mrf.mxu0
    %4657 = vmatprep.mubr.f32.mxu0 0.0
    %4658 = vmatmul.mubr.f32.gmra.mxu0 %v3330
    %v4659 = vpop.f32.mrf.mxu0
    %v4660 = vadd.f32 0.0, %v4659
    %v4661 = vpop.f32.mrf.mxu0
    %4662 = vmatprep.mubr.f32.mxu0 0.0
    %4663 = vmatmul.mubr.f32.gmra.mxu0 %v3333
    %v4664 = vpop.f32.mrf.mxu0
    %v4665 = vadd.f32 0.0, %v4664
    %v4666 = vpop.f32.mrf.mxu0
    %4667 = vmatprep.mubr.f32.mxu0 0.0
    %4668 = vmatmul.mubr.f32.gmra.mxu0 %v3336
    %v4669 = vpop.f32.mrf.mxu0
    %v4670 = vadd.f32 0.0, %v4669
    %v4671 = vpop.f32.mrf.mxu0
    %4672 = vmatprep.mubr.f32.mxu0 0.0
    %4673 = vmatmul.mubr.f32.gmra.mxu0 %v3339
    %v4674 = vpop.f32.mrf.mxu0
    %v4675 = vadd.f32 0.0, %v4674
    %v4676 = vpop.f32.mrf.mxu0
    %4677 = vmatprep.mubr.f32.mxu0 0.0
    %4678 = vmatmul.mubr.f32.gmra.mxu0 %v3342
    %v4679 = vpop.f32.mrf.mxu0
    %v4680 = vadd.f32 0.0, %v4679
    %v4681 = vpop.f32.mrf.mxu0
    %4682 = vdwg.mxu0
    %4683 = vmatprep.subr.mxu0 0.0
    %4684 = vmatpush1.msra.mxu0 0.0
    %4685 = vmatprep.subr.mxu0 0.0
    %4686 = vmatpush1.msra.mxu0 0.0
    %4687 = vmatprep.subr.mxu0 0.0
    %4688 = vmatpush1.msra.mxu0 0.0
    %4689 = vmatprep.subr.mxu0 0.0
    %4690 = vmatpush1.msra.mxu0 0.0
    %4691 = vmatprep.subr.mxu0 0.0
    %4692 = vmatpush1.msra.mxu0 0.0
    %4693 = vmatprep.subr.mxu0 0.0
    %4694 = vmatpush1.msra.mxu0 0.0
    %4695 = vmatprep.subr.mxu0 0.0
    %4696 = vmatpush1.msra.mxu0 0.0
    %4697 = vmatprep.subr.mxu0 0.0
    %4698 = vmatpush1.msra.mxu0 0.0
    %4699 = vmatprep.subr.mxu0 0.0
    %4700 = vmatpush1.msra.mxu0 0.0
    %4701 = vmatprep.subr.mxu0 0.0
    %4702 = vmatpush1.msra.mxu0 0.0
    %4703 = vmatprep.subr.mxu0 0.0
    %4704 = vmatpush1.msra.mxu0 0.0
    %4705 = vmatprep.subr.mxu0 0.0
    %4706 = vmatpush1.msra.mxu0 0.0
    %4707 = vmatprep.subr.mxu0 0.0
    %4708 = vmatpush1.msra.mxu0 %v4537
    %4709 = vmatprep.subr.mxu0 0.0
    %4710 = vmatpush1.msra.mxu0 %v4536
    %4711 = vmatprep.subr.mxu0 0.0
    %4712 = vmatpush1.msra.mxu0 %v4535
    %4713 = vmatprep.subr.mxu0 0.0
    %4714 = vmatpush1.msra.mxu0 %v4534
    %4715 = vmatprep.subr.mxu0 0.0
    %4716 = vmatpush2.msra.mxu0 0.0
    %4717 = vmatprep.subr.mxu0 0.0
    %4718 = vmatpush2.msra.mxu0 0.0
    %4719 = vmatprep.subr.mxu0 0.0
    %4720 = vmatpush2.msra.mxu0 0.0
    %4721 = vmatprep.subr.mxu0 0.0
    %4722 = vmatpush2.msra.mxu0 0.0
    %4723 = vmatprep.subr.mxu0 0.0
    %4724 = vmatpush2.msra.mxu0 0.0
    %4725 = vmatprep.subr.mxu0 0.0
    %4726 = vmatpush2.msra.mxu0 0.0
    %4727 = vmatprep.subr.mxu0 0.0
    %4728 = vmatpush2.msra.mxu0 0.0
    %4729 = vmatprep.subr.mxu0 0.0
    %4730 = vmatpush2.msra.mxu0 0.0
    %4731 = vmatprep.subr.mxu0 0.0
    %4732 = vmatpush2.msra.mxu0 0.0
    %4733 = vmatprep.subr.mxu0 0.0
    %4734 = vmatpush2.msra.mxu0 0.0
    %4735 = vmatprep.subr.mxu0 0.0
    %4736 = vmatpush2.msra.mxu0 0.0
    %4737 = vmatprep.subr.mxu0 0.0
    %4738 = vmatpush2.msra.mxu0 0.0
    %4739 = vmatprep.subr.mxu0 0.0
    %4740 = vmatpush2.msra.mxu0 0.0
    %4741 = vmatprep.subr.mxu0 0.0
    %4742 = vmatpush2.msra.mxu0 0.0
    %4743 = vmatprep.subr.mxu0 0.0
    %4744 = vmatpush2.msra.mxu0 0.0
    %4745 = vmatprep.subr.mxu0 0.0
    %4746 = vmatpush2.msra.mxu0 0.0
    %4747 = vmatprep.mubr.f32.mxu0 0.0
    %4748 = vmatmul.mubr.f32.gmra.mxu0 %v3490
    %v4749 = vpop.f32.mrf.mxu0
    %v4750 = vadd.f32 %v4605, %v4749
    %v4751 = vpop.f32.mrf.mxu0
    %4752 = vmatprep.mubr.f32.mxu0 0.0
    %4753 = vmatmul.mubr.f32.gmra.mxu0 %v3493
    %v4754 = vpop.f32.mrf.mxu0
    %v4755 = vadd.f32 %v4610, %v4754
    %v4756 = vpop.f32.mrf.mxu0
    %4757 = vmatprep.mubr.f32.mxu0 0.0
    %4758 = vmatmul.mubr.f32.gmra.mxu0 %v3496
    %v4759 = vpop.f32.mrf.mxu0
    %v4760 = vadd.f32 %v4615, %v4759
    %v4761 = vpop.f32.mrf.mxu0
    %4762 = vmatprep.mubr.f32.mxu0 0.0
    %4763 = vmatmul.mubr.f32.gmra.mxu0 %v3499
    %v4764 = vpop.f32.mrf.mxu0
    %v4765 = vadd.f32 %v4620, %v4764
    %v4766 = vpop.f32.mrf.mxu0
    %4767 = vmatprep.mubr.f32.mxu0 0.0
    %4768 = vmatmul.mubr.f32.gmra.mxu0 %v3502
    %v4769 = vpop.f32.mrf.mxu0
    %v4770 = vadd.f32 %v4625, %v4769
    %v4771 = vpop.f32.mrf.mxu0
    %4772 = vmatprep.mubr.f32.mxu0 0.0
    %4773 = vmatmul.mubr.f32.gmra.mxu0 %v3505
    %v4774 = vpop.f32.mrf.mxu0
    %v4775 = vadd.f32 %v4630, %v4774
    %v4776 = vpop.f32.mrf.mxu0
    %4777 = vmatprep.mubr.f32.mxu0 0.0
    %4778 = vmatmul.mubr.f32.gmra.mxu0 %v3508
    %v4779 = vpop.f32.mrf.mxu0
    %v4780 = vadd.f32 %v4635, %v4779
    %v4781 = vpop.f32.mrf.mxu0
    %4782 = vmatprep.mubr.f32.mxu0 0.0
    %4783 = vmatmul.mubr.f32.gmra.mxu0 %v3511
    %v4784 = vpop.f32.mrf.mxu0
    %v4785 = vadd.f32 %v4640, %v4784
    %v4786 = vpop.f32.mrf.mxu0
    %4787 = vmatprep.mubr.f32.mxu0 0.0
    %4788 = vmatmul.mubr.f32.gmra.mxu0 %v3514
    %v4789 = vpop.f32.mrf.mxu0
    %v4790 = vadd.f32 %v4645, %v4789
    %v4791 = vpop.f32.mrf.mxu0
    %4792 = vmatprep.mubr.f32.mxu0 0.0
    %4793 = vmatmul.mubr.f32.gmra.mxu0 %v3517
    %v4794 = vpop.f32.mrf.mxu0
    %v4795 = vadd.f32 %v4650, %v4794
    %v4796 = vpop.f32.mrf.mxu0
    %4797 = vmatprep.mubr.f32.mxu0 0.0
    %4798 = vmatmul.mubr.f32.gmra.mxu0 %v3520
    %v4799 = vpop.f32.mrf.mxu0
    %v4800 = vadd.f32 %v4655, %v4799
    %v4801 = vpop.f32.mrf.mxu0
    %4802 = vmatprep.mubr.f32.mxu0 0.0
    %4803 = vmatmul.mubr.f32.gmra.mxu0 %v3523
    %v4804 = vpop.f32.mrf.mxu0
    %v4805 = vadd.f32 %v4660, %v4804
    %v4806 = vpop.f32.mrf.mxu0
    %4807 = vmatprep.mubr.f32.mxu0 0.0
    %4808 = vmatmul.mubr.f32.gmra.mxu0 %v3526
    %v4809 = vpop.f32.mrf.mxu0
    %v4810 = vadd.f32 %v4665, %v4809
    %v4811 = vpop.f32.mrf.mxu0
    %4812 = vmatprep.mubr.f32.mxu0 0.0
    %4813 = vmatmul.mubr.f32.gmra.mxu0 %v3529
    %v4814 = vpop.f32.mrf.mxu0
    %v4815 = vadd.f32 %v4670, %v4814
    %v4816 = vpop.f32.mrf.mxu0
    %4817 = vmatprep.mubr.f32.mxu0 0.0
    %4818 = vmatmul.mubr.f32.gmra.mxu0 %v3532
    %v4819 = vpop.f32.mrf.mxu0
    %v4820 = vadd.f32 %v4675, %v4819
    %v4821 = vpop.f32.mrf.mxu0
    %4822 = vmatprep.mubr.f32.mxu0 0.0
    %4823 = vmatmul.mubr.f32.gmra.mxu0 %v3535
    %v4824 = vpop.f32.mrf.mxu0
    %v4825 = vadd.f32 %v4680, %v4824
    %v4826 = vpop.f32.mrf.mxu0
    %4827 = vdwg.mxu0
    %v4828 = vadd.f32 %v4750, %v3215
    %v4829 = vadd.f32 %v4755, %v3220
    %v4830 = vadd.f32 %v4760, %v3225
    %v4831 = vadd.f32 %v4765, %v3230
    %v4832 = vadd.f32 %v4770, %v3235
    %v4833 = vadd.f32 %v4775, %v3240
    %v4834 = vadd.f32 %v4780, %v3245
    %v4835 = vadd.f32 %v4785, %v3250
    %v4836 = vadd.f32 %v4790, %v3255
    %v4837 = vadd.f32 %v4795, %v3260
    %v4838 = vadd.f32 %v4800, %v3265
    %v4839 = vadd.f32 %v4805, %v3270
    %v4840 = vadd.f32 %v4810, %v3275
    %v4841 = vadd.f32 %v4815, %v3280
    %v4842 = vadd.f32 %v4820, %v3285
    %v4843 = vadd.f32 %v4825, %v3290
    %v4844 = vmul.f32 %v4828, 0.5
    %v4845 = vmul.f32 %v4829, 0.5
    %v4846 = vmul.f32 %v4830, 0.5
    %v4847 = vmul.f32 %v4831, 0.5
    %v4848 = vtanh.pop %v4844
    %v4849 = vtanh.pop %v4845
    %v4850 = vtanh.pop %v4846
    %v4851 = vtanh.pop %v4847
    %v4852 = vadd.f32 %v4848, 1.0
    %v4853 = vadd.f32 %v4849, 1.0
    %v4854 = vadd.f32 %v4850, 1.0
    %v4855 = vadd.f32 %v4851, 1.0
    %v4856 = vmul.f32 %v4852, 0.5
    %v4857 = vmul.f32 %v4853, 0.5
    %v4858 = vmul.f32 %v4854, 0.5
    %v4859 = vmul.f32 %v4855, 0.5
    %v4860 = vmul.f32 %v4832, 0.5
    %v4861 = vmul.f32 %v4833, 0.5
    %v4862 = vmul.f32 %v4834, 0.5
    %v4863 = vmul.f32 %v4835, 0.5
    %v4864 = vtanh.pop %v4860
    %v4865 = vtanh.pop %v4861
    %v4866 = vtanh.pop %v4862
    %v4867 = vtanh.pop %v4863
    %v4868 = vadd.f32 %v4864, 1.0
    %v4869 = vadd.f32 %v4865, 1.0
    %v4870 = vadd.f32 %v4866, 1.0
    %v4871 = vadd.f32 %v4867, 1.0
    %v4872 = vmul.f32 %v4868, 0.5
    %v4873 = vmul.f32 %v4869, 0.5
    %v4874 = vmul.f32 %v4870, 0.5
    %v4875 = vmul.f32 %v4871, 0.5
    %v4876 = vtanh.pop %v4836
    %v4877 = vtanh.pop %v4837
    %v4878 = vtanh.pop %v4838
    %v4879 = vtanh.pop %v4839
    %v4880 = vmul.f32 %v4840, 0.5
    %v4881 = vmul.f32 %v4841, 0.5
    %v4882 = vmul.f32 %v4842, 0.5
    %v4883 = vmul.f32 %v4843, 0.5
    %v4884 = vtanh.pop %v4880
    %v4885 = vtanh.pop %v4881
    %v4886 = vtanh.pop %v4882
    %v4887 = vtanh.pop %v4883
    %v4888 = vadd.f32 %v4884, 1.0
    %v4889 = vadd.f32 %v4885, 1.0
    %v4890 = vadd.f32 %v4886, 1.0
    %v4891 = vadd.f32 %v4887, 1.0
    %v4892 = vmul.f32 %v4888, 0.5
    %v4893 = vmul.f32 %v4889, 0.5
    %v4894 = vmul.f32 %v4890, 0.5
    %v4895 = vmul.f32 %v4891, 0.5
    %v4896 = vmul.f32 %v4872, %v4522
    %v4897 = vmul.f32 %v4873, %v4523
    %v4898 = vmul.f32 %v4874, %v4524
    %v4899 = vmul.f32 %v4875, %v4525
    %v4900 = vmul.f32 %v4856, %v4876
    %v4901 = vmul.f32 %v4857, %v4877
    %v4902 = vmul.f32 %v4858, %v4878
    %v4903 = vmul.f32 %v4859, %v4879
    %v4904 = vadd.f32 %v4896, %v4900
    %v4905 = vadd.f32 %v4897, %v4901
    %v4906 = vadd.f32 %v4898, %v4902
    %v4907 = vadd.f32 %v4899, %v4903
    %v4908 = vtanh.pop %v4904
    %v4909 = vtanh.pop %v4905
    %v4910 = vtanh.pop %v4906
    %v4911 = vtanh.pop %v4907
    %v4912 = vmul.f32 %v4892, %v4908
    %v4913 = vmul.f32 %v4893, %v4909
    %v4914 = vmul.f32 %v4894, %v4910
    %v4915 = vmul.f32 %v4895, %v4911
    %v4916 = vld [vmem:[%s1374] sm:$0xff]
    %v4917 = vld [vmem:[%s1374 + $0x8] sm:$0xff]
    %v4918 = vld [vmem:[%s1374 + $0x10] sm:$0xff]
    %v4919 = vld [vmem:[%s1374 + $0x18] sm:$0xff]
    %4920 = vmatprep.subr.mxu0 0.0
    %4921 = vmatpush1.msra.mxu0 0.0
    %4922 = vmatprep.subr.mxu0 0.0
    %4923 = vmatpush1.msra.mxu0 0.0
    %4924 = vmatprep.subr.mxu0 0.0
    %4925 = vmatpush1.msra.mxu0 0.0
    %4926 = vmatprep.subr.mxu0 0.0
    %4927 = vmatpush1.msra.mxu0 0.0
    %4928 = vmatprep.subr.mxu0 0.0
    %4929 = vmatpush1.msra.mxu0 0.0
    %4930 = vmatprep.subr.mxu0 0.0
    %4931 = vmatpush1.msra.mxu0 0.0
    %4932 = vmatprep.subr.mxu0 0.0
    %4933 = vmatpush1.msra.mxu0 0.0
    %4934 = vmatprep.subr.mxu0 0.0
    %4935 = vmatpush1.msra.mxu0 0.0
    %4936 = vmatprep.subr.mxu0 0.0
    %4937 = vmatpush1.msra.mxu0 0.0
    %4938 = vmatprep.subr.mxu0 0.0
    %4939 = vmatpush1.msra.mxu0 0.0
    %4940 = vmatprep.subr.mxu0 0.0
    %4941 = vmatpush1.msra.mxu0 0.0
    %4942 = vmatprep.subr.mxu0 0.0
    %4943 = vmatpush1.msra.mxu0 0.0
    %4944 = vmatprep.subr.mxu0 0.0
    %4945 = vmatpush1.msra.mxu0 %v4915
    %4946 = vmatprep.subr.mxu0 0.0
    %4947 = vmatpush1.msra.mxu0 %v4914
    %4948 = vmatprep.subr.mxu0 0.0
    %4949 = vmatpush1.msra.mxu0 %v4913
    %4950 = vmatprep.subr.mxu0 0.0
    %4951 = vmatpush1.msra.mxu0 %v4912
    %4952 = vmatprep.subr.mxu0 0.0
    %4953 = vmatpush2.msra.mxu0 0.0
    %4954 = vmatprep.subr.mxu0 0.0
    %4955 = vmatpush2.msra.mxu0 0.0
    %4956 = vmatprep.subr.mxu0 0.0
    %4957 = vmatpush2.msra.mxu0 0.0
    %4958 = vmatprep.subr.mxu0 0.0
    %4959 = vmatpush2.msra.mxu0 0.0
    %4960 = vmatprep.subr.mxu0 0.0
    %4961 = vmatpush2.msra.mxu0 0.0
    %4962 = vmatprep.subr.mxu0 0.0
    %4963 = vmatpush2.msra.mxu0 0.0
    %4964 = vmatprep.subr.mxu0 0.0
    %4965 = vmatpush2.msra.mxu0 0.0
    %4966 = vmatprep.subr.mxu0 0.0
    %4967 = vmatpush2.msra.mxu0 0.0
    %4968 = vmatprep.subr.mxu0 0.0
    %4969 = vmatpush2.msra.mxu0 0.0
    %4970 = vmatprep.subr.mxu0 0.0
    %4971 = vmatpush2.msra.mxu0 0.0
    %4972 = vmatprep.subr.mxu0 0.0
    %4973 = vmatpush2.msra.mxu0 0.0
    %4974 = vmatprep.subr.mxu0 0.0
    %4975 = vmatpush2.msra.mxu0 0.0
    %4976 = vmatprep.subr.mxu0 0.0
    %4977 = vmatpush2.msra.mxu0 0.0
    %4978 = vmatprep.subr.mxu0 0.0
    %4979 = vmatpush2.msra.mxu0 0.0
    %4980 = vmatprep.subr.mxu0 0.0
    %4981 = vmatpush2.msra.mxu0 0.0
    %4982 = vmatprep.subr.mxu0 0.0
    %4983 = vmatpush2.msra.mxu0 0.0
    %4984 = vmatprep.mubr.f32.mxu0 0.0
    %4985 = vmatmul.mubr.f32.gmra.mxu0 %v3297
    %v4986 = vpop.f32.mrf.mxu0
    %v4987 = vadd.f32 0.0, %v4986
    %v4988 = vpop.f32.mrf.mxu0
    %4989 = vmatprep.mubr.f32.mxu0 0.0
    %4990 = vmatmul.mubr.f32.gmra.mxu0 %v3300
    %v4991 = vpop.f32.mrf.mxu0
    %v4992 = vadd.f32 0.0, %v4991
    %v4993 = vpop.f32.mrf.mxu0
    %4994 = vmatprep.mubr.f32.mxu0 0.0
    %4995 = vmatmul.mubr.f32.gmra.mxu0 %v3303
    %v4996 = vpop.f32.mrf.mxu0
    %v4997 = vadd.f32 0.0, %v4996
    %v4998 = vpop.f32.mrf.mxu0
    %4999 = vmatprep.mubr.f32.mxu0 0.0
    %5000 = vmatmul.mubr.f32.gmra.mxu0 %v3306
    %v5001 = vpop.f32.mrf.mxu0
    %v5002 = vadd.f32 0.0, %v5001
    %v5003 = vpop.f32.mrf.mxu0
    %5004 = vmatprep.mubr.f32.mxu0 0.0
    %5005 = vmatmul.mubr.f32.gmra.mxu0 %v3309
    %v5006 = vpop.f32.mrf.mxu0
    %v5007 = vadd.f32 0.0, %v5006
    %v5008 = vpop.f32.mrf.mxu0
    %5009 = vmatprep.mubr.f32.mxu0 0.0
    %5010 = vmatmul.mubr.f32.gmra.mxu0 %v3312
    %v5011 = vpop.f32.mrf.mxu0
    %v5012 = vadd.f32 0.0, %v5011
    %v5013 = vpop.f32.mrf.mxu0
    %5014 = vmatprep.mubr.f32.mxu0 0.0
    %5015 = vmatmul.mubr.f32.gmra.mxu0 %v3315
    %v5016 = vpop.f32.mrf.mxu0
    %v5017 = vadd.f32 0.0, %v5016
    %v5018 = vpop.f32.mrf.mxu0
    %5019 = vmatprep.mubr.f32.mxu0 0.0
    %5020 = vmatmul.mubr.f32.gmra.mxu0 %v3318
    %v5021 = vpop.f32.mrf.mxu0
    %v5022 = vadd.f32 0.0, %v5021
    %v5023 = vpop.f32.mrf.mxu0
    %5024 = vmatprep.mubr.f32.mxu0 0.0
    %5025 = vmatmul.mubr.f32.gmra.mxu0 %v3321
    %v5026 = vpop.f32.mrf.mxu0
    %v5027 = vadd.f32 0.0, %v5026
    %v5028 = vpop.f32.mrf.mxu0
    %5029 = vmatprep.mubr.f32.mxu0 0.0
    %5030 = vmatmul.mubr.f32.gmra.mxu0 %v3324
    %v5031 = vpop.f32.mrf.mxu0
    %v5032 = vadd.f32 0.0, %v5031
    %v5033 = vpop.f32.mrf.mxu0
    %5034 = vmatprep.mubr.f32.mxu0 0.0
    %5035 = vmatmul.mubr.f32.gmra.mxu0 %v3327
    %v5036 = vpop.f32.mrf.mxu0
    %v5037 = vadd.f32 0.0, %v5036
    %v5038 = vpop.f32.mrf.mxu0
    %5039 = vmatprep.mubr.f32.mxu0 0.0
    %5040 = vmatmul.mubr.f32.gmra.mxu0 %v3330
    %v5041 = vpop.f32.mrf.mxu0
    %v5042 = vadd.f32 0.0, %v5041
    %v5043 = vpop.f32.mrf.mxu0
    %5044 = vmatprep.mubr.f32.mxu0 0.0
    %5045 = vmatmul.mubr.f32.gmra.mxu0 %v3333
    %v5046 = vpop.f32.mrf.mxu0
    %v5047 = vadd.f32 0.0, %v5046
    %v5048 = vpop.f32.mrf.mxu0
    %5049 = vmatprep.mubr.f32.mxu0 0.0
    %5050 = vmatmul.mubr.f32.gmra.mxu0 %v3336
    %v5051 = vpop.f32.mrf.mxu0
    %v5052 = vadd.f32 0.0, %v5051
    %v5053 = vpop.f32.mrf.mxu0
    %5054 = vmatprep.mubr.f32.mxu0 0.0
    %5055 = vmatmul.mubr.f32.gmra.mxu0 %v3339
    %v5056 = vpop.f32.mrf.mxu0
    %v5057 = vadd.f32 0.0, %v5056
    %v5058 = vpop.f32.mrf.mxu0
    %5059 = vmatprep.mubr.f32.mxu0 0.0
    %5060 = vmatmul.mubr.f32.gmra.mxu0 %v3342
    %v5061 = vpop.f32.mrf.mxu0
    %v5062 = vadd.f32 0.0, %v5061
    %v5063 = vpop.f32.mrf.mxu0
    %5064 = vdwg.mxu0
    %5065 = vmatprep.subr.mxu0 0.0
    %5066 = vmatpush1.msra.mxu0 0.0
    %5067 = vmatprep.subr.mxu0 0.0
    %5068 = vmatpush1.msra.mxu0 0.0
    %5069 = vmatprep.subr.mxu0 0.0
    %5070 = vmatpush1.msra.mxu0 0.0
    %5071 = vmatprep.subr.mxu0 0.0
    %5072 = vmatpush1.msra.mxu0 0.0
    %5073 = vmatprep.subr.mxu0 0.0
    %5074 = vmatpush1.msra.mxu0 0.0
    %5075 = vmatprep.subr.mxu0 0.0
    %5076 = vmatpush1.msra.mxu0 0.0
    %5077 = vmatprep.subr.mxu0 0.0
    %5078 = vmatpush1.msra.mxu0 0.0
    %5079 = vmatprep.subr.mxu0 0.0
    %5080 = vmatpush1.msra.mxu0 0.0
    %5081 = vmatprep.subr.mxu0 0.0
    %5082 = vmatpush1.msra.mxu0 0.0
    %5083 = vmatprep.subr.mxu0 0.0
    %5084 = vmatpush1.msra.mxu0 0.0
    %5085 = vmatprep.subr.mxu0 0.0
    %5086 = vmatpush1.msra.mxu0 0.0
    %5087 = vmatprep.subr.mxu0 0.0
    %5088 = vmatpush1.msra.mxu0 0.0
    %5089 = vmatprep.subr.mxu0 0.0
    %5090 = vmatpush1.msra.mxu0 %v4919
    %5091 = vmatprep.subr.mxu0 0.0
    %5092 = vmatpush1.msra.mxu0 %v4918
    %5093 = vmatprep.subr.mxu0 0.0
    %5094 = vmatpush1.msra.mxu0 %v4917
    %5095 = vmatprep.subr.mxu0 0.0
    %5096 = vmatpush1.msra.mxu0 %v4916
    %5097 = vmatprep.subr.mxu0 0.0
    %5098 = vmatpush2.msra.mxu0 0.0
    %5099 = vmatprep.subr.mxu0 0.0
    %5100 = vmatpush2.msra.mxu0 0.0
    %5101 = vmatprep.subr.mxu0 0.0
    %5102 = vmatpush2.msra.mxu0 0.0
    %5103 = vmatprep.subr.mxu0 0.0
    %5104 = vmatpush2.msra.mxu0 0.0
    %5105 = vmatprep.subr.mxu0 0.0
    %5106 = vmatpush2.msra.mxu0 0.0
    %5107 = vmatprep.subr.mxu0 0.0
    %5108 = vmatpush2.msra.mxu0 0.0
    %5109 = vmatprep.subr.mxu0 0.0
    %5110 = vmatpush2.msra.mxu0 0.0
    %5111 = vmatprep.subr.mxu0 0.0
    %5112 = vmatpush2.msra.mxu0 0.0
    %5113 = vmatprep.subr.mxu0 0.0
    %5114 = vmatpush2.msra.mxu0 0.0
    %5115 = vmatprep.subr.mxu0 0.0
    %5116 = vmatpush2.msra.mxu0 0.0
    %5117 = vmatprep.subr.mxu0 0.0
    %5118 = vmatpush2.msra.mxu0 0.0
    %5119 = vmatprep.subr.mxu0 0.0
    %5120 = vmatpush2.msra.mxu0 0.0
    %5121 = vmatprep.subr.mxu0 0.0
    %5122 = vmatpush2.msra.mxu0 0.0
    %5123 = vmatprep.subr.mxu0 0.0
    %5124 = vmatpush2.msra.mxu0 0.0
    %5125 = vmatprep.subr.mxu0 0.0
    %5126 = vmatpush2.msra.mxu0 0.0
    %5127 = vmatprep.subr.mxu0 0.0
    %5128 = vmatpush2.msra.mxu0 0.0
    %5129 = vmatprep.mubr.f32.mxu0 0.0
    %5130 = vmatmul.mubr.f32.gmra.mxu0 %v3490
    %v5131 = vpop.f32.mrf.mxu0
    %v5132 = vadd.f32 %v4987, %v5131
    %v5133 = vpop.f32.mrf.mxu0
    %5134 = vmatprep.mubr.f32.mxu0 0.0
    %5135 = vmatmul.mubr.f32.gmra.mxu0 %v3493
    %v5136 = vpop.f32.mrf.mxu0
    %v5137 = vadd.f32 %v4992, %v5136
    %v5138 = vpop.f32.mrf.mxu0
    %5139 = vmatprep.mubr.f32.mxu0 0.0
    %5140 = vmatmul.mubr.f32.gmra.mxu0 %v3496
    %v5141 = vpop.f32.mrf.mxu0
    %v5142 = vadd.f32 %v4997, %v5141
    %v5143 = vpop.f32.mrf.mxu0
    %5144 = vmatprep.mubr.f32.mxu0 0.0
    %5145 = vmatmul.mubr.f32.gmra.mxu0 %v3499
    %v5146 = vpop.f32.mrf.mxu0
    %v5147 = vadd.f32 %v5002, %v5146
    %v5148 = vpop.f32.mrf.mxu0
    %5149 = vmatprep.mubr.f32.mxu0 0.0
    %5150 = vmatmul.mubr.f32.gmra.mxu0 %v3502
    %v5151 = vpop.f32.mrf.mxu0
    %v5152 = vadd.f32 %v5007, %v5151
    %v5153 = vpop.f32.mrf.mxu0
    %5154 = vmatprep.mubr.f32.mxu0 0.0
    %5155 = vmatmul.mubr.f32.gmra.mxu0 %v3505
    %v5156 = vpop.f32.mrf.mxu0
    %v5157 = vadd.f32 %v5012, %v5156
    %v5158 = vpop.f32.mrf.mxu0
    %5159 = vmatprep.mubr.f32.mxu0 0.0
    %5160 = vmatmul.mubr.f32.gmra.mxu0 %v3508
    %v5161 = vpop.f32.mrf.mxu0
    %v5162 = vadd.f32 %v5017, %v5161
    %v5163 = vpop.f32.mrf.mxu0
    %5164 = vmatprep.mubr.f32.mxu0 0.0
    %5165 = vmatmul.mubr.f32.gmra.mxu0 %v3511
    %v5166 = vpop.f32.mrf.mxu0
    %v5167 = vadd.f32 %v5022, %v5166
    %v5168 = vpop.f32.mrf.mxu0
    %5169 = vmatprep.mubr.f32.mxu0 0.0
    %5170 = vmatmul.mubr.f32.gmra.mxu0 %v3514
    %v5171 = vpop.f32.mrf.mxu0
    %v5172 = vadd.f32 %v5027, %v5171
    %v5173 = vpop.f32.mrf.mxu0
    %5174 = vmatprep.mubr.f32.mxu0 0.0
    %5175 = vmatmul.mubr.f32.gmra.mxu0 %v3517
    %v5176 = vpop.f32.mrf.mxu0
    %v5177 = vadd.f32 %v5032, %v5176
    %v5178 = vpop.f32.mrf.mxu0
    %5179 = vmatprep.mubr.f32.mxu0 0.0
    %5180 = vmatmul.mubr.f32.gmra.mxu0 %v3520
    %v5181 = vpop.f32.mrf.mxu0
    %v5182 = vadd.f32 %v5037, %v5181
    %v5183 = vpop.f32.mrf.mxu0
    %5184 = vmatprep.mubr.f32.mxu0 0.0
    %5185 = vmatmul.mubr.f32.gmra.mxu0 %v3523
    %v5186 = vpop.f32.mrf.mxu0
    %v5187 = vadd.f32 %v5042, %v5186
    %v5188 = vpop.f32.mrf.mxu0
    %5189 = vmatprep.mubr.f32.mxu0 0.0
    %5190 = vmatmul.mubr.f32.gmra.mxu0 %v3526
    %v5191 = vpop.f32.mrf.mxu0
    %v5192 = vadd.f32 %v5047, %v5191
    %v5193 = vpop.f32.mrf.mxu0
    %5194 = vmatprep.mubr.f32.mxu0 0.0
    %5195 = vmatmul.mubr.f32.gmra.mxu0 %v3529
    %v5196 = vpop.f32.mrf.mxu0
    %v5197 = vadd.f32 %v5052, %v5196
    %v5198 = vpop.f32.mrf.mxu0
    %5199 = vmatprep.mubr.f32.mxu0 0.0
    %5200 = vmatmul.mubr.f32.gmra.mxu0 %v3532
    %v5201 = vpop.f32.mrf.mxu0
    %v5202 = vadd.f32 %v5057, %v5201
    %v5203 = vpop.f32.mrf.mxu0
    %5204 = vmatprep.mubr.f32.mxu0 0.0
    %5205 = vmatmul.mubr.f32.gmra.mxu0 %v3535
    %v5206 = vpop.f32.mrf.mxu0
    %v5207 = vadd.f32 %v5062, %v5206
    %v5208 = vpop.f32.mrf.mxu0
    %5209 = vdwg.mxu0
    %v5210 = vadd.f32 %v5132, %v3215
    %v5211 = vadd.f32 %v5137, %v3220
    %v5212 = vadd.f32 %v5142, %v3225
    %v5213 = vadd.f32 %v5147, %v3230
    %v5214 = vadd.f32 %v5152, %v3235
    %v5215 = vadd.f32 %v5157, %v3240
    %v5216 = vadd.f32 %v5162, %v3245
    %v5217 = vadd.f32 %v5167, %v3250
    %v5218 = vadd.f32 %v5172, %v3255
    %v5219 = vadd.f32 %v5177, %v3260
    %v5220 = vadd.f32 %v5182, %v3265
    %v5221 = vadd.f32 %v5187, %v3270
    %v5222 = vadd.f32 %v5192, %v3275
    %v5223 = vadd.f32 %v5197, %v3280
    %v5224 = vadd.f32 %v5202, %v3285
    %v5225 = vadd.f32 %v5207, %v3290
    %v5226 = vmul.f32 %v5210, 0.5
    %v5227 = vmul.f32 %v5211, 0.5
    %v5228 = vmul.f32 %v5212, 0.5
    %v5229 = vmul.f32 %v5213, 0.5
    %v5230 = vtanh.pop %v5226
    %v5231 = vtanh.pop %v5227
    %v5232 = vtanh.pop %v5228
    %v5233 = vtanh.pop %v5229
    %v5234 = vadd.f32 %v5230, 1.0
    %v5235 = vadd.f32 %v5231, 1.0
    %v5236 = vadd.f32 %v5232, 1.0
    %v5237 = vadd.f32 %v5233, 1.0
    %v5238 = vmul.f32 %v5234, 0.5
    %v5239 = vmul.f32 %v5235, 0.5
    %v5240 = vmul.f32 %v5236, 0.5
    %v5241 = vmul.f32 %v5237, 0.5
    %v5242 = vmul.f32 %v5214, 0.5
    %v5243 = vmul.f32 %v5215, 0.5
    %v5244 = vmul.f32 %v5216, 0.5
    %v5245 = vmul.f32 %v5217, 0.5
    %v5246 = vtanh.pop %v5242
    %v5247 = vtanh.pop %v5243
    %v5248 = vtanh.pop %v5244
    %v5249 = vtanh.pop %v5245
    %v5250 = vadd.f32 %v5246, 1.0
    %v5251 = vadd.f32 %v5247, 1.0
    %v5252 = vadd.f32 %v5248, 1.0
    %v5253 = vadd.f32 %v5249, 1.0
    %v5254 = vmul.f32 %v5250, 0.5
    %v5255 = vmul.f32 %v5251, 0.5
    %v5256 = vmul.f32 %v5252, 0.5
    %v5257 = vmul.f32 %v5253, 0.5
    %v5258 = vtanh.pop %v5218
    %v5259 = vtanh.pop %v5219
    %v5260 = vtanh.pop %v5220
    %v5261 = vtanh.pop %v5221
    %v5262 = vmul.f32 %v5222, 0.5
    %v5263 = vmul.f32 %v5223, 0.5
    %v5264 = vmul.f32 %v5224, 0.5
    %v5265 = vmul.f32 %v5225, 0.5
    %v5266 = vtanh.pop %v5262
    %v5267 = vtanh.pop %v5263
    %v5268 = vtanh.pop %v5264
    %v5269 = vtanh.pop %v5265
    %v5270 = vadd.f32 %v5266, 1.0
    %v5271 = vadd.f32 %v5267, 1.0
    %v5272 = vadd.f32 %v5268, 1.0
    %v5273 = vadd.f32 %v5269, 1.0
    %v5274 = vmul.f32 %v5270, 0.5
    %v5275 = vmul.f32 %v5271, 0.5
    %v5276 = vmul.f32 %v5272, 0.5
    %v5277 = vmul.f32 %v5273, 0.5
    %v5278 = vmul.f32 %v5254, %v4904
    %v5279 = vmul.f32 %v5255, %v4905
    %v5280 = vmul.f32 %v5256, %v4906
    %v5281 = vmul.f32 %v5257, %v4907
    %v5282 = vmul.f32 %v5238, %v5258
    %v5283 = vmul.f32 %v5239, %v5259
    %v5284 = vmul.f32 %v5240, %v5260
    %v5285 = vmul.f32 %v5241, %v5261
    %v5286 = vadd.f32 %v5278, %v5282
    %v5287 = vadd.f32 %v5279, %v5283
    %v5288 = vadd.f32 %v5280, %v5284
    %v5289 = vadd.f32 %v5281, %v5285
    %v5290 = vtanh.pop %v5286
    %v5291 = vtanh.pop %v5287
    %v5292 = vtanh.pop %v5288
    %v5293 = vtanh.pop %v5289
    %v5294 = vmul.f32 %v5274, %v5290
    %v5295 = vmul.f32 %v5275, %v5291
    %v5296 = vmul.f32 %v5276, %v5292
    %v5297 = vmul.f32 %v5277, %v5293
    %v5298 = vld [vmem:[%s1629] sm:$0xff]
    %v5299 = vld [vmem:[%s1629 + $0x8] sm:$0xff]
    %v5300 = vld [vmem:[%s1629 + $0x10] sm:$0xff]
    %v5301 = vld [vmem:[%s1629 + $0x18] sm:$0xff]
    %5302 = vmatprep.subr.mxu0 0.0
    %5303 = vmatpush1.msra.mxu0 0.0
    %5304 = vmatprep.subr.mxu0 0.0
    %5305 = vmatpush1.msra.mxu0 0.0
    %5306 = vmatprep.subr.mxu0 0.0
    %5307 = vmatpush1.msra.mxu0 0.0
    %5308 = vmatprep.subr.mxu0 0.0
    %5309 = vmatpush1.msra.mxu0 0.0
    %5310 = vmatprep.subr.mxu0 0.0
    %5311 = vmatpush1.msra.mxu0 0.0
    %5312 = vmatprep.subr.mxu0 0.0
    %5313 = vmatpush1.msra.mxu0 0.0
    %5314 = vmatprep.subr.mxu0 0.0
    %5315 = vmatpush1.msra.mxu0 0.0
    %5316 = vmatprep.subr.mxu0 0.0
    %5317 = vmatpush1.msra.mxu0 0.0
    %5318 = vmatprep.subr.mxu0 0.0
    %5319 = vmatpush1.msra.mxu0 0.0
    %5320 = vmatprep.subr.mxu0 0.0
    %5321 = vmatpush1.msra.mxu0 0.0
    %5322 = vmatprep.subr.mxu0 0.0
    %5323 = vmatpush1.msra.mxu0 0.0
    %5324 = vmatprep.subr.mxu0 0.0
    %5325 = vmatpush1.msra.mxu0 0.0
    %5326 = vmatprep.subr.mxu0 0.0
    %5327 = vmatpush1.msra.mxu0 %v5297
    %5328 = vmatprep.subr.mxu0 0.0
    %5329 = vmatpush1.msra.mxu0 %v5296
    %5330 = vmatprep.subr.mxu0 0.0
    %5331 = vmatpush1.msra.mxu0 %v5295
    %5332 = vmatprep.subr.mxu0 0.0
    %5333 = vmatpush1.msra.mxu0 %v5294
    %5334 = vmatprep.subr.mxu0 0.0
    %5335 = vmatpush2.msra.mxu0 0.0
    %5336 = vmatprep.subr.mxu0 0.0
    %5337 = vmatpush2.msra.mxu0 0.0
    %5338 = vmatprep.subr.mxu0 0.0
    %5339 = vmatpush2.msra.mxu0 0.0
    %5340 = vmatprep.subr.mxu0 0.0
    %5341 = vmatpush2.msra.mxu0 0.0
    %5342 = vmatprep.subr.mxu0 0.0
    %5343 = vmatpush2.msra.mxu0 0.0
    %5344 = vmatprep.subr.mxu0 0.0
    %5345 = vmatpush2.msra.mxu0 0.0
    %5346 = vmatprep.subr.mxu0 0.0
    %5347 = vmatpush2.msra.mxu0 0.0
    %5348 = vmatprep.subr.mxu0 0.0
    %5349 = vmatpush2.msra.mxu0 0.0
    %5350 = vmatprep.subr.mxu0 0.0
    %5351 = vmatpush2.msra.mxu0 0.0
    %5352 = vmatprep.subr.mxu0 0.0
    %5353 = vmatpush2.msra.mxu0 0.0
    %5354 = vmatprep.subr.mxu0 0.0
    %5355 = vmatpush2.msra.mxu0 0.0
    %5356 = vmatprep.subr.mxu0 0.0
    %5357 = vmatpush2.msra.mxu0 0.0
    %5358 = vmatprep.subr.mxu0 0.0
    %5359 = vmatpush2.msra.mxu0 0.0
    %5360 = vmatprep.subr.mxu0 0.0
    %5361 = vmatpush2.msra.mxu0 0.0
    %5362 = vmatprep.subr.mxu0 0.0
    %5363 = vmatpush2.msra.mxu0 0.0
    %5364 = vmatprep.subr.mxu0 0.0
    %5365 = vmatpush2.msra.mxu0 0.0
    %5366 = vmatprep.mubr.f32.mxu0 0.0
    %5367 = vmatmul.mubr.f32.gmra.mxu0 %v3297
    %v5368 = vpop.f32.mrf.mxu0
    %v5369 = vadd.f32 0.0, %v5368
    %v5370 = vpop.f32.mrf.mxu0
    %5371 = vmatprep.mubr.f32.mxu0 0.0
    %5372 = vmatmul.mubr.f32.gmra.mxu0 %v3300
    %v5373 = vpop.f32.mrf.mxu0
    %v5374 = vadd.f32 0.0, %v5373
    %v5375 = vpop.f32.mrf.mxu0
    %5376 = vmatprep.mubr.f32.mxu0 0.0
    %5377 = vmatmul.mubr.f32.gmra.mxu0 %v3303
    %v5378 = vpop.f32.mrf.mxu0
    %v5379 = vadd.f32 0.0, %v5378
    %v5380 = vpop.f32.mrf.mxu0
    %5381 = vmatprep.mubr.f32.mxu0 0.0
    %5382 = vmatmul.mubr.f32.gmra.mxu0 %v3306
    %v5383 = vpop.f32.mrf.mxu0
    %v5384 = vadd.f32 0.0, %v5383
    %v5385 = vpop.f32.mrf.mxu0
    %5386 = vmatprep.mubr.f32.mxu0 0.0
    %5387 = vmatmul.mubr.f32.gmra.mxu0 %v3309
    %v5388 = vpop.f32.mrf.mxu0
    %v5389 = vadd.f32 0.0, %v5388
    %v5390 = vpop.f32.mrf.mxu0
    %5391 = vmatprep.mubr.f32.mxu0 0.0
    %5392 = vmatmul.mubr.f32.gmra.mxu0 %v3312
    %v5393 = vpop.f32.mrf.mxu0
    %v5394 = vadd.f32 0.0, %v5393
    %v5395 = vpop.f32.mrf.mxu0
    %5396 = vmatprep.mubr.f32.mxu0 0.0
    %5397 = vmatmul.mubr.f32.gmra.mxu0 %v3315
    %v5398 = vpop.f32.mrf.mxu0
    %v5399 = vadd.f32 0.0, %v5398
    %v5400 = vpop.f32.mrf.mxu0
    %5401 = vmatprep.mubr.f32.mxu0 0.0
    %5402 = vmatmul.mubr.f32.gmra.mxu0 %v3318
    %v5403 = vpop.f32.mrf.mxu0
    %v5404 = vadd.f32 0.0, %v5403
    %v5405 = vpop.f32.mrf.mxu0
    %5406 = vmatprep.mubr.f32.mxu0 0.0
    %5407 = vmatmul.mubr.f32.gmra.mxu0 %v3321
    %v5408 = vpop.f32.mrf.mxu0
    %v5409 = vadd.f32 0.0, %v5408
    %v5410 = vpop.f32.mrf.mxu0
    %5411 = vmatprep.mubr.f32.mxu0 0.0
    %5412 = vmatmul.mubr.f32.gmra.mxu0 %v3324
    %v5413 = vpop.f32.mrf.mxu0
    %v5414 = vadd.f32 0.0, %v5413
    %v5415 = vpop.f32.mrf.mxu0
    %5416 = vmatprep.mubr.f32.mxu0 0.0
    %5417 = vmatmul.mubr.f32.gmra.mxu0 %v3327
    %v5418 = vpop.f32.mrf.mxu0
    %v5419 = vadd.f32 0.0, %v5418
    %v5420 = vpop.f32.mrf.mxu0
    %5421 = vmatprep.mubr.f32.mxu0 0.0
    %5422 = vmatmul.mubr.f32.gmra.mxu0 %v3330
    %v5423 = vpop.f32.mrf.mxu0
    %v5424 = vadd.f32 0.0, %v5423
    %v5425 = vpop.f32.mrf.mxu0
    %5426 = vmatprep.mubr.f32.mxu0 0.0
    %5427 = vmatmul.mubr.f32.gmra.mxu0 %v3333
    %v5428 = vpop.f32.mrf.mxu0
    %v5429 = vadd.f32 0.0, %v5428
    %v5430 = vpop.f32.mrf.mxu0
    %5431 = vmatprep.mubr.f32.mxu0 0.0
    %5432 = vmatmul.mubr.f32.gmra.mxu0 %v3336
    %v5433 = vpop.f32.mrf.mxu0
    %v5434 = vadd.f32 0.0, %v5433
    %v5435 = vpop.f32.mrf.mxu0
    %5436 = vmatprep.mubr.f32.mxu0 0.0
    %5437 = vmatmul.mubr.f32.gmra.mxu0 %v3339
    %v5438 = vpop.f32.mrf.mxu0
    %v5439 = vadd.f32 0.0, %v5438
    %v5440 = vpop.f32.mrf.mxu0
    %5441 = vmatprep.mubr.f32.mxu0 0.0
    %5442 = vmatmul.mubr.f32.gmra.mxu0 %v3342
    %v5443 = vpop.f32.mrf.mxu0
    %v5444 = vadd.f32 0.0, %v5443
    %v5445 = vpop.f32.mrf.mxu0
    %5446 = vdwg.mxu0
    %5447 = vmatprep.subr.mxu0 0.0
    %5448 = vmatpush1.msra.mxu0 0.0
    %5449 = vmatprep.subr.mxu0 0.0
    %5450 = vmatpush1.msra.mxu0 0.0
    %5451 = vmatprep.subr.mxu0 0.0
    %5452 = vmatpush1.msra.mxu0 0.0
    %5453 = vmatprep.subr.mxu0 0.0
    %5454 = vmatpush1.msra.mxu0 0.0
    %5455 = vmatprep.subr.mxu0 0.0
    %5456 = vmatpush1.msra.mxu0 0.0
    %5457 = vmatprep.subr.mxu0 0.0
    %5458 = vmatpush1.msra.mxu0 0.0
    %5459 = vmatprep.subr.mxu0 0.0
    %5460 = vmatpush1.msra.mxu0 0.0
    %5461 = vmatprep.subr.mxu0 0.0
    %5462 = vmatpush1.msra.mxu0 0.0
    %5463 = vmatprep.subr.mxu0 0.0
    %5464 = vmatpush1.msra.mxu0 0.0
    %5465 = vmatprep.subr.mxu0 0.0
    %5466 = vmatpush1.msra.mxu0 0.0
    %5467 = vmatprep.subr.mxu0 0.0
    %5468 = vmatpush1.msra.mxu0 0.0
    %5469 = vmatprep.subr.mxu0 0.0
    %5470 = vmatpush1.msra.mxu0 0.0
    %5471 = vmatprep.subr.mxu0 0.0
    %5472 = vmatpush1.msra.mxu0 %v5301
    %5473 = vmatprep.subr.mxu0 0.0
    %5474 = vmatpush1.msra.mxu0 %v5300
    %5475 = vmatprep.subr.mxu0 0.0
    %5476 = vmatpush1.msra.mxu0 %v5299
    %5477 = vmatprep.subr.mxu0 0.0
    %5478 = vmatpush1.msra.mxu0 %v5298
    %5479 = vmatprep.subr.mxu0 0.0
    %5480 = vmatpush2.msra.mxu0 0.0
    %5481 = vmatprep.subr.mxu0 0.0
    %5482 = vmatpush2.msra.mxu0 0.0
    %5483 = vmatprep.subr.mxu0 0.0
    %5484 = vmatpush2.msra.mxu0 0.0
    %5485 = vmatprep.subr.mxu0 0.0
    %5486 = vmatpush2.msra.mxu0 0.0
    %5487 = vmatprep.subr.mxu0 0.0
    %5488 = vmatpush2.msra.mxu0 0.0
    %5489 = vmatprep.subr.mxu0 0.0
    %5490 = vmatpush2.msra.mxu0 0.0
    %5491 = vmatprep.subr.mxu0 0.0
    %5492 = vmatpush2.msra.mxu0 0.0
    %5493 = vmatprep.subr.mxu0 0.0
    %5494 = vmatpush2.msra.mxu0 0.0
    %5495 = vmatprep.subr.mxu0 0.0
    %5496 = vmatpush2.msra.mxu0 0.0
    %5497 = vmatprep.subr.mxu0 0.0
    %5498 = vmatpush2.msra.mxu0 0.0
    %5499 = vmatprep.subr.mxu0 0.0
    %5500 = vmatpush2.msra.mxu0 0.0
    %5501 = vmatprep.subr.mxu0 0.0
    %5502 = vmatpush2.msra.mxu0 0.0
    %5503 = vmatprep.subr.mxu0 0.0
    %5504 = vmatpush2.msra.mxu0 0.0
    %5505 = vmatprep.subr.mxu0 0.0
    %5506 = vmatpush2.msra.mxu0 0.0
    %5507 = vmatprep.subr.mxu0 0.0
    %5508 = vmatpush2.msra.mxu0 0.0
    %5509 = vmatprep.subr.mxu0 0.0
    %5510 = vmatpush2.msra.mxu0 0.0
    %5511 = vmatprep.mubr.f32.mxu0 0.0
    %5512 = vmatmul.mubr.f32.gmra.mxu0 %v3490
    %v5513 = vpop.f32.mrf.mxu0
    %v5514 = vadd.f32 %v5369, %v5513
    %v5515 = vpop.f32.mrf.mxu0
    %5516 = vmatprep.mubr.f32.mxu0 0.0
    %5517 = vmatmul.mubr.f32.gmra.mxu0 %v3493
    %v5518 = vpop.f32.mrf.mxu0
    %v5519 = vadd.f32 %v5374, %v5518
    %v5520 = vpop.f32.mrf.mxu0
    %5521 = vmatprep.mubr.f32.mxu0 0.0
    %5522 = vmatmul.mubr.f32.gmra.mxu0 %v3496
    %v5523 = vpop.f32.mrf.mxu0
    %v5524 = vadd.f32 %v5379, %v5523
    %v5525 = vpop.f32.mrf.mxu0
    %5526 = vmatprep.mubr.f32.mxu0 0.0
    %5527 = vmatmul.mubr.f32.gmra.mxu0 %v3499
    %v5528 = vpop.f32.mrf.mxu0
    %v5529 = vadd.f32 %v5384, %v5528
    %v5530 = vpop.f32.mrf.mxu0
    %5531 = vmatprep.mubr.f32.mxu0 0.0
    %5532 = vmatmul.mubr.f32.gmra.mxu0 %v3502
    %v5533 = vpop.f32.mrf.mxu0
    %v5534 = vadd.f32 %v5389, %v5533
    %v5535 = vpop.f32.mrf.mxu0
    %5536 = vmatprep.mubr.f32.mxu0 0.0
    %5537 = vmatmul.mubr.f32.gmra.mxu0 %v3505
    %v5538 = vpop.f32.mrf.mxu0
    %v5539 = vadd.f32 %v5394, %v5538
    %v5540 = vpop.f32.mrf.mxu0
    %5541 = vmatprep.mubr.f32.mxu0 0.0
    %5542 = vmatmul.mubr.f32.gmra.mxu0 %v3508
    %v5543 = vpop.f32.mrf.mxu0
    %v5544 = vadd.f32 %v5399, %v5543
    %v5545 = vpop.f32.mrf.mxu0
    %5546 = vmatprep.mubr.f32.mxu0 0.0
    %5547 = vmatmul.mubr.f32.gmra.mxu0 %v3511
    %v5548 = vpop.f32.mrf.mxu0
    %v5549 = vadd.f32 %v5404, %v5548
    %v5550 = vpop.f32.mrf.mxu0
    %5551 = vmatprep.mubr.f32.mxu0 0.0
    %5552 = vmatmul.mubr.f32.gmra.mxu0 %v3514
    %v5553 = vpop.f32.mrf.mxu0
    %v5554 = vadd.f32 %v5409, %v5553
    %v5555 = vpop.f32.mrf.mxu0
    %5556 = vmatprep.mubr.f32.mxu0 0.0
    %5557 = vmatmul.mubr.f32.gmra.mxu0 %v3517
    %v5558 = vpop.f32.mrf.mxu0
    %v5559 = vadd.f32 %v5414, %v5558
    %v5560 = vpop.f32.mrf.mxu0
    %5561 = vmatprep.mubr.f32.mxu0 0.0
    %5562 = vmatmul.mubr.f32.gmra.mxu0 %v3520
    %v5563 = vpop.f32.mrf.mxu0
    %v5564 = vadd.f32 %v5419, %v5563
    %v5565 = vpop.f32.mrf.mxu0
    %5566 = vmatprep.mubr.f32.mxu0 0.0
    %5567 = vmatmul.mubr.f32.gmra.mxu0 %v3523
    %v5568 = vpop.f32.mrf.mxu0
    %v5569 = vadd.f32 %v5424, %v5568
    %v5570 = vpop.f32.mrf.mxu0
    %5571 = vmatprep.mubr.f32.mxu0 0.0
    %5572 = vmatmul.mubr.f32.gmra.mxu0 %v3526
    %v5573 = vpop.f32.mrf.mxu0
    %v5574 = vadd.f32 %v5429, %v5573
    %v5575 = vpop.f32.mrf.mxu0
    %5576 = vmatprep.mubr.f32.mxu0 0.0
    %5577 = vmatmul.mubr.f32.gmra.mxu0 %v3529
    %v5578 = vpop.f32.mrf.mxu0
    %v5579 = vadd.f32 %v5434, %v5578
    %v5580 = vpop.f32.mrf.mxu0
    %5581 = vmatprep.mubr.f32.mxu0 0.0
    %5582 = vmatmul.mubr.f32.gmra.mxu0 %v3532
    %v5583 = vpop.f32.mrf.mxu0
    %v5584 = vadd.f32 %v5439, %v5583
    %v5585 = vpop.f32.mrf.mxu0
    %5586 = vmatprep.mubr.f32.mxu0 0.0
    %5587 = vmatmul.mubr.f32.gmra.mxu0 %v3535
    %v5588 = vpop.f32.mrf.mxu0
    %v5589 = vadd.f32 %v5444, %v5588
    %v5590 = vpop.f32.mrf.mxu0
    %5591 = vdwg.mxu0
    %v5592 = vadd.f32 %v5514, %v3215
    %v5593 = vadd.f32 %v5519, %v3220
    %v5594 = vadd.f32 %v5524, %v3225
    %v5595 = vadd.f32 %v5529, %v3230
    %v5596 = vadd.f32 %v5534, %v3235
    %v5597 = vadd.f32 %v5539, %v3240
    %v5598 = vadd.f32 %v5544, %v3245
    %v5599 = vadd.f32 %v5549, %v3250
    %v5600 = vadd.f32 %v5554, %v3255
    %v5601 = vadd.f32 %v5559, %v3260
    %v5602 = vadd.f32 %v5564, %v3265
    %v5603 = vadd.f32 %v5569, %v3270
    %v5604 = vadd.f32 %v5574, %v3275
    %v5605 = vadd.f32 %v5579, %v3280
    %v5606 = vadd.f32 %v5584, %v3285
    %v5607 = vadd.f32 %v5589, %v3290
    %v5608 = vmul.f32 %v5592, 0.5
    %v5609 = vmul.f32 %v5593, 0.5
    %v5610 = vmul.f32 %v5594, 0.5
    %v5611 = vmul.f32 %v5595, 0.5
    %v5612 = vtanh.pop %v5608
    %v5613 = vtanh.pop %v5609
    %v5614 = vtanh.pop %v5610
    %v5615 = vtanh.pop %v5611
    %v5616 = vadd.f32 %v5612, 1.0
    %v5617 = vadd.f32 %v5613, 1.0
    %v5618 = vadd.f32 %v5614, 1.0
    %v5619 = vadd.f32 %v5615, 1.0
    %v5620 = vmul.f32 %v5616, 0.5
    %v5621 = vmul.f32 %v5617, 0.5
    %v5622 = vmul.f32 %v5618, 0.5
    %v5623 = vmul.f32 %v5619, 0.5
    %v5624 = vmul.f32 %v5596, 0.5
    %v5625 = vmul.f32 %v5597, 0.5
    %v5626 = vmul.f32 %v5598, 0.5
    %v5627 = vmul.f32 %v5599, 0.5
    %v5628 = vtanh.pop %v5624
    %v5629 = vtanh.pop %v5625
    %v5630 = vtanh.pop %v5626
    %v5631 = vtanh.pop %v5627
    %v5632 = vadd.f32 %v5628, 1.0
    %v5633 = vadd.f32 %v5629, 1.0
    %v5634 = vadd.f32 %v5630, 1.0
    %v5635 = vadd.f32 %v5631, 1.0
    %v5636 = vmul.f32 %v5632, 0.5
    %v5637 = vmul.f32 %v5633, 0.5
    %v5638 = vmul.f32 %v5634, 0.5
    %v5639 = vmul.f32 %v5635, 0.5
    %v5640 = vtanh.pop %v5600
    %v5641 = vtanh.pop %v5601
    %v5642 = vtanh.pop %v5602
    %v5643 = vtanh.pop %v5603
    %v5644 = vmul.f32 %v5604, 0.5
    %v5645 = vmul.f32 %v5605, 0.5
    %v5646 = vmul.f32 %v5606, 0.5
    %v5647 = vmul.f32 %v5607, 0.5
    %v5648 = vtanh.pop %v5644
    %v5649 = vtanh.pop %v5645
    %v5650 = vtanh.pop %v5646
    %v5651 = vtanh.pop %v5647
    %v5652 = vadd.f32 %v5648, 1.0
    %v5653 = vadd.f32 %v5649, 1.0
    %v5654 = vadd.f32 %v5650, 1.0
    %v5655 = vadd.f32 %v5651, 1.0
    %v5656 = vmul.f32 %v5652, 0.5
    %v5657 = vmul.f32 %v5653, 0.5
    %v5658 = vmul.f32 %v5654, 0.5
    %v5659 = vmul.f32 %v5655, 0.5
    %v5660 = vmul.f32 %v5636, %v5286
    %v5661 = vmul.f32 %v5637, %v5287
    %v5662 = vmul.f32 %v5638, %v5288
    %v5663 = vmul.f32 %v5639, %v5289
    %v5664 = vmul.f32 %v5620, %v5640
    %v5665 = vmul.f32 %v5621, %v5641
    %v5666 = vmul.f32 %v5622, %v5642
    %v5667 = vmul.f32 %v5623, %v5643
    %v5668 = vadd.f32 %v5660, %v5664
    %v5669 = vadd.f32 %v5661, %v5665
    %v5670 = vadd.f32 %v5662, %v5666
    %v5671 = vadd.f32 %v5663, %v5667
    %v5672 = vtanh.pop %v5668
    %v5673 = vtanh.pop %v5669
    %v5674 = vtanh.pop %v5670
    %v5675 = vtanh.pop %v5671
    %v5676 = vmul.f32 %v5656, %v5672
    %v5677 = vmul.f32 %v5657, %v5673
    %v5678 = vmul.f32 %v5658, %v5674
    %v5679 = vmul.f32 %v5659, %v5675
    %v5680 = vld [vmem:[%s1884] sm:$0xff]
    %v5681 = vld [vmem:[%s1884 + $0x8] sm:$0xff]
    %v5682 = vld [vmem:[%s1884 + $0x10] sm:$0xff]
    %v5683 = vld [vmem:[%s1884 + $0x18] sm:$0xff]
    %5684 = vmatprep.subr.mxu0 0.0
    %5685 = vmatpush1.msra.mxu0 0.0
    %5686 = vmatprep.subr.mxu0 0.0
    %5687 = vmatpush1.msra.mxu0 0.0
    %5688 = vmatprep.subr.mxu0 0.0
    %5689 = vmatpush1.msra.mxu0 0.0
    %5690 = vmatprep.subr.mxu0 0.0
    %5691 = vmatpush1.msra.mxu0 0.0
    %5692 = vmatprep.subr.mxu0 0.0
    %5693 = vmatpush1.msra.mxu0 0.0
    %5694 = vmatprep.subr.mxu0 0.0
    %5695 = vmatpush1.msra.mxu0 0.0
    %5696 = vmatprep.subr.mxu0 0.0
    %5697 = vmatpush1.msra.mxu0 0.0
    %5698 = vmatprep.subr.mxu0 0.0
    %5699 = vmatpush1.msra.mxu0 0.0
    %5700 = vmatprep.subr.mxu0 0.0
    %5701 = vmatpush1.msra.mxu0 0.0
    %5702 = vmatprep.subr.mxu0 0.0
    %5703 = vmatpush1.msra.mxu0 0.0
    %5704 = vmatprep.subr.mxu0 0.0
    %5705 = vmatpush1.msra.mxu0 0.0
    %5706 = vmatprep.subr.mxu0 0.0
    %5707 = vmatpush1.msra.mxu0 0.0
    %5708 = vmatprep.subr.mxu0 0.0
    %5709 = vmatpush1.msra.mxu0 %v5679
    %5710 = vmatprep.subr.mxu0 0.0
    %5711 = vmatpush1.msra.mxu0 %v5678
    %5712 = vmatprep.subr.mxu0 0.0
    %5713 = vmatpush1.msra.mxu0 %v5677
    %5714 = vmatprep.subr.mxu0 0.0
    %5715 = vmatpush1.msra.mxu0 %v5676
    %5716 = vmatprep.subr.mxu0 0.0
    %5717 = vmatpush2.msra.mxu0 0.0
    %5718 = vmatprep.subr.mxu0 0.0
    %5719 = vmatpush2.msra.mxu0 0.0
    %5720 = vmatprep.subr.mxu0 0.0
    %5721 = vmatpush2.msra.mxu0 0.0
    %5722 = vmatprep.subr.mxu0 0.0
    %5723 = vmatpush2.msra.mxu0 0.0
    %5724 = vmatprep.subr.mxu0 0.0
    %5725 = vmatpush2.msra.mxu0 0.0
    %5726 = vmatprep.subr.mxu0 0.0
    %5727 = vmatpush2.msra.mxu0 0.0
    %5728 = vmatprep.subr.mxu0 0.0
    %5729 = vmatpush2.msra.mxu0 0.0
    %5730 = vmatprep.subr.mxu0 0.0
    %5731 = vmatpush2.msra.mxu0 0.0
    %5732 = vmatprep.subr.mxu0 0.0
    %5733 = vmatpush2.msra.mxu0 0.0
    %5734 = vmatprep.subr.mxu0 0.0
    %5735 = vmatpush2.msra.mxu0 0.0
    %5736 = vmatprep.subr.mxu0 0.0
    %5737 = vmatpush2.msra.mxu0 0.0
    %5738 = vmatprep.subr.mxu0 0.0
    %5739 = vmatpush2.msra.mxu0 0.0
    %5740 = vmatprep.subr.mxu0 0.0
    %5741 = vmatpush2.msra.mxu0 0.0
    %5742 = vmatprep.subr.mxu0 0.0
    %5743 = vmatpush2.msra.mxu0 0.0
    %5744 = vmatprep.subr.mxu0 0.0
    %5745 = vmatpush2.msra.mxu0 0.0
    %5746 = vmatprep.subr.mxu0 0.0
    %5747 = vmatpush2.msra.mxu0 0.0
    %5748 = vmatprep.mubr.f32.mxu0 0.0
    %5749 = vmatmul.mubr.f32.gmra.mxu0 %v3297
    %v5750 = vpop.f32.mrf.mxu0
    %v5751 = vadd.f32 0.0, %v5750
    %v5752 = vpop.f32.mrf.mxu0
    %5753 = vmatprep.mubr.f32.mxu0 0.0
    %5754 = vmatmul.mubr.f32.gmra.mxu0 %v3300
    %v5755 = vpop.f32.mrf.mxu0
    %v5756 = vadd.f32 0.0, %v5755
    %v5757 = vpop.f32.mrf.mxu0
    %5758 = vmatprep.mubr.f32.mxu0 0.0
    %5759 = vmatmul.mubr.f32.gmra.mxu0 %v3303
    %v5760 = vpop.f32.mrf.mxu0
    %v5761 = vadd.f32 0.0, %v5760
    %v5762 = vpop.f32.mrf.mxu0
    %5763 = vmatprep.mubr.f32.mxu0 0.0
    %5764 = vmatmul.mubr.f32.gmra.mxu0 %v3306
    %v5765 = vpop.f32.mrf.mxu0
    %v5766 = vadd.f32 0.0, %v5765
    %v5767 = vpop.f32.mrf.mxu0
    %5768 = vmatprep.mubr.f32.mxu0 0.0
    %5769 = vmatmul.mubr.f32.gmra.mxu0 %v3309
    %v5770 = vpop.f32.mrf.mxu0
    %v5771 = vadd.f32 0.0, %v5770
    %v5772 = vpop.f32.mrf.mxu0
    %5773 = vmatprep.mubr.f32.mxu0 0.0
    %5774 = vmatmul.mubr.f32.gmra.mxu0 %v3312
    %v5775 = vpop.f32.mrf.mxu0
    %v5776 = vadd.f32 0.0, %v5775
    %v5777 = vpop.f32.mrf.mxu0
    %5778 = vmatprep.mubr.f32.mxu0 0.0
    %5779 = vmatmul.mubr.f32.gmra.mxu0 %v3315
    %v5780 = vpop.f32.mrf.mxu0
    %v5781 = vadd.f32 0.0, %v5780
    %v5782 = vpop.f32.mrf.mxu0
    %5783 = vmatprep.mubr.f32.mxu0 0.0
    %5784 = vmatmul.mubr.f32.gmra.mxu0 %v3318
    %v5785 = vpop.f32.mrf.mxu0
    %v5786 = vadd.f32 0.0, %v5785
    %v5787 = vpop.f32.mrf.mxu0
    %5788 = vmatprep.mubr.f32.mxu0 0.0
    %5789 = vmatmul.mubr.f32.gmra.mxu0 %v3321
    %v5790 = vpop.f32.mrf.mxu0
    %v5791 = vadd.f32 0.0, %v5790
    %v5792 = vpop.f32.mrf.mxu0
    %5793 = vmatprep.mubr.f32.mxu0 0.0
    %5794 = vmatmul.mubr.f32.gmra.mxu0 %v3324
    %v5795 = vpop.f32.mrf.mxu0
    %v5796 = vadd.f32 0.0, %v5795
    %v5797 = vpop.f32.mrf.mxu0
    %5798 = vmatprep.mubr.f32.mxu0 0.0
    %5799 = vmatmul.mubr.f32.gmra.mxu0 %v3327
    %v5800 = vpop.f32.mrf.mxu0
    %v5801 = vadd.f32 0.0, %v5800
    %v5802 = vpop.f32.mrf.mxu0
    %5803 = vmatprep.mubr.f32.mxu0 0.0
    %5804 = vmatmul.mubr.f32.gmra.mxu0 %v3330
    %v5805 = vpop.f32.mrf.mxu0
    %v5806 = vadd.f32 0.0, %v5805
    %v5807 = vpop.f32.mrf.mxu0
    %5808 = vmatprep.mubr.f32.mxu0 0.0
    %5809 = vmatmul.mubr.f32.gmra.mxu0 %v3333
    %v5810 = vpop.f32.mrf.mxu0
    %v5811 = vadd.f32 0.0, %v5810
    %v5812 = vpop.f32.mrf.mxu0
    %5813 = vmatprep.mubr.f32.mxu0 0.0
    %5814 = vmatmul.mubr.f32.gmra.mxu0 %v3336
    %v5815 = vpop.f32.mrf.mxu0
    %v5816 = vadd.f32 0.0, %v5815
    %v5817 = vpop.f32.mrf.mxu0
    %5818 = vmatprep.mubr.f32.mxu0 0.0
    %5819 = vmatmul.mubr.f32.gmra.mxu0 %v3339
    %v5820 = vpop.f32.mrf.mxu0
    %v5821 = vadd.f32 0.0, %v5820
    %v5822 = vpop.f32.mrf.mxu0
    %5823 = vmatprep.mubr.f32.mxu0 0.0
    %5824 = vmatmul.mubr.f32.gmra.mxu0 %v3342
    %v5825 = vpop.f32.mrf.mxu0
    %v5826 = vadd.f32 0.0, %v5825
    %v5827 = vpop.f32.mrf.mxu0
    %5828 = vdwg.mxu0
    %5829 = vmatprep.subr.mxu0 0.0
    %5830 = vmatpush1.msra.mxu0 0.0
    %5831 = vmatprep.subr.mxu0 0.0
    %5832 = vmatpush1.msra.mxu0 0.0
    %5833 = vmatprep.subr.mxu0 0.0
    %5834 = vmatpush1.msra.mxu0 0.0
    %5835 = vmatprep.subr.mxu0 0.0
    %5836 = vmatpush1.msra.mxu0 0.0
    %5837 = vmatprep.subr.mxu0 0.0
    %5838 = vmatpush1.msra.mxu0 0.0
    %5839 = vmatprep.subr.mxu0 0.0
    %5840 = vmatpush1.msra.mxu0 0.0
    %5841 = vmatprep.subr.mxu0 0.0
    %5842 = vmatpush1.msra.mxu0 0.0
    %5843 = vmatprep.subr.mxu0 0.0
    %5844 = vmatpush1.msra.mxu0 0.0
    %5845 = vmatprep.subr.mxu0 0.0
    %5846 = vmatpush1.msra.mxu0 0.0
    %5847 = vmatprep.subr.mxu0 0.0
    %5848 = vmatpush1.msra.mxu0 0.0
    %5849 = vmatprep.subr.mxu0 0.0
    %5850 = vmatpush1.msra.mxu0 0.0
    %5851 = vmatprep.subr.mxu0 0.0
    %5852 = vmatpush1.msra.mxu0 0.0
    %5853 = vmatprep.subr.mxu0 0.0
    %5854 = vmatpush1.msra.mxu0 %v5683
    %5855 = vmatprep.subr.mxu0 0.0
    %5856 = vmatpush1.msra.mxu0 %v5682
    %5857 = vmatprep.subr.mxu0 0.0
    %5858 = vmatpush1.msra.mxu0 %v5681
    %5859 = vmatprep.subr.mxu0 0.0
    %5860 = vmatpush1.msra.mxu0 %v5680
    %5861 = vmatprep.subr.mxu0 0.0
    %5862 = vmatpush2.msra.mxu0 0.0
    %5863 = vmatprep.subr.mxu0 0.0
    %5864 = vmatpush2.msra.mxu0 0.0
    %5865 = vmatprep.subr.mxu0 0.0
    %5866 = vmatpush2.msra.mxu0 0.0
    %5867 = vmatprep.subr.mxu0 0.0
    %5868 = vmatpush2.msra.mxu0 0.0
    %5869 = vmatprep.subr.mxu0 0.0
    %5870 = vmatpush2.msra.mxu0 0.0
    %5871 = vmatprep.subr.mxu0 0.0
    %5872 = vmatpush2.msra.mxu0 0.0
    %5873 = vmatprep.subr.mxu0 0.0
    %5874 = vmatpush2.msra.mxu0 0.0
    %5875 = vmatprep.subr.mxu0 0.0
    %5876 = vmatpush2.msra.mxu0 0.0
    %5877 = vmatprep.subr.mxu0 0.0
    %5878 = vmatpush2.msra.mxu0 0.0
    %5879 = vmatprep.subr.mxu0 0.0
    %5880 = vmatpush2.msra.mxu0 0.0
    %5881 = vmatprep.subr.mxu0 0.0
    %5882 = vmatpush2.msra.mxu0 0.0
    %5883 = vmatprep.subr.mxu0 0.0
    %5884 = vmatpush2.msra.mxu0 0.0
    %5885 = vmatprep.subr.mxu0 0.0
    %5886 = vmatpush2.msra.mxu0 0.0
    %5887 = vmatprep.subr.mxu0 0.0
    %5888 = vmatpush2.msra.mxu0 0.0
    %5889 = vmatprep.subr.mxu0 0.0
    %5890 = vmatpush2.msra.mxu0 0.0
    %5891 = vmatprep.subr.mxu0 0.0
    %5892 = vmatpush2.msra.mxu0 0.0
    %5893 = vmatprep.mubr.f32.mxu0 0.0
    %5894 = vmatmul.mubr.f32.gmra.mxu0 %v3490
    %v5895 = vpop.f32.mrf.mxu0
    %v5896 = vadd.f32 %v5751, %v5895
    %v5897 = vpop.f32.mrf.mxu0
    %5898 = vmatprep.mubr.f32.mxu0 0.0
    %5899 = vmatmul.mubr.f32.gmra.mxu0 %v3493
    %v5900 = vpop.f32.mrf.mxu0
    %v5901 = vadd.f32 %v5756, %v5900
    %v5902 = vpop.f32.mrf.mxu0
    %5903 = vmatprep.mubr.f32.mxu0 0.0
    %5904 = vmatmul.mubr.f32.gmra.mxu0 %v3496
    %v5905 = vpop.f32.mrf.mxu0
    %v5906 = vadd.f32 %v5761, %v5905
    %v5907 = vpop.f32.mrf.mxu0
    %5908 = vmatprep.mubr.f32.mxu0 0.0
    %5909 = vmatmul.mubr.f32.gmra.mxu0 %v3499
    %v5910 = vpop.f32.mrf.mxu0
    %v5911 = vadd.f32 %v5766, %v5910
    %v5912 = vpop.f32.mrf.mxu0
    %5913 = vmatprep.mubr.f32.mxu0 0.0
    %5914 = vmatmul.mubr.f32.gmra.mxu0 %v3502
    %v5915 = vpop.f32.mrf.mxu0
    %v5916 = vadd.f32 %v5771, %v5915
    %v5917 = vpop.f32.mrf.mxu0
    %5918 = vmatprep.mubr.f32.mxu0 0.0
    %5919 = vmatmul.mubr.f32.gmra.mxu0 %v3505
    %v5920 = vpop.f32.mrf.mxu0
    %v5921 = vadd.f32 %v5776, %v5920
    %v5922 = vpop.f32.mrf.mxu0
    %5923 = vmatprep.mubr.f32.mxu0 0.0
    %5924 = vmatmul.mubr.f32.gmra.mxu0 %v3508
    %v5925 = vpop.f32.mrf.mxu0
    %v5926 = vadd.f32 %v5781, %v5925
    %v5927 = vpop.f32.mrf.mxu0
    %5928 = vmatprep.mubr.f32.mxu0 0.0
    %5929 = vmatmul.mubr.f32.gmra.mxu0 %v3511
    %v5930 = vpop.f32.mrf.mxu0
    %v5931 = vadd.f32 %v5786, %v5930
    %v5932 = vpop.f32.mrf.mxu0
    %5933 = vmatprep.mubr.f32.mxu0 0.0
    %5934 = vmatmul.mubr.f32.gmra.mxu0 %v3514
    %v5935 = vpop.f32.mrf.mxu0
    %v5936 = vadd.f32 %v5791, %v5935
    %v5937 = vpop.f32.mrf.mxu0
    %5938 = vmatprep.mubr.f32.mxu0 0.0
    %5939 = vmatmul.mubr.f32.gmra.mxu0 %v3517
    %v5940 = vpop.f32.mrf.mxu0
    %v5941 = vadd.f32 %v5796, %v5940
    %v5942 = vpop.f32.mrf.mxu0
    %5943 = vmatprep.mubr.f32.mxu0 0.0
    %5944 = vmatmul.mubr.f32.gmra.mxu0 %v3520
    %v5945 = vpop.f32.mrf.mxu0
    %v5946 = vadd.f32 %v5801, %v5945
    %v5947 = vpop.f32.mrf.mxu0
    %5948 = vmatprep.mubr.f32.mxu0 0.0
    %5949 = vmatmul.mubr.f32.gmra.mxu0 %v3523
    %v5950 = vpop.f32.mrf.mxu0
    %v5951 = vadd.f32 %v5806, %v5950
    %v5952 = vpop.f32.mrf.mxu0
    %5953 = vmatprep.mubr.f32.mxu0 0.0
    %5954 = vmatmul.mubr.f32.gmra.mxu0 %v3526
    %v5955 = vpop.f32.mrf.mxu0
    %v5956 = vadd.f32 %v5811, %v5955
    %v5957 = vpop.f32.mrf.mxu0
    %5958 = vmatprep.mubr.f32.mxu0 0.0
    %5959 = vmatmul.mubr.f32.gmra.mxu0 %v3529
    %v5960 = vpop.f32.mrf.mxu0
    %v5961 = vadd.f32 %v5816, %v5960
    %v5962 = vpop.f32.mrf.mxu0
    %5963 = vmatprep.mubr.f32.mxu0 0.0
    %5964 = vmatmul.mubr.f32.gmra.mxu0 %v3532
    %v5965 = vpop.f32.mrf.mxu0
    %v5966 = vadd.f32 %v5821, %v5965
    %v5967 = vpop.f32.mrf.mxu0
    %5968 = vmatprep.mubr.f32.mxu0 0.0
    %5969 = vmatmul.mubr.f32.gmra.mxu0 %v3535
    %v5970 = vpop.f32.mrf.mxu0
    %v5971 = vadd.f32 %v5826, %v5970
    %v5972 = vpop.f32.mrf.mxu0
    %5973 = vdwg.mxu0
    %v5974 = vadd.f32 %v5896, %v3215
    %v5975 = vadd.f32 %v5901, %v3220
    %v5976 = vadd.f32 %v5906, %v3225
    %v5977 = vadd.f32 %v5911, %v3230
    %v5978 = vadd.f32 %v5916, %v3235
    %v5979 = vadd.f32 %v5921, %v3240
    %v5980 = vadd.f32 %v5926, %v3245
    %v5981 = vadd.f32 %v5931, %v3250
    %v5982 = vadd.f32 %v5936, %v3255
    %v5983 = vadd.f32 %v5941, %v3260
    %v5984 = vadd.f32 %v5946, %v3265
    %v5985 = vadd.f32 %v5951, %v3270
    %v5986 = vadd.f32 %v5956, %v3275
    %v5987 = vadd.f32 %v5961, %v3280
    %v5988 = vadd.f32 %v5966, %v3285
    %v5989 = vadd.f32 %v5971, %v3290
    %v5990 = vmul.f32 %v5974, 0.5
    %v5991 = vmul.f32 %v5975, 0.5
    %v5992 = vmul.f32 %v5976, 0.5
    %v5993 = vmul.f32 %v5977, 0.5
    %v5994 = vtanh.pop %v5990
    %v5995 = vtanh.pop %v5991
    %v5996 = vtanh.pop %v5992
    %v5997 = vtanh.pop %v5993
    %v5998 = vadd.f32 %v5994, 1.0
    %v5999 = vadd.f32 %v5995, 1.0
    %v6000 = vadd.f32 %v5996, 1.0
    %v6001 = vadd.f32 %v5997, 1.0
    %v6002 = vmul.f32 %v5998, 0.5
    %v6003 = vmul.f32 %v5999, 0.5
    %v6004 = vmul.f32 %v6000, 0.5
    %v6005 = vmul.f32 %v6001, 0.5
    %v6006 = vmul.f32 %v5978, 0.5
    %v6007 = vmul.f32 %v5979, 0.5
    %v6008 = vmul.f32 %v5980, 0.5
    %v6009 = vmul.f32 %v5981, 0.5
    %v6010 = vtanh.pop %v6006
    %v6011 = vtanh.pop %v6007
    %v6012 = vtanh.pop %v6008
    %v6013 = vtanh.pop %v6009
    %v6014 = vadd.f32 %v6010, 1.0
    %v6015 = vadd.f32 %v6011, 1.0
    %v6016 = vadd.f32 %v6012, 1.0
    %v6017 = vadd.f32 %v6013, 1.0
    %v6018 = vmul.f32 %v6014, 0.5
    %v6019 = vmul.f32 %v6015, 0.5
    %v6020 = vmul.f32 %v6016, 0.5
    %v6021 = vmul.f32 %v6017, 0.5
    %v6022 = vtanh.pop %v5982
    %v6023 = vtanh.pop %v5983
    %v6024 = vtanh.pop %v5984
    %v6025 = vtanh.pop %v5985
    %v6026 = vmul.f32 %v5986, 0.5
    %v6027 = vmul.f32 %v5987, 0.5
    %v6028 = vmul.f32 %v5988, 0.5
    %v6029 = vmul.f32 %v5989, 0.5
    %v6030 = vtanh.pop %v6026
    %v6031 = vtanh.pop %v6027
    %v6032 = vtanh.pop %v6028
    %v6033 = vtanh.pop %v6029
    %v6034 = vadd.f32 %v6030, 1.0
    %v6035 = vadd.f32 %v6031, 1.0
    %v6036 = vadd.f32 %v6032, 1.0
    %v6037 = vadd.f32 %v6033, 1.0
    %v6038 = vmul.f32 %v6034, 0.5
    %v6039 = vmul.f32 %v6035, 0.5
    %v6040 = vmul.f32 %v6036, 0.5
    %v6041 = vmul.f32 %v6037, 0.5
    %v6042 = vmul.f32 %v6018, %v5668
    %v6043 = vmul.f32 %v6019, %v5669
    %v6044 = vmul.f32 %v6020, %v5670
    %v6045 = vmul.f32 %v6021, %v5671
    %v6046 = vmul.f32 %v6002, %v6022
    %v6047 = vmul.f32 %v6003, %v6023
    %v6048 = vmul.f32 %v6004, %v6024
    %v6049 = vmul.f32 %v6005, %v6025
    %v6050 = vadd.f32 %v6042, %v6046
    %v6051 = vadd.f32 %v6043, %v6047
    %v6052 = vadd.f32 %v6044, %v6048
    %v6053 = vadd.f32 %v6045, %v6049
    %v6054 = vtanh.pop %v6050
    %v6055 = vtanh.pop %v6051
    %v6056 = vtanh.pop %v6052
    %v6057 = vtanh.pop %v6053
    %v6058 = vmul.f32 %v6038, %v6054
    %v6059 = vmul.f32 %v6039, %v6055
    %v6060 = vmul.f32 %v6040, %v6056
    %v6061 = vmul.f32 %v6041, %v6057
    %v6062 = vld [vmem:[%s2139] sm:$0xff]
    %v6063 = vld [vmem:[%s2139 + $0x8] sm:$0xff]
    %v6064 = vld [vmem:[%s2139 + $0x10] sm:$0xff]
    %v6065 = vld [vmem:[%s2139 + $0x18] sm:$0xff]
    %6066 = vmatprep.subr.mxu0 0.0
    %6067 = vmatpush1.msra.mxu0 0.0
    %6068 = vmatprep.subr.mxu0 0.0
    %6069 = vmatpush1.msra.mxu0 0.0
    %6070 = vmatprep.subr.mxu0 0.0
    %6071 = vmatpush1.msra.mxu0 0.0
    %6072 = vmatprep.subr.mxu0 0.0
    %6073 = vmatpush1.msra.mxu0 0.0
    %6074 = vmatprep.subr.mxu0 0.0
    %6075 = vmatpush1.msra.mxu0 0.0
    %6076 = vmatprep.subr.mxu0 0.0
    %6077 = vmatpush1.msra.mxu0 0.0
    %6078 = vmatprep.subr.mxu0 0.0
    %6079 = vmatpush1.msra.mxu0 0.0
    %6080 = vmatprep.subr.mxu0 0.0
    %6081 = vmatpush1.msra.mxu0 0.0
    %6082 = vmatprep.subr.mxu0 0.0
    %6083 = vmatpush1.msra.mxu0 0.0
    %6084 = vmatprep.subr.mxu0 0.0
    %6085 = vmatpush1.msra.mxu0 0.0
    %6086 = vmatprep.subr.mxu0 0.0
    %6087 = vmatpush1.msra.mxu0 0.0
    %6088 = vmatprep.subr.mxu0 0.0
    %6089 = vmatpush1.msra.mxu0 0.0
    %6090 = vmatprep.subr.mxu0 0.0
    %6091 = vmatpush1.msra.mxu0 %v6061
    %6092 = vmatprep.subr.mxu0 0.0
    %6093 = vmatpush1.msra.mxu0 %v6060
    %6094 = vmatprep.subr.mxu0 0.0
    %6095 = vmatpush1.msra.mxu0 %v6059
    %6096 = vmatprep.subr.mxu0 0.0
    %6097 = vmatpush1.msra.mxu0 %v6058
    %6098 = vmatprep.subr.mxu0 0.0
    %6099 = vmatpush2.msra.mxu0 0.0
    %6100 = vmatprep.subr.mxu0 0.0
    %6101 = vmatpush2.msra.mxu0 0.0
    %6102 = vmatprep.subr.mxu0 0.0
    %6103 = vmatpush2.msra.mxu0 0.0
    %6104 = vmatprep.subr.mxu0 0.0
    %6105 = vmatpush2.msra.mxu0 0.0
    %6106 = vmatprep.subr.mxu0 0.0
    %6107 = vmatpush2.msra.mxu0 0.0
    %6108 = vmatprep.subr.mxu0 0.0
    %6109 = vmatpush2.msra.mxu0 0.0
    %6110 = vmatprep.subr.mxu0 0.0
    %6111 = vmatpush2.msra.mxu0 0.0
    %6112 = vmatprep.subr.mxu0 0.0
    %6113 = vmatpush2.msra.mxu0 0.0
    %6114 = vmatprep.subr.mxu0 0.0
    %6115 = vmatpush2.msra.mxu0 0.0
    %6116 = vmatprep.subr.mxu0 0.0
    %6117 = vmatpush2.msra.mxu0 0.0
    %6118 = vmatprep.subr.mxu0 0.0
    %6119 = vmatpush2.msra.mxu0 0.0
    %6120 = vmatprep.subr.mxu0 0.0
    %6121 = vmatpush2.msra.mxu0 0.0
    %6122 = vmatprep.subr.mxu0 0.0
    %6123 = vmatpush2.msra.mxu0 0.0
    %6124 = vmatprep.subr.mxu0 0.0
    %6125 = vmatpush2.msra.mxu0 0.0
    %6126 = vmatprep.subr.mxu0 0.0
    %6127 = vmatpush2.msra.mxu0 0.0
    %6128 = vmatprep.subr.mxu0 0.0
    %6129 = vmatpush2.msra.mxu0 0.0
    %6130 = vmatprep.mubr.f32.mxu0 0.0
    %6131 = vmatmul.mubr.f32.gmra.mxu0 %v3297
    %v6132 = vpop.f32.mrf.mxu0
    %v6133 = vadd.f32 0.0, %v6132
    %v6134 = vpop.f32.mrf.mxu0
    %6135 = vmatprep.mubr.f32.mxu0 0.0
    %6136 = vmatmul.mubr.f32.gmra.mxu0 %v3300
    %v6137 = vpop.f32.mrf.mxu0
    %v6138 = vadd.f32 0.0, %v6137
    %v6139 = vpop.f32.mrf.mxu0
    %6140 = vmatprep.mubr.f32.mxu0 0.0
    %6141 = vmatmul.mubr.f32.gmra.mxu0 %v3303
    %v6142 = vpop.f32.mrf.mxu0
    %v6143 = vadd.f32 0.0, %v6142
    %v6144 = vpop.f32.mrf.mxu0
    %6145 = vmatprep.mubr.f32.mxu0 0.0
    %6146 = vmatmul.mubr.f32.gmra.mxu0 %v3306
    %v6147 = vpop.f32.mrf.mxu0
    %v6148 = vadd.f32 0.0, %v6147
    %v6149 = vpop.f32.mrf.mxu0
    %6150 = vmatprep.mubr.f32.mxu0 0.0
    %6151 = vmatmul.mubr.f32.gmra.mxu0 %v3309
    %v6152 = vpop.f32.mrf.mxu0
    %v6153 = vadd.f32 0.0, %v6152
    %v6154 = vpop.f32.mrf.mxu0
    %6155 = vmatprep.mubr.f32.mxu0 0.0
    %6156 = vmatmul.mubr.f32.gmra.mxu0 %v3312
    %v6157 = vpop.f32.mrf.mxu0
    %v6158 = vadd.f32 0.0, %v6157
    %v6159 = vpop.f32.mrf.mxu0
    %6160 = vmatprep.mubr.f32.mxu0 0.0
    %6161 = vmatmul.mubr.f32.gmra.mxu0 %v3315
    %v6162 = vpop.f32.mrf.mxu0
    %v6163 = vadd.f32 0.0, %v6162
    %v6164 = vpop.f32.mrf.mxu0
    %6165 = vmatprep.mubr.f32.mxu0 0.0
    %6166 = vmatmul.mubr.f32.gmra.mxu0 %v3318
    %v6167 = vpop.f32.mrf.mxu0
    %v6168 = vadd.f32 0.0, %v6167
    %v6169 = vpop.f32.mrf.mxu0
    %6170 = vmatprep.mubr.f32.mxu0 0.0
    %6171 = vmatmul.mubr.f32.gmra.mxu0 %v3321
    %v6172 = vpop.f32.mrf.mxu0
    %v6173 = vadd.f32 0.0, %v6172
    %v6174 = vpop.f32.mrf.mxu0
    %6175 = vmatprep.mubr.f32.mxu0 0.0
    %6176 = vmatmul.mubr.f32.gmra.mxu0 %v3324
    %v6177 = vpop.f32.mrf.mxu0
    %v6178 = vadd.f32 0.0, %v6177
    %v6179 = vpop.f32.mrf.mxu0
    %6180 = vmatprep.mubr.f32.mxu0 0.0
    %6181 = vmatmul.mubr.f32.gmra.mxu0 %v3327
    %v6182 = vpop.f32.mrf.mxu0
    %v6183 = vadd.f32 0.0, %v6182
    %v6184 = vpop.f32.mrf.mxu0
    %6185 = vmatprep.mubr.f32.mxu0 0.0
    %6186 = vmatmul.mubr.f32.gmra.mxu0 %v3330
    %v6187 = vpop.f32.mrf.mxu0
    %v6188 = vadd.f32 0.0, %v6187
    %v6189 = vpop.f32.mrf.mxu0
    %6190 = vmatprep.mubr.f32.mxu0 0.0
    %6191 = vmatmul.mubr.f32.gmra.mxu0 %v3333
    %v6192 = vpop.f32.mrf.mxu0
    %v6193 = vadd.f32 0.0, %v6192
    %v6194 = vpop.f32.mrf.mxu0
    %6195 = vmatprep.mubr.f32.mxu0 0.0
    %6196 = vmatmul.mubr.f32.gmra.mxu0 %v3336
    %v6197 = vpop.f32.mrf.mxu0
    %v6198 = vadd.f32 0.0, %v6197
    %v6199 = vpop.f32.mrf.mxu0
    %6200 = vmatprep.mubr.f32.mxu0 0.0
    %6201 = vmatmul.mubr.f32.gmra.mxu0 %v3339
    %v6202 = vpop.f32.mrf.mxu0
    %v6203 = vadd.f32 0.0, %v6202
    %v6204 = vpop.f32.mrf.mxu0
    %6205 = vmatprep.mubr.f32.mxu0 0.0
    %6206 = vmatmul.mubr.f32.gmra.mxu0 %v3342
    %v6207 = vpop.f32.mrf.mxu0
    %v6208 = vadd.f32 0.0, %v6207
    %v6209 = vpop.f32.mrf.mxu0
    %6210 = vdwg.mxu0
    %6211 = vmatprep.subr.mxu0 0.0
    %6212 = vmatpush1.msra.mxu0 0.0
    %6213 = vmatprep.subr.mxu0 0.0
    %6214 = vmatpush1.msra.mxu0 0.0
    %6215 = vmatprep.subr.mxu0 0.0
    %6216 = vmatpush1.msra.mxu0 0.0
    %6217 = vmatprep.subr.mxu0 0.0
    %6218 = vmatpush1.msra.mxu0 0.0
    %6219 = vmatprep.subr.mxu0 0.0
    %6220 = vmatpush1.msra.mxu0 0.0
    %6221 = vmatprep.subr.mxu0 0.0
    %6222 = vmatpush1.msra.mxu0 0.0
    %6223 = vmatprep.subr.mxu0 0.0
    %6224 = vmatpush1.msra.mxu0 0.0
    %6225 = vmatprep.subr.mxu0 0.0
    %6226 = vmatpush1.msra.mxu0 0.0
    %6227 = vmatprep.subr.mxu0 0.0
    %6228 = vmatpush1.msra.mxu0 0.0
    %6229 = vmatprep.subr.mxu0 0.0
    %6230 = vmatpush1.msra.mxu0 0.0
    %6231 = vmatprep.subr.mxu0 0.0
    %6232 = vmatpush1.msra.mxu0 0.0
    %6233 = vmatprep.subr.mxu0 0.0
    %6234 = vmatpush1.msra.mxu0 0.0
    %6235 = vmatprep.subr.mxu0 0.0
    %6236 = vmatpush1.msra.mxu0 %v6065
    %6237 = vmatprep.subr.mxu0 0.0
    %6238 = vmatpush1.msra.mxu0 %v6064
    %6239 = vmatprep.subr.mxu0 0.0
    %6240 = vmatpush1.msra.mxu0 %v6063
    %6241 = vmatprep.subr.mxu0 0.0
    %6242 = vmatpush1.msra.mxu0 %v6062
    %6243 = vmatprep.subr.mxu0 0.0
    %6244 = vmatpush2.msra.mxu0 0.0
    %6245 = vmatprep.subr.mxu0 0.0
    %6246 = vmatpush2.msra.mxu0 0.0
    %6247 = vmatprep.subr.mxu0 0.0
    %6248 = vmatpush2.msra.mxu0 0.0
    %6249 = vmatprep.subr.mxu0 0.0
    %6250 = vmatpush2.msra.mxu0 0.0
    %6251 = vmatprep.subr.mxu0 0.0
    %6252 = vmatpush2.msra.mxu0 0.0
    %6253 = vmatprep.subr.mxu0 0.0
    %6254 = vmatpush2.msra.mxu0 0.0
    %6255 = vmatprep.subr.mxu0 0.0
    %6256 = vmatpush2.msra.mxu0 0.0
    %6257 = vmatprep.subr.mxu0 0.0
    %6258 = vmatpush2.msra.mxu0 0.0
    %6259 = vmatprep.subr.mxu0 0.0
    %6260 = vmatpush2.msra.mxu0 0.0
    %6261 = vmatprep.subr.mxu0 0.0
    %6262 = vmatpush2.msra.mxu0 0.0
    %6263 = vmatprep.subr.mxu0 0.0
    %6264 = vmatpush2.msra.mxu0 0.0
    %6265 = vmatprep.subr.mxu0 0.0
    %6266 = vmatpush2.msra.mxu0 0.0
    %6267 = vmatprep.subr.mxu0 0.0
    %6268 = vmatpush2.msra.mxu0 0.0
    %6269 = vmatprep.subr.mxu0 0.0
    %6270 = vmatpush2.msra.mxu0 0.0
    %6271 = vmatprep.subr.mxu0 0.0
    %6272 = vmatpush2.msra.mxu0 0.0
    %6273 = vmatprep.subr.mxu0 0.0
    %6274 = vmatpush2.msra.mxu0 0.0
    %6275 = vmatprep.mubr.f32.mxu0 0.0
    %6276 = vmatmul.mubr.f32.gmra.mxu0 %v3490
    %v6277 = vpop.f32.mrf.mxu0
    %v6278 = vadd.f32 %v6133, %v6277
    %v6279 = vpop.f32.mrf.mxu0
    %6280 = vmatprep.mubr.f32.mxu0 0.0
    %6281 = vmatmul.mubr.f32.gmra.mxu0 %v3493
    %v6282 = vpop.f32.mrf.mxu0
    %v6283 = vadd.f32 %v6138, %v6282
    %v6284 = vpop.f32.mrf.mxu0
    %6285 = vmatprep.mubr.f32.mxu0 0.0
    %6286 = vmatmul.mubr.f32.gmra.mxu0 %v3496
    %v6287 = vpop.f32.mrf.mxu0
    %v6288 = vadd.f32 %v6143, %v6287
    %v6289 = vpop.f32.mrf.mxu0
    %6290 = vmatprep.mubr.f32.mxu0 0.0
    %6291 = vmatmul.mubr.f32.gmra.mxu0 %v3499
    %v6292 = vpop.f32.mrf.mxu0
    %v6293 = vadd.f32 %v6148, %v6292
    %v6294 = vpop.f32.mrf.mxu0
    %6295 = vmatprep.mubr.f32.mxu0 0.0
    %6296 = vmatmul.mubr.f32.gmra.mxu0 %v3502
    %v6297 = vpop.f32.mrf.mxu0
    %v6298 = vadd.f32 %v6153, %v6297
    %v6299 = vpop.f32.mrf.mxu0
    %6300 = vmatprep.mubr.f32.mxu0 0.0
    %6301 = vmatmul.mubr.f32.gmra.mxu0 %v3505
    %v6302 = vpop.f32.mrf.mxu0
    %v6303 = vadd.f32 %v6158, %v6302
    %v6304 = vpop.f32.mrf.mxu0
    %6305 = vmatprep.mubr.f32.mxu0 0.0
    %6306 = vmatmul.mubr.f32.gmra.mxu0 %v3508
    %v6307 = vpop.f32.mrf.mxu0
    %v6308 = vadd.f32 %v6163, %v6307
    %v6309 = vpop.f32.mrf.mxu0
    %6310 = vmatprep.mubr.f32.mxu0 0.0
    %6311 = vmatmul.mubr.f32.gmra.mxu0 %v3511
    %v6312 = vpop.f32.mrf.mxu0
    %v6313 = vadd.f32 %v6168, %v6312
    %v6314 = vpop.f32.mrf.mxu0
    %6315 = vmatprep.mubr.f32.mxu0 0.0
    %6316 = vmatmul.mubr.f32.gmra.mxu0 %v3514
    %v6317 = vpop.f32.mrf.mxu0
    %v6318 = vadd.f32 %v6173, %v6317
    %v6319 = vpop.f32.mrf.mxu0
    %6320 = vmatprep.mubr.f32.mxu0 0.0
    %6321 = vmatmul.mubr.f32.gmra.mxu0 %v3517
    %v6322 = vpop.f32.mrf.mxu0
    %v6323 = vadd.f32 %v6178, %v6322
    %v6324 = vpop.f32.mrf.mxu0
    %6325 = vmatprep.mubr.f32.mxu0 0.0
    %6326 = vmatmul.mubr.f32.gmra.mxu0 %v3520
    %v6327 = vpop.f32.mrf.mxu0
    %v6328 = vadd.f32 %v6183, %v6327
    %v6329 = vpop.f32.mrf.mxu0
    %6330 = vmatprep.mubr.f32.mxu0 0.0
    %6331 = vmatmul.mubr.f32.gmra.mxu0 %v3523
    %v6332 = vpop.f32.mrf.mxu0
    %v6333 = vadd.f32 %v6188, %v6332
    %v6334 = vpop.f32.mrf.mxu0
    %6335 = vmatprep.mubr.f32.mxu0 0.0
    %6336 = vmatmul.mubr.f32.gmra.mxu0 %v3526
    %v6337 = vpop.f32.mrf.mxu0
    %v6338 = vadd.f32 %v6193, %v6337
    %v6339 = vpop.f32.mrf.mxu0
    %6340 = vmatprep.mubr.f32.mxu0 0.0
    %6341 = vmatmul.mubr.f32.gmra.mxu0 %v3529
    %v6342 = vpop.f32.mrf.mxu0
    %v6343 = vadd.f32 %v6198, %v6342
    %v6344 = vpop.f32.mrf.mxu0
    %6345 = vmatprep.mubr.f32.mxu0 0.0
    %6346 = vmatmul.mubr.f32.gmra.mxu0 %v3532
    %v6347 = vpop.f32.mrf.mxu0
    %v6348 = vadd.f32 %v6203, %v6347
    %v6349 = vpop.f32.mrf.mxu0
    %6350 = vmatprep.mubr.f32.mxu0 0.0
    %6351 = vmatmul.mubr.f32.gmra.mxu0 %v3535
    %v6352 = vpop.f32.mrf.mxu0
    %v6353 = vadd.f32 %v6208, %v6352
    %v6354 = vpop.f32.mrf.mxu0
    %6355 = vdwg.mxu0
    %v6356 = vadd.f32 %v6278, %v3215
    %v6357 = vadd.f32 %v6283, %v3220
    %v6358 = vadd.f32 %v6288, %v3225
    %v6359 = vadd.f32 %v6293, %v3230
    %v6360 = vadd.f32 %v6298, %v3235
    %v6361 = vadd.f32 %v6303, %v3240
    %v6362 = vadd.f32 %v6308, %v3245
    %v6363 = vadd.f32 %v6313, %v3250
    %v6364 = vadd.f32 %v6318, %v3255
    %v6365 = vadd.f32 %v6323, %v3260
    %v6366 = vadd.f32 %v6328, %v3265
    %v6367 = vadd.f32 %v6333, %v3270
    %v6368 = vadd.f32 %v6338, %v3275
    %v6369 = vadd.f32 %v6343, %v3280
    %v6370 = vadd.f32 %v6348, %v3285
    %v6371 = vadd.f32 %v6353, %v3290
    %v6372 = vmul.f32 %v6356, 0.5
    %v6373 = vmul.f32 %v6357, 0.5
    %v6374 = vmul.f32 %v6358, 0.5
    %v6375 = vmul.f32 %v6359, 0.5
    %v6376 = vtanh.pop %v6372
    %v6377 = vtanh.pop %v6373
    %v6378 = vtanh.pop %v6374
    %v6379 = vtanh.pop %v6375
    %v6380 = vadd.f32 %v6376, 1.0
    %v6381 = vadd.f32 %v6377, 1.0
    %v6382 = vadd.f32 %v6378, 1.0
    %v6383 = vadd.f32 %v6379, 1.0
    %v6384 = vmul.f32 %v6380, 0.5
    %v6385 = vmul.f32 %v6381, 0.5
    %v6386 = vmul.f32 %v6382, 0.5
    %v6387 = vmul.f32 %v6383, 0.5
    %v6388 = vmul.f32 %v6360, 0.5
    %v6389 = vmul.f32 %v6361, 0.5
    %v6390 = vmul.f32 %v6362, 0.5
    %v6391 = vmul.f32 %v6363, 0.5
    %v6392 = vtanh.pop %v6388
    %v6393 = vtanh.pop %v6389
    %v6394 = vtanh.pop %v6390
    %v6395 = vtanh.pop %v6391
    %v6396 = vadd.f32 %v6392, 1.0
    %v6397 = vadd.f32 %v6393, 1.0
    %v6398 = vadd.f32 %v6394, 1.0
    %v6399 = vadd.f32 %v6395, 1.0
    %v6400 = vmul.f32 %v6396, 0.5
    %v6401 = vmul.f32 %v6397, 0.5
    %v6402 = vmul.f32 %v6398, 0.5
    %v6403 = vmul.f32 %v6399, 0.5
    %v6404 = vtanh.pop %v6364
    %v6405 = vtanh.pop %v6365
    %v6406 = vtanh.pop %v6366
    %v6407 = vtanh.pop %v6367
    %v6408 = vmul.f32 %v6368, 0.5
    %v6409 = vmul.f32 %v6369, 0.5
    %v6410 = vmul.f32 %v6370, 0.5
    %v6411 = vmul.f32 %v6371, 0.5
    %v6412 = vtanh.pop %v6408
    %v6413 = vtanh.pop %v6409
    %v6414 = vtanh.pop %v6410
    %v6415 = vtanh.pop %v6411
    %v6416 = vadd.f32 %v6412, 1.0
    %v6417 = vadd.f32 %v6413, 1.0
    %v6418 = vadd.f32 %v6414, 1.0
    %v6419 = vadd.f32 %v6415, 1.0
    %v6420 = vmul.f32 %v6416, 0.5
    %v6421 = vmul.f32 %v6417, 0.5
    %v6422 = vmul.f32 %v6418, 0.5
    %v6423 = vmul.f32 %v6419, 0.5
    %v6424 = vmul.f32 %v6400, %v6050
    %v6425 = vmul.f32 %v6401, %v6051
    %v6426 = vmul.f32 %v6402, %v6052
    %v6427 = vmul.f32 %v6403, %v6053
    %v6428 = vmul.f32 %v6384, %v6404
    %v6429 = vmul.f32 %v6385, %v6405
    %v6430 = vmul.f32 %v6386, %v6406
    %v6431 = vmul.f32 %v6387, %v6407
    %v6432 = vadd.f32 %v6424, %v6428
    %v6433 = vadd.f32 %v6425, %v6429
    %v6434 = vadd.f32 %v6426, %v6430
    %v6435 = vadd.f32 %v6427, %v6431
    %v6436 = vtanh.pop %v6432
    %v6437 = vtanh.pop %v6433
    %v6438 = vtanh.pop %v6434
    %v6439 = vtanh.pop %v6435
    %v6440 = vmul.f32 %v6420, %v6436
    %v6441 = vmul.f32 %v6421, %v6437
    %v6442 = vmul.f32 %v6422, %v6438
    %v6443 = vmul.f32 %v6423, %v6439
    %v6444 = vld [vmem:[%s2394] sm:$0xff]
    %v6445 = vld [vmem:[%s2394 + $0x8] sm:$0xff]
    %v6446 = vld [vmem:[%s2394 + $0x10] sm:$0xff]
    %v6447 = vld [vmem:[%s2394 + $0x18] sm:$0xff]
    %6448 = vmatprep.subr.mxu0 0.0
    %6449 = vmatpush1.msra.mxu0 0.0
    %6450 = vmatprep.subr.mxu0 0.0
    %6451 = vmatpush1.msra.mxu0 0.0
    %6452 = vmatprep.subr.mxu0 0.0
    %6453 = vmatpush1.msra.mxu0 0.0
    %6454 = vmatprep.subr.mxu0 0.0
    %6455 = vmatpush1.msra.mxu0 0.0
    %6456 = vmatprep.subr.mxu0 0.0
    %6457 = vmatpush1.msra.mxu0 0.0
    %6458 = vmatprep.subr.mxu0 0.0
    %6459 = vmatpush1.msra.mxu0 0.0
    %6460 = vmatprep.subr.mxu0 0.0
    %6461 = vmatpush1.msra.mxu0 0.0
    %6462 = vmatprep.subr.mxu0 0.0
    %6463 = vmatpush1.msra.mxu0 0.0
    %6464 = vmatprep.subr.mxu0 0.0
    %6465 = vmatpush1.msra.mxu0 0.0
    %6466 = vmatprep.subr.mxu0 0.0
    %6467 = vmatpush1.msra.mxu0 0.0
    %6468 = vmatprep.subr.mxu0 0.0
    %6469 = vmatpush1.msra.mxu0 0.0
    %6470 = vmatprep.subr.mxu0 0.0
    %6471 = vmatpush1.msra.mxu0 0.0
    %6472 = vmatprep.subr.mxu0 0.0
    %6473 = vmatpush1.msra.mxu0 %v6443
    %6474 = vmatprep.subr.mxu0 0.0
    %6475 = vmatpush1.msra.mxu0 %v6442
    %6476 = vmatprep.subr.mxu0 0.0
    %6477 = vmatpush1.msra.mxu0 %v6441
    %6478 = vmatprep.subr.mxu0 0.0
    %6479 = vmatpush1.msra.mxu0 %v6440
    %6480 = vmatprep.subr.mxu0 0.0
    %6481 = vmatpush2.msra.mxu0 0.0
    %6482 = vmatprep.subr.mxu0 0.0
    %6483 = vmatpush2.msra.mxu0 0.0
    %6484 = vmatprep.subr.mxu0 0.0
    %6485 = vmatpush2.msra.mxu0 0.0
    %6486 = vmatprep.subr.mxu0 0.0
    %6487 = vmatpush2.msra.mxu0 0.0
    %6488 = vmatprep.subr.mxu0 0.0
    %6489 = vmatpush2.msra.mxu0 0.0
    %6490 = vmatprep.subr.mxu0 0.0
    %6491 = vmatpush2.msra.mxu0 0.0
    %6492 = vmatprep.subr.mxu0 0.0
    %6493 = vmatpush2.msra.mxu0 0.0
    %6494 = vmatprep.subr.mxu0 0.0
    %6495 = vmatpush2.msra.mxu0 0.0
    %6496 = vmatprep.subr.mxu0 0.0
    %6497 = vmatpush2.msra.mxu0 0.0
    %6498 = vmatprep.subr.mxu0 0.0
    %6499 = vmatpush2.msra.mxu0 0.0
    %6500 = vmatprep.subr.mxu0 0.0
    %6501 = vmatpush2.msra.mxu0 0.0
    %6502 = vmatprep.subr.mxu0 0.0
    %6503 = vmatpush2.msra.mxu0 0.0
    %6504 = vmatprep.subr.mxu0 0.0
    %6505 = vmatpush2.msra.mxu0 0.0
    %6506 = vmatprep.subr.mxu0 0.0
    %6507 = vmatpush2.msra.mxu0 0.0
    %6508 = vmatprep.subr.mxu0 0.0
    %6509 = vmatpush2.msra.mxu0 0.0
    %6510 = vmatprep.subr.mxu0 0.0
    %6511 = vmatpush2.msra.mxu0 0.0
    %6512 = vmatprep.mubr.f32.mxu0 0.0
    %6513 = vmatmul.mubr.f32.gmra.mxu0 %v3297
    %v6514 = vpop.f32.mrf.mxu0
    %v6515 = vadd.f32 0.0, %v6514
    %v6516 = vpop.f32.mrf.mxu0
    %6517 = vmatprep.mubr.f32.mxu0 0.0
    %6518 = vmatmul.mubr.f32.gmra.mxu0 %v3300
    %v6519 = vpop.f32.mrf.mxu0
    %v6520 = vadd.f32 0.0, %v6519
    %v6521 = vpop.f32.mrf.mxu0
    %6522 = vmatprep.mubr.f32.mxu0 0.0
    %6523 = vmatmul.mubr.f32.gmra.mxu0 %v3303
    %v6524 = vpop.f32.mrf.mxu0
    %v6525 = vadd.f32 0.0, %v6524
    %v6526 = vpop.f32.mrf.mxu0
    %6527 = vmatprep.mubr.f32.mxu0 0.0
    %6528 = vmatmul.mubr.f32.gmra.mxu0 %v3306
    %v6529 = vpop.f32.mrf.mxu0
    %v6530 = vadd.f32 0.0, %v6529
    %v6531 = vpop.f32.mrf.mxu0
    %6532 = vmatprep.mubr.f32.mxu0 0.0
    %6533 = vmatmul.mubr.f32.gmra.mxu0 %v3309
    %v6534 = vpop.f32.mrf.mxu0
    %v6535 = vadd.f32 0.0, %v6534
    %v6536 = vpop.f32.mrf.mxu0
    %6537 = vmatprep.mubr.f32.mxu0 0.0
    %6538 = vmatmul.mubr.f32.gmra.mxu0 %v3312
    %v6539 = vpop.f32.mrf.mxu0
    %v6540 = vadd.f32 0.0, %v6539
    %v6541 = vpop.f32.mrf.mxu0
    %6542 = vmatprep.mubr.f32.mxu0 0.0
    %6543 = vmatmul.mubr.f32.gmra.mxu0 %v3315
    %v6544 = vpop.f32.mrf.mxu0
    %v6545 = vadd.f32 0.0, %v6544
    %v6546 = vpop.f32.mrf.mxu0
    %6547 = vmatprep.mubr.f32.mxu0 0.0
    %6548 = vmatmul.mubr.f32.gmra.mxu0 %v3318
    %v6549 = vpop.f32.mrf.mxu0
    %v6550 = vadd.f32 0.0, %v6549
    %v6551 = vpop.f32.mrf.mxu0
    %6552 = vmatprep.mubr.f32.mxu0 0.0
    %6553 = vmatmul.mubr.f32.gmra.mxu0 %v3321
    %v6554 = vpop.f32.mrf.mxu0
    %v6555 = vadd.f32 0.0, %v6554
    %v6556 = vpop.f32.mrf.mxu0
    %6557 = vmatprep.mubr.f32.mxu0 0.0
    %6558 = vmatmul.mubr.f32.gmra.mxu0 %v3324
    %v6559 = vpop.f32.mrf.mxu0
    %v6560 = vadd.f32 0.0, %v6559
    %v6561 = vpop.f32.mrf.mxu0
    %6562 = vmatprep.mubr.f32.mxu0 0.0
    %6563 = vmatmul.mubr.f32.gmra.mxu0 %v3327
    %v6564 = vpop.f32.mrf.mxu0
    %v6565 = vadd.f32 0.0, %v6564
    %v6566 = vpop.f32.mrf.mxu0
    %6567 = vmatprep.mubr.f32.mxu0 0.0
    %6568 = vmatmul.mubr.f32.gmra.mxu0 %v3330
    %v6569 = vpop.f32.mrf.mxu0
    %v6570 = vadd.f32 0.0, %v6569
    %v6571 = vpop.f32.mrf.mxu0
    %6572 = vmatprep.mubr.f32.mxu0 0.0
    %6573 = vmatmul.mubr.f32.gmra.mxu0 %v3333
    %v6574 = vpop.f32.mrf.mxu0
    %v6575 = vadd.f32 0.0, %v6574
    %v6576 = vpop.f32.mrf.mxu0
    %6577 = vmatprep.mubr.f32.mxu0 0.0
    %6578 = vmatmul.mubr.f32.gmra.mxu0 %v3336
    %v6579 = vpop.f32.mrf.mxu0
    %v6580 = vadd.f32 0.0, %v6579
    %v6581 = vpop.f32.mrf.mxu0
    %6582 = vmatprep.mubr.f32.mxu0 0.0
    %6583 = vmatmul.mubr.f32.gmra.mxu0 %v3339
    %v6584 = vpop.f32.mrf.mxu0
    %v6585 = vadd.f32 0.0, %v6584
    %v6586 = vpop.f32.mrf.mxu0
    %6587 = vmatprep.mubr.f32.mxu0 0.0
    %6588 = vmatmul.mubr.f32.gmra.mxu0 %v3342
    %v6589 = vpop.f32.mrf.mxu0
    %v6590 = vadd.f32 0.0, %v6589
    %v6591 = vpop.f32.mrf.mxu0
    %6592 = vdwg.mxu0
    %6593 = vmatprep.subr.mxu0 0.0
    %6594 = vmatpush1.msra.mxu0 0.0
    %6595 = vmatprep.subr.mxu0 0.0
    %6596 = vmatpush1.msra.mxu0 0.0
    %6597 = vmatprep.subr.mxu0 0.0
    %6598 = vmatpush1.msra.mxu0 0.0
    %6599 = vmatprep.subr.mxu0 0.0
    %6600 = vmatpush1.msra.mxu0 0.0
    %6601 = vmatprep.subr.mxu0 0.0
    %6602 = vmatpush1.msra.mxu0 0.0
    %6603 = vmatprep.subr.mxu0 0.0
    %6604 = vmatpush1.msra.mxu0 0.0
    %6605 = vmatprep.subr.mxu0 0.0
    %6606 = vmatpush1.msra.mxu0 0.0
    %6607 = vmatprep.subr.mxu0 0.0
    %6608 = vmatpush1.msra.mxu0 0.0
    %6609 = vmatprep.subr.mxu0 0.0
    %6610 = vmatpush1.msra.mxu0 0.0
    %6611 = vmatprep.subr.mxu0 0.0
    %6612 = vmatpush1.msra.mxu0 0.0
    %6613 = vmatprep.subr.mxu0 0.0
    %6614 = vmatpush1.msra.mxu0 0.0
    %6615 = vmatprep.subr.mxu0 0.0
    %6616 = vmatpush1.msra.mxu0 0.0
    %6617 = vmatprep.subr.mxu0 0.0
    %6618 = vmatpush1.msra.mxu0 %v6447
    %6619 = vmatprep.subr.mxu0 0.0
    %6620 = vmatpush1.msra.mxu0 %v6446
    %6621 = vmatprep.subr.mxu0 0.0
    %6622 = vmatpush1.msra.mxu0 %v6445
    %6623 = vmatprep.subr.mxu0 0.0
    %6624 = vmatpush1.msra.mxu0 %v6444
    %6625 = vmatprep.subr.mxu0 0.0
    %6626 = vmatpush2.msra.mxu0 0.0
    %6627 = vmatprep.subr.mxu0 0.0
    %6628 = vmatpush2.msra.mxu0 0.0
    %6629 = vmatprep.subr.mxu0 0.0
    %6630 = vmatpush2.msra.mxu0 0.0
    %6631 = vmatprep.subr.mxu0 0.0
    %6632 = vmatpush2.msra.mxu0 0.0
    %6633 = vmatprep.subr.mxu0 0.0
    %6634 = vmatpush2.msra.mxu0 0.0
    %6635 = vmatprep.subr.mxu0 0.0
    %6636 = vmatpush2.msra.mxu0 0.0
    %6637 = vmatprep.subr.mxu0 0.0
    %6638 = vmatpush2.msra.mxu0 0.0
    %6639 = vmatprep.subr.mxu0 0.0
    %6640 = vmatpush2.msra.mxu0 0.0
    %6641 = vmatprep.subr.mxu0 0.0
    %6642 = vmatpush2.msra.mxu0 0.0
    %6643 = vmatprep.subr.mxu0 0.0
    %6644 = vmatpush2.msra.mxu0 0.0
    %6645 = vmatprep.subr.mxu0 0.0
    %6646 = vmatpush2.msra.mxu0 0.0
    %6647 = vmatprep.subr.mxu0 0.0
    %6648 = vmatpush2.msra.mxu0 0.0
    %6649 = vmatprep.subr.mxu0 0.0
    %6650 = vmatpush2.msra.mxu0 0.0
    %6651 = vmatprep.subr.mxu0 0.0
    %6652 = vmatpush2.msra.mxu0 0.0
    %6653 = vmatprep.subr.mxu0 0.0
    %6654 = vmatpush2.msra.mxu0 0.0
    %6655 = vmatprep.subr.mxu0 0.0
    %6656 = vmatpush2.msra.mxu0 0.0
    %6657 = vmatprep.mubr.f32.mxu0 0.0
    %6658 = vmatmul.mubr.f32.gmra.mxu0 %v3490
    %v6659 = vpop.f32.mrf.mxu0
    %v6660 = vadd.f32 %v6515, %v6659
    %v6661 = vpop.f32.mrf.mxu0
    %6662 = vmatprep.mubr.f32.mxu0 0.0
    %6663 = vmatmul.mubr.f32.gmra.mxu0 %v3493
    %v6664 = vpop.f32.mrf.mxu0
    %v6665 = vadd.f32 %v6520, %v6664
    %v6666 = vpop.f32.mrf.mxu0
    %6667 = vmatprep.mubr.f32.mxu0 0.0
    %6668 = vmatmul.mubr.f32.gmra.mxu0 %v3496
    %v6669 = vpop.f32.mrf.mxu0
    %v6670 = vadd.f32 %v6525, %v6669
    %v6671 = vpop.f32.mrf.mxu0
    %6672 = vmatprep.mubr.f32.mxu0 0.0
    %6673 = vmatmul.mubr.f32.gmra.mxu0 %v3499
    %v6674 = vpop.f32.mrf.mxu0
    %v6675 = vadd.f32 %v6530, %v6674
    %v6676 = vpop.f32.mrf.mxu0
    %6677 = vmatprep.mubr.f32.mxu0 0.0
    %6678 = vmatmul.mubr.f32.gmra.mxu0 %v3502
    %v6679 = vpop.f32.mrf.mxu0
    %v6680 = vadd.f32 %v6535, %v6679
    %v6681 = vpop.f32.mrf.mxu0
    %6682 = vmatprep.mubr.f32.mxu0 0.0
    %6683 = vmatmul.mubr.f32.gmra.mxu0 %v3505
    %v6684 = vpop.f32.mrf.mxu0
    %v6685 = vadd.f32 %v6540, %v6684
    %v6686 = vpop.f32.mrf.mxu0
    %6687 = vmatprep.mubr.f32.mxu0 0.0
    %6688 = vmatmul.mubr.f32.gmra.mxu0 %v3508
    %v6689 = vpop.f32.mrf.mxu0
    %v6690 = vadd.f32 %v6545, %v6689
    %v6691 = vpop.f32.mrf.mxu0
    %6692 = vmatprep.mubr.f32.mxu0 0.0
    %6693 = vmatmul.mubr.f32.gmra.mxu0 %v3511
    %v6694 = vpop.f32.mrf.mxu0
    %v6695 = vadd.f32 %v6550, %v6694
    %v6696 = vpop.f32.mrf.mxu0
    %6697 = vmatprep.mubr.f32.mxu0 0.0
    %6698 = vmatmul.mubr.f32.gmra.mxu0 %v3514
    %v6699 = vpop.f32.mrf.mxu0
    %v6700 = vadd.f32 %v6555, %v6699
    %v6701 = vpop.f32.mrf.mxu0
    %6702 = vmatprep.mubr.f32.mxu0 0.0
    %6703 = vmatmul.mubr.f32.gmra.mxu0 %v3517
    %v6704 = vpop.f32.mrf.mxu0
    %v6705 = vadd.f32 %v6560, %v6704
    %v6706 = vpop.f32.mrf.mxu0
    %6707 = vmatprep.mubr.f32.mxu0 0.0
    %6708 = vmatmul.mubr.f32.gmra.mxu0 %v3520
    %v6709 = vpop.f32.mrf.mxu0
    %v6710 = vadd.f32 %v6565, %v6709
    %v6711 = vpop.f32.mrf.mxu0
    %6712 = vmatprep.mubr.f32.mxu0 0.0
    %6713 = vmatmul.mubr.f32.gmra.mxu0 %v3523
    %v6714 = vpop.f32.mrf.mxu0
    %v6715 = vadd.f32 %v6570, %v6714
    %v6716 = vpop.f32.mrf.mxu0
    %6717 = vmatprep.mubr.f32.mxu0 0.0
    %6718 = vmatmul.mubr.f32.gmra.mxu0 %v3526
    %v6719 = vpop.f32.mrf.mxu0
    %v6720 = vadd.f32 %v6575, %v6719
    %v6721 = vpop.f32.mrf.mxu0
    %6722 = vmatprep.mubr.f32.mxu0 0.0
    %6723 = vmatmul.mubr.f32.gmra.mxu0 %v3529
    %v6724 = vpop.f32.mrf.mxu0
    %v6725 = vadd.f32 %v6580, %v6724
    %v6726 = vpop.f32.mrf.mxu0
    %6727 = vmatprep.mubr.f32.mxu0 0.0
    %6728 = vmatmul.mubr.f32.gmra.mxu0 %v3532
    %v6729 = vpop.f32.mrf.mxu0
    %v6730 = vadd.f32 %v6585, %v6729
    %v6731 = vpop.f32.mrf.mxu0
    %6732 = vmatprep.mubr.f32.mxu0 0.0
    %6733 = vmatmul.mubr.f32.gmra.mxu0 %v3535
    %v6734 = vpop.f32.mrf.mxu0
    %v6735 = vadd.f32 %v6590, %v6734
    %v6736 = vpop.f32.mrf.mxu0
    %6737 = vdwg.mxu0
    %v6738 = vadd.f32 %v6660, %v3215
    %v6739 = vadd.f32 %v6665, %v3220
    %v6740 = vadd.f32 %v6670, %v3225
    %v6741 = vadd.f32 %v6675, %v3230
    %v6742 = vadd.f32 %v6680, %v3235
    %v6743 = vadd.f32 %v6685, %v3240
    %v6744 = vadd.f32 %v6690, %v3245
    %v6745 = vadd.f32 %v6695, %v3250
    %v6746 = vadd.f32 %v6700, %v3255
    %v6747 = vadd.f32 %v6705, %v3260
    %v6748 = vadd.f32 %v6710, %v3265
    %v6749 = vadd.f32 %v6715, %v3270
    %v6750 = vadd.f32 %v6720, %v3275
    %v6751 = vadd.f32 %v6725, %v3280
    %v6752 = vadd.f32 %v6730, %v3285
    %v6753 = vadd.f32 %v6735, %v3290
    %v6754 = vmul.f32 %v6738, 0.5
    %v6755 = vmul.f32 %v6739, 0.5
    %v6756 = vmul.f32 %v6740, 0.5
    %v6757 = vmul.f32 %v6741, 0.5
    %v6758 = vtanh.pop %v6754
    %v6759 = vtanh.pop %v6755
    %v6760 = vtanh.pop %v6756
    %v6761 = vtanh.pop %v6757
    %v6762 = vadd.f32 %v6758, 1.0
    %v6763 = vadd.f32 %v6759, 1.0
    %v6764 = vadd.f32 %v6760, 1.0
    %v6765 = vadd.f32 %v6761, 1.0
    %v6766 = vmul.f32 %v6762, 0.5
    %v6767 = vmul.f32 %v6763, 0.5
    %v6768 = vmul.f32 %v6764, 0.5
    %v6769 = vmul.f32 %v6765, 0.5
    %v6770 = vmul.f32 %v6742, 0.5
    %v6771 = vmul.f32 %v6743, 0.5
    %v6772 = vmul.f32 %v6744, 0.5
    %v6773 = vmul.f32 %v6745, 0.5
    %v6774 = vtanh.pop %v6770
    %v6775 = vtanh.pop %v6771
    %v6776 = vtanh.pop %v6772
    %v6777 = vtanh.pop %v6773
    %v6778 = vadd.f32 %v6774, 1.0
    %v6779 = vadd.f32 %v6775, 1.0
    %v6780 = vadd.f32 %v6776, 1.0
    %v6781 = vadd.f32 %v6777, 1.0
    %v6782 = vmul.f32 %v6778, 0.5
    %v6783 = vmul.f32 %v6779, 0.5
    %v6784 = vmul.f32 %v6780, 0.5
    %v6785 = vmul.f32 %v6781, 0.5
    %v6786 = vtanh.pop %v6746
    %v6787 = vtanh.pop %v6747
    %v6788 = vtanh.pop %v6748
    %v6789 = vtanh.pop %v6749
    %v6790 = vmul.f32 %v6750, 0.5
    %v6791 = vmul.f32 %v6751, 0.5
    %v6792 = vmul.f32 %v6752, 0.5
    %v6793 = vmul.f32 %v6753, 0.5
    %v6794 = vtanh.pop %v6790
    %v6795 = vtanh.pop %v6791
    %v6796 = vtanh.pop %v6792
    %v6797 = vtanh.pop %v6793
    %v6798 = vadd.f32 %v6794, 1.0
    %v6799 = vadd.f32 %v6795, 1.0
    %v6800 = vadd.f32 %v6796, 1.0
    %v6801 = vadd.f32 %v6797, 1.0
    %v6802 = vmul.f32 %v6798, 0.5
    %v6803 = vmul.f32 %v6799, 0.5
    %v6804 = vmul.f32 %v6800, 0.5
    %v6805 = vmul.f32 %v6801, 0.5
    %v6806 = vmul.f32 %v6782, %v6432
    %v6807 = vmul.f32 %v6783, %v6433
    %v6808 = vmul.f32 %v6784, %v6434
    %v6809 = vmul.f32 %v6785, %v6435
    %v6810 = vmul.f32 %v6766, %v6786
    %v6811 = vmul.f32 %v6767, %v6787
    %v6812 = vmul.f32 %v6768, %v6788
    %v6813 = vmul.f32 %v6769, %v6789
    %v6814 = vadd.f32 %v6806, %v6810
    %v6815 = vadd.f32 %v6807, %v6811
    %v6816 = vadd.f32 %v6808, %v6812
    %v6817 = vadd.f32 %v6809, %v6813
    %v6818 = vtanh.pop %v6814
    %v6819 = vtanh.pop %v6815
    %v6820 = vtanh.pop %v6816
    %v6821 = vtanh.pop %v6817
    %v6822 = vmul.f32 %v6802, %v6818
    %v6823 = vmul.f32 %v6803, %v6819
    %v6824 = vmul.f32 %v6804, %v6820
    %v6825 = vmul.f32 %v6805, %v6821
    %v6826 = vld [vmem:[%s2649] sm:$0xff]
    %v6827 = vld [vmem:[%s2649 + $0x8] sm:$0xff]
    %v6828 = vld [vmem:[%s2649 + $0x10] sm:$0xff]
    %v6829 = vld [vmem:[%s2649 + $0x18] sm:$0xff]
    %6830 = vmatprep.subr.mxu0 0.0
    %6831 = vmatpush1.msra.mxu0 0.0
    %6832 = vmatprep.subr.mxu0 0.0
    %6833 = vmatpush1.msra.mxu0 0.0
    %6834 = vmatprep.subr.mxu0 0.0
    %6835 = vmatpush1.msra.mxu0 0.0
    %6836 = vmatprep.subr.mxu0 0.0
    %6837 = vmatpush1.msra.mxu0 0.0
    %6838 = vmatprep.subr.mxu0 0.0
    %6839 = vmatpush1.msra.mxu0 0.0
    %6840 = vmatprep.subr.mxu0 0.0
    %6841 = vmatpush1.msra.mxu0 0.0
    %6842 = vmatprep.subr.mxu0 0.0
    %6843 = vmatpush1.msra.mxu0 0.0
    %6844 = vmatprep.subr.mxu0 0.0
    %6845 = vmatpush1.msra.mxu0 0.0
    %6846 = vmatprep.subr.mxu0 0.0
    %6847 = vmatpush1.msra.mxu0 0.0
    %6848 = vmatprep.subr.mxu0 0.0
    %6849 = vmatpush1.msra.mxu0 0.0
    %6850 = vmatprep.subr.mxu0 0.0
    %6851 = vmatpush1.msra.mxu0 0.0
    %6852 = vmatprep.subr.mxu0 0.0
    %6853 = vmatpush1.msra.mxu0 0.0
    %6854 = vmatprep.subr.mxu0 0.0
    %6855 = vmatpush1.msra.mxu0 %v6825
    %6856 = vmatprep.subr.mxu0 0.0
    %6857 = vmatpush1.msra.mxu0 %v6824
    %6858 = vmatprep.subr.mxu0 0.0
    %6859 = vmatpush1.msra.mxu0 %v6823
    %6860 = vmatprep.subr.mxu0 0.0
    %6861 = vmatpush1.msra.mxu0 %v6822
    %6862 = vmatprep.subr.mxu0 0.0
    %6863 = vmatpush2.msra.mxu0 0.0
    %6864 = vmatprep.subr.mxu0 0.0
    %6865 = vmatpush2.msra.mxu0 0.0
    %6866 = vmatprep.subr.mxu0 0.0
    %6867 = vmatpush2.msra.mxu0 0.0
    %6868 = vmatprep.subr.mxu0 0.0
    %6869 = vmatpush2.msra.mxu0 0.0
    %6870 = vmatprep.subr.mxu0 0.0
    %6871 = vmatpush2.msra.mxu0 0.0
    %6872 = vmatprep.subr.mxu0 0.0
    %6873 = vmatpush2.msra.mxu0 0.0
    %6874 = vmatprep.subr.mxu0 0.0
    %6875 = vmatpush2.msra.mxu0 0.0
    %6876 = vmatprep.subr.mxu0 0.0
    %6877 = vmatpush2.msra.mxu0 0.0
    %6878 = vmatprep.subr.mxu0 0.0
    %6879 = vmatpush2.msra.mxu0 0.0
    %6880 = vmatprep.subr.mxu0 0.0
    %6881 = vmatpush2.msra.mxu0 0.0
    %6882 = vmatprep.subr.mxu0 0.0
    %6883 = vmatpush2.msra.mxu0 0.0
    %6884 = vmatprep.subr.mxu0 0.0
    %6885 = vmatpush2.msra.mxu0 0.0
    %6886 = vmatprep.subr.mxu0 0.0
    %6887 = vmatpush2.msra.mxu0 0.0
    %6888 = vmatprep.subr.mxu0 0.0
    %6889 = vmatpush2.msra.mxu0 0.0
    %6890 = vmatprep.subr.mxu0 0.0
    %6891 = vmatpush2.msra.mxu0 0.0
    %6892 = vmatprep.subr.mxu0 0.0
    %6893 = vmatpush2.msra.mxu0 0.0
    %6894 = vmatprep.mubr.f32.mxu0 0.0
    %6895 = vmatmul.mubr.f32.gmra.mxu0 %v3297
    %v6896 = vpop.f32.mrf.mxu0
    %v6897 = vadd.f32 0.0, %v6896
    %v6898 = vpop.f32.mrf.mxu0
    %6899 = vmatprep.mubr.f32.mxu0 0.0
    %6900 = vmatmul.mubr.f32.gmra.mxu0 %v3300
    %v6901 = vpop.f32.mrf.mxu0
    %v6902 = vadd.f32 0.0, %v6901
    %v6903 = vpop.f32.mrf.mxu0
    %6904 = vmatprep.mubr.f32.mxu0 0.0
    %6905 = vmatmul.mubr.f32.gmra.mxu0 %v3303
    %v6906 = vpop.f32.mrf.mxu0
    %v6907 = vadd.f32 0.0, %v6906
    %v6908 = vpop.f32.mrf.mxu0
    %6909 = vmatprep.mubr.f32.mxu0 0.0
    %6910 = vmatmul.mubr.f32.gmra.mxu0 %v3306
    %v6911 = vpop.f32.mrf.mxu0
    %v6912 = vadd.f32 0.0, %v6911
    %v6913 = vpop.f32.mrf.mxu0
    %6914 = vmatprep.mubr.f32.mxu0 0.0
    %6915 = vmatmul.mubr.f32.gmra.mxu0 %v3309
    %v6916 = vpop.f32.mrf.mxu0
    %v6917 = vadd.f32 0.0, %v6916
    %v6918 = vpop.f32.mrf.mxu0
    %6919 = vmatprep.mubr.f32.mxu0 0.0
    %6920 = vmatmul.mubr.f32.gmra.mxu0 %v3312
    %v6921 = vpop.f32.mrf.mxu0
    %v6922 = vadd.f32 0.0, %v6921
    %v6923 = vpop.f32.mrf.mxu0
    %6924 = vmatprep.mubr.f32.mxu0 0.0
    %6925 = vmatmul.mubr.f32.gmra.mxu0 %v3315
    %v6926 = vpop.f32.mrf.mxu0
    %v6927 = vadd.f32 0.0, %v6926
    %v6928 = vpop.f32.mrf.mxu0
    %6929 = vmatprep.mubr.f32.mxu0 0.0
    %6930 = vmatmul.mubr.f32.gmra.mxu0 %v3318
    %v6931 = vpop.f32.mrf.mxu0
    %v6932 = vadd.f32 0.0, %v6931
    %v6933 = vpop.f32.mrf.mxu0
    %6934 = vmatprep.mubr.f32.mxu0 0.0
    %6935 = vmatmul.mubr.f32.gmra.mxu0 %v3321
    %v6936 = vpop.f32.mrf.mxu0
    %v6937 = vadd.f32 0.0, %v6936
    %v6938 = vpop.f32.mrf.mxu0
    %6939 = vmatprep.mubr.f32.mxu0 0.0
    %6940 = vmatmul.mubr.f32.gmra.mxu0 %v3324
    %v6941 = vpop.f32.mrf.mxu0
    %v6942 = vadd.f32 0.0, %v6941
    %v6943 = vpop.f32.mrf.mxu0
    %6944 = vmatprep.mubr.f32.mxu0 0.0
    %6945 = vmatmul.mubr.f32.gmra.mxu0 %v3327
    %v6946 = vpop.f32.mrf.mxu0
    %v6947 = vadd.f32 0.0, %v6946
    %v6948 = vpop.f32.mrf.mxu0
    %6949 = vmatprep.mubr.f32.mxu0 0.0
    %6950 = vmatmul.mubr.f32.gmra.mxu0 %v3330
    %v6951 = vpop.f32.mrf.mxu0
    %v6952 = vadd.f32 0.0, %v6951
    %v6953 = vpop.f32.mrf.mxu0
    %6954 = vmatprep.mubr.f32.mxu0 0.0
    %6955 = vmatmul.mubr.f32.gmra.mxu0 %v3333
    %v6956 = vpop.f32.mrf.mxu0
    %v6957 = vadd.f32 0.0, %v6956
    %v6958 = vpop.f32.mrf.mxu0
    %6959 = vmatprep.mubr.f32.mxu0 0.0
    %6960 = vmatmul.mubr.f32.gmra.mxu0 %v3336
    %v6961 = vpop.f32.mrf.mxu0
    %v6962 = vadd.f32 0.0, %v6961
    %v6963 = vpop.f32.mrf.mxu0
    %6964 = vmatprep.mubr.f32.mxu0 0.0
    %6965 = vmatmul.mubr.f32.gmra.mxu0 %v3339
    %v6966 = vpop.f32.mrf.mxu0
    %v6967 = vadd.f32 0.0, %v6966
    %v6968 = vpop.f32.mrf.mxu0
    %6969 = vmatprep.mubr.f32.mxu0 0.0
    %6970 = vmatmul.mubr.f32.gmra.mxu0 %v3342
    %v6971 = vpop.f32.mrf.mxu0
    %v6972 = vadd.f32 0.0, %v6971
    %v6973 = vpop.f32.mrf.mxu0
    %6974 = vdwg.mxu0
    %6975 = vmatprep.subr.mxu0 0.0
    %6976 = vmatpush1.msra.mxu0 0.0
    %6977 = vmatprep.subr.mxu0 0.0
    %6978 = vmatpush1.msra.mxu0 0.0
    %6979 = vmatprep.subr.mxu0 0.0
    %6980 = vmatpush1.msra.mxu0 0.0
    %6981 = vmatprep.subr.mxu0 0.0
    %6982 = vmatpush1.msra.mxu0 0.0
    %6983 = vmatprep.subr.mxu0 0.0
    %6984 = vmatpush1.msra.mxu0 0.0
    %6985 = vmatprep.subr.mxu0 0.0
    %6986 = vmatpush1.msra.mxu0 0.0
    %6987 = vmatprep.subr.mxu0 0.0
    %6988 = vmatpush1.msra.mxu0 0.0
    %6989 = vmatprep.subr.mxu0 0.0
    %6990 = vmatpush1.msra.mxu0 0.0
    %6991 = vmatprep.subr.mxu0 0.0
    %6992 = vmatpush1.msra.mxu0 0.0
    %6993 = vmatprep.subr.mxu0 0.0
    %6994 = vmatpush1.msra.mxu0 0.0
    %6995 = vmatprep.subr.mxu0 0.0
    %6996 = vmatpush1.msra.mxu0 0.0
    %6997 = vmatprep.subr.mxu0 0.0
    %6998 = vmatpush1.msra.mxu0 0.0
    %6999 = vmatprep.subr.mxu0 0.0
    %7000 = vmatpush1.msra.mxu0 %v6829
    %7001 = vmatprep.subr.mxu0 0.0
    %7002 = vmatpush1.msra.mxu0 %v6828
    %7003 = vmatprep.subr.mxu0 0.0
    %7004 = vmatpush1.msra.mxu0 %v6827
    %7005 = vmatprep.subr.mxu0 0.0
    %7006 = vmatpush1.msra.mxu0 %v6826
    %7007 = vmatprep.subr.mxu0 0.0
    %7008 = vmatpush2.msra.mxu0 0.0
    %7009 = vmatprep.subr.mxu0 0.0
    %7010 = vmatpush2.msra.mxu0 0.0
    %7011 = vmatprep.subr.mxu0 0.0
    %7012 = vmatpush2.msra.mxu0 0.0
    %7013 = vmatprep.subr.mxu0 0.0
    %7014 = vmatpush2.msra.mxu0 0.0
    %7015 = vmatprep.subr.mxu0 0.0
    %7016 = vmatpush2.msra.mxu0 0.0
    %7017 = vmatprep.subr.mxu0 0.0
    %7018 = vmatpush2.msra.mxu0 0.0
    %7019 = vmatprep.subr.mxu0 0.0
    %7020 = vmatpush2.msra.mxu0 0.0
    %7021 = vmatprep.subr.mxu0 0.0
    %7022 = vmatpush2.msra.mxu0 0.0
    %7023 = vmatprep.subr.mxu0 0.0
    %7024 = vmatpush2.msra.mxu0 0.0
    %7025 = vmatprep.subr.mxu0 0.0
    %7026 = vmatpush2.msra.mxu0 0.0
    %7027 = vmatprep.subr.mxu0 0.0
    %7028 = vmatpush2.msra.mxu0 0.0
    %7029 = vmatprep.subr.mxu0 0.0
    %7030 = vmatpush2.msra.mxu0 0.0
    %7031 = vmatprep.subr.mxu0 0.0
    %7032 = vmatpush2.msra.mxu0 0.0
    %7033 = vmatprep.subr.mxu0 0.0
    %7034 = vmatpush2.msra.mxu0 0.0
    %7035 = vmatprep.subr.mxu0 0.0
    %7036 = vmatpush2.msra.mxu0 0.0
    %7037 = vmatprep.subr.mxu0 0.0
    %7038 = vmatpush2.msra.mxu0 0.0
    %7039 = vmatprep.mubr.f32.mxu0 0.0
    %7040 = vmatmul.mubr.f32.gmra.mxu0 %v3490
    %v7041 = vpop.f32.mrf.mxu0
    %v7042 = vadd.f32 %v6897, %v7041
    %v7043 = vpop.f32.mrf.mxu0
    %7044 = vmatprep.mubr.f32.mxu0 0.0
    %7045 = vmatmul.mubr.f32.gmra.mxu0 %v3493
    %v7046 = vpop.f32.mrf.mxu0
    %v7047 = vadd.f32 %v6902, %v7046
    %v7048 = vpop.f32.mrf.mxu0
    %7049 = vmatprep.mubr.f32.mxu0 0.0
    %7050 = vmatmul.mubr.f32.gmra.mxu0 %v3496
    %v7051 = vpop.f32.mrf.mxu0
    %v7052 = vadd.f32 %v6907, %v7051
    %v7053 = vpop.f32.mrf.mxu0
    %7054 = vmatprep.mubr.f32.mxu0 0.0
    %7055 = vmatmul.mubr.f32.gmra.mxu0 %v3499
    %v7056 = vpop.f32.mrf.mxu0
    %v7057 = vadd.f32 %v6912, %v7056
    %v7058 = vpop.f32.mrf.mxu0
    %7059 = vmatprep.mubr.f32.mxu0 0.0
    %7060 = vmatmul.mubr.f32.gmra.mxu0 %v3502
    %v7061 = vpop.f32.mrf.mxu0
    %v7062 = vadd.f32 %v6917, %v7061
    %v7063 = vpop.f32.mrf.mxu0
    %7064 = vmatprep.mubr.f32.mxu0 0.0
    %7065 = vmatmul.mubr.f32.gmra.mxu0 %v3505
    %v7066 = vpop.f32.mrf.mxu0
    %v7067 = vadd.f32 %v6922, %v7066
    %v7068 = vpop.f32.mrf.mxu0
    %7069 = vmatprep.mubr.f32.mxu0 0.0
    %7070 = vmatmul.mubr.f32.gmra.mxu0 %v3508
    %v7071 = vpop.f32.mrf.mxu0
    %v7072 = vadd.f32 %v6927, %v7071
    %v7073 = vpop.f32.mrf.mxu0
    %7074 = vmatprep.mubr.f32.mxu0 0.0
    %7075 = vmatmul.mubr.f32.gmra.mxu0 %v3511
    %v7076 = vpop.f32.mrf.mxu0
    %v7077 = vadd.f32 %v6932, %v7076
    %v7078 = vpop.f32.mrf.mxu0
    %7079 = vmatprep.mubr.f32.mxu0 0.0
    %7080 = vmatmul.mubr.f32.gmra.mxu0 %v3514
    %v7081 = vpop.f32.mrf.mxu0
    %v7082 = vadd.f32 %v6937, %v7081
    %v7083 = vpop.f32.mrf.mxu0
    %7084 = vmatprep.mubr.f32.mxu0 0.0
    %7085 = vmatmul.mubr.f32.gmra.mxu0 %v3517
    %v7086 = vpop.f32.mrf.mxu0
    %v7087 = vadd.f32 %v6942, %v7086
    %v7088 = vpop.f32.mrf.mxu0
    %7089 = vmatprep.mubr.f32.mxu0 0.0
    %7090 = vmatmul.mubr.f32.gmra.mxu0 %v3520
    %v7091 = vpop.f32.mrf.mxu0
    %v7092 = vadd.f32 %v6947, %v7091
    %v7093 = vpop.f32.mrf.mxu0
    %7094 = vmatprep.mubr.f32.mxu0 0.0
    %7095 = vmatmul.mubr.f32.gmra.mxu0 %v3523
    %v7096 = vpop.f32.mrf.mxu0
    %v7097 = vadd.f32 %v6952, %v7096
    %v7098 = vpop.f32.mrf.mxu0
    %7099 = vmatprep.mubr.f32.mxu0 0.0
    %7100 = vmatmul.mubr.f32.gmra.mxu0 %v3526
    %v7101 = vpop.f32.mrf.mxu0
    %v7102 = vadd.f32 %v6957, %v7101
    %v7103 = vpop.f32.mrf.mxu0
    %7104 = vmatprep.mubr.f32.mxu0 0.0
    %7105 = vmatmul.mubr.f32.gmra.mxu0 %v3529
    %v7106 = vpop.f32.mrf.mxu0
    %v7107 = vadd.f32 %v6962, %v7106
    %v7108 = vpop.f32.mrf.mxu0
    %7109 = vmatprep.mubr.f32.mxu0 0.0
    %7110 = vmatmul.mubr.f32.gmra.mxu0 %v3532
    %v7111 = vpop.f32.mrf.mxu0
    %v7112 = vadd.f32 %v6967, %v7111
    %v7113 = vpop.f32.mrf.mxu0
    %7114 = vmatprep.mubr.f32.mxu0 0.0
    %7115 = vmatmul.mubr.f32.gmra.mxu0 %v3535
    %v7116 = vpop.f32.mrf.mxu0
    %v7117 = vadd.f32 %v6972, %v7116
    %v7118 = vpop.f32.mrf.mxu0
    %7119 = vdwg.mxu0
    %v7120 = vadd.f32 %v7042, %v3215
    %v7121 = vadd.f32 %v7047, %v3220
    %v7122 = vadd.f32 %v7052, %v3225
    %v7123 = vadd.f32 %v7057, %v3230
    %v7124 = vadd.f32 %v7062, %v3235
    %v7125 = vadd.f32 %v7067, %v3240
    %v7126 = vadd.f32 %v7072, %v3245
    %v7127 = vadd.f32 %v7077, %v3250
    %v7128 = vadd.f32 %v7082, %v3255
    %v7129 = vadd.f32 %v7087, %v3260
    %v7130 = vadd.f32 %v7092, %v3265
    %v7131 = vadd.f32 %v7097, %v3270
    %v7132 = vadd.f32 %v7102, %v3275
    %v7133 = vadd.f32 %v7107, %v3280
    %v7134 = vadd.f32 %v7112, %v3285
    %v7135 = vadd.f32 %v7117, %v3290
    %v7136 = vmul.f32 %v7120, 0.5
    %v7137 = vmul.f32 %v7121, 0.5
    %v7138 = vmul.f32 %v7122, 0.5
    %v7139 = vmul.f32 %v7123, 0.5
    %v7140 = vtanh.pop %v7136
    %v7141 = vtanh.pop %v7137
    %v7142 = vtanh.pop %v7138
    %v7143 = vtanh.pop %v7139
    %v7144 = vadd.f32 %v7140, 1.0
    %v7145 = vadd.f32 %v7141, 1.0
    %v7146 = vadd.f32 %v7142, 1.0
    %v7147 = vadd.f32 %v7143, 1.0
    %v7148 = vmul.f32 %v7144, 0.5
    %v7149 = vmul.f32 %v7145, 0.5
    %v7150 = vmul.f32 %v7146, 0.5
    %v7151 = vmul.f32 %v7147, 0.5
    %v7152 = vmul.f32 %v7124, 0.5
    %v7153 = vmul.f32 %v7125, 0.5
    %v7154 = vmul.f32 %v7126, 0.5
    %v7155 = vmul.f32 %v7127, 0.5
    %v7156 = vtanh.pop %v7152
    %v7157 = vtanh.pop %v7153
    %v7158 = vtanh.pop %v7154
    %v7159 = vtanh.pop %v7155
    %v7160 = vadd.f32 %v7156, 1.0
    %v7161 = vadd.f32 %v7157, 1.0
    %v7162 = vadd.f32 %v7158, 1.0
    %v7163 = vadd.f32 %v7159, 1.0
    %v7164 = vmul.f32 %v7160, 0.5
    %v7165 = vmul.f32 %v7161, 0.5
    %v7166 = vmul.f32 %v7162, 0.5
    %v7167 = vmul.f32 %v7163, 0.5
    %v7168 = vtanh.pop %v7128
    %v7169 = vtanh.pop %v7129
    %v7170 = vtanh.pop %v7130
    %v7171 = vtanh.pop %v7131
    %v7172 = vmul.f32 %v7132, 0.5
    %v7173 = vmul.f32 %v7133, 0.5
    %v7174 = vmul.f32 %v7134, 0.5
    %v7175 = vmul.f32 %v7135, 0.5
    %v7176 = vtanh.pop %v7172
    %v7177 = vtanh.pop %v7173
    %v7178 = vtanh.pop %v7174
    %v7179 = vtanh.pop %v7175
    %v7180 = vadd.f32 %v7176, 1.0
    %v7181 = vadd.f32 %v7177, 1.0
    %v7182 = vadd.f32 %v7178, 1.0
    %v7183 = vadd.f32 %v7179, 1.0
    %v7184 = vmul.f32 %v7180, 0.5
    %v7185 = vmul.f32 %v7181, 0.5
    %v7186 = vmul.f32 %v7182, 0.5
    %v7187 = vmul.f32 %v7183, 0.5
    %v7188 = vmul.f32 %v7164, %v6814
    %v7189 = vmul.f32 %v7165, %v6815
    %v7190 = vmul.f32 %v7166, %v6816
    %v7191 = vmul.f32 %v7167, %v6817
    %v7192 = vmul.f32 %v7148, %v7168
    %v7193 = vmul.f32 %v7149, %v7169
    %v7194 = vmul.f32 %v7150, %v7170
    %v7195 = vmul.f32 %v7151, %v7171
    %v7196 = vadd.f32 %v7188, %v7192
    %v7197 = vadd.f32 %v7189, %v7193
    %v7198 = vadd.f32 %v7190, %v7194
    %v7199 = vadd.f32 %v7191, %v7195
    %v7200 = vtanh.pop %v7196
    %v7201 = vtanh.pop %v7197
    %v7202 = vtanh.pop %v7198
    %v7203 = vtanh.pop %v7199
    %v7204 = vmul.f32 %v7184, %v7200
    %v7205 = vmul.f32 %v7185, %v7201
    %v7206 = vmul.f32 %v7186, %v7202
    %v7207 = vmul.f32 %v7187, %v7203
    %v7208 = vld [vmem:[%s2904] sm:$0xff]
    %v7209 = vld [vmem:[%s2904 + $0x8] sm:$0xff]
    %v7210 = vld [vmem:[%s2904 + $0x10] sm:$0xff]
    %v7211 = vld [vmem:[%s2904 + $0x18] sm:$0xff]
    %7212 = vmatprep.subr.mxu0 0.0
    %7213 = vmatpush1.msra.mxu0 0.0
    %7214 = vmatprep.subr.mxu0 0.0
    %7215 = vmatpush1.msra.mxu0 0.0
    %7216 = vmatprep.subr.mxu0 0.0
    %7217 = vmatpush1.msra.mxu0 0.0
    %7218 = vmatprep.subr.mxu0 0.0
    %7219 = vmatpush1.msra.mxu0 0.0
    %7220 = vmatprep.subr.mxu0 0.0
    %7221 = vmatpush1.msra.mxu0 0.0
    %7222 = vmatprep.subr.mxu0 0.0
    %7223 = vmatpush1.msra.mxu0 0.0
    %7224 = vmatprep.subr.mxu0 0.0
    %7225 = vmatpush1.msra.mxu0 0.0
    %7226 = vmatprep.subr.mxu0 0.0
    %7227 = vmatpush1.msra.mxu0 0.0
    %7228 = vmatprep.subr.mxu0 0.0
    %7229 = vmatpush1.msra.mxu0 0.0
    %7230 = vmatprep.subr.mxu0 0.0
    %7231 = vmatpush1.msra.mxu0 0.0
    %7232 = vmatprep.subr.mxu0 0.0
    %7233 = vmatpush1.msra.mxu0 0.0
    %7234 = vmatprep.subr.mxu0 0.0
    %7235 = vmatpush1.msra.mxu0 0.0
    %7236 = vmatprep.subr.mxu0 0.0
    %7237 = vmatpush1.msra.mxu0 %v7207
    %7238 = vmatprep.subr.mxu0 0.0
    %7239 = vmatpush1.msra.mxu0 %v7206
    %7240 = vmatprep.subr.mxu0 0.0
    %7241 = vmatpush1.msra.mxu0 %v7205
    %7242 = vmatprep.subr.mxu0 0.0
    %7243 = vmatpush1.msra.mxu0 %v7204
    %7244 = vmatprep.subr.mxu0 0.0
    %7245 = vmatpush2.msra.mxu0 0.0
    %7246 = vmatprep.subr.mxu0 0.0
    %7247 = vmatpush2.msra.mxu0 0.0
    %7248 = vmatprep.subr.mxu0 0.0
    %7249 = vmatpush2.msra.mxu0 0.0
    %7250 = vmatprep.subr.mxu0 0.0
    %7251 = vmatpush2.msra.mxu0 0.0
    %7252 = vmatprep.subr.mxu0 0.0
    %7253 = vmatpush2.msra.mxu0 0.0
    %7254 = vmatprep.subr.mxu0 0.0
    %7255 = vmatpush2.msra.mxu0 0.0
    %7256 = vmatprep.subr.mxu0 0.0
    %7257 = vmatpush2.msra.mxu0 0.0
    %7258 = vmatprep.subr.mxu0 0.0
    %7259 = vmatpush2.msra.mxu0 0.0
    %7260 = vmatprep.subr.mxu0 0.0
    %7261 = vmatpush2.msra.mxu0 0.0
    %7262 = vmatprep.subr.mxu0 0.0
    %7263 = vmatpush2.msra.mxu0 0.0
    %7264 = vmatprep.subr.mxu0 0.0
    %7265 = vmatpush2.msra.mxu0 0.0
    %7266 = vmatprep.subr.mxu0 0.0
    %7267 = vmatpush2.msra.mxu0 0.0
    %7268 = vmatprep.subr.mxu0 0.0
    %7269 = vmatpush2.msra.mxu0 0.0
    %7270 = vmatprep.subr.mxu0 0.0
    %7271 = vmatpush2.msra.mxu0 0.0
    %7272 = vmatprep.subr.mxu0 0.0
    %7273 = vmatpush2.msra.mxu0 0.0
    %7274 = vmatprep.subr.mxu0 0.0
    %7275 = vmatpush2.msra.mxu0 0.0
    %7276 = vmatprep.mubr.f32.mxu0 0.0
    %7277 = vmatmul.mubr.f32.gmra.mxu0 %v3297
    %v7278 = vpop.f32.mrf.mxu0
    %v7279 = vadd.f32 0.0, %v7278
    %v7280 = vpop.f32.mrf.mxu0
    %7281 = vmatprep.mubr.f32.mxu0 0.0
    %7282 = vmatmul.mubr.f32.gmra.mxu0 %v3300
    %v7283 = vpop.f32.mrf.mxu0
    %v7284 = vadd.f32 0.0, %v7283
    %v7285 = vpop.f32.mrf.mxu0
    %7286 = vmatprep.mubr.f32.mxu0 0.0
    %7287 = vmatmul.mubr.f32.gmra.mxu0 %v3303
    %v7288 = vpop.f32.mrf.mxu0
    %v7289 = vadd.f32 0.0, %v7288
    %v7290 = vpop.f32.mrf.mxu0
    %7291 = vmatprep.mubr.f32.mxu0 0.0
    %7292 = vmatmul.mubr.f32.gmra.mxu0 %v3306
    %v7293 = vpop.f32.mrf.mxu0
    %v7294 = vadd.f32 0.0, %v7293
    %v7295 = vpop.f32.mrf.mxu0
    %7296 = vmatprep.mubr.f32.mxu0 0.0
    %7297 = vmatmul.mubr.f32.gmra.mxu0 %v3309
    %v7298 = vpop.f32.mrf.mxu0
    %v7299 = vadd.f32 0.0, %v7298
    %v7300 = vpop.f32.mrf.mxu0
    %7301 = vmatprep.mubr.f32.mxu0 0.0
    %7302 = vmatmul.mubr.f32.gmra.mxu0 %v3312
    %v7303 = vpop.f32.mrf.mxu0
    %v7304 = vadd.f32 0.0, %v7303
    %v7305 = vpop.f32.mrf.mxu0
    %7306 = vmatprep.mubr.f32.mxu0 0.0
    %7307 = vmatmul.mubr.f32.gmra.mxu0 %v3315
    %v7308 = vpop.f32.mrf.mxu0
    %v7309 = vadd.f32 0.0, %v7308
    %v7310 = vpop.f32.mrf.mxu0
    %7311 = vmatprep.mubr.f32.mxu0 0.0
    %7312 = vmatmul.mubr.f32.gmra.mxu0 %v3318
    %v7313 = vpop.f32.mrf.mxu0
    %v7314 = vadd.f32 0.0, %v7313
    %v7315 = vpop.f32.mrf.mxu0
    %7316 = vmatprep.mubr.f32.mxu0 0.0
    %7317 = vmatmul.mubr.f32.gmra.mxu0 %v3321
    %v7318 = vpop.f32.mrf.mxu0
    %v7319 = vadd.f32 0.0, %v7318
    %v7320 = vpop.f32.mrf.mxu0
    %7321 = vmatprep.mubr.f32.mxu0 0.0
    %7322 = vmatmul.mubr.f32.gmra.mxu0 %v3324
    %v7323 = vpop.f32.mrf.mxu0
    %v7324 = vadd.f32 0.0, %v7323
    %v7325 = vpop.f32.mrf.mxu0
    %7326 = vmatprep.mubr.f32.mxu0 0.0
    %7327 = vmatmul.mubr.f32.gmra.mxu0 %v3327
    %v7328 = vpop.f32.mrf.mxu0
    %v7329 = vadd.f32 0.0, %v7328
    %v7330 = vpop.f32.mrf.mxu0
    %7331 = vmatprep.mubr.f32.mxu0 0.0
    %7332 = vmatmul.mubr.f32.gmra.mxu0 %v3330
    %v7333 = vpop.f32.mrf.mxu0
    %v7334 = vadd.f32 0.0, %v7333
    %v7335 = vpop.f32.mrf.mxu0
    %7336 = vmatprep.mubr.f32.mxu0 0.0
    %7337 = vmatmul.mubr.f32.gmra.mxu0 %v3333
    %v7338 = vpop.f32.mrf.mxu0
    %v7339 = vadd.f32 0.0, %v7338
    %v7340 = vpop.f32.mrf.mxu0
    %7341 = vmatprep.mubr.f32.mxu0 0.0
    %7342 = vmatmul.mubr.f32.gmra.mxu0 %v3336
    %v7343 = vpop.f32.mrf.mxu0
    %v7344 = vadd.f32 0.0, %v7343
    %v7345 = vpop.f32.mrf.mxu0
    %7346 = vmatprep.mubr.f32.mxu0 0.0
    %7347 = vmatmul.mubr.f32.gmra.mxu0 %v3339
    %v7348 = vpop.f32.mrf.mxu0
    %v7349 = vadd.f32 0.0, %v7348
    %v7350 = vpop.f32.mrf.mxu0
    %7351 = vmatprep.mubr.f32.mxu0 0.0
    %7352 = vmatmul.mubr.f32.gmra.mxu0 %v3342
    %v7353 = vpop.f32.mrf.mxu0
    %v7354 = vadd.f32 0.0, %v7353
    %v7355 = vpop.f32.mrf.mxu0
    %7356 = vdwg.mxu0
    %7357 = vmatprep.subr.mxu0 0.0
    %7358 = vmatpush1.msra.mxu0 0.0
    %7359 = vmatprep.subr.mxu0 0.0
    %7360 = vmatpush1.msra.mxu0 0.0
    %7361 = vmatprep.subr.mxu0 0.0
    %7362 = vmatpush1.msra.mxu0 0.0
    %7363 = vmatprep.subr.mxu0 0.0
    %7364 = vmatpush1.msra.mxu0 0.0
    %7365 = vmatprep.subr.mxu0 0.0
    %7366 = vmatpush1.msra.mxu0 0.0
    %7367 = vmatprep.subr.mxu0 0.0
    %7368 = vmatpush1.msra.mxu0 0.0
    %7369 = vmatprep.subr.mxu0 0.0
    %7370 = vmatpush1.msra.mxu0 0.0
    %7371 = vmatprep.subr.mxu0 0.0
    %7372 = vmatpush1.msra.mxu0 0.0
    %7373 = vmatprep.subr.mxu0 0.0
    %7374 = vmatpush1.msra.mxu0 0.0
    %7375 = vmatprep.subr.mxu0 0.0
    %7376 = vmatpush1.msra.mxu0 0.0
    %7377 = vmatprep.subr.mxu0 0.0
    %7378 = vmatpush1.msra.mxu0 0.0
    %7379 = vmatprep.subr.mxu0 0.0
    %7380 = vmatpush1.msra.mxu0 0.0
    %7381 = vmatprep.subr.mxu0 0.0
    %7382 = vmatpush1.msra.mxu0 %v7211
    %7383 = vmatprep.subr.mxu0 0.0
    %7384 = vmatpush1.msra.mxu0 %v7210
    %7385 = vmatprep.subr.mxu0 0.0
    %7386 = vmatpush1.msra.mxu0 %v7209
    %7387 = vmatprep.subr.mxu0 0.0
    %7388 = vmatpush1.msra.mxu0 %v7208
    %7389 = vmatprep.subr.mxu0 0.0
    %7390 = vmatpush2.msra.mxu0 0.0
    %7391 = vmatprep.subr.mxu0 0.0
    %7392 = vmatpush2.msra.mxu0 0.0
    %7393 = vmatprep.subr.mxu0 0.0
    %7394 = vmatpush2.msra.mxu0 0.0
    %7395 = vmatprep.subr.mxu0 0.0
    %7396 = vmatpush2.msra.mxu0 0.0
    %7397 = vmatprep.subr.mxu0 0.0
    %7398 = vmatpush2.msra.mxu0 0.0
    %7399 = vmatprep.subr.mxu0 0.0
    %7400 = vmatpush2.msra.mxu0 0.0
    %7401 = vmatprep.subr.mxu0 0.0
    %7402 = vmatpush2.msra.mxu0 0.0
    %7403 = vmatprep.subr.mxu0 0.0
    %7404 = vmatpush2.msra.mxu0 0.0
    %7405 = vmatprep.subr.mxu0 0.0
    %7406 = vmatpush2.msra.mxu0 0.0
    %7407 = vmatprep.subr.mxu0 0.0
    %7408 = vmatpush2.msra.mxu0 0.0
    %7409 = vmatprep.subr.mxu0 0.0
    %7410 = vmatpush2.msra.mxu0 0.0
    %7411 = vmatprep.subr.mxu0 0.0
    %7412 = vmatpush2.msra.mxu0 0.0
    %7413 = vmatprep.subr.mxu0 0.0
    %7414 = vmatpush2.msra.mxu0 0.0
    %7415 = vmatprep.subr.mxu0 0.0
    %7416 = vmatpush2.msra.mxu0 0.0
    %7417 = vmatprep.subr.mxu0 0.0
    %7418 = vmatpush2.msra.mxu0 0.0
    %7419 = vmatprep.subr.mxu0 0.0
    %7420 = vmatpush2.msra.mxu0 0.0
    %7421 = vmatprep.mubr.f32.mxu0 0.0
    %7422 = vmatmul.mubr.f32.gmra.mxu0 %v3490
    %v7423 = vpop.f32.mrf.mxu0
    %v7424 = vadd.f32 %v7279, %v7423
    %v7425 = vpop.f32.mrf.mxu0
    %7426 = vmatprep.mubr.f32.mxu0 0.0
    %7427 = vmatmul.mubr.f32.gmra.mxu0 %v3493
    %v7428 = vpop.f32.mrf.mxu0
    %v7429 = vadd.f32 %v7284, %v7428
    %v7430 = vpop.f32.mrf.mxu0
    %7431 = vmatprep.mubr.f32.mxu0 0.0
    %7432 = vmatmul.mubr.f32.gmra.mxu0 %v3496
    %v7433 = vpop.f32.mrf.mxu0
    %v7434 = vadd.f32 %v7289, %v7433
    %v7435 = vpop.f32.mrf.mxu0
    %7436 = vmatprep.mubr.f32.mxu0 0.0
    %7437 = vmatmul.mubr.f32.gmra.mxu0 %v3499
    %v7438 = vpop.f32.mrf.mxu0
    %v7439 = vadd.f32 %v7294, %v7438
    %v7440 = vpop.f32.mrf.mxu0
    %7441 = vmatprep.mubr.f32.mxu0 0.0
    %7442 = vmatmul.mubr.f32.gmra.mxu0 %v3502
    %v7443 = vpop.f32.mrf.mxu0
    %v7444 = vadd.f32 %v7299, %v7443
    %v7445 = vpop.f32.mrf.mxu0
    %7446 = vmatprep.mubr.f32.mxu0 0.0
    %7447 = vmatmul.mubr.f32.gmra.mxu0 %v3505
    %v7448 = vpop.f32.mrf.mxu0
    %v7449 = vadd.f32 %v7304, %v7448
    %v7450 = vpop.f32.mrf.mxu0
    %7451 = vmatprep.mubr.f32.mxu0 0.0
    %7452 = vmatmul.mubr.f32.gmra.mxu0 %v3508
    %v7453 = vpop.f32.mrf.mxu0
    %v7454 = vadd.f32 %v7309, %v7453
    %v7455 = vpop.f32.mrf.mxu0
    %7456 = vmatprep.mubr.f32.mxu0 0.0
    %7457 = vmatmul.mubr.f32.gmra.mxu0 %v3511
    %v7458 = vpop.f32.mrf.mxu0
    %v7459 = vadd.f32 %v7314, %v7458
    %v7460 = vpop.f32.mrf.mxu0
    %7461 = vmatprep.mubr.f32.mxu0 0.0
    %7462 = vmatmul.mubr.f32.gmra.mxu0 %v3514
    %v7463 = vpop.f32.mrf.mxu0
    %v7464 = vadd.f32 %v7319, %v7463
    %v7465 = vpop.f32.mrf.mxu0
    %7466 = vmatprep.mubr.f32.mxu0 0.0
    %7467 = vmatmul.mubr.f32.gmra.mxu0 %v3517
    %v7468 = vpop.f32.mrf.mxu0
    %v7469 = vadd.f32 %v7324, %v7468
    %v7470 = vpop.f32.mrf.mxu0
    %7471 = vmatprep.mubr.f32.mxu0 0.0
    %7472 = vmatmul.mubr.f32.gmra.mxu0 %v3520
    %v7473 = vpop.f32.mrf.mxu0
    %v7474 = vadd.f32 %v7329, %v7473
    %v7475 = vpop.f32.mrf.mxu0
    %7476 = vmatprep.mubr.f32.mxu0 0.0
    %7477 = vmatmul.mubr.f32.gmra.mxu0 %v3523
    %v7478 = vpop.f32.mrf.mxu0
    %v7479 = vadd.f32 %v7334, %v7478
    %v7480 = vpop.f32.mrf.mxu0
    %7481 = vmatprep.mubr.f32.mxu0 0.0
    %7482 = vmatmul.mubr.f32.gmra.mxu0 %v3526
    %v7483 = vpop.f32.mrf.mxu0
    %v7484 = vadd.f32 %v7339, %v7483
    %v7485 = vpop.f32.mrf.mxu0
    %7486 = vmatprep.mubr.f32.mxu0 0.0
    %7487 = vmatmul.mubr.f32.gmra.mxu0 %v3529
    %v7488 = vpop.f32.mrf.mxu0
    %v7489 = vadd.f32 %v7344, %v7488
    %v7490 = vpop.f32.mrf.mxu0
    %7491 = vmatprep.mubr.f32.mxu0 0.0
    %7492 = vmatmul.mubr.f32.gmra.mxu0 %v3532
    %v7493 = vpop.f32.mrf.mxu0
    %v7494 = vadd.f32 %v7349, %v7493
    %v7495 = vpop.f32.mrf.mxu0
    %7496 = vmatprep.mubr.f32.mxu0 0.0
    %7497 = vmatmul.mubr.f32.gmra.mxu0 %v3535
    %v7498 = vpop.f32.mrf.mxu0
    %v7499 = vadd.f32 %v7354, %v7498
    %v7500 = vpop.f32.mrf.mxu0
    %7501 = vdwg.mxu0
    %v7502 = vadd.f32 %v7424, %v3215
    %v7503 = vadd.f32 %v7429, %v3220
    %v7504 = vadd.f32 %v7434, %v3225
    %v7505 = vadd.f32 %v7439, %v3230
    %v7506 = vadd.f32 %v7444, %v3235
    %v7507 = vadd.f32 %v7449, %v3240
    %v7508 = vadd.f32 %v7454, %v3245
    %v7509 = vadd.f32 %v7459, %v3250
    %v7510 = vadd.f32 %v7464, %v3255
    %v7511 = vadd.f32 %v7469, %v3260
    %v7512 = vadd.f32 %v7474, %v3265
    %v7513 = vadd.f32 %v7479, %v3270
    %v7514 = vadd.f32 %v7484, %v3275
    %v7515 = vadd.f32 %v7489, %v3280
    %v7516 = vadd.f32 %v7494, %v3285
    %v7517 = vadd.f32 %v7499, %v3290
    %v7518 = vmul.f32 %v7502, 0.5
    %v7519 = vmul.f32 %v7503, 0.5
    %v7520 = vmul.f32 %v7504, 0.5
    %v7521 = vmul.f32 %v7505, 0.5
    %v7522 = vtanh.pop %v7518
    %v7523 = vtanh.pop %v7519
    %v7524 = vtanh.pop %v7520
    %v7525 = vtanh.pop %v7521
    %v7526 = vadd.f32 %v7522, 1.0
    %v7527 = vadd.f32 %v7523, 1.0
    %v7528 = vadd.f32 %v7524, 1.0
    %v7529 = vadd.f32 %v7525, 1.0
    %v7530 = vmul.f32 %v7526, 0.5
    %v7531 = vmul.f32 %v7527, 0.5
    %v7532 = vmul.f32 %v7528, 0.5
    %v7533 = vmul.f32 %v7529, 0.5
    %v7534 = vmul.f32 %v7506, 0.5
    %v7535 = vmul.f32 %v7507, 0.5
    %v7536 = vmul.f32 %v7508, 0.5
    %v7537 = vmul.f32 %v7509, 0.5
    %v7538 = vtanh.pop %v7534
    %v7539 = vtanh.pop %v7535
    %v7540 = vtanh.pop %v7536
    %v7541 = vtanh.pop %v7537
    %v7542 = vadd.f32 %v7538, 1.0
    %v7543 = vadd.f32 %v7539, 1.0
    %v7544 = vadd.f32 %v7540, 1.0
    %v7545 = vadd.f32 %v7541, 1.0
    %v7546 = vmul.f32 %v7542, 0.5
    %v7547 = vmul.f32 %v7543, 0.5
    %v7548 = vmul.f32 %v7544, 0.5
    %v7549 = vmul.f32 %v7545, 0.5
    %v7550 = vtanh.pop %v7510
    %v7551 = vtanh.pop %v7511
    %v7552 = vtanh.pop %v7512
    %v7553 = vtanh.pop %v7513
    %v7554 = vmul.f32 %v7514, 0.5
    %v7555 = vmul.f32 %v7515, 0.5
    %v7556 = vmul.f32 %v7516, 0.5
    %v7557 = vmul.f32 %v7517, 0.5
    %v7558 = vtanh.pop %v7554
    %v7559 = vtanh.pop %v7555
    %v7560 = vtanh.pop %v7556
    %v7561 = vtanh.pop %v7557
    %v7562 = vadd.f32 %v7558, 1.0
    %v7563 = vadd.f32 %v7559, 1.0
    %v7564 = vadd.f32 %v7560, 1.0
    %v7565 = vadd.f32 %v7561, 1.0
    %v7566 = vmul.f32 %v7562, 0.5
    %v7567 = vmul.f32 %v7563, 0.5
    %v7568 = vmul.f32 %v7564, 0.5
    %v7569 = vmul.f32 %v7565, 0.5
    %v7570 = vmul.f32 %v7546, %v7196
    %v7571 = vmul.f32 %v7547, %v7197
    %v7572 = vmul.f32 %v7548, %v7198
    %v7573 = vmul.f32 %v7549, %v7199
    %v7574 = vmul.f32 %v7530, %v7550
    %v7575 = vmul.f32 %v7531, %v7551
    %v7576 = vmul.f32 %v7532, %v7552
    %v7577 = vmul.f32 %v7533, %v7553
    %v7578 = vadd.f32 %v7570, %v7574
    %v7579 = vadd.f32 %v7571, %v7575
    %v7580 = vadd.f32 %v7572, %v7576
    %v7581 = vadd.f32 %v7573, %v7577
    %v7582 = vtanh.pop %v7578
    %v7583 = vtanh.pop %v7579
    %v7584 = vtanh.pop %v7580
    %v7585 = vtanh.pop %v7581
    %v7586 = vmul.f32 %v7566, %v7582
    %v7587 = vmul.f32 %v7567, %v7583
    %v7588 = vmul.f32 %v7568, %v7584
    %v7589 = vmul.f32 %v7569, %v7585
    %v7590 = vld [vmem:[%s3159] sm:$0xff]
    %v7591 = vld [vmem:[%s3159 + $0x8] sm:$0xff]
    %v7592 = vld [vmem:[%s3159 + $0x10] sm:$0xff]
    %v7593 = vld [vmem:[%s3159 + $0x18] sm:$0xff]
    %7594 = vmatprep.subr.mxu0 0.0
    %7595 = vmatpush1.msra.mxu0 0.0
    %7596 = vmatprep.subr.mxu0 0.0
    %7597 = vmatpush1.msra.mxu0 0.0
    %7598 = vmatprep.subr.mxu0 0.0
    %7599 = vmatpush1.msra.mxu0 0.0
    %7600 = vmatprep.subr.mxu0 0.0
    %7601 = vmatpush1.msra.mxu0 0.0
    %7602 = vmatprep.subr.mxu0 0.0
    %7603 = vmatpush1.msra.mxu0 0.0
    %7604 = vmatprep.subr.mxu0 0.0
    %7605 = vmatpush1.msra.mxu0 0.0
    %7606 = vmatprep.subr.mxu0 0.0
    %7607 = vmatpush1.msra.mxu0 0.0
    %7608 = vmatprep.subr.mxu0 0.0
    %7609 = vmatpush1.msra.mxu0 0.0
    %7610 = vmatprep.subr.mxu0 0.0
    %7611 = vmatpush1.msra.mxu0 0.0
    %7612 = vmatprep.subr.mxu0 0.0
    %7613 = vmatpush1.msra.mxu0 0.0
    %7614 = vmatprep.subr.mxu0 0.0
    %7615 = vmatpush1.msra.mxu0 0.0
    %7616 = vmatprep.subr.mxu0 0.0
    %7617 = vmatpush1.msra.mxu0 0.0
    %7618 = vmatprep.subr.mxu0 0.0
    %7619 = vmatpush1.msra.mxu0 %v7589
    %7620 = vmatprep.subr.mxu0 0.0
    %7621 = vmatpush1.msra.mxu0 %v7588
    %7622 = vmatprep.subr.mxu0 0.0
    %7623 = vmatpush1.msra.mxu0 %v7587
    %7624 = vmatprep.subr.mxu0 0.0
    %7625 = vmatpush1.msra.mxu0 %v7586
    %7626 = vmatprep.subr.mxu0 0.0
    %7627 = vmatpush2.msra.mxu0 0.0
    %7628 = vmatprep.subr.mxu0 0.0
    %7629 = vmatpush2.msra.mxu0 0.0
    %7630 = vmatprep.subr.mxu0 0.0
    %7631 = vmatpush2.msra.mxu0 0.0
    %7632 = vmatprep.subr.mxu0 0.0
    %7633 = vmatpush2.msra.mxu0 0.0
    %7634 = vmatprep.subr.mxu0 0.0
    %7635 = vmatpush2.msra.mxu0 0.0
    %7636 = vmatprep.subr.mxu0 0.0
    %7637 = vmatpush2.msra.mxu0 0.0
    %7638 = vmatprep.subr.mxu0 0.0
    %7639 = vmatpush2.msra.mxu0 0.0
    %7640 = vmatprep.subr.mxu0 0.0
    %7641 = vmatpush2.msra.mxu0 0.0
    %7642 = vmatprep.subr.mxu0 0.0
    %7643 = vmatpush2.msra.mxu0 0.0
    %7644 = vmatprep.subr.mxu0 0.0
    %7645 = vmatpush2.msra.mxu0 0.0
    %7646 = vmatprep.subr.mxu0 0.0
    %7647 = vmatpush2.msra.mxu0 0.0
    %7648 = vmatprep.subr.mxu0 0.0
    %7649 = vmatpush2.msra.mxu0 0.0
    %7650 = vmatprep.subr.mxu0 0.0
    %7651 = vmatpush2.msra.mxu0 0.0
    %7652 = vmatprep.subr.mxu0 0.0
    %7653 = vmatpush2.msra.mxu0 0.0
    %7654 = vmatprep.subr.mxu0 0.0
    %7655 = vmatpush2.msra.mxu0 0.0
    %7656 = vmatprep.subr.mxu0 0.0
    %7657 = vmatpush2.msra.mxu0 0.0
    %7658 = vmatprep.mubr.f32.mxu0 0.0
    %7659 = vmatmul.mubr.f32.gmra.mxu0 %v3297
    %v7660 = vpop.f32.mrf.mxu0
    %v7661 = vadd.f32 0.0, %v7660
    %v7662 = vpop.f32.mrf.mxu0
    %7663 = vmatprep.mubr.f32.mxu0 0.0
    %7664 = vmatmul.mubr.f32.gmra.mxu0 %v3300
    %v7665 = vpop.f32.mrf.mxu0
    %v7666 = vadd.f32 0.0, %v7665
    %v7667 = vpop.f32.mrf.mxu0
    %7668 = vmatprep.mubr.f32.mxu0 0.0
    %7669 = vmatmul.mubr.f32.gmra.mxu0 %v3303
    %v7670 = vpop.f32.mrf.mxu0
    %v7671 = vadd.f32 0.0, %v7670
    %v7672 = vpop.f32.mrf.mxu0
    %7673 = vmatprep.mubr.f32.mxu0 0.0
    %7674 = vmatmul.mubr.f32.gmra.mxu0 %v3306
    %v7675 = vpop.f32.mrf.mxu0
    %v7676 = vadd.f32 0.0, %v7675
    %v7677 = vpop.f32.mrf.mxu0
    %7678 = vmatprep.mubr.f32.mxu0 0.0
    %7679 = vmatmul.mubr.f32.gmra.mxu0 %v3309
    %v7680 = vpop.f32.mrf.mxu0
    %v7681 = vadd.f32 0.0, %v7680
    %v7682 = vpop.f32.mrf.mxu0
    %7683 = vmatprep.mubr.f32.mxu0 0.0
    %7684 = vmatmul.mubr.f32.gmra.mxu0 %v3312
    %v7685 = vpop.f32.mrf.mxu0
    %v7686 = vadd.f32 0.0, %v7685
    %v7687 = vpop.f32.mrf.mxu0
    %7688 = vmatprep.mubr.f32.mxu0 0.0
    %7689 = vmatmul.mubr.f32.gmra.mxu0 %v3315
    %v7690 = vpop.f32.mrf.mxu0
    %v7691 = vadd.f32 0.0, %v7690
    %v7692 = vpop.f32.mrf.mxu0
    %7693 = vmatprep.mubr.f32.mxu0 0.0
    %7694 = vmatmul.mubr.f32.gmra.mxu0 %v3318
    %v7695 = vpop.f32.mrf.mxu0
    %v7696 = vadd.f32 0.0, %v7695
    %v7697 = vpop.f32.mrf.mxu0
    %7698 = vmatprep.mubr.f32.mxu0 0.0
    %7699 = vmatmul.mubr.f32.gmra.mxu0 %v3321
    %v7700 = vpop.f32.mrf.mxu0
    %v7701 = vadd.f32 0.0, %v7700
    %v7702 = vpop.f32.mrf.mxu0
    %7703 = vmatprep.mubr.f32.mxu0 0.0
    %7704 = vmatmul.mubr.f32.gmra.mxu0 %v3324
    %v7705 = vpop.f32.mrf.mxu0
    %v7706 = vadd.f32 0.0, %v7705
    %v7707 = vpop.f32.mrf.mxu0
    %7708 = vmatprep.mubr.f32.mxu0 0.0
    %7709 = vmatmul.mubr.f32.gmra.mxu0 %v3327
    %v7710 = vpop.f32.mrf.mxu0
    %v7711 = vadd.f32 0.0, %v7710
    %v7712 = vpop.f32.mrf.mxu0
    %7713 = vmatprep.mubr.f32.mxu0 0.0
    %7714 = vmatmul.mubr.f32.gmra.mxu0 %v3330
    %v7715 = vpop.f32.mrf.mxu0
    %v7716 = vadd.f32 0.0, %v7715
    %v7717 = vpop.f32.mrf.mxu0
    %7718 = vmatprep.mubr.f32.mxu0 0.0
    %7719 = vmatmul.mubr.f32.gmra.mxu0 %v3333
    %v7720 = vpop.f32.mrf.mxu0
    %v7721 = vadd.f32 0.0, %v7720
    %v7722 = vpop.f32.mrf.mxu0
    %7723 = vmatprep.mubr.f32.mxu0 0.0
    %7724 = vmatmul.mubr.f32.gmra.mxu0 %v3336
    %v7725 = vpop.f32.mrf.mxu0
    %v7726 = vadd.f32 0.0, %v7725
    %v7727 = vpop.f32.mrf.mxu0
    %7728 = vmatprep.mubr.f32.mxu0 0.0
    %7729 = vmatmul.mubr.f32.gmra.mxu0 %v3339
    %v7730 = vpop.f32.mrf.mxu0
    %v7731 = vadd.f32 0.0, %v7730
    %v7732 = vpop.f32.mrf.mxu0
    %7733 = vmatprep.mubr.f32.mxu0 0.0
    %7734 = vmatmul.mubr.f32.gmra.mxu0 %v3342
    %v7735 = vpop.f32.mrf.mxu0
    %v7736 = vadd.f32 0.0, %v7735
    %v7737 = vpop.f32.mrf.mxu0
    %7738 = vdwg.mxu0
    %7739 = vmatprep.subr.mxu0 0.0
    %7740 = vmatpush1.msra.mxu0 0.0
    %7741 = vmatprep.subr.mxu0 0.0
    %7742 = vmatpush1.msra.mxu0 0.0
    %7743 = vmatprep.subr.mxu0 0.0
    %7744 = vmatpush1.msra.mxu0 0.0
    %7745 = vmatprep.subr.mxu0 0.0
    %7746 = vmatpush1.msra.mxu0 0.0
    %7747 = vmatprep.subr.mxu0 0.0
    %7748 = vmatpush1.msra.mxu0 0.0
    %7749 = vmatprep.subr.mxu0 0.0
    %7750 = vmatpush1.msra.mxu0 0.0
    %7751 = vmatprep.subr.mxu0 0.0
    %7752 = vmatpush1.msra.mxu0 0.0
    %7753 = vmatprep.subr.mxu0 0.0
    %7754 = vmatpush1.msra.mxu0 0.0
    %7755 = vmatprep.subr.mxu0 0.0
    %7756 = vmatpush1.msra.mxu0 0.0
    %7757 = vmatprep.subr.mxu0 0.0
    %7758 = vmatpush1.msra.mxu0 0.0
    %7759 = vmatprep.subr.mxu0 0.0
    %7760 = vmatpush1.msra.mxu0 0.0
    %7761 = vmatprep.subr.mxu0 0.0
    %7762 = vmatpush1.msra.mxu0 0.0
    %7763 = vmatprep.subr.mxu0 0.0
    %7764 = vmatpush1.msra.mxu0 %v7593
    %7765 = vmatprep.subr.mxu0 0.0
    %7766 = vmatpush1.msra.mxu0 %v7592
    %7767 = vmatprep.subr.mxu0 0.0
    %7768 = vmatpush1.msra.mxu0 %v7591
    %7769 = vmatprep.subr.mxu0 0.0
    %7770 = vmatpush1.msra.mxu0 %v7590
    %7771 = vmatprep.subr.mxu0 0.0
    %7772 = vmatpush2.msra.mxu0 0.0
    %7773 = vmatprep.subr.mxu0 0.0
    %7774 = vmatpush2.msra.mxu0 0.0
    %7775 = vmatprep.subr.mxu0 0.0
    %7776 = vmatpush2.msra.mxu0 0.0
    %7777 = vmatprep.subr.mxu0 0.0
    %7778 = vmatpush2.msra.mxu0 0.0
    %7779 = vmatprep.subr.mxu0 0.0
    %7780 = vmatpush2.msra.mxu0 0.0
    %7781 = vmatprep.subr.mxu0 0.0
    %7782 = vmatpush2.msra.mxu0 0.0
    %7783 = vmatprep.subr.mxu0 0.0
    %7784 = vmatpush2.msra.mxu0 0.0
    %7785 = vmatprep.subr.mxu0 0.0
    %7786 = vmatpush2.msra.mxu0 0.0
    %7787 = vmatprep.subr.mxu0 0.0
    %7788 = vmatpush2.msra.mxu0 0.0
    %7789 = vmatprep.subr.mxu0 0.0
    %7790 = vmatpush2.msra.mxu0 0.0
    %7791 = vmatprep.subr.mxu0 0.0
    %7792 = vmatpush2.msra.mxu0 0.0
    %7793 = vmatprep.subr.mxu0 0.0
    %7794 = vmatpush2.msra.mxu0 0.0
    %7795 = vmatprep.subr.mxu0 0.0
    %7796 = vmatpush2.msra.mxu0 0.0
    %7797 = vmatprep.subr.mxu0 0.0
    %7798 = vmatpush2.msra.mxu0 0.0
    %7799 = vmatprep.subr.mxu0 0.0
    %7800 = vmatpush2.msra.mxu0 0.0
    %7801 = vmatprep.subr.mxu0 0.0
    %7802 = vmatpush2.msra.mxu0 0.0
    %7803 = vmatprep.mubr.f32.mxu0 0.0
    %7804 = vmatmul.mubr.f32.gmra.mxu0 %v3490
    %v7805 = vpop.f32.mrf.mxu0
    %v7806 = vadd.f32 %v7661, %v7805
    %v7807 = vpop.f32.mrf.mxu0
    %7808 = vmatprep.mubr.f32.mxu0 0.0
    %7809 = vmatmul.mubr.f32.gmra.mxu0 %v3493
    %v7810 = vpop.f32.mrf.mxu0
    %v7811 = vadd.f32 %v7666, %v7810
    %v7812 = vpop.f32.mrf.mxu0
    %7813 = vmatprep.mubr.f32.mxu0 0.0
    %7814 = vmatmul.mubr.f32.gmra.mxu0 %v3496
    %v7815 = vpop.f32.mrf.mxu0
    %v7816 = vadd.f32 %v7671, %v7815
    %v7817 = vpop.f32.mrf.mxu0
    %7818 = vmatprep.mubr.f32.mxu0 0.0
    %7819 = vmatmul.mubr.f32.gmra.mxu0 %v3499
    %v7820 = vpop.f32.mrf.mxu0
    %v7821 = vadd.f32 %v7676, %v7820
    %v7822 = vpop.f32.mrf.mxu0
    %7823 = vmatprep.mubr.f32.mxu0 0.0
    %7824 = vmatmul.mubr.f32.gmra.mxu0 %v3502
    %v7825 = vpop.f32.mrf.mxu0
    %v7826 = vadd.f32 %v7681, %v7825
    %v7827 = vpop.f32.mrf.mxu0
    %7828 = vmatprep.mubr.f32.mxu0 0.0
    %7829 = vmatmul.mubr.f32.gmra.mxu0 %v3505
    %v7830 = vpop.f32.mrf.mxu0
    %v7831 = vadd.f32 %v7686, %v7830
    %v7832 = vpop.f32.mrf.mxu0
    %7833 = vmatprep.mubr.f32.mxu0 0.0
    %7834 = vmatmul.mubr.f32.gmra.mxu0 %v3508
    %v7835 = vpop.f32.mrf.mxu0
    %v7836 = vadd.f32 %v7691, %v7835
    %v7837 = vpop.f32.mrf.mxu0
    %7838 = vmatprep.mubr.f32.mxu0 0.0
    %7839 = vmatmul.mubr.f32.gmra.mxu0 %v3511
    %v7840 = vpop.f32.mrf.mxu0
    %v7841 = vadd.f32 %v7696, %v7840
    %v7842 = vpop.f32.mrf.mxu0
    %7843 = vmatprep.mubr.f32.mxu0 0.0
    %7844 = vmatmul.mubr.f32.gmra.mxu0 %v3514
    %v7845 = vpop.f32.mrf.mxu0
    %v7846 = vadd.f32 %v7701, %v7845
    %v7847 = vpop.f32.mrf.mxu0
    %7848 = vmatprep.mubr.f32.mxu0 0.0
    %7849 = vmatmul.mubr.f32.gmra.mxu0 %v3517
    %v7850 = vpop.f32.mrf.mxu0
    %v7851 = vadd.f32 %v7706, %v7850
    %v7852 = vpop.f32.mrf.mxu0
    %7853 = vmatprep.mubr.f32.mxu0 0.0
    %7854 = vmatmul.mubr.f32.gmra.mxu0 %v3520
    %v7855 = vpop.f32.mrf.mxu0
    %v7856 = vadd.f32 %v7711, %v7855
    %v7857 = vpop.f32.mrf.mxu0
    %7858 = vmatprep.mubr.f32.mxu0 0.0
    %7859 = vmatmul.mubr.f32.gmra.mxu0 %v3523
    %v7860 = vpop.f32.mrf.mxu0
    %v7861 = vadd.f32 %v7716, %v7860
    %v7862 = vpop.f32.mrf.mxu0
    %7863 = vmatprep.mubr.f32.mxu0 0.0
    %7864 = vmatmul.mubr.f32.gmra.mxu0 %v3526
    %v7865 = vpop.f32.mrf.mxu0
    %v7866 = vadd.f32 %v7721, %v7865
    %v7867 = vpop.f32.mrf.mxu0
    %7868 = vmatprep.mubr.f32.mxu0 0.0
    %7869 = vmatmul.mubr.f32.gmra.mxu0 %v3529
    %v7870 = vpop.f32.mrf.mxu0
    %v7871 = vadd.f32 %v7726, %v7870
    %v7872 = vpop.f32.mrf.mxu0
    %7873 = vmatprep.mubr.f32.mxu0 0.0
    %7874 = vmatmul.mubr.f32.gmra.mxu0 %v3532
    %v7875 = vpop.f32.mrf.mxu0
    %v7876 = vadd.f32 %v7731, %v7875
    %v7877 = vpop.f32.mrf.mxu0
    %7878 = vmatprep.mubr.f32.mxu0 0.0
    %7879 = vmatmul.mubr.f32.gmra.mxu0 %v3535
    %v7880 = vpop.f32.mrf.mxu0
    %v7881 = vadd.f32 %v7736, %v7880
    %v7882 = vpop.f32.mrf.mxu0
    %7883 = vdwg.mxu0
    %v7884 = vadd.f32 %v7806, %v3215
    %v7885 = vadd.f32 %v7811, %v3220
    %v7886 = vadd.f32 %v7816, %v3225
    %v7887 = vadd.f32 %v7821, %v3230
    %v7888 = vadd.f32 %v7826, %v3235
    %v7889 = vadd.f32 %v7831, %v3240
    %v7890 = vadd.f32 %v7836, %v3245
    %v7891 = vadd.f32 %v7841, %v3250
    %v7892 = vadd.f32 %v7846, %v3255
    %v7893 = vadd.f32 %v7851, %v3260
    %v7894 = vadd.f32 %v7856, %v3265
    %v7895 = vadd.f32 %v7861, %v3270
    %v7896 = vadd.f32 %v7866, %v3275
    %v7897 = vadd.f32 %v7871, %v3280
    %v7898 = vadd.f32 %v7876, %v3285
    %v7899 = vadd.f32 %v7881, %v3290
    %v7900 = vmul.f32 %v7884, 0.5
    %v7901 = vmul.f32 %v7885, 0.5
    %v7902 = vmul.f32 %v7886, 0.5
    %v7903 = vmul.f32 %v7887, 0.5
    %v7904 = vtanh.pop %v7900
    %v7905 = vtanh.pop %v7901
    %v7906 = vtanh.pop %v7902
    %v7907 = vtanh.pop %v7903
    %v7908 = vadd.f32 %v7904, 1.0
    %v7909 = vadd.f32 %v7905, 1.0
    %v7910 = vadd.f32 %v7906, 1.0
    %v7911 = vadd.f32 %v7907, 1.0
    %v7912 = vmul.f32 %v7908, 0.5
    %v7913 = vmul.f32 %v7909, 0.5
    %v7914 = vmul.f32 %v7910, 0.5
    %v7915 = vmul.f32 %v7911, 0.5
    %v7916 = vmul.f32 %v7888, 0.5
    %v7917 = vmul.f32 %v7889, 0.5
    %v7918 = vmul.f32 %v7890, 0.5
    %v7919 = vmul.f32 %v7891, 0.5
    %v7920 = vtanh.pop %v7916
    %v7921 = vtanh.pop %v7917
    %v7922 = vtanh.pop %v7918
    %v7923 = vtanh.pop %v7919
    %v7924 = vadd.f32 %v7920, 1.0
    %v7925 = vadd.f32 %v7921, 1.0
    %v7926 = vadd.f32 %v7922, 1.0
    %v7927 = vadd.f32 %v7923, 1.0
    %v7928 = vmul.f32 %v7924, 0.5
    %v7929 = vmul.f32 %v7925, 0.5
    %v7930 = vmul.f32 %v7926, 0.5
    %v7931 = vmul.f32 %v7927, 0.5
    %v7932 = vtanh.pop %v7892
    %v7933 = vtanh.pop %v7893
    %v7934 = vtanh.pop %v7894
    %v7935 = vtanh.pop %v7895
    %v7936 = vmul.f32 %v7896, 0.5
    %v7937 = vmul.f32 %v7897, 0.5
    %v7938 = vmul.f32 %v7898, 0.5
    %v7939 = vmul.f32 %v7899, 0.5
    %v7940 = vtanh.pop %v7936
    %v7941 = vtanh.pop %v7937
    %v7942 = vtanh.pop %v7938
    %v7943 = vtanh.pop %v7939
    %v7944 = vadd.f32 %v7940, 1.0
    %v7945 = vadd.f32 %v7941, 1.0
    %v7946 = vadd.f32 %v7942, 1.0
    %v7947 = vadd.f32 %v7943, 1.0
    %v7948 = vmul.f32 %v7944, 0.5
    %v7949 = vmul.f32 %v7945, 0.5
    %v7950 = vmul.f32 %v7946, 0.5
    %v7951 = vmul.f32 %v7947, 0.5
    %v7952 = vmul.f32 %v7928, %v7578
    %v7953 = vmul.f32 %v7929, %v7579
    %v7954 = vmul.f32 %v7930, %v7580
    %v7955 = vmul.f32 %v7931, %v7581
    %v7956 = vmul.f32 %v7912, %v7932
    %v7957 = vmul.f32 %v7913, %v7933
    %v7958 = vmul.f32 %v7914, %v7934
    %v7959 = vmul.f32 %v7915, %v7935
    %v7960 = vadd.f32 %v7952, %v7956
    %v7961 = vadd.f32 %v7953, %v7957
    %v7962 = vadd.f32 %v7954, %v7958
    %v7963 = vadd.f32 %v7955, %v7959
    %v7964 = vtanh.pop %v7960
    %v7965 = vtanh.pop %v7961
    %v7966 = vtanh.pop %v7962
    %v7967 = vtanh.pop %v7963
    %v7968 = vmul.f32 %v7948, %v7964
    %v7969 = vmul.f32 %v7949, %v7965
    %v7970 = vmul.f32 %v7950, %v7966
    %v7971 = vmul.f32 %v7951, %v7967
    %v7972 = vld [vmem:[%s5] sm:$0xf]
    %v7973 = vld [vmem:[%s6] sm:$0xf]
    %7975 = vset.pattern.permute.xlu0 0
    %7976 = vperm.xlu0 %7975, %v7973
    %v7977 = vpop.permute.xlu0 %7976
    %v7980 = vsel %vm73, %v7972, 0
    %7982 = vmatprep.subr.mxu0 0.0
    %7983 = vmatpush1.msra.mxu0 0.0
    %7984 = vmatprep.subr.mxu0 0.0
    %7985 = vmatpush1.msra.mxu0 0.0
    %7986 = vmatprep.subr.mxu0 0.0
    %7987 = vmatpush1.msra.mxu0 0.0
    %7988 = vmatprep.subr.mxu0 0.0
    %7989 = vmatpush1.msra.mxu0 0.0
    %7990 = vmatprep.subr.mxu0 0.0
    %7991 = vmatpush1.msra.mxu0 0.0
    %7992 = vmatprep.subr.mxu0 0.0
    %7993 = vmatpush1.msra.mxu0 0.0
    %7994 = vmatprep.subr.mxu0 0.0
    %7995 = vmatpush1.msra.mxu0 0.0
    %7996 = vmatprep.subr.mxu0 0.0
    %7997 = vmatpush1.msra.mxu0 0.0
    %7998 = vmatprep.subr.mxu0 0.0
    %7999 = vmatpush1.msra.mxu0 0.0
    %8000 = vmatprep.subr.mxu0 0.0
    %8001 = vmatpush1.msra.mxu0 0.0
    %8002 = vmatprep.subr.mxu0 0.0
    %8003 = vmatpush1.msra.mxu0 0.0
    %8004 = vmatprep.subr.mxu0 0.0
    %8005 = vmatpush1.msra.mxu0 0.0
    %8006 = vmatprep.subr.mxu0 0.0
    %8007 = vmatpush1.msra.mxu0 %v7971
    %8008 = vmatprep.subr.mxu0 0.0
    %8009 = vmatpush1.msra.mxu0 %v7970
    %8010 = vmatprep.subr.mxu0 0.0
    %8011 = vmatpush1.msra.mxu0 %v7969
    %8012 = vmatprep.subr.mxu0 0.0
    %8013 = vmatpush1.msra.mxu0 %v7968
    %8014 = vmatprep.subr.mxu0 0.0
    %8015 = vmatpush2.msra.mxu0 0.0
    %8016 = vmatprep.subr.mxu0 0.0
    %8017 = vmatpush2.msra.mxu0 0.0
    %8018 = vmatprep.subr.mxu0 0.0
    %8019 = vmatpush2.msra.mxu0 0.0
    %8020 = vmatprep.subr.mxu0 0.0
    %8021 = vmatpush2.msra.mxu0 0.0
    %8022 = vmatprep.subr.mxu0 0.0
    %8023 = vmatpush2.msra.mxu0 0.0
    %8024 = vmatprep.subr.mxu0 0.0
    %8025 = vmatpush2.msra.mxu0 0.0
    %8026 = vmatprep.subr.mxu0 0.0
    %8027 = vmatpush2.msra.mxu0 0.0
    %8028 = vmatprep.subr.mxu0 0.0
    %8029 = vmatpush2.msra.mxu0 0.0
    %8030 = vmatprep.subr.mxu0 0.0
    %8031 = vmatpush2.msra.mxu0 0.0
    %8032 = vmatprep.subr.mxu0 0.0
    %8033 = vmatpush2.msra.mxu0 0.0
    %8034 = vmatprep.subr.mxu0 0.0
    %8035 = vmatpush2.msra.mxu0 0.0
    %8036 = vmatprep.subr.mxu0 0.0
    %8037 = vmatpush2.msra.mxu0 0.0
    %8038 = vmatprep.subr.mxu0 0.0
    %8039 = vmatpush2.msra.mxu0 0.0
    %8040 = vmatprep.subr.mxu0 0.0
    %8041 = vmatpush2.msra.mxu0 0.0
    %8042 = vmatprep.subr.mxu0 0.0
    %8043 = vmatpush2.msra.mxu0 0.0
    %8044 = vmatprep.subr.mxu0 0.0
    %8045 = vmatpush2.msra.mxu0 0.0
    %8046 = vmatprep.mubr.f32.mxu0 0.0
    %8047 = vmatmul.mubr.f32.gmra.mxu0 %v7980
    %v8048 = vpop.f32.mrf.mxu0
    %v8049 = vadd.f32 %v7977, %v8048
    %v8050 = vpop.f32.mrf.mxu0
    %8051 = vdwg.mxu0
    %vm8052 = vcmask 1043456
    %v8053 = vsel %vm8052, %v8049, -inf
    %v8054 = vrot.slane %v8053, 4
    %v8055 = vmax.f32 %v8053, %v8054
    %v8056 = vrot.slane %v8055, 2
    %v8057 = vmax.f32 %v8055, %v8056
    %v8058 = vrot.slane %v8057, 1
    %v8059 = vmax.f32 %v8057, %v8058
    %v8060 = vsub.f32 %v8049, %v8059
    %v8061 = vmul.f32 %v8060, 1.442695
    %v8062 = vpow.pop %v8061
    %v8063 = vsel %vm8052, %v8062, 0.0
    %v8064 = vrot.slane %v8063, 4
    %v8065 = vadd.f32 %v8063, %v8064
    %v8066 = vrot.slane %v8065, 2
    %v8067 = vadd.f32 %v8065, %v8066
    %v8068 = vrot.slane %v8067, 1
    %v8069 = vadd.f32 %v8067, %v8068
    %v8070 = vlog2.pop %v8069
    %v8071 = vmul.f32 %v8070, 0.6931472
    %v8072 = vsub.f32 %v8060, %v8071
    %8073 = vst [vmem:[#allocation6] sm:$0xf] %v8072
    // Predicated region
    $region34: #{tpu_custom_call.1} parent=1 // pred_check
      _
    $region35: #{tpu_custom_call.1} parent=1 // pred_check_branch
      %8075 = sbr.rel (0) target = $region37
    $region36: #{tpu_custom_call.1} parent=1 // pred_region
      %s8077 = ssub.s32 64, 64
      %8078 = vsyncadd [#allocation5], %s8077
      %s8080 = sshll.u32 [#allocation6], 4
      %s8081 = int_to_ptr.vmem [resolvable:$true] %s8080
      %8083 = dma.vmem_to_hbm [thread:$0]  %s8081, 64, %s7, [#allocation5]
    $region37: #{tpu_custom_call.1} parent=1 // pred_fallthru
      _
    // Predicated region
    $region38: #{tpu_custom_call.1} parent=1 // pred_check
      _
    $region39: #{tpu_custom_call.1} parent=1 // pred_check_branch
      %8085 = sbr.rel (0) target = $region41
    $region40: #{tpu_custom_call.1} parent=1 // pred_region
      %8086 = dma.done [#allocation5], 64
    $region41: #{tpu_custom_call.1} parent=1 // pred_fallthru
      _
    %8087 = vsyncpa [#allocation4], 1
    %8088 = vsyncpa [#allocation5], 1

</llo_original>
